<compile_context>
chip_gen: v7x
topology: tpu7x:2x2x1
jax: 0.10.0
libtpu: 0.0.40
codegen_flags: <defaults>
</compile_context>

<pallas_src>
import functools

import numpy as np
import jax
import jax.numpy as jnp
from jax import lax
from jax.experimental import pallas as pl
from jax.experimental.pallas import tpu as pltpu

_C = 128  # every channel dim is zero-padded to one full lane tile


# ----------------------------------------------------------------------------
# Fused kernel: one grid step = one batch element.
# ----------------------------------------------------------------------------
def _sr_fused_kernel(mask_ref, p1_ref, w1_ref, b1_ref, w2_ref, b2_ref,
                     w3_ref, b3_ref, w4_ref, b4_ref, o_ref,
                     a1, a2, a3, *, H, W):
    # mask_ref : (B, 1)   f32   1.0 for valid columns (j < W), 0.0 for halo cols
    # p1_ref   : (1, B, 32) bf16  conv1 5x5 patches over the (H, W+2) base grid
    # w1_ref   : (32, 128) bf16 ; w2/w3/w4_ref : (9*128, 128) bf16 (per-tap blocks)
    # bX_ref   : (1, 128)  f32
    # o_ref    : (1, B, 128) f32  lane-dense conv4 output slab
    # a1/a2/a3 : VMEM (nrows, 128) bf16  flattened padded activations
    W2 = W + 2
    B = H * W2                # rows of every layer's output slab
    off0 = W2 + 1             # flat-row offset of interior pixel (0, 0)
    nrows = a1.shape[0]

    # Halo maintenance: zero ONLY the rows the slab write never touches (top
    # padded row + left halo of row 1, and the bottom padded row + spare rows).
    # Left/right halo columns inside the slab region are zeroed by the mask
    # multiply below.  Done every grid step -> correct under parallel sharding.
    zero_head = jnp.zeros((off0, _C), a1.dtype)
    zero_tail = jnp.zeros((nrows - off0 - B, _C), a1.dtype)
    for buf in (a1, a2, a3):
        buf[0:off0, :] = zero_head
        buf[off0 + B:nrows, :] = zero_tail

    mask = mask_ref[...]                                    # (B, 1) f32

    # ---- conv1: 1 -> 64, 5x5, ReLU.  One (B,32)@(32,128) MXU matmul, one
    # contiguous lane-dense slab store.
    y = jnp.dot(p1_ref[0], w1_ref[...], preferred_element_type=jnp.float32)
    y = jnp.maximum(y + b1_ref[...], 0.0) * mask
    a1[off0:off0 + B, :] = y.astype(a1.dtype)

    def conv3x3(src, w_ref, b_ref, relu):
        # 9 constant-offset contiguous windows of the flat buffer, each fed to
        # a K=128 MXU matmul and accumulated in f32 (no im2col column buffer,
        # hence no extra VMEM store traffic).
        acc = None
        for t in range(9):
            off = (t // 3) * W2 + (t % 3)
            part = jnp.dot(src[off:off + B, :],
                           w_ref[t * _C:(t + 1) * _C, :],
                           preferred_element_type=jnp.float32)
            acc = part if acc is None else acc + part
        y = acc + b_ref[...]
        if relu:
            y = jnp.maximum(y, 0.0)
        return y * mask

    # ---- conv2: 64 -> 64, 3x3, ReLU.
    a2[off0:off0 + B, :] = conv3x3(a1, w2_ref, b2_ref, True).astype(a2.dtype)
    # ---- conv3: 64 -> 32 (padded to 128), 3x3, ReLU.
    a3[off0:off0 + B, :] = conv3x3(a2, w3_ref, b3_ref, True).astype(a3.dtype)
    # ---- conv4: 32 -> r^2 (padded to 128), 3x3, no ReLU.  Lane-dense store;
    # the wrapper slices out the real channels / columns.
    o_ref[0] = conv3x3(a3, w4_ref, b4_ref, False).astype(o_ref.dtype)


# ----------------------------------------------------------------------------
# Deterministic parameter init (mirrors torch.nn.init.orthogonal_ semantics on
# the (Cout, Cin*KH*KW) flattening, with gain).
# ----------------------------------------------------------------------------
def orthogonal_conv_weight(rng, cout, cin, kh, kw, gain):
    rows, cols = cout, cin * kh * kw
    flat = rng.standard_normal((rows, cols)).astype(np.float64)
    if rows < cols:
        flat = flat.T
    q, r = np.linalg.qr(flat)
    q = q * np.sign(np.diag(r))
    if rows < cols:
        q = q.T
    w_oihw = (gain * q).reshape(cout, cin, kh, kw).astype(np.float32)
    # -> (KH, KW, Cin, Cout) for the NHWC kernel.
    return jnp.asarray(np.transpose(w_oihw, (2, 3, 1, 0)))


def make_params(upscale_factor, seed=0):
    rng = np.random.default_rng(seed)
    relu_gain = float(np.sqrt(2.0))  # init.calculate_gain('relu')
    r2 = upscale_factor ** 2
    return {
        "w1": orthogonal_conv_weight(rng, 64, 1, 5, 5, relu_gain),
        "b1": jnp.asarray(np.linspace(-0.1, 0.1, 64, dtype=np.float32)),
        "w2": orthogonal_conv_weight(rng, 64, 64, 3, 3, relu_gain),
        "b2": jnp.asarray(np.linspace(-0.1, 0.1, 64, dtype=np.float32)),
        "w3": orthogonal_conv_weight(rng, 32, 64, 3, 3, relu_gain),
        "b3": jnp.asarray(np.linspace(-0.1, 0.1, 32, dtype=np.float32)),
        "w4": orthogonal_conv_weight(rng, r2, 32, 3, 3, 1.0),
        "b4": jnp.asarray(np.linspace(-0.1, 0.1, r2, dtype=np.float32)),
    }


# ----------------------------------------------------------------------------
# Full forward pass.  Input/output follow the PyTorch NCHW convention.
# ----------------------------------------------------------------------------
def sr_forward(x_nchw, params, upscale_factor):
    r = upscale_factor
    r2 = r * r
    N, _, H, W = x_nchw.shape
    W2 = W + 2
    B = H * W2
    # flat buffer rows: must cover the largest tap window (offset 2*W2+2),
    # rounded up to a bf16 sublane tile.
    nrows = -(-(B + 2 * W2 + 2) // 16) * 16

    # conv1 5x5 patches over the (H, W+2) base grid: row b = i*W2 + j holds the
    # patch at (i, j) for j < W and zeros for the two halo columns (the kernel's
    # mask zeroes their outputs anyway).  Tap order (kh, kw) matches w1 below.
    x = x_nchw[:, 0, :, :]                                   # (N, H, W)
    xp = jnp.pad(x, ((0, 0), (2, 2), (2, 2)))                # (N, H+4, W+4)
    taps = [xp[:, kh:kh + H, kw:kw + W] for kh in range(5) for kw in range(5)]
    p = jnp.stack(taps, axis=-1)                             # (N, H, W, 25)
    p = jnp.pad(p, ((0, 0), (0, 0), (0, 2), (0, 7)))         # (N, H, W2, 32)
    p1 = p.reshape(N, B, 32).astype(jnp.bfloat16)

    # Column-validity mask over the base grid (1 for j < W, 0 for halo cols).
    mask = (jnp.arange(B, dtype=jnp.int32) % W2 < W)
    mask = mask.astype(jnp.float32).reshape(B, 1)

    # Zero-pad weights/biases to 128 lanes (and conv1's K to 32) host-side.
    def pad2(w, rows, cols):
        return jnp.zeros((rows, cols), w.dtype).at[:w.shape[0], :w.shape[1]].set(w)

    def pad_taps(w):  # (3, 3, cin, cout) -> (9*128, 128) per-tap blocks
        kh, kw, cin, cout = w.shape
        wp = jnp.zeros((kh * kw, _C, _C), w.dtype)
        wp = wp.at[:, :cin, :cout].set(w.reshape(kh * kw, cin, cout))
        return wp.reshape(kh * kw * _C, _C)

    w1 = pad2(params["w1"].reshape(25, 64), 32, _C).astype(jnp.bfloat16)
    w2 = pad_taps(params["w2"]).astype(jnp.bfloat16)
    w3 = pad_taps(params["w3"]).astype(jnp.bfloat16)
    w4 = pad_taps(params["w4"]).astype(jnp.bfloat16)
    b1 = pad2(params["b1"].reshape(1, 64), 1, _C)
    b2 = pad2(params["b2"].reshape(1, 64), 1, _C)
    b3 = pad2(params["b3"].reshape(1, 32), 1, _C)
    b4 = pad2(params["b4"].reshape(1, r2), 1, _C)

    kernel = functools.partial(_sr_fused_kernel, H=H, W=W)
    rep2 = lambda n: (0, 0)      # replicated (full-array) weight/bias/mask blocks

    flops = 2 * N * B * (32 * _C + 3 * 9 * _C * _C)
    bytes_accessed = (p1.size * 2 + mask.size * 4
                      + (w1.size + w2.size + w3.size + w4.size) * 2
                      + (b1.size + b2.size + b3.size + b4.size) * 4
                      + N * B * _C * 4)

    y = pl.pallas_call(
        kernel,
        out_shape=jax.ShapeDtypeStruct((N, B, _C), jnp.float32),
        grid=(N,),
        in_specs=[
            pl.BlockSpec((B, 1), rep2),                        # column mask
            pl.BlockSpec((1, B, 32), lambda n: (n, 0, 0)),     # conv1 patches
            pl.BlockSpec((32, _C), rep2),                      # w1
            pl.BlockSpec((1, _C), rep2),                       # b1
            pl.BlockSpec((9 * _C, _C), rep2),                  # w2
            pl.BlockSpec((1, _C), rep2),                       # b2
            pl.BlockSpec((9 * _C, _C), rep2),                  # w3
            pl.BlockSpec((1, _C), rep2),                       # b3
            pl.BlockSpec((9 * _C, _C), rep2),                  # w4
            pl.BlockSpec((1, _C), rep2),                       # b4
        ],
        out_specs=pl.BlockSpec((1, B, _C), lambda n: (n, 0, 0)),
        scratch_shapes=[pltpu.VMEM((nrows, _C), jnp.bfloat16)] * 3,
        compiler_params=pltpu.CompilerParams(
            dimension_semantics=("parallel",)),                # v7x: 2 TCs
        cost_estimate=pl.CostEstimate(flops=flops, transcendentals=0,
                                      bytes_accessed=bytes_accessed),
    )(mask, p1, w1, b1, w2, b2, w3, b3, w4, b4)

    # Slice real columns/channels, then pixel shuffle (pure data rearrangement
    # of the tiny final tensor, kept as XLA glue at the boundary).
    y = y.reshape(N, H, W2, _C)[:, :, :W, :r2]                 # (N, H, W, r^2)
    y = y.reshape(N, H, W, r, r)
    y = jnp.transpose(y, (0, 1, 3, 2, 4))                      # (N, H, r, W, r)
    return y.reshape(N, 1, H * r, W * r)                       # NCHW


# ----------------------------------------------------------------------------
# Pure-JAX f32 reference for a tolerance check.
# ----------------------------------------------------------------------------
def sr_reference(x_nchw, params, r):
    def conv(x, w, b):
        y = lax.conv_general_dilated(x, w, (1, 1), "SAME",
                                     dimension_numbers=("NHWC", "HWIO", "NHWC"))
        return y + b.reshape(1, 1, 1, -1)

    x = jnp.transpose(x_nchw, (0, 2, 3, 1))
    y = jax.nn.relu(conv(x, params["w1"], params["b1"]))
    y = jax.nn.relu(conv(y, params["w2"], params["b2"]))
    y = jax.nn.relu(conv(y, params["w3"], params["b3"]))
    y = conv(y, params["w4"], params["b4"])
    N, H, W, _ = y.shape
    y = y.reshape(N, H, W, r, r)
    y = jnp.transpose(y, (0, 1, 3, 2, 4))
    return y.reshape(N, 1, H * r, W * r)


if __name__ == "__main__":
    upscale_factor = 3
    N, C, H, W = 2, 1, 16, 16

    key = jax.random.PRNGKey(0)
    x = jax.random.normal(key, (N, C, H, W), dtype=jnp.float32)

    params = make_params(upscale_factor, seed=0)

    fwd = jax.jit(functools.partial(sr_forward, upscale_factor=upscale_factor))
    out = jax.block_until_ready(fwd(x, params))

    expected_shape = (N, 1, H * upscale_factor, W * upscale_factor)
    assert out.shape == expected_shape, (out.shape, expected_shape)
    assert out.dtype == jnp.float32
    assert bool(jnp.all(jnp.isfinite(out)))

    ref = sr_reference(x, params, upscale_factor)
    err = float(jnp.max(jnp.abs(out - ref)))
    scale = float(jnp.max(jnp.abs(ref)))
    assert err <= 5e-2 * scale + 1e-2, (err, scale)   # bf16 operands, f32 acc

    print("KERNEL_OK")
</pallas_src>

<mosaic_0001>
module attributes {stable_mosaic.version = 11 : i64} {
  func.func @_sr_fused_kernel(%arg0: i32, %arg1: memref<288x1xf32, #tpu.memory_space<vmem>>, %arg2: memref<1x288x32xbf16, #tpu.memory_space<vmem>>, %arg3: memref<32x128xbf16, #tpu.memory_space<vmem>>, %arg4: memref<1x128xf32, #tpu.memory_space<vmem>>, %arg5: memref<1152x128xbf16, #tpu.memory_space<vmem>>, %arg6: memref<1x128xf32, #tpu.memory_space<vmem>>, %arg7: memref<1152x128xbf16, #tpu.memory_space<vmem>>, %arg8: memref<1x128xf32, #tpu.memory_space<vmem>>, %arg9: memref<1152x128xbf16, #tpu.memory_space<vmem>>, %arg10: memref<1x128xf32, #tpu.memory_space<vmem>>, %arg11: memref<1x288x128xf32, #tpu.memory_space<vmem>>, %arg12: memref<336x128xbf16, #tpu.memory_space<vmem>>, %arg13: memref<336x128xbf16, #tpu.memory_space<vmem>>, %arg14: memref<336x128xbf16, #tpu.memory_space<vmem>>) attributes {dimension_semantics = [#tpu.dimension_semantics<parallel>], iteration_bounds = array<i64: 2>, scalar_prefetch = 0 : i64, scratch_operands = 3 : i64, tpu.core_type = #tpu.core_type<tc>, window_params = [{pipeline_mode = #tpu.pipeline_mode<synchronous>, transform_indices = @transform_0, window_bounds = array<i64: 288, 1>}, {transform_indices = @transform_1, window_bounds = array<i64: 1, 288, 32>}, {pipeline_mode = #tpu.pipeline_mode<synchronous>, transform_indices = @transform_2, window_bounds = array<i64: 32, 128>}, {pipeline_mode = #tpu.pipeline_mode<synchronous>, transform_indices = @transform_3, window_bounds = array<i64: 1, 128>}, {pipeline_mode = #tpu.pipeline_mode<synchronous>, transform_indices = @transform_4, window_bounds = array<i64: 1152, 128>}, {pipeline_mode = #tpu.pipeline_mode<synchronous>, transform_indices = @transform_5, window_bounds = array<i64: 1, 128>}, {pipeline_mode = #tpu.pipeline_mode<synchronous>, transform_indices = @transform_6, window_bounds = array<i64: 1152, 128>}, {pipeline_mode = #tpu.pipeline_mode<synchronous>, transform_indices = @transform_7, window_bounds = array<i64: 1, 128>}, {pipeline_mode = #tpu.pipeline_mode<synchronous>, transform_indices = @transform_8, window_bounds = array<i64: 1152, 128>}, {pipeline_mode = #tpu.pipeline_mode<synchronous>, transform_indices = @transform_9, window_bounds = array<i64: 1, 128>}, {transform_indices = @transform_10, window_bounds = array<i64: 1, 288, 128>}]} {
    %cst = arith.constant 0.000000e+00 : bf16
    %0 = vector.broadcast %cst : bf16 to vector<19x128xbf16>
    %cst_0 = arith.constant 0.000000e+00 : bf16
    %1 = vector.broadcast %cst_0 : bf16 to vector<29x128xbf16>
    %c0 = arith.constant 0 : index
    %c0_1 = arith.constant 0 : index
    %2 = vector.load %arg12[%c0, %c0_1] : memref<336x128xbf16, #tpu.memory_space<vmem>>, vector<19x128xbf16>
    tpu.vector_store %arg12[%c0, %c0_1], %0 {strides = array<i32>} : memref<336x128xbf16, #tpu.memory_space<vmem>>, vector<19x128xbf16>,
    %c307 = arith.constant 307 : index
    %c0_2 = arith.constant 0 : index
    %3 = vector.load %arg12[%c307, %c0_2] : memref<336x128xbf16, #tpu.memory_space<vmem>>, vector<29x128xbf16>
    tpu.vector_store %arg12[%c307, %c0_2], %1 {strides = array<i32>} : memref<336x128xbf16, #tpu.memory_space<vmem>>, vector<29x128xbf16>,
    %c0_3 = arith.constant 0 : index
    %c0_4 = arith.constant 0 : index
    %4 = vector.load %arg13[%c0_3, %c0_4] : memref<336x128xbf16, #tpu.memory_space<vmem>>, vector<19x128xbf16>
    tpu.vector_store %arg13[%c0_3, %c0_4], %0 {strides = array<i32>} : memref<336x128xbf16, #tpu.memory_space<vmem>>, vector<19x128xbf16>,
    %c307_5 = arith.constant 307 : index
    %c0_6 = arith.constant 0 : index
    %5 = vector.load %arg13[%c307_5, %c0_6] : memref<336x128xbf16, #tpu.memory_space<vmem>>, vector<29x128xbf16>
    tpu.vector_store %arg13[%c307_5, %c0_6], %1 {strides = array<i32>} : memref<336x128xbf16, #tpu.memory_space<vmem>>, vector<29x128xbf16>,
    %c0_7 = arith.constant 0 : index
    %c0_8 = arith.constant 0 : index
    %6 = vector.load %arg14[%c0_7, %c0_8] : memref<336x128xbf16, #tpu.memory_space<vmem>>, vector<19x128xbf16>
    tpu.vector_store %arg14[%c0_7, %c0_8], %0 {strides = array<i32>} : memref<336x128xbf16, #tpu.memory_space<vmem>>, vector<19x128xbf16>,
    %c307_9 = arith.constant 307 : index
    %c0_10 = arith.constant 0 : index
    %7 = vector.load %arg14[%c307_9, %c0_10] : memref<336x128xbf16, #tpu.memory_space<vmem>>, vector<29x128xbf16>
    tpu.vector_store %arg14[%c307_9, %c0_10], %1 {strides = array<i32>} : memref<336x128xbf16, #tpu.memory_space<vmem>>, vector<29x128xbf16>,
    %c0_11 = arith.constant 0 : index
    %c0_12 = arith.constant 0 : index
    %8 = vector.load %arg1[%c0_11, %c0_12] : memref<288x1xf32, #tpu.memory_space<vmem>>, vector<288x1xf32>
    %c0_13 = arith.constant 0 : index
    %c0_14 = arith.constant 0 : index
    %c0_15 = arith.constant 0 : index
    %9 = vector.load %arg2[%c0_13, %c0_14, %c0_15] : memref<1x288x32xbf16, #tpu.memory_space<vmem>>, vector<1x288x32xbf16>
    %10 = vector.shape_cast %9 : vector<1x288x32xbf16> to vector<288x32xbf16>
    %c0_16 = arith.constant 0 : index
    %c0_17 = arith.constant 0 : index
    %11 = vector.load %arg3[%c0_16, %c0_17] : memref<32x128xbf16, #tpu.memory_space<vmem>>, vector<32x128xbf16>
    %cst_18 = arith.constant dense<0.000000e+00> : vector<288x128xf32>
    %12 = tpu.matmul %10, %11, %cst_18 {dimension_numbers = #tpu.dot_dimension_numbers<[1], [0], [0], [1], [0, 0, 1, 1], [], []>} : vector<288x32xbf16>, vector<32x128xbf16>, vector<288x128xf32> -> vector<288x128xf32>
    %c0_19 = arith.constant 0 : index
    %c0_20 = arith.constant 0 : index
    %13 = vector.load %arg4[%c0_19, %c0_20] : memref<1x128xf32, #tpu.memory_space<vmem>>, vector<1x128xf32>
    %14 = vector.broadcast %13 : vector<1x128xf32> to vector<288x128xf32>
    %15 = arith.addf %12, %14 : vector<288x128xf32>
    %cst_21 = arith.constant 0.000000e+00 : f32
    %16 = vector.broadcast %cst_21 : f32 to vector<288x128xf32>
    %17 = arith.maximumf %15, %16 : vector<288x128xf32>
    %18 = vector.broadcast %8 : vector<288x1xf32> to vector<288x128xf32>
    %19 = arith.mulf %17, %18 : vector<288x128xf32>
    %20 = arith.truncf %19 : vector<288x128xf32> to vector<288x128xbf16>
    %c19 = arith.constant 19 : index
    %c0_22 = arith.constant 0 : index
    %21 = vector.load %arg12[%c19, %c0_22] : memref<336x128xbf16, #tpu.memory_space<vmem>>, vector<288x128xbf16>
    tpu.vector_store %arg12[%c19, %c0_22], %20 {strides = array<i32>} : memref<336x128xbf16, #tpu.memory_space<vmem>>, vector<288x128xbf16>,
    %c0_23 = arith.constant 0 : index
    %c0_24 = arith.constant 0 : index
    %22 = vector.load %arg12[%c0_23, %c0_24] : memref<336x128xbf16, #tpu.memory_space<vmem>>, vector<288x128xbf16>
    %c0_25 = arith.constant 0 : index
    %c0_26 = arith.constant 0 : index
    %23 = vector.load %arg5[%c0_25, %c0_26] : memref<1152x128xbf16, #tpu.memory_space<vmem>>, vector<128x128xbf16>
    %cst_27 = arith.constant dense<0.000000e+00> : vector<288x128xf32>
    %24 = tpu.matmul %22, %23, %cst_27 {dimension_numbers = #tpu.dot_dimension_numbers<[1], [0], [0], [1], [0, 0, 1, 1], [], []>} : vector<288x128xbf16>, vector<128x128xbf16>, vector<288x128xf32> -> vector<288x128xf32>
    %c1 = arith.constant 1 : index
    %c0_28 = arith.constant 0 : index
    %25 = vector.load %arg12[%c1, %c0_28] : memref<336x128xbf16, #tpu.memory_space<vmem>>, vector<288x128xbf16>
    %c128 = arith.constant 128 : index
    %c0_29 = arith.constant 0 : index
    %26 = vector.load %arg5[%c128, %c0_29] : memref<1152x128xbf16, #tpu.memory_space<vmem>>, vector<128x128xbf16>
    %cst_30 = arith.constant dense<0.000000e+00> : vector<288x128xf32>
    %27 = tpu.matmul %25, %26, %cst_30 {dimension_numbers = #tpu.dot_dimension_numbers<[1], [0], [0], [1], [0, 0, 1, 1], [], []>} : vector<288x128xbf16>, vector<128x128xbf16>, vector<288x128xf32> -> vector<288x128xf32>
    %28 = arith.addf %24, %27 : vector<288x128xf32>
    %c2 = arith.constant 2 : index
    %c0_31 = arith.constant 0 : index
    %29 = vector.load %arg12[%c2, %c0_31] : memref<336x128xbf16, #tpu.memory_space<vmem>>, vector<288x128xbf16>
    %c256 = arith.constant 256 : index
    %c0_32 = arith.constant 0 : index
    %30 = vector.load %arg5[%c256, %c0_32] : memref<1152x128xbf16, #tpu.memory_space<vmem>>, vector<128x128xbf16>
    %cst_33 = arith.constant dense<0.000000e+00> : vector<288x128xf32>
    %31 = tpu.matmul %29, %30, %cst_33 {dimension_numbers = #tpu.dot_dimension_numbers<[1], [0], [0], [1], [0, 0, 1, 1], [], []>} : vector<288x128xbf16>, vector<128x128xbf16>, vector<288x128xf32> -> vector<288x128xf32>
    %32 = arith.addf %28, %31 : vector<288x128xf32>
    %c18 = arith.constant 18 : index
    %c0_34 = arith.constant 0 : index
    %33 = vector.load %arg12[%c18, %c0_34] : memref<336x128xbf16, #tpu.memory_space<vmem>>, vector<288x128xbf16>
    %c384 = arith.constant 384 : index
    %c0_35 = arith.constant 0 : index
    %34 = vector.load %arg5[%c384, %c0_35] : memref<1152x128xbf16, #tpu.memory_space<vmem>>, vector<128x128xbf16>
    %cst_36 = arith.constant dense<0.000000e+00> : vector<288x128xf32>
    %35 = tpu.matmul %33, %34, %cst_36 {dimension_numbers = #tpu.dot_dimension_numbers<[1], [0], [0], [1], [0, 0, 1, 1], [], []>} : vector<288x128xbf16>, vector<128x128xbf16>, vector<288x128xf32> -> vector<288x128xf32>
    %36 = arith.addf %32, %35 : vector<288x128xf32>
    %c19_37 = arith.constant 19 : index
    %c0_38 = arith.constant 0 : index
    %37 = vector.load %arg12[%c19_37, %c0_38] : memref<336x128xbf16, #tpu.memory_space<vmem>>, vector<288x128xbf16>
    %c512 = arith.constant 512 : index
    %c0_39 = arith.constant 0 : index
    %38 = vector.load %arg5[%c512, %c0_39] : memref<1152x128xbf16, #tpu.memory_space<vmem>>, vector<128x128xbf16>
    %cst_40 = arith.constant dense<0.000000e+00> : vector<288x128xf32>
    %39 = tpu.matmul %37, %38, %cst_40 {dimension_numbers = #tpu.dot_dimension_numbers<[1], [0], [0], [1], [0, 0, 1, 1], [], []>} : vector<288x128xbf16>, vector<128x128xbf16>, vector<288x128xf32> -> vector<288x128xf32>
    %40 = arith.addf %36, %39 : vector<288x128xf32>
    %c20 = arith.constant 20 : index
    %c0_41 = arith.constant 0 : index
    %41 = vector.load %arg12[%c20, %c0_41] : memref<336x128xbf16, #tpu.memory_space<vmem>>, vector<288x128xbf16>
    %c640 = arith.constant 640 : index
    %c0_42 = arith.constant 0 : index
    %42 = vector.load %arg5[%c640, %c0_42] : memref<1152x128xbf16, #tpu.memory_space<vmem>>, vector<128x128xbf16>
    %cst_43 = arith.constant dense<0.000000e+00> : vector<288x128xf32>
    %43 = tpu.matmul %41, %42, %cst_43 {dimension_numbers = #tpu.dot_dimension_numbers<[1], [0], [0], [1], [0, 0, 1, 1], [], []>} : vector<288x128xbf16>, vector<128x128xbf16>, vector<288x128xf32> -> vector<288x128xf32>
    %44 = arith.addf %40, %43 : vector<288x128xf32>
    %c36 = arith.constant 36 : index
    %c0_44 = arith.constant 0 : index
    %45 = vector.load %arg12[%c36, %c0_44] : memref<336x128xbf16, #tpu.memory_space<vmem>>, vector<288x128xbf16>
    %c768 = arith.constant 768 : index
    %c0_45 = arith.constant 0 : index
    %46 = vector.load %arg5[%c768, %c0_45] : memref<1152x128xbf16, #tpu.memory_space<vmem>>, vector<128x128xbf16>
    %cst_46 = arith.constant dense<0.000000e+00> : vector<288x128xf32>
    %47 = tpu.matmul %45, %46, %cst_46 {dimension_numbers = #tpu.dot_dimension_numbers<[1], [0], [0], [1], [0, 0, 1, 1], [], []>} : vector<288x128xbf16>, vector<128x128xbf16>, vector<288x128xf32> -> vector<288x128xf32>
    %48 = arith.addf %44, %47 : vector<288x128xf32>
    %c37 = arith.constant 37 : index
    %c0_47 = arith.constant 0 : index
    %49 = vector.load %arg12[%c37, %c0_47] : memref<336x128xbf16, #tpu.memory_space<vmem>>, vector<288x128xbf16>
    %c896 = arith.constant 896 : index
    %c0_48 = arith.constant 0 : index
    %50 = vector.load %arg5[%c896, %c0_48] : memref<1152x128xbf16, #tpu.memory_space<vmem>>, vector<128x128xbf16>
    %cst_49 = arith.constant dense<0.000000e+00> : vector<288x128xf32>
    %51 = tpu.matmul %49, %50, %cst_49 {dimension_numbers = #tpu.dot_dimension_numbers<[1], [0], [0], [1], [0, 0, 1, 1], [], []>} : vector<288x128xbf16>, vector<128x128xbf16>, vector<288x128xf32> -> vector<288x128xf32>
    %52 = arith.addf %48, %51 : vector<288x128xf32>
    %c38 = arith.constant 38 : index
    %c0_50 = arith.constant 0 : index
    %53 = vector.load %arg12[%c38, %c0_50] : memref<336x128xbf16, #tpu.memory_space<vmem>>, vector<288x128xbf16>
    %c1024 = arith.constant 1024 : index
    %c0_51 = arith.constant 0 : index
    %54 = vector.load %arg5[%c1024, %c0_51] : memref<1152x128xbf16, #tpu.memory_space<vmem>>, vector<128x128xbf16>
    %cst_52 = arith.constant dense<0.000000e+00> : vector<288x128xf32>
    %55 = tpu.matmul %53, %54, %cst_52 {dimension_numbers = #tpu.dot_dimension_numbers<[1], [0], [0], [1], [0, 0, 1, 1], [], []>} : vector<288x128xbf16>, vector<128x128xbf16>, vector<288x128xf32> -> vector<288x128xf32>
    %56 = arith.addf %52, %55 : vector<288x128xf32>
    %c0_53 = arith.constant 0 : index
    %c0_54 = arith.constant 0 : index
    %57 = vector.load %arg6[%c0_53, %c0_54] : memref<1x128xf32, #tpu.memory_space<vmem>>, vector<1x128xf32>
    %58 = vector.broadcast %57 : vector<1x128xf32> to vector<288x128xf32>
    %59 = arith.addf %56, %58 : vector<288x128xf32>
    %cst_55 = arith.constant 0.000000e+00 : f32
    %60 = vector.broadcast %cst_55 : f32 to vector<288x128xf32>
    %61 = arith.maximumf %59, %60 : vector<288x128xf32>
    %62 = vector.broadcast %8 : vector<288x1xf32> to vector<288x128xf32>
    %63 = arith.mulf %61, %62 : vector<288x128xf32>
    %64 = arith.truncf %63 : vector<288x128xf32> to vector<288x128xbf16>
    %c19_56 = arith.constant 19 : index
    %c0_57 = arith.constant 0 : index
    %65 = vector.load %arg13[%c19_56, %c0_57] : memref<336x128xbf16, #tpu.memory_space<vmem>>, vector<288x128xbf16>
    tpu.vector_store %arg13[%c19_56, %c0_57], %64 {strides = array<i32>} : memref<336x128xbf16, #tpu.memory_space<vmem>>, vector<288x128xbf16>,
    %c0_58 = arith.constant 0 : index
    %c0_59 = arith.constant 0 : index
    %66 = vector.load %arg13[%c0_58, %c0_59] : memref<336x128xbf16, #tpu.memory_space<vmem>>, vector<288x128xbf16>
    %c0_60 = arith.constant 0 : index
    %c0_61 = arith.constant 0 : index
    %67 = vector.load %arg7[%c0_60, %c0_61] : memref<1152x128xbf16, #tpu.memory_space<vmem>>, vector<128x128xbf16>
    %cst_62 = arith.constant dense<0.000000e+00> : vector<288x128xf32>
    %68 = tpu.matmul %66, %67, %cst_62 {dimension_numbers = #tpu.dot_dimension_numbers<[1], [0], [0], [1], [0, 0, 1, 1], [], []>} : vector<288x128xbf16>, vector<128x128xbf16>, vector<288x128xf32> -> vector<288x128xf32>
    %c1_63 = arith.constant 1 : index
    %c0_64 = arith.constant 0 : index
    %69 = vector.load %arg13[%c1_63, %c0_64] : memref<336x128xbf16, #tpu.memory_space<vmem>>, vector<288x128xbf16>
    %c128_65 = arith.constant 128 : index
    %c0_66 = arith.constant 0 : index
    %70 = vector.load %arg7[%c128_65, %c0_66] : memref<1152x128xbf16, #tpu.memory_space<vmem>>, vector<128x128xbf16>
    %cst_67 = arith.constant dense<0.000000e+00> : vector<288x128xf32>
    %71 = tpu.matmul %69, %70, %cst_67 {dimension_numbers = #tpu.dot_dimension_numbers<[1], [0], [0], [1], [0, 0, 1, 1], [], []>} : vector<288x128xbf16>, vector<128x128xbf16>, vector<288x128xf32> -> vector<288x128xf32>
    %72 = arith.addf %68, %71 : vector<288x128xf32>
    %c2_68 = arith.constant 2 : index
    %c0_69 = arith.constant 0 : index
    %73 = vector.load %arg13[%c2_68, %c0_69] : memref<336x128xbf16, #tpu.memory_space<vmem>>, vector<288x128xbf16>
    %c256_70 = arith.constant 256 : index
    %c0_71 = arith.constant 0 : index
    %74 = vector.load %arg7[%c256_70, %c0_71] : memref<1152x128xbf16, #tpu.memory_space<vmem>>, vector<128x128xbf16>
    %cst_72 = arith.constant dense<0.000000e+00> : vector<288x128xf32>
    %75 = tpu.matmul %73, %74, %cst_72 {dimension_numbers = #tpu.dot_dimension_numbers<[1], [0], [0], [1], [0, 0, 1, 1], [], []>} : vector<288x128xbf16>, vector<128x128xbf16>, vector<288x128xf32> -> vector<288x128xf32>
    %76 = arith.addf %72, %75 : vector<288x128xf32>
    %c18_73 = arith.constant 18 : index
    %c0_74 = arith.constant 0 : index
    %77 = vector.load %arg13[%c18_73, %c0_74] : memref<336x128xbf16, #tpu.memory_space<vmem>>, vector<288x128xbf16>
    %c384_75 = arith.constant 384 : index
    %c0_76 = arith.constant 0 : index
    %78 = vector.load %arg7[%c384_75, %c0_76] : memref<1152x128xbf16, #tpu.memory_space<vmem>>, vector<128x128xbf16>
    %cst_77 = arith.constant dense<0.000000e+00> : vector<288x128xf32>
    %79 = tpu.matmul %77, %78, %cst_77 {dimension_numbers = #tpu.dot_dimension_numbers<[1], [0], [0], [1], [0, 0, 1, 1], [], []>} : vector<288x128xbf16>, vector<128x128xbf16>, vector<288x128xf32> -> vector<288x128xf32>
    %80 = arith.addf %76, %79 : vector<288x128xf32>
    %c19_78 = arith.constant 19 : index
    %c0_79 = arith.constant 0 : index
    %81 = vector.load %arg13[%c19_78, %c0_79] : memref<336x128xbf16, #tpu.memory_space<vmem>>, vector<288x128xbf16>
    %c512_80 = arith.constant 512 : index
    %c0_81 = arith.constant 0 : index
    %82 = vector.load %arg7[%c512_80, %c0_81] : memref<1152x128xbf16, #tpu.memory_space<vmem>>, vector<128x128xbf16>
    %cst_82 = arith.constant dense<0.000000e+00> : vector<288x128xf32>
    %83 = tpu.matmul %81, %82, %cst_82 {dimension_numbers = #tpu.dot_dimension_numbers<[1], [0], [0], [1], [0, 0, 1, 1], [], []>} : vector<288x128xbf16>, vector<128x128xbf16>, vector<288x128xf32> -> vector<288x128xf32>
    %84 = arith.addf %80, %83 : vector<288x128xf32>
    %c20_83 = arith.constant 20 : index
    %c0_84 = arith.constant 0 : index
    %85 = vector.load %arg13[%c20_83, %c0_84] : memref<336x128xbf16, #tpu.memory_space<vmem>>, vector<288x128xbf16>
    %c640_85 = arith.constant 640 : index
    %c0_86 = arith.constant 0 : index
    %86 = vector.load %arg7[%c640_85, %c0_86] : memref<1152x128xbf16, #tpu.memory_space<vmem>>, vector<128x128xbf16>
    %cst_87 = arith.constant dense<0.000000e+00> : vector<288x128xf32>
    %87 = tpu.matmul %85, %86, %cst_87 {dimension_numbers = #tpu.dot_dimension_numbers<[1], [0], [0], [1], [0, 0, 1, 1], [], []>} : vector<288x128xbf16>, vector<128x128xbf16>, vector<288x128xf32> -> vector<288x128xf32>
    %88 = arith.addf %84, %87 : vector<288x128xf32>
    %c36_88 = arith.constant 36 : index
    %c0_89 = arith.constant 0 : index
    %89 = vector.load %arg13[%c36_88, %c0_89] : memref<336x128xbf16, #tpu.memory_space<vmem>>, vector<288x128xbf16>
    %c768_90 = arith.constant 768 : index
    %c0_91 = arith.constant 0 : index
    %90 = vector.load %arg7[%c768_90, %c0_91] : memref<1152x128xbf16, #tpu.memory_space<vmem>>, vector<128x128xbf16>
    %cst_92 = arith.constant dense<0.000000e+00> : vector<288x128xf32>
    %91 = tpu.matmul %89, %90, %cst_92 {dimension_numbers = #tpu.dot_dimension_numbers<[1], [0], [0], [1], [0, 0, 1, 1], [], []>} : vector<288x128xbf16>, vector<128x128xbf16>, vector<288x128xf32> -> vector<288x128xf32>
    %92 = arith.addf %88, %91 : vector<288x128xf32>
    %c37_93 = arith.constant 37 : index
    %c0_94 = arith.constant 0 : index
    %93 = vector.load %arg13[%c37_93, %c0_94] : memref<336x128xbf16, #tpu.memory_space<vmem>>, vector<288x128xbf16>
    %c896_95 = arith.constant 896 : index
    %c0_96 = arith.constant 0 : index
    %94 = vector.load %arg7[%c896_95, %c0_96] : memref<1152x128xbf16, #tpu.memory_space<vmem>>, vector<128x128xbf16>
    %cst_97 = arith.constant dense<0.000000e+00> : vector<288x128xf32>
    %95 = tpu.matmul %93, %94, %cst_97 {dimension_numbers = #tpu.dot_dimension_numbers<[1], [0], [0], [1], [0, 0, 1, 1], [], []>} : vector<288x128xbf16>, vector<128x128xbf16>, vector<288x128xf32> -> vector<288x128xf32>
    %96 = arith.addf %92, %95 : vector<288x128xf32>
    %c38_98 = arith.constant 38 : index
    %c0_99 = arith.constant 0 : index
    %97 = vector.load %arg13[%c38_98, %c0_99] : memref<336x128xbf16, #tpu.memory_space<vmem>>, vector<288x128xbf16>
    %c1024_100 = arith.constant 1024 : index
    %c0_101 = arith.constant 0 : index
    %98 = vector.load %arg7[%c1024_100, %c0_101] : memref<1152x128xbf16, #tpu.memory_space<vmem>>, vector<128x128xbf16>
    %cst_102 = arith.constant dense<0.000000e+00> : vector<288x128xf32>
    %99 = tpu.matmul %97, %98, %cst_102 {dimension_numbers = #tpu.dot_dimension_numbers<[1], [0], [0], [1], [0, 0, 1, 1], [], []>} : vector<288x128xbf16>, vector<128x128xbf16>, vector<288x128xf32> -> vector<288x128xf32>
    %100 = arith.addf %96, %99 : vector<288x128xf32>
    %c0_103 = arith.constant 0 : index
    %c0_104 = arith.constant 0 : index
    %101 = vector.load %arg8[%c0_103, %c0_104] : memref<1x128xf32, #tpu.memory_space<vmem>>, vector<1x128xf32>
    %102 = vector.broadcast %101 : vector<1x128xf32> to vector<288x128xf32>
    %103 = arith.addf %100, %102 : vector<288x128xf32>
    %cst_105 = arith.constant 0.000000e+00 : f32
    %104 = vector.broadcast %cst_105 : f32 to vector<288x128xf32>
    %105 = arith.maximumf %103, %104 : vector<288x128xf32>
    %106 = vector.broadcast %8 : vector<288x1xf32> to vector<288x128xf32>
    %107 = arith.mulf %105, %106 : vector<288x128xf32>
    %108 = arith.truncf %107 : vector<288x128xf32> to vector<288x128xbf16>
    %c19_106 = arith.constant 19 : index
    %c0_107 = arith.constant 0 : index
    %109 = vector.load %arg14[%c19_106, %c0_107] : memref<336x128xbf16, #tpu.memory_space<vmem>>, vector<288x128xbf16>
    tpu.vector_store %arg14[%c19_106, %c0_107], %108 {strides = array<i32>} : memref<336x128xbf16, #tpu.memory_space<vmem>>, vector<288x128xbf16>,
    %c0_108 = arith.constant 0 : index
    %c0_109 = arith.constant 0 : index
    %110 = vector.load %arg14[%c0_108, %c0_109] : memref<336x128xbf16, #tpu.memory_space<vmem>>, vector<288x128xbf16>
    %c0_110 = arith.constant 0 : index
    %c0_111 = arith.constant 0 : index
    %111 = vector.load %arg9[%c0_110, %c0_111] : memref<1152x128xbf16, #tpu.memory_space<vmem>>, vector<128x128xbf16>
    %cst_112 = arith.constant dense<0.000000e+00> : vector<288x128xf32>
    %112 = tpu.matmul %110, %111, %cst_112 {dimension_numbers = #tpu.dot_dimension_numbers<[1], [0], [0], [1], [0, 0, 1, 1], [], []>} : vector<288x128xbf16>, vector<128x128xbf16>, vector<288x128xf32> -> vector<288x128xf32>
    %c1_113 = arith.constant 1 : index
    %c0_114 = arith.constant 0 : index
    %113 = vector.load %arg14[%c1_113, %c0_114] : memref<336x128xbf16, #tpu.memory_space<vmem>>, vector<288x128xbf16>
    %c128_115 = arith.constant 128 : index
    %c0_116 = arith.constant 0 : index
    %114 = vector.load %arg9[%c128_115, %c0_116] : memref<1152x128xbf16, #tpu.memory_space<vmem>>, vector<128x128xbf16>
    %cst_117 = arith.constant dense<0.000000e+00> : vector<288x128xf32>
    %115 = tpu.matmul %113, %114, %cst_117 {dimension_numbers = #tpu.dot_dimension_numbers<[1], [0], [0], [1], [0, 0, 1, 1], [], []>} : vector<288x128xbf16>, vector<128x128xbf16>, vector<288x128xf32> -> vector<288x128xf32>
    %116 = arith.addf %112, %115 : vector<288x128xf32>
    %c2_118 = arith.constant 2 : index
    %c0_119 = arith.constant 0 : index
    %117 = vector.load %arg14[%c2_118, %c0_119] : memref<336x128xbf16, #tpu.memory_space<vmem>>, vector<288x128xbf16>
    %c256_120 = arith.constant 256 : index
    %c0_121 = arith.constant 0 : index
    %118 = vector.load %arg9[%c256_120, %c0_121] : memref<1152x128xbf16, #tpu.memory_space<vmem>>, vector<128x128xbf16>
    %cst_122 = arith.constant dense<0.000000e+00> : vector<288x128xf32>
    %119 = tpu.matmul %117, %118, %cst_122 {dimension_numbers = #tpu.dot_dimension_numbers<[1], [0], [0], [1], [0, 0, 1, 1], [], []>} : vector<288x128xbf16>, vector<128x128xbf16>, vector<288x128xf32> -> vector<288x128xf32>
    %120 = arith.addf %116, %119 : vector<288x128xf32>
    %c18_123 = arith.constant 18 : index
    %c0_124 = arith.constant 0 : index
    %121 = vector.load %arg14[%c18_123, %c0_124] : memref<336x128xbf16, #tpu.memory_space<vmem>>, vector<288x128xbf16>
    %c384_125 = arith.constant 384 : index
    %c0_126 = arith.constant 0 : index
    %122 = vector.load %arg9[%c384_125, %c0_126] : memref<1152x128xbf16, #tpu.memory_space<vmem>>, vector<128x128xbf16>
    %cst_127 = arith.constant dense<0.000000e+00> : vector<288x128xf32>
    %123 = tpu.matmul %121, %122, %cst_127 {dimension_numbers = #tpu.dot_dimension_numbers<[1], [0], [0], [1], [0, 0, 1, 1], [], []>} : vector<288x128xbf16>, vector<128x128xbf16>, vector<288x128xf32> -> vector<288x128xf32>
    %124 = arith.addf %120, %123 : vector<288x128xf32>
    %c19_128 = arith.constant 19 : index
    %c0_129 = arith.constant 0 : index
    %125 = vector.load %arg14[%c19_128, %c0_129] : memref<336x128xbf16, #tpu.memory_space<vmem>>, vector<288x128xbf16>
    %c512_130 = arith.constant 512 : index
    %c0_131 = arith.constant 0 : index
    %126 = vector.load %arg9[%c512_130, %c0_131] : memref<1152x128xbf16, #tpu.memory_space<vmem>>, vector<128x128xbf16>
    %cst_132 = arith.constant dense<0.000000e+00> : vector<288x128xf32>
    %127 = tpu.matmul %125, %126, %cst_132 {dimension_numbers = #tpu.dot_dimension_numbers<[1], [0], [0], [1], [0, 0, 1, 1], [], []>} : vector<288x128xbf16>, vector<128x128xbf16>, vector<288x128xf32> -> vector<288x128xf32>
    %128 = arith.addf %124, %127 : vector<288x128xf32>
    %c20_133 = arith.constant 20 : index
    %c0_134 = arith.constant 0 : index
    %129 = vector.load %arg14[%c20_133, %c0_134] : memref<336x128xbf16, #tpu.memory_space<vmem>>, vector<288x128xbf16>
    %c640_135 = arith.constant 640 : index
    %c0_136 = arith.constant 0 : index
    %130 = vector.load %arg9[%c640_135, %c0_136] : memref<1152x128xbf16, #tpu.memory_space<vmem>>, vector<128x128xbf16>
    %cst_137 = arith.constant dense<0.000000e+00> : vector<288x128xf32>
    %131 = tpu.matmul %129, %130, %cst_137 {dimension_numbers = #tpu.dot_dimension_numbers<[1], [0], [0], [1], [0, 0, 1, 1], [], []>} : vector<288x128xbf16>, vector<128x128xbf16>, vector<288x128xf32> -> vector<288x128xf32>
    %132 = arith.addf %128, %131 : vector<288x128xf32>
    %c36_138 = arith.constant 36 : index
    %c0_139 = arith.constant 0 : index
    %133 = vector.load %arg14[%c36_138, %c0_139] : memref<336x128xbf16, #tpu.memory_space<vmem>>, vector<288x128xbf16>
    %c768_140 = arith.constant 768 : index
    %c0_141 = arith.constant 0 : index
    %134 = vector.load %arg9[%c768_140, %c0_141] : memref<1152x128xbf16, #tpu.memory_space<vmem>>, vector<128x128xbf16>
    %cst_142 = arith.constant dense<0.000000e+00> : vector<288x128xf32>
    %135 = tpu.matmul %133, %134, %cst_142 {dimension_numbers = #tpu.dot_dimension_numbers<[1], [0], [0], [1], [0, 0, 1, 1], [], []>} : vector<288x128xbf16>, vector<128x128xbf16>, vector<288x128xf32> -> vector<288x128xf32>
    %136 = arith.addf %132, %135 : vector<288x128xf32>
    %c37_143 = arith.constant 37 : index
    %c0_144 = arith.constant 0 : index
    %137 = vector.load %arg14[%c37_143, %c0_144] : memref<336x128xbf16, #tpu.memory_space<vmem>>, vector<288x128xbf16>
    %c896_145 = arith.constant 896 : index
    %c0_146 = arith.constant 0 : index
    %138 = vector.load %arg9[%c896_145, %c0_146] : memref<1152x128xbf16, #tpu.memory_space<vmem>>, vector<128x128xbf16>
    %cst_147 = arith.constant dense<0.000000e+00> : vector<288x128xf32>
    %139 = tpu.matmul %137, %138, %cst_147 {dimension_numbers = #tpu.dot_dimension_numbers<[1], [0], [0], [1], [0, 0, 1, 1], [], []>} : vector<288x128xbf16>, vector<128x128xbf16>, vector<288x128xf32> -> vector<288x128xf32>
    %140 = arith.addf %136, %139 : vector<288x128xf32>
    %c38_148 = arith.constant 38 : index
    %c0_149 = arith.constant 0 : index
    %141 = vector.load %arg14[%c38_148, %c0_149] : memref<336x128xbf16, #tpu.memory_space<vmem>>, vector<288x128xbf16>
    %c1024_150 = arith.constant 1024 : index
    %c0_151 = arith.constant 0 : index
    %142 = vector.load %arg9[%c1024_150, %c0_151] : memref<1152x128xbf16, #tpu.memory_space<vmem>>, vector<128x128xbf16>
    %cst_152 = arith.constant dense<0.000000e+00> : vector<288x128xf32>
    %143 = tpu.matmul %141, %142, %cst_152 {dimension_numbers = #tpu.dot_dimension_numbers<[1], [0], [0], [1], [0, 0, 1, 1], [], []>} : vector<288x128xbf16>, vector<128x128xbf16>, vector<288x128xf32> -> vector<288x128xf32>
    %144 = arith.addf %140, %143 : vector<288x128xf32>
    %c0_153 = arith.constant 0 : index
    %c0_154 = arith.constant 0 : index
    %145 = vector.load %arg10[%c0_153, %c0_154] : memref<1x128xf32, #tpu.memory_space<vmem>>, vector<1x128xf32>
    %146 = vector.broadcast %145 : vector<1x128xf32> to vector<288x128xf32>
    %147 = arith.addf %144, %146 : vector<288x128xf32>
    %148 = vector.broadcast %8 : vector<288x1xf32> to vector<288x128xf32>
    %149 = arith.mulf %147, %148 : vector<288x128xf32>
    %c0_155 = arith.constant 0 : index
    %c0_156 = arith.constant 0 : index
    %c0_157 = arith.constant 0 : index
    %150 = vector.load %arg11[%c0_155, %c0_156, %c0_157] : memref<1x288x128xf32, #tpu.memory_space<vmem>>, vector<1x288x128xf32>
    %151 = vector.shape_cast %150 : vector<1x288x128xf32> to vector<288x128xf32>
    %152 = vector.shape_cast %149 : vector<288x128xf32> to vector<1x288x128xf32>
    tpu.vector_store %arg11[%c0_155, %c0_156, %c0_157], %152 {strides = array<i32>} : memref<1x288x128xf32, #tpu.memory_space<vmem>>, vector<1x288x128xf32>,
    return
  }
  func.func @transform_0(%arg0: i32) -> (i32, i32) {
    %c0_i32 = arith.constant 0 : i32
    %c0_i32_0 = arith.constant 0 : i32
    %c0_i32_1 = arith.constant 0 : i32
    return %c0_i32, %c0_i32_0 : i32, i32
  }
  func.func @transform_1(%arg0: i32) -> (i32, i32, i32) {
    %c0_i32 = arith.constant 0 : i32
    %c0_i32_0 = arith.constant 0 : i32
    %c0_i32_1 = arith.constant 0 : i32
    return %arg0, %c0_i32, %c0_i32_0 : i32, i32, i32
  }
  func.func @transform_2(%arg0: i32) -> (i32, i32) {
    %c0_i32 = arith.constant 0 : i32
    %c0_i32_0 = arith.constant 0 : i32
    %c0_i32_1 = arith.constant 0 : i32
    return %c0_i32, %c0_i32_0 : i32, i32
  }
  func.func @transform_3(%arg0: i32) -> (i32, i32) {
    %c0_i32 = arith.constant 0 : i32
    %c0_i32_0 = arith.constant 0 : i32
    %c0_i32_1 = arith.constant 0 : i32
    return %c0_i32, %c0_i32_0 : i32, i32
  }
  func.func @transform_4(%arg0: i32) -> (i32, i32) {
    %c0_i32 = arith.constant 0 : i32
    %c0_i32_0 = arith.constant 0 : i32
    %c0_i32_1 = arith.constant 0 : i32
    return %c0_i32, %c0_i32_0 : i32, i32
  }
  func.func @transform_5(%arg0: i32) -> (i32, i32) {
    %c0_i32 = arith.constant 0 : i32
    %c0_i32_0 = arith.constant 0 : i32
    %c0_i32_1 = arith.constant 0 : i32
    return %c0_i32, %c0_i32_0 : i32, i32
  }
  func.func @transform_6(%arg0: i32) -> (i32, i32) {
    %c0_i32 = arith.constant 0 : i32
    %c0_i32_0 = arith.constant 0 : i32
    %c0_i32_1 = arith.constant 0 : i32
    return %c0_i32, %c0_i32_0 : i32, i32
  }
  func.func @transform_7(%arg0: i32) -> (i32, i32) {
    %c0_i32 = arith.constant 0 : i32
    %c0_i32_0 = arith.constant 0 : i32
    %c0_i32_1 = arith.constant 0 : i32
    return %c0_i32, %c0_i32_0 : i32, i32
  }
  func.func @transform_8(%arg0: i32) -> (i32, i32) {
    %c0_i32 = arith.constant 0 : i32
    %c0_i32_0 = arith.constant 0 : i32
    %c0_i32_1 = arith.constant 0 : i32
    return %c0_i32, %c0_i32_0 : i32, i32
  }
  func.func @transform_9(%arg0: i32) -> (i32, i32) {
    %c0_i32 = arith.constant 0 : i32
    %c0_i32_0 = arith.constant 0 : i32
    %c0_i32_1 = arith.constant 0 : i32
    return %c0_i32, %c0_i32_0 : i32, i32
  }
  func.func @transform_10(%arg0: i32) -> (i32, i32, i32) {
    %c0_i32 = arith.constant 0 : i32
    %c0_i32_0 = arith.constant 0 : i32
    %c0_i32_1 = arith.constant 0 : i32
    return %arg0, %c0_i32, %c0_i32_0 : i32, i32, i32
  }
}

</mosaic_0001>

<llo_original>
// kernel: sr_forward.1
$region0: #{sr_forward.1}
  #allocation0 [shape = 'u32[]', space=smem, size = 0x4, offset = 0x4, fixed_abs, tag = 'smem constant byte address 0x4 - core index']
  #allocation1 [shape = 'u32[144,128]{1,0:T(1,128)}', space=vmem, size = 0x12000, scoped, tag = 'internal scratch']
  #allocation2 [shape = 'bf16[336,128]{1,0:T(16,128)(2,1)}', space=vmem, size = 0x15000, scoped, tag = 'scratch operand']
  #allocation3 [shape = 'bf16[336,128]{1,0:T(16,128)(2,1)}', space=vmem, size = 0x15000, scoped, tag = 'scratch operand']
  #allocation4 [shape = 'bf16[336,128]{1,0:T(16,128)(2,1)}', space=vmem, size = 0x15000, scoped, tag = 'scratch operand']
  %s0 = inlined_call_operand.vmem [shape: f32[288,1], index: 0, kind: input, shape index: {}]
  %s1 = inlined_call_operand.vmem [shape: bf16[2,288,32], index: 1, kind: input, shape index: {}]
  %s2 = inlined_call_operand.vmem [shape: bf16[32,128], index: 2, kind: input, shape index: {}]
  %s3 = inlined_call_operand.vmem [shape: f32[1,128], index: 3, kind: input, shape index: {}]
  %s4 = inlined_call_operand.vmem [shape: bf16[1152,128], index: 4, kind: input, shape index: {}]
  %s5 = inlined_call_operand.vmem [shape: f32[1,128], index: 5, kind: input, shape index: {}]
  %s6 = inlined_call_operand.vmem [shape: bf16[1152,128], index: 6, kind: input, shape index: {}]
  %s7 = inlined_call_operand.vmem [shape: f32[1,128], index: 7, kind: input, shape index: {}]
  %s8 = inlined_call_operand.vmem [shape: bf16[1152,128], index: 8, kind: input, shape index: {}]
  %s9 = inlined_call_operand.vmem [shape: f32[1,128], index: 9, kind: input, shape index: {}]
  %s10 = inlined_call_operand.vmem [shape: f32[2,288,128], index: 10, kind: output, shape index: {}]
  %s11 = sld [smem:[#allocation0]]
  $region73: #{sr_forward.1} parent=0
    _
  %s13 = ssub.s32 1, %s11
  %s14 = scalar_select 0, %s13, %s11
  loop: start=0, step=1, limit=4
  $region2: #{sr_forward.1} parent=0 // loop_pre_header
    _
  $region3: #{sr_forward.1} parent=0 // loop_header
    %s16 = sphi 0, %s20
    %p17 = scmp.ge.s32.totalorder %s16, 4
    %s24 = sphi 0, %s24
    %s26 = sphi 0, %s24
    %s27 = sphi 0, %s26
    %s41 = sphi 0, %s27
    %s47 = sphi 0, %s49
    %s50 = sphi 0, %s47
    %s51 = sphi 0, %s50
    %s67 = sphi 0, %s51
    %s71 = sphi 0, %s71
    %s73 = sphi 0, %s71
    %s74 = sphi 0, %s73
    %s88 = sphi 0, %s74
    %s92 = sphi 0, %s92
    %s94 = sphi 0, %s92
    %s95 = sphi 0, %s94
    %s109 = sphi 0, %s95
    %s113 = sphi 0, %s113
    %s115 = sphi 0, %s113
    %s116 = sphi 0, %s115
    %s130 = sphi 0, %s116
    %s134 = sphi 0, %s134
    %s136 = sphi 0, %s134
    %s137 = sphi 0, %s136
    %s151 = sphi 0, %s137
    %s155 = sphi 0, %s155
    %s157 = sphi 0, %s155
    %s158 = sphi 0, %s157
    %s172 = sphi 0, %s158
    %s176 = sphi 0, %s176
    %s178 = sphi 0, %s176
    %s179 = sphi 0, %s178
    %s193 = sphi 0, %s179
    %s197 = sphi 0, %s197
    %s199 = sphi 0, %s197
    %s200 = sphi 0, %s199
    %s214 = sphi 0, %s200
    %s218 = sphi 0, %s218
    %s220 = sphi 0, %s218
    %s221 = sphi 0, %s220
    %s235 = sphi 0, %s221
    %s241 = sphi 0, %s243
    %s244 = sphi 0, %s241
    %s245 = sphi 0, %s244
    %s261 = sphi 0, %s245
  $region4: #{sr_forward.1} parent=0 // loop_header_branch
    %19 = sbr.rel (%p17) target = $region8
  $region5: #{sr_forward.1} parent=0 // loop_body
    %s21 = ssub.s32 %s16, 1
    %s22 = ssub.s32 %s16, 2
    %s23 = sadd.s32 %s16, 1
    %s25 = sadd.s32 %s24, 1
    %p28 = scmp.eq.s32.totalorder %s16, 1
    %p29 = scmp.ne.s32.totalorder %s24, %s26
    %p30 = scmp.eq.s32.totalorder %s16, 0
    %p31 = por %p29, %p30
    %p32 = scmp.ne.s32.totalorder %s24, %s26
    %p33 = scmp.eq.s32.totalorder %s21, 1
    %p34 = por %p32, %p33
    %p35 = scmp.ne.s32.totalorder %s26, %s27
    %p36 = scmp.eq.s32.totalorder %s21, 0
    %p37 = por %p35, %p36
    %p38 = scmp.ne.s32.totalorder %s26, %s27
    %p39 = scmp.eq.s32.totalorder %s22, 1
    %p40 = por %p38, %p39
    %p42 = scmp.ne.s32.totalorder %s27, %s41
    %p43 = scmp.eq.s32.totalorder %s22, 0
    %p44 = por %p42, %p43
    %s45 = ssub.s32 %s16, %s23
    %p46 = scmp.eq.s32.totalorder %s45, 0
    %s48 = sadd.s32 %s47, 1
    %s49 = scalar_select %p46, %s47, %s48
    %p52 = pneg %p46
    %p53 = scmp.eq.s32.totalorder %s16, 1
    %p54 = por %p52, %p53
    %p55 = scmp.ne.s32.totalorder %s47, %s50
    %p56 = scmp.eq.s32.totalorder %s16, 0
    %p57 = por %p55, %p56
    %p58 = scmp.ne.s32.totalorder %s47, %s50
    %p59 = scmp.eq.s32.totalorder %s21, 1
    %p60 = por %p58, %p59
    %p61 = scmp.ne.s32.totalorder %s50, %s51
    %p62 = scmp.eq.s32.totalorder %s21, 0
    %p63 = por %p61, %p62
    %p64 = scmp.ne.s32.totalorder %s50, %s51
    %p65 = scmp.eq.s32.totalorder %s22, 1
    %p66 = por %p64, %p65
    %p68 = scmp.ne.s32.totalorder %s51, %s67
    %p69 = scmp.eq.s32.totalorder %s22, 0
    %p70 = por %p68, %p69
    %s72 = sadd.s32 %s71, 1
    %p75 = scmp.eq.s32.totalorder %s16, 1
    %p76 = scmp.ne.s32.totalorder %s71, %s73
    %p77 = scmp.eq.s32.totalorder %s16, 0
    %p78 = por %p76, %p77
    %p79 = scmp.ne.s32.totalorder %s71, %s73
    %p80 = scmp.eq.s32.totalorder %s21, 1
    %p81 = por %p79, %p80
    %p82 = scmp.ne.s32.totalorder %s73, %s74
    %p83 = scmp.eq.s32.totalorder %s21, 0
    %p84 = por %p82, %p83
    %p85 = scmp.ne.s32.totalorder %s73, %s74
    %p86 = scmp.eq.s32.totalorder %s22, 1
    %p87 = por %p85, %p86
    %p89 = scmp.ne.s32.totalorder %s74, %s88
    %p90 = scmp.eq.s32.totalorder %s22, 0
    %p91 = por %p89, %p90
    %s93 = sadd.s32 %s92, 1
    %p96 = scmp.eq.s32.totalorder %s16, 1
    %p97 = scmp.ne.s32.totalorder %s92, %s94
    %p98 = scmp.eq.s32.totalorder %s16, 0
    %p99 = por %p97, %p98
    %p100 = scmp.ne.s32.totalorder %s92, %s94
    %p101 = scmp.eq.s32.totalorder %s21, 1
    %p102 = por %p100, %p101
    %p103 = scmp.ne.s32.totalorder %s94, %s95
    %p104 = scmp.eq.s32.totalorder %s21, 0
    %p105 = por %p103, %p104
    %p106 = scmp.ne.s32.totalorder %s94, %s95
    %p107 = scmp.eq.s32.totalorder %s22, 1
    %p108 = por %p106, %p107
    %p110 = scmp.ne.s32.totalorder %s95, %s109
    %p111 = scmp.eq.s32.totalorder %s22, 0
    %p112 = por %p110, %p111
    %s114 = sadd.s32 %s113, 1
    %p117 = scmp.eq.s32.totalorder %s16, 1
    %p118 = scmp.ne.s32.totalorder %s113, %s115
    %p119 = scmp.eq.s32.totalorder %s16, 0
    %p120 = por %p118, %p119
    %p121 = scmp.ne.s32.totalorder %s113, %s115
    %p122 = scmp.eq.s32.totalorder %s21, 1
    %p123 = por %p121, %p122
    %p124 = scmp.ne.s32.totalorder %s115, %s116
    %p125 = scmp.eq.s32.totalorder %s21, 0
    %p126 = por %p124, %p125
    %p127 = scmp.ne.s32.totalorder %s115, %s116
    %p128 = scmp.eq.s32.totalorder %s22, 1
    %p129 = por %p127, %p128
    %p131 = scmp.ne.s32.totalorder %s116, %s130
    %p132 = scmp.eq.s32.totalorder %s22, 0
    %p133 = por %p131, %p132
    %s135 = sadd.s32 %s134, 1
    %p138 = scmp.eq.s32.totalorder %s16, 1
    %p139 = scmp.ne.s32.totalorder %s134, %s136
    %p140 = scmp.eq.s32.totalorder %s16, 0
    %p141 = por %p139, %p140
    %p142 = scmp.ne.s32.totalorder %s134, %s136
    %p143 = scmp.eq.s32.totalorder %s21, 1
    %p144 = por %p142, %p143
    %p145 = scmp.ne.s32.totalorder %s136, %s137
    %p146 = scmp.eq.s32.totalorder %s21, 0
    %p147 = por %p145, %p146
    %p148 = scmp.ne.s32.totalorder %s136, %s137
    %p149 = scmp.eq.s32.totalorder %s22, 1
    %p150 = por %p148, %p149
    %p152 = scmp.ne.s32.totalorder %s137, %s151
    %p153 = scmp.eq.s32.totalorder %s22, 0
    %p154 = por %p152, %p153
    %s156 = sadd.s32 %s155, 1
    %p159 = scmp.eq.s32.totalorder %s16, 1
    %p160 = scmp.ne.s32.totalorder %s155, %s157
    %p161 = scmp.eq.s32.totalorder %s16, 0
    %p162 = por %p160, %p161
    %p163 = scmp.ne.s32.totalorder %s155, %s157
    %p164 = scmp.eq.s32.totalorder %s21, 1
    %p165 = por %p163, %p164
    %p166 = scmp.ne.s32.totalorder %s157, %s158
    %p167 = scmp.eq.s32.totalorder %s21, 0
    %p168 = por %p166, %p167
    %p169 = scmp.ne.s32.totalorder %s157, %s158
    %p170 = scmp.eq.s32.totalorder %s22, 1
    %p171 = por %p169, %p170
    %p173 = scmp.ne.s32.totalorder %s158, %s172
    %p174 = scmp.eq.s32.totalorder %s22, 0
    %p175 = por %p173, %p174
    %s177 = sadd.s32 %s176, 1
    %p180 = scmp.eq.s32.totalorder %s16, 1
    %p181 = scmp.ne.s32.totalorder %s176, %s178
    %p182 = scmp.eq.s32.totalorder %s16, 0
    %p183 = por %p181, %p182
    %p184 = scmp.ne.s32.totalorder %s176, %s178
    %p185 = scmp.eq.s32.totalorder %s21, 1
    %p186 = por %p184, %p185
    %p187 = scmp.ne.s32.totalorder %s178, %s179
    %p188 = scmp.eq.s32.totalorder %s21, 0
    %p189 = por %p187, %p188
    %p190 = scmp.ne.s32.totalorder %s178, %s179
    %p191 = scmp.eq.s32.totalorder %s22, 1
    %p192 = por %p190, %p191
    %p194 = scmp.ne.s32.totalorder %s179, %s193
    %p195 = scmp.eq.s32.totalorder %s22, 0
    %p196 = por %p194, %p195
    %s198 = sadd.s32 %s197, 1
    %p201 = scmp.eq.s32.totalorder %s16, 1
    %p202 = scmp.ne.s32.totalorder %s197, %s199
    %p203 = scmp.eq.s32.totalorder %s16, 0
    %p204 = por %p202, %p203
    %p205 = scmp.ne.s32.totalorder %s197, %s199
    %p206 = scmp.eq.s32.totalorder %s21, 1
    %p207 = por %p205, %p206
    %p208 = scmp.ne.s32.totalorder %s199, %s200
    %p209 = scmp.eq.s32.totalorder %s21, 0
    %p210 = por %p208, %p209
    %p211 = scmp.ne.s32.totalorder %s199, %s200
    %p212 = scmp.eq.s32.totalorder %s22, 1
    %p213 = por %p211, %p212
    %p215 = scmp.ne.s32.totalorder %s200, %s214
    %p216 = scmp.eq.s32.totalorder %s22, 0
    %p217 = por %p215, %p216
    %s219 = sadd.s32 %s218, 1
    %p222 = scmp.eq.s32.totalorder %s16, 1
    %p223 = scmp.ne.s32.totalorder %s218, %s220
    %p224 = scmp.eq.s32.totalorder %s16, 0
    %p225 = por %p223, %p224
    %p226 = scmp.ne.s32.totalorder %s218, %s220
    %p227 = scmp.eq.s32.totalorder %s21, 1
    %p228 = por %p226, %p227
    %p229 = scmp.ne.s32.totalorder %s220, %s221
    %p230 = scmp.eq.s32.totalorder %s21, 0
    %p231 = por %p229, %p230
    %p232 = scmp.ne.s32.totalorder %s220, %s221
    %p233 = scmp.eq.s32.totalorder %s22, 1
    %p234 = por %p232, %p233
    %p236 = scmp.ne.s32.totalorder %s221, %s235
    %p237 = scmp.eq.s32.totalorder %s22, 0
    %p238 = por %p236, %p237
    %s239 = ssub.s32 %s16, %s23
    %p240 = scmp.eq.s32.totalorder %s239, 0
    %s242 = sadd.s32 %s241, 1
    %s243 = scalar_select %p240, %s241, %s242
    %p246 = pneg %p240
    %p247 = scmp.eq.s32.totalorder %s16, 1
    %p248 = por %p246, %p247
    %p249 = scmp.ne.s32.totalorder %s241, %s244
    %p250 = scmp.eq.s32.totalorder %s16, 0
    %p251 = por %p249, %p250
    %p252 = scmp.ne.s32.totalorder %s241, %s244
    %p253 = scmp.eq.s32.totalorder %s21, 1
    %p254 = por %p252, %p253
    %p255 = scmp.ne.s32.totalorder %s244, %s245
    %p256 = scmp.eq.s32.totalorder %s21, 0
    %p257 = por %p255, %p256
    %p258 = scmp.ne.s32.totalorder %s244, %s245
    %p259 = scmp.eq.s32.totalorder %s22, 1
    %p260 = por %p258, %p259
    %p262 = scmp.ne.s32.totalorder %s245, %s261
    %p263 = scmp.eq.s32.totalorder %s22, 0
    %p264 = por %p262, %p263
    %p265 = scmp.le.s32.totalorder 1, %s16
    %p266 = scmp.lt.s32.totalorder %s16, 3
    %p267 = pnand %p265, %p266
    %p268 = pneg %p267
    // Predicated region
    $region9: #{sr_forward.1} parent=5 // pred_check
      _
    $region10: #{sr_forward.1} parent=5 // pred_check_branch
      %270 = sbr.rel (%p267) target = $region12
    $region11: #{sr_forward.1} parent=5 // pred_region
      %s271 = ssub.s32 %s16, 1
      // Predicated region
      $region13: #{sr_forward.1} parent=11 // pred_check
        %p272 = pneg %p37
      $region14: #{sr_forward.1} parent=11 // pred_check_branch
        %274 = sbr.rel (%p272) target = $region16
      $region15: #{sr_forward.1} parent=11 // pred_region
        _
      $region16: #{sr_forward.1} parent=11 // pred_fallthru
        _
      // Predicated region
      $region17: #{sr_forward.1} parent=11 // pred_check
        %p275 = pneg %p84
      $region18: #{sr_forward.1} parent=11 // pred_check_branch
        %277 = sbr.rel (%p275) target = $region20
      $region19: #{sr_forward.1} parent=11 // pred_region
        _
      $region20: #{sr_forward.1} parent=11 // pred_fallthru
        _
      // Predicated region
      $region21: #{sr_forward.1} parent=11 // pred_check
        %p278 = pneg %p105
      $region22: #{sr_forward.1} parent=11 // pred_check_branch
        %280 = sbr.rel (%p278) target = $region24
      $region23: #{sr_forward.1} parent=11 // pred_region
        _
      $region24: #{sr_forward.1} parent=11 // pred_fallthru
        _
      // Predicated region
      $region25: #{sr_forward.1} parent=11 // pred_check
        %p281 = pneg %p126
      $region26: #{sr_forward.1} parent=11 // pred_check_branch
        %283 = sbr.rel (%p281) target = $region28
      $region27: #{sr_forward.1} parent=11 // pred_region
        _
      $region28: #{sr_forward.1} parent=11 // pred_fallthru
        _
      // Predicated region
      $region29: #{sr_forward.1} parent=11 // pred_check
        %p284 = pneg %p147
      $region30: #{sr_forward.1} parent=11 // pred_check_branch
        %286 = sbr.rel (%p284) target = $region32
      $region31: #{sr_forward.1} parent=11 // pred_region
        _
      $region32: #{sr_forward.1} parent=11 // pred_fallthru
        _
      // Predicated region
      $region33: #{sr_forward.1} parent=11 // pred_check
        %p287 = pneg %p168
      $region34: #{sr_forward.1} parent=11 // pred_check_branch
        %289 = sbr.rel (%p287) target = $region36
      $region35: #{sr_forward.1} parent=11 // pred_region
        _
      $region36: #{sr_forward.1} parent=11 // pred_fallthru
        _
      // Predicated region
      $region37: #{sr_forward.1} parent=11 // pred_check
        %p290 = pneg %p189
      $region38: #{sr_forward.1} parent=11 // pred_check_branch
        %292 = sbr.rel (%p290) target = $region40
      $region39: #{sr_forward.1} parent=11 // pred_region
        _
      $region40: #{sr_forward.1} parent=11 // pred_fallthru
        _
      // Predicated region
      $region41: #{sr_forward.1} parent=11 // pred_check
        %p293 = pneg %p210
      $region42: #{sr_forward.1} parent=11 // pred_check_branch
        %295 = sbr.rel (%p293) target = $region44
      $region43: #{sr_forward.1} parent=11 // pred_region
        _
      $region44: #{sr_forward.1} parent=11 // pred_fallthru
        _
      // Predicated region
      $region45: #{sr_forward.1} parent=11 // pred_check
        %p296 = pneg %p231
      $region46: #{sr_forward.1} parent=11 // pred_check_branch
        %298 = sbr.rel (%p296) target = $region48
      $region47: #{sr_forward.1} parent=11 // pred_region
        _
      $region48: #{sr_forward.1} parent=11 // pred_fallthru
        _
    $region12: #{sr_forward.1} parent=5 // pred_fallthru
      _
    %p299 = scmp.lt.s32.totalorder %s16, 2
    // Predicated region
    $region49: #{sr_forward.1} parent=5 // pred_check
      %p300 = pneg %p299
    $region50: #{sr_forward.1} parent=5 // pred_check_branch
      %302 = sbr.rel (%p300) target = $region52
    $region51: #{sr_forward.1} parent=5 // pred_region
      // Predicated region
      $region53: #{sr_forward.1} parent=51 // pred_check
        %p303 = pneg %p57
      $region54: #{sr_forward.1} parent=51 // pred_check_branch
        %305 = sbr.rel (%p303) target = $region56
      $region55: #{sr_forward.1} parent=51 // pred_region
        %p306 = scmp.lt.s32.totalorder %s16, 1
        %s307 = scalar_select %p306, %s16, 1
        %s308 = smul.addr %s307, 36
        %s309 = smul.addr %s308, 4
        %s310 = scalar_lea.vmem %s1, %s309
      $region56: #{sr_forward.1} parent=51 // pred_fallthru
        _
    $region52: #{sr_forward.1} parent=5 // pred_fallthru
      _
    %p311 = scmp.le.s32.totalorder 1, %s16
    %p312 = scmp.lt.s32.totalorder %s16, 3
    %p313 = pnand %p311, %p312
    %p314 = pneg %p313
    // Predicated region
    $region57: #{sr_forward.1} parent=5 // pred_check
      _
    $region58: #{sr_forward.1} parent=5 // pred_check_branch
      %316 = sbr.rel (%p313) target = $region60
    $region59: #{sr_forward.1} parent=5 // pred_region
      %s317 = ssub.s32 %s16, 1
      %p318 = pneg %p37
      %p319 = pneg %p34
      %p320 = scmp.lt.s32.totalorder %s21, 1
      %s321 = scalar_select %p320, %s21, 1
      %s322 = smul.addr %s321, 36
      %s323 = smul.addr %s322, 4
      %s324 = scalar_lea.vmem %s1, %s323
      %p325 = pneg %p63
      %p326 = pneg %p60
      %p327 = pneg %p84
      %p328 = pneg %p81
      %p329 = pneg %p105
      %p330 = pneg %p102
      %p331 = pneg %p126
      %p332 = pneg %p123
      %p333 = pneg %p147
      %p334 = pneg %p144
      %p335 = pneg %p168
      %p336 = pneg %p165
      %p337 = pneg %p189
      %p338 = pneg %p186
      %p339 = pneg %p210
      %p340 = pneg %p207
      %p341 = pneg %p231
      %p342 = pneg %p228
      %p343 = pneg %p257
      %p344 = pneg %p254
      %p345 = scmp.lt.s32.totalorder %s21, 1
      %s346 = scalar_select %p345, %s21, 1
      %s347 = smul.addr %s346, 36
      %s348 = smul.addr %s347, 8
      %s349 = scalar_lea.vmem %s10, %s348
      %p350 = scmp.lt.s32.totalorder %s21, 1
      %s351 = scalar_select %p350, %s21, 1
      %s352 = smul.addr %s351, 36
      %s353 = smul.addr %s352, 4
      %s354 = scalar_lea.vmem %s1, %s353
      %p355 = scmp.lt.s32.totalorder %s21, 1
      %s356 = scalar_select %p355, %s21, 1
      %s357 = smul.addr %s356, 36
      %s358 = smul.addr %s357, 8
      %s359 = scalar_lea.vmem %s10, %s358
      %361 = vst [vmem:[#allocation2] sm:$0xff] 0
      %vm362 = vcmask 1041408
      %vm363 = vsmask.f32 1280
      %vm364 = vmand %vm362, %vm363
      %v365 = vld [vmem:[#allocation2 + $0x8] sm:$0x3]
      %v366 = vsel %vm364, 0, %v365
      %367 = vst [vmem:[#allocation2 + $0x8] sm:$0x3] %v366
      %vm368 = vcmask 1047553
      %vm369 = vsmask.f32 7942
      %vm370 = vmand %vm368, %vm369
      %v371 = vld [vmem:[#allocation2 + $0x98] sm:$0xfe]
      %v372 = vsel %vm370, 0, %v371
      %373 = vst [vmem:[#allocation2 + $0x98] sm:$0xfe] %v372
      %374 = vst [vmem:[#allocation2 + $0xa0] sm:$0xff] 0
      %375 = vst [vmem:[#allocation3] sm:$0xff] 0
      %v376 = vld [vmem:[#allocation3 + $0x8] sm:$0x3]
      %v377 = vsel %vm364, 0, %v376
      %378 = vst [vmem:[#allocation3 + $0x8] sm:$0x3] %v377
      %v379 = vld [vmem:[#allocation3 + $0x98] sm:$0xfe]
      %v380 = vsel %vm370, 0, %v379
      %381 = vst [vmem:[#allocation3 + $0x98] sm:$0xfe] %v380
      %382 = vst [vmem:[#allocation3 + $0xa0] sm:$0xff] 0
      %383 = vst [vmem:[#allocation4] sm:$0xff] 0
      %v384 = vld [vmem:[#allocation4 + $0x8] sm:$0x3]
      %v385 = vsel %vm364, 0, %v384
      %386 = vst [vmem:[#allocation4 + $0x8] sm:$0x3] %v385
      %v387 = vld [vmem:[#allocation4 + $0x98] sm:$0xfe]
      %v388 = vsel %vm370, 0, %v387
      %389 = vst [vmem:[#allocation4 + $0x98] sm:$0xfe] %v388
      %390 = vst [vmem:[#allocation4 + $0xa0] sm:$0xff] 0
      %v391 = vld [vmem:[%s0] sm:$0xff]
      %v392 = vld [vmem:[%s0 + $0x8] sm:$0xff]
      %v393 = vld [vmem:[%s0 + $0x10] sm:$0xff]
      %v394 = vld [vmem:[%s0 + $0x18] sm:$0xff]
      %v395 = vld [vmem:[%s0 + $0x20] sm:$0xff]
      %v396 = vld [vmem:[%s0 + $0x28] sm:$0xff]
      %v397 = vld [vmem:[%s0 + $0x30] sm:$0xff]
      %v398 = vld [vmem:[%s0 + $0x38] sm:$0xff]
      %v399 = vld [vmem:[%s0 + $0x40] sm:$0xff]
      %v400 = vld [vmem:[%s0 + $0x48] sm:$0xff]
      %v401 = vld [vmem:[%s0 + $0x50] sm:$0xff]
      %v402 = vld [vmem:[%s0 + $0x58] sm:$0xff]
      %v403 = vld [vmem:[%s0 + $0x60] sm:$0xff]
      %v404 = vld [vmem:[%s0 + $0x68] sm:$0xff]
      %v405 = vld [vmem:[%s0 + $0x70] sm:$0xff]
      %v406 = vld [vmem:[%s0 + $0x78] sm:$0xff]
      %v407 = vld [vmem:[%s0 + $0x80] sm:$0xff]
      %v408 = vld [vmem:[%s0 + $0x88] sm:$0xff]
      %v409 = vld [vmem:[%s0 + $0x90] sm:$0xff]
      %v410 = vld [vmem:[%s0 + $0x98] sm:$0xff]
      %v411 = vld [vmem:[%s0 + $0xa0] sm:$0xff]
      %v412 = vld [vmem:[%s0 + $0xa8] sm:$0xff]
      %v413 = vld [vmem:[%s0 + $0xb0] sm:$0xff]
      %v414 = vld [vmem:[%s0 + $0xb8] sm:$0xff]
      %v415 = vld [vmem:[%s0 + $0xc0] sm:$0xff]
      %v416 = vld [vmem:[%s0 + $0xc8] sm:$0xff]
      %v417 = vld [vmem:[%s0 + $0xd0] sm:$0xff]
      %v418 = vld [vmem:[%s0 + $0xd8] sm:$0xff]
      %v419 = vld [vmem:[%s0 + $0xe0] sm:$0xff]
      %v420 = vld [vmem:[%s0 + $0xe8] sm:$0xff]
      %v421 = vld [vmem:[%s0 + $0xf0] sm:$0xff]
      %v422 = vld [vmem:[%s0 + $0xf8] sm:$0xff]
      %v423 = vld [vmem:[%s0 + $0x100] sm:$0xff]
      %v424 = vld [vmem:[%s0 + $0x108] sm:$0xff]
      %v425 = vld [vmem:[%s0 + $0x110] sm:$0xff]
      %v426 = vld [vmem:[%s0 + $0x118] sm:$0xff]
      %v427 = vld [vmem:[%s354] sm:$0xf]
      %v428 = vld [vmem:[%s354 + $0x4] sm:$0xf]
      %v429 = vld [vmem:[%s354 + $0x8] sm:$0xf]
      %v430 = vld [vmem:[%s354 + $0xc] sm:$0xf]
      %v431 = vld [vmem:[%s354 + $0x10] sm:$0xf]
      %v432 = vld [vmem:[%s354 + $0x14] sm:$0xf]
      %v433 = vld [vmem:[%s354 + $0x18] sm:$0xf]
      %v434 = vld [vmem:[%s354 + $0x1c] sm:$0xf]
      %v435 = vld [vmem:[%s354 + $0x20] sm:$0xf]
      %v436 = vld [vmem:[%s354 + $0x24] sm:$0xf]
      %v437 = vld [vmem:[%s354 + $0x28] sm:$0xf]
      %v438 = vld [vmem:[%s354 + $0x2c] sm:$0xf]
      %v439 = vld [vmem:[%s354 + $0x30] sm:$0xf]
      %v440 = vld [vmem:[%s354 + $0x34] sm:$0xf]
      %v441 = vld [vmem:[%s354 + $0x38] sm:$0xf]
      %v442 = vld [vmem:[%s354 + $0x3c] sm:$0xf]
      %v443 = vld [vmem:[%s354 + $0x40] sm:$0xf]
      %v444 = vld [vmem:[%s354 + $0x44] sm:$0xf]
      %v445 = vld [vmem:[%s354 + $0x48] sm:$0xf]
      %v446 = vld [vmem:[%s354 + $0x4c] sm:$0xf]
      %v447 = vld [vmem:[%s354 + $0x50] sm:$0xf]
      %v448 = vld [vmem:[%s354 + $0x54] sm:$0xf]
      %v449 = vld [vmem:[%s354 + $0x58] sm:$0xf]
      %v450 = vld [vmem:[%s354 + $0x5c] sm:$0xf]
      %v451 = vld [vmem:[%s354 + $0x60] sm:$0xf]
      %v452 = vld [vmem:[%s354 + $0x64] sm:$0xf]
      %v453 = vld [vmem:[%s354 + $0x68] sm:$0xf]
      %v454 = vld [vmem:[%s354 + $0x6c] sm:$0xf]
      %v455 = vld [vmem:[%s354 + $0x70] sm:$0xf]
      %v456 = vld [vmem:[%s354 + $0x74] sm:$0xf]
      %v457 = vld [vmem:[%s354 + $0x78] sm:$0xf]
      %v458 = vld [vmem:[%s354 + $0x7c] sm:$0xf]
      %v459 = vld [vmem:[%s354 + $0x80] sm:$0xf]
      %v460 = vld [vmem:[%s354 + $0x84] sm:$0xf]
      %v461 = vld [vmem:[%s354 + $0x88] sm:$0xf]
      %v462 = vld [vmem:[%s354 + $0x8c] sm:$0xf]
      %v463 = vld [vmem:[%s2] sm:$0xf]
      %v464 = vld [vmem:[%s2 + $0x4] sm:$0xf]
      %v465 = vld [vmem:[%s2 + $0x8] sm:$0xf]
      %v466 = vld [vmem:[%s2 + $0xc] sm:$0xf]
      %v467 = vld [vmem:[%s3] sm:$0x1]
      %v469 = vlaneseq
      %v470 = vshrl.u32 %v469, 7
      %v471 = vsub.s32 0, %v470
      %v472 = vrot.slane %v467, %v471
      %v510 = vunpack.c.l.b16 %v427
      %v511 = vunpack.c.l.b16 %v428
      %v512 = vunpack.c.l.b16 %v429
      %v513 = vunpack.c.l.b16 %v430
      %v514 = vunpack.c.l.b16 %v431
      %v515 = vunpack.c.l.b16 %v432
      %v516 = vunpack.c.l.b16 %v433
      %v517 = vunpack.c.l.b16 %v434
      %v518 = vunpack.c.l.b16 %v435
      %v519 = vunpack.c.l.b16 %v436
      %v520 = vunpack.c.l.b16 %v437
      %v521 = vunpack.c.l.b16 %v438
      %v522 = vunpack.c.l.b16 %v439
      %v523 = vunpack.c.l.b16 %v440
      %v524 = vunpack.c.l.b16 %v441
      %v525 = vunpack.c.l.b16 %v442
      %v526 = vunpack.c.l.b16 %v443
      %v527 = vunpack.c.l.b16 %v444
      %v528 = vunpack.c.l.b16 %v445
      %v529 = vunpack.c.l.b16 %v446
      %v530 = vunpack.c.l.b16 %v447
      %v531 = vunpack.c.l.b16 %v448
      %v532 = vunpack.c.l.b16 %v449
      %v533 = vunpack.c.l.b16 %v450
      %v534 = vunpack.c.l.b16 %v451
      %v535 = vunpack.c.l.b16 %v452
      %v536 = vunpack.c.l.b16 %v453
      %v537 = vunpack.c.l.b16 %v454
      %v538 = vunpack.c.l.b16 %v455
      %v539 = vunpack.c.l.b16 %v456
      %v540 = vunpack.c.l.b16 %v457
      %v541 = vunpack.c.l.b16 %v458
      %v542 = vunpack.c.l.b16 %v459
      %v543 = vunpack.c.l.b16 %v460
      %v544 = vunpack.c.l.b16 %v461
      %v545 = vunpack.c.l.b16 %v462
      %v546 = vpack.c.b16 %v511, %v510
      %v547 = vpack.c.b16 %v513, %v512
      %v548 = vpack.c.b16 %v515, %v514
      %v549 = vpack.c.b16 %v517, %v516
      %v550 = vpack.c.b16 %v519, %v518
      %v551 = vpack.c.b16 %v521, %v520
      %v552 = vpack.c.b16 %v523, %v522
      %v553 = vpack.c.b16 %v525, %v524
      %v554 = vpack.c.b16 %v527, %v526
      %v555 = vpack.c.b16 %v529, %v528
      %v556 = vpack.c.b16 %v531, %v530
      %v557 = vpack.c.b16 %v533, %v532
      %v558 = vpack.c.b16 %v535, %v534
      %v559 = vpack.c.b16 %v537, %v536
      %v560 = vpack.c.b16 %v539, %v538
      %v561 = vpack.c.b16 %v541, %v540
      %v562 = vpack.c.b16 %v543, %v542
      %v563 = vpack.c.b16 %v545, %v544
      %v568 = vunpack.c.l.b16 %v463
      %v569 = vunpack.c.l.b16 %v464
      %v570 = vunpack.c.l.b16 %v465
      %v571 = vunpack.c.l.b16 %v466
      %v572 = vpack.c.b16 %v569, %v568
      %v573 = vpack.c.b16 %v571, %v570
      %vm576 = vcmask 261120
      %v578 = vsel %vm576, %v546, 0
      %v581 = vsel %vm576, %v547, 0
      %v584 = vsel %vm576, %v548, 0
      %v587 = vsel %vm576, %v549, 0
      %v590 = vsel %vm576, %v550, 0
      %v593 = vsel %vm576, %v551, 0
      %v596 = vsel %vm576, %v552, 0
      %v599 = vsel %vm576, %v553, 0
      %v602 = vsel %vm576, %v554, 0
      %v605 = vsel %vm576, %v555, 0
      %v608 = vsel %vm576, %v556, 0
      %v611 = vsel %vm576, %v557, 0
      %v614 = vsel %vm576, %v558, 0
      %v617 = vsel %vm576, %v559, 0
      %v620 = vsel %vm576, %v560, 0
      %v623 = vsel %vm576, %v561, 0
      %v626 = vsel %vm576, %v562, 0
      %v629 = vsel %vm576, %v563, 0
      %631 = vmatprep.subr.bf16.mxu0 0
      %632 = vmatpush1.bf16.msra.mxu0 %v572
      %633 = vmatprep.subr.bf16.mxu0 0
      %634 = vmatpush1.bf16.msra.mxu0 %v573
      %635 = vmatprep.subr.bf16.mxu0 0
      %636 = vmatpush1.bf16.msra.mxu0 0
      %637 = vmatprep.subr.bf16.mxu0 0
      %638 = vmatpush1.bf16.msra.mxu0 0
      %639 = vmatprep.subr.bf16.mxu0 0
      %640 = vmatpush1.bf16.msra.mxu0 0
      %641 = vmatprep.subr.bf16.mxu0 0
      %642 = vmatpush1.bf16.msra.mxu0 0
      %643 = vmatprep.subr.bf16.mxu0 0
      %644 = vmatpush1.bf16.msra.mxu0 0
      %645 = vmatprep.subr.bf16.mxu0 0
      %646 = vmatpush1.bf16.msra.mxu0 0
      %647 = vmatprep.subr.bf16.mxu0 0
      %648 = vmatpush1.bf16.msra.mxu0 0
      %649 = vmatprep.subr.bf16.mxu0 0
      %650 = vmatpush1.bf16.msra.mxu0 0
      %651 = vmatprep.subr.bf16.mxu0 0
      %652 = vmatpush1.bf16.msra.mxu0 0
      %653 = vmatprep.subr.bf16.mxu0 0
      %654 = vmatpush1.bf16.msra.mxu0 0
      %655 = vmatprep.subr.bf16.mxu0 0
      %656 = vmatpush1.bf16.msra.mxu0 0
      %657 = vmatprep.subr.bf16.mxu0 0
      %658 = vmatpush1.bf16.msra.mxu0 0
      %659 = vmatprep.subr.bf16.mxu0 0
      %660 = vmatpush1.bf16.msra.mxu0 0
      %661 = vmatprep.subr.bf16.mxu0 0
      %662 = vmatpush1.bf16.msra.mxu0 0
      %663 = vmatprep.mubr.bf16.mxu0 0
      %664 = vmatmul.mubr.bf16.gmra.mrb[0].mxu0 %v578
      %v665 = vpop.f32.mrb[0].mxu0
      %v666 = vadd.f32 %v472, %v665
      %v667 = vpop.f32.mrb[0].mxu0
      %v668 = vpop.f32.mrb[0].mxu0
      %v669 = vadd.f32 %v472, %v668
      %v670 = vpop.f32.mrb[0].mxu0
      %671 = vmatprep.mubr.bf16.mxu0 0
      %672 = vmatmul.mubr.bf16.gmra.mrb[0].mxu0 %v581
      %v673 = vpop.f32.mrb[0].mxu0
      %v674 = vadd.f32 %v472, %v673
      %v675 = vpop.f32.mrb[0].mxu0
      %v676 = vpop.f32.mrb[0].mxu0
      %v677 = vadd.f32 %v472, %v676
      %v678 = vpop.f32.mrb[0].mxu0
      %679 = vmatprep.mubr.bf16.mxu0 0
      %680 = vmatmul.mubr.bf16.gmra.mrb[0].mxu0 %v584
      %v681 = vpop.f32.mrb[0].mxu0
      %v682 = vadd.f32 %v472, %v681
      %v683 = vpop.f32.mrb[0].mxu0
      %v684 = vpop.f32.mrb[0].mxu0
      %v685 = vadd.f32 %v472, %v684
      %v686 = vpop.f32.mrb[0].mxu0
      %687 = vmatprep.mubr.bf16.mxu0 0
      %688 = vmatmul.mubr.bf16.gmra.mrb[0].mxu0 %v587
      %v689 = vpop.f32.mrb[0].mxu0
      %v690 = vadd.f32 %v472, %v689
      %v691 = vpop.f32.mrb[0].mxu0
      %v692 = vpop.f32.mrb[0].mxu0
      %v693 = vadd.f32 %v472, %v692
      %v694 = vpop.f32.mrb[0].mxu0
      %695 = vmatprep.mubr.bf16.mxu0 0
      %696 = vmatmul.mubr.bf16.gmra.mrb[0].mxu0 %v590
      %v697 = vpop.f32.mrb[0].mxu0
      %v698 = vadd.f32 %v472, %v697
      %v699 = vpop.f32.mrb[0].mxu0
      %v700 = vpop.f32.mrb[0].mxu0
      %v701 = vadd.f32 %v472, %v700
      %v702 = vpop.f32.mrb[0].mxu0
      %703 = vmatprep.mubr.bf16.mxu0 0
      %704 = vmatmul.mubr.bf16.gmra.mrb[0].mxu0 %v593
      %v705 = vpop.f32.mrb[0].mxu0
      %v706 = vadd.f32 %v472, %v705
      %v707 = vpop.f32.mrb[0].mxu0
      %v708 = vpop.f32.mrb[0].mxu0
      %v709 = vadd.f32 %v472, %v708
      %v710 = vpop.f32.mrb[0].mxu0
      %711 = vmatprep.mubr.bf16.mxu0 0
      %712 = vmatmul.mubr.bf16.gmra.mrb[0].mxu0 %v596
      %v713 = vpop.f32.mrb[0].mxu0
      %v714 = vadd.f32 %v472, %v713
      %v715 = vpop.f32.mrb[0].mxu0
      %v716 = vpop.f32.mrb[0].mxu0
      %v717 = vadd.f32 %v472, %v716
      %v718 = vpop.f32.mrb[0].mxu0
      %719 = vmatprep.mubr.bf16.mxu0 0
      %720 = vmatmul.mubr.bf16.gmra.mrb[0].mxu0 %v599
      %v721 = vpop.f32.mrb[0].mxu0
      %v722 = vadd.f32 %v472, %v721
      %v723 = vpop.f32.mrb[0].mxu0
      %v724 = vpop.f32.mrb[0].mxu0
      %v725 = vadd.f32 %v472, %v724
      %v726 = vpop.f32.mrb[0].mxu0
      %727 = vmatprep.mubr.bf16.mxu0 0
      %728 = vmatmul.mubr.bf16.gmra.mrb[0].mxu0 %v602
      %v729 = vpop.f32.mrb[0].mxu0
      %v730 = vadd.f32 %v472, %v729
      %v731 = vpop.f32.mrb[0].mxu0
      %v732 = vpop.f32.mrb[0].mxu0
      %v733 = vadd.f32 %v472, %v732
      %v734 = vpop.f32.mrb[0].mxu0
      %735 = vmatprep.mubr.bf16.mxu0 0
      %736 = vmatmul.mubr.bf16.gmra.mrb[0].mxu0 %v605
      %v737 = vpop.f32.mrb[0].mxu0
      %v738 = vadd.f32 %v472, %v737
      %v739 = vpop.f32.mrb[0].mxu0
      %v740 = vpop.f32.mrb[0].mxu0
      %v741 = vadd.f32 %v472, %v740
      %v742 = vpop.f32.mrb[0].mxu0
      %743 = vmatprep.mubr.bf16.mxu0 0
      %744 = vmatmul.mubr.bf16.gmra.mrb[0].mxu0 %v608
      %v745 = vpop.f32.mrb[0].mxu0
      %v746 = vadd.f32 %v472, %v745
      %v747 = vpop.f32.mrb[0].mxu0
      %v748 = vpop.f32.mrb[0].mxu0
      %v749 = vadd.f32 %v472, %v748
      %v750 = vpop.f32.mrb[0].mxu0
      %751 = vmatprep.mubr.bf16.mxu0 0
      %752 = vmatmul.mubr.bf16.gmra.mrb[0].mxu0 %v611
      %v753 = vpop.f32.mrb[0].mxu0
      %v754 = vadd.f32 %v472, %v753
      %v755 = vpop.f32.mrb[0].mxu0
      %v756 = vpop.f32.mrb[0].mxu0
      %v757 = vadd.f32 %v472, %v756
      %v758 = vpop.f32.mrb[0].mxu0
      %759 = vmatprep.mubr.bf16.mxu0 0
      %760 = vmatmul.mubr.bf16.gmra.mrb[0].mxu0 %v614
      %v761 = vpop.f32.mrb[0].mxu0
      %v762 = vadd.f32 %v472, %v761
      %v763 = vpop.f32.mrb[0].mxu0
      %v764 = vpop.f32.mrb[0].mxu0
      %v765 = vadd.f32 %v472, %v764
      %v766 = vpop.f32.mrb[0].mxu0
      %767 = vmatprep.mubr.bf16.mxu0 0
      %768 = vmatmul.mubr.bf16.gmra.mrb[0].mxu0 %v617
      %v769 = vpop.f32.mrb[0].mxu0
      %v770 = vadd.f32 %v472, %v769
      %v771 = vpop.f32.mrb[0].mxu0
      %v772 = vpop.f32.mrb[0].mxu0
      %v773 = vadd.f32 %v472, %v772
      %v774 = vpop.f32.mrb[0].mxu0
      %775 = vmatprep.mubr.bf16.mxu0 0
      %776 = vmatmul.mubr.bf16.gmra.mrb[0].mxu0 %v620
      %v777 = vpop.f32.mrb[0].mxu0
      %v778 = vadd.f32 %v472, %v777
      %v779 = vpop.f32.mrb[0].mxu0
      %v780 = vpop.f32.mrb[0].mxu0
      %v781 = vadd.f32 %v472, %v780
      %v782 = vpop.f32.mrb[0].mxu0
      %783 = vmatprep.mubr.bf16.mxu0 0
      %784 = vmatmul.mubr.bf16.gmra.mrb[0].mxu0 %v623
      %v785 = vpop.f32.mrb[0].mxu0
      %v786 = vadd.f32 %v472, %v785
      %v787 = vpop.f32.mrb[0].mxu0
      %v788 = vpop.f32.mrb[0].mxu0
      %v789 = vadd.f32 %v472, %v788
      %v790 = vpop.f32.mrb[0].mxu0
      %791 = vmatprep.mubr.bf16.mxu0 0
      %792 = vmatmul.mubr.bf16.gmra.mrb[0].mxu0 %v626
      %v793 = vpop.f32.mrb[0].mxu0
      %v794 = vadd.f32 %v472, %v793
      %v795 = vpop.f32.mrb[0].mxu0
      %v796 = vpop.f32.mrb[0].mxu0
      %v797 = vadd.f32 %v472, %v796
      %v798 = vpop.f32.mrb[0].mxu0
      %799 = vmatprep.mubr.bf16.mxu0 0
      %800 = vmatmul.mubr.bf16.gmra.mrb[0].mxu0 %v629
      %v801 = vpop.f32.mrb[0].mxu0
      %v802 = vadd.f32 %v472, %v801
      %v803 = vpop.f32.mrb[0].mxu0
      %v804 = vpop.f32.mrb[0].mxu0
      %v805 = vadd.f32 %v472, %v804
      %v806 = vpop.f32.mrb[0].mxu0
      %807 = vdwg.mxu0
      %v808 = vmax.f32 %v666, 0.0
      %v809 = vmax.f32 %v669, 0.0
      %v810 = vmax.f32 %v674, 0.0
      %v811 = vmax.f32 %v677, 0.0
      %v812 = vmax.f32 %v682, 0.0
      %v813 = vmax.f32 %v685, 0.0
      %v814 = vmax.f32 %v690, 0.0
      %v815 = vmax.f32 %v693, 0.0
      %v816 = vmax.f32 %v698, 0.0
      %v817 = vmax.f32 %v701, 0.0
      %v818 = vmax.f32 %v706, 0.0
      %v819 = vmax.f32 %v709, 0.0
      %v820 = vmax.f32 %v714, 0.0
      %v821 = vmax.f32 %v717, 0.0
      %v822 = vmax.f32 %v722, 0.0
      %v823 = vmax.f32 %v725, 0.0
      %v824 = vmax.f32 %v730, 0.0
      %v825 = vmax.f32 %v733, 0.0
      %v826 = vmax.f32 %v738, 0.0
      %v827 = vmax.f32 %v741, 0.0
      %v828 = vmax.f32 %v746, 0.0
      %v829 = vmax.f32 %v749, 0.0
      %v830 = vmax.f32 %v754, 0.0
      %v831 = vmax.f32 %v757, 0.0
      %v832 = vmax.f32 %v762, 0.0
      %v833 = vmax.f32 %v765, 0.0
      %v834 = vmax.f32 %v770, 0.0
      %v835 = vmax.f32 %v773, 0.0
      %v836 = vmax.f32 %v778, 0.0
      %v837 = vmax.f32 %v781, 0.0
      %v838 = vmax.f32 %v786, 0.0
      %v839 = vmax.f32 %v789, 0.0
      %v840 = vmax.f32 %v794, 0.0
      %v841 = vmax.f32 %v797, 0.0
      %v842 = vmax.f32 %v802, 0.0
      %v843 = vmax.f32 %v805, 0.0
      %845 = vset.pattern.permute.xlu0 0
      %846 = vperm.xlu0 %845, %v391
      %v847 = vpop.permute.xlu0 %846
      %850 = vset.pattern.permute.xlu0 0
      %851 = vperm.xlu0 %850, %v392
      %v852 = vpop.permute.xlu0 %851
      %855 = vset.pattern.permute.xlu0 0
      %856 = vperm.xlu0 %855, %v393
      %v857 = vpop.permute.xlu0 %856
      %860 = vset.pattern.permute.xlu0 0
      %861 = vperm.xlu0 %860, %v394
      %v862 = vpop.permute.xlu0 %861
      %865 = vset.pattern.permute.xlu0 0
      %866 = vperm.xlu0 %865, %v395
      %v867 = vpop.permute.xlu0 %866
      %870 = vset.pattern.permute.xlu0 0
      %871 = vperm.xlu0 %870, %v396
      %v872 = vpop.permute.xlu0 %871
      %875 = vset.pattern.permute.xlu0 0
      %876 = vperm.xlu0 %875, %v397
      %v877 = vpop.permute.xlu0 %876
      %880 = vset.pattern.permute.xlu0 0
      %881 = vperm.xlu0 %880, %v398
      %v882 = vpop.permute.xlu0 %881
      %885 = vset.pattern.permute.xlu0 0
      %886 = vperm.xlu0 %885, %v399
      %v887 = vpop.permute.xlu0 %886
      %890 = vset.pattern.permute.xlu0 0
      %891 = vperm.xlu0 %890, %v400
      %v892 = vpop.permute.xlu0 %891
      %895 = vset.pattern.permute.xlu0 0
      %896 = vperm.xlu0 %895, %v401
      %v897 = vpop.permute.xlu0 %896
      %900 = vset.pattern.permute.xlu0 0
      %901 = vperm.xlu0 %900, %v402
      %v902 = vpop.permute.xlu0 %901
      %905 = vset.pattern.permute.xlu0 0
      %906 = vperm.xlu0 %905, %v403
      %v907 = vpop.permute.xlu0 %906
      %910 = vset.pattern.permute.xlu0 0
      %911 = vperm.xlu0 %910, %v404
      %v912 = vpop.permute.xlu0 %911
      %915 = vset.pattern.permute.xlu0 0
      %916 = vperm.xlu0 %915, %v405
      %v917 = vpop.permute.xlu0 %916
      %920 = vset.pattern.permute.xlu0 0
      %921 = vperm.xlu0 %920, %v406
      %v922 = vpop.permute.xlu0 %921
      %925 = vset.pattern.permute.xlu0 0
      %926 = vperm.xlu0 %925, %v407
      %v927 = vpop.permute.xlu0 %926
      %930 = vset.pattern.permute.xlu0 0
      %931 = vperm.xlu0 %930, %v408
      %v932 = vpop.permute.xlu0 %931
      %935 = vset.pattern.permute.xlu0 0
      %936 = vperm.xlu0 %935, %v409
      %v937 = vpop.permute.xlu0 %936
      %940 = vset.pattern.permute.xlu0 0
      %941 = vperm.xlu0 %940, %v410
      %v942 = vpop.permute.xlu0 %941
      %945 = vset.pattern.permute.xlu0 0
      %946 = vperm.xlu0 %945, %v411
      %v947 = vpop.permute.xlu0 %946
      %950 = vset.pattern.permute.xlu0 0
      %951 = vperm.xlu0 %950, %v412
      %v952 = vpop.permute.xlu0 %951
      %955 = vset.pattern.permute.xlu0 0
      %956 = vperm.xlu0 %955, %v413
      %v957 = vpop.permute.xlu0 %956
      %960 = vset.pattern.permute.xlu0 0
      %961 = vperm.xlu0 %960, %v414
      %v962 = vpop.permute.xlu0 %961
      %965 = vset.pattern.permute.xlu0 0
      %966 = vperm.xlu0 %965, %v415
      %v967 = vpop.permute.xlu0 %966
      %970 = vset.pattern.permute.xlu0 0
      %971 = vperm.xlu0 %970, %v416
      %v972 = vpop.permute.xlu0 %971
      %975 = vset.pattern.permute.xlu0 0
      %976 = vperm.xlu0 %975, %v417
      %v977 = vpop.permute.xlu0 %976
      %980 = vset.pattern.permute.xlu0 0
      %981 = vperm.xlu0 %980, %v418
      %v982 = vpop.permute.xlu0 %981
      %985 = vset.pattern.permute.xlu0 0
      %986 = vperm.xlu0 %985, %v419
      %v987 = vpop.permute.xlu0 %986
      %990 = vset.pattern.permute.xlu0 0
      %991 = vperm.xlu0 %990, %v420
      %v992 = vpop.permute.xlu0 %991
      %995 = vset.pattern.permute.xlu0 0
      %996 = vperm.xlu0 %995, %v421
      %v997 = vpop.permute.xlu0 %996
      %1000 = vset.pattern.permute.xlu0 0
      %1001 = vperm.xlu0 %1000, %v422
      %v1002 = vpop.permute.xlu0 %1001
      %1005 = vset.pattern.permute.xlu0 0
      %1006 = vperm.xlu0 %1005, %v423
      %v1007 = vpop.permute.xlu0 %1006
      %1010 = vset.pattern.permute.xlu0 0
      %1011 = vperm.xlu0 %1010, %v424
      %v1012 = vpop.permute.xlu0 %1011
      %1015 = vset.pattern.permute.xlu0 0
      %1016 = vperm.xlu0 %1015, %v425
      %v1017 = vpop.permute.xlu0 %1016
      %1020 = vset.pattern.permute.xlu0 0
      %1021 = vperm.xlu0 %1020, %v426
      %v1022 = vpop.permute.xlu0 %1021
      %v1024 = vmul.f32 %v808, %v847
      %v1025 = vmul.f32 %v809, %v852
      %v1026 = vmul.f32 %v810, %v857
      %v1027 = vmul.f32 %v811, %v862
      %v1028 = vmul.f32 %v812, %v867
      %v1029 = vmul.f32 %v813, %v872
      %v1030 = vmul.f32 %v814, %v877
      %v1031 = vmul.f32 %v815, %v882
      %v1032 = vmul.f32 %v816, %v887
      %v1033 = vmul.f32 %v817, %v892
      %v1034 = vmul.f32 %v818, %v897
      %v1035 = vmul.f32 %v819, %v902
      %v1036 = vmul.f32 %v820, %v907
      %v1037 = vmul.f32 %v821, %v912
      %v1038 = vmul.f32 %v822, %v917
      %v1039 = vmul.f32 %v823, %v922
      %v1040 = vmul.f32 %v824, %v927
      %v1041 = vmul.f32 %v825, %v932
      %v1042 = vmul.f32 %v826, %v937
      %v1043 = vmul.f32 %v827, %v942
      %v1044 = vmul.f32 %v828, %v947
      %v1045 = vmul.f32 %v829, %v952
      %v1046 = vmul.f32 %v830, %v957
      %v1047 = vmul.f32 %v831, %v962
      %v1048 = vmul.f32 %v832, %v967
      %v1049 = vmul.f32 %v833, %v972
      %v1050 = vmul.f32 %v834, %v977
      %v1051 = vmul.f32 %v835, %v982
      %v1052 = vmul.f32 %v836, %v987
      %v1053 = vmul.f32 %v837, %v992
      %v1054 = vmul.f32 %v838, %v997
      %v1055 = vmul.f32 %v839, %v1002
      %v1056 = vmul.f32 %v840, %v1007
      %v1057 = vmul.f32 %v841, %v1012
      %v1058 = vmul.f32 %v842, %v1017
      %v1059 = vmul.f32 %v843, %v1022
      %v1060 = vpack.c.bf16 %v1025, %v1024
      %v1061 = vpack.c.bf16 %v1027, %v1026
      %v1062 = vpack.c.bf16 %v1029, %v1028
      %v1063 = vpack.c.bf16 %v1031, %v1030
      %v1064 = vpack.c.bf16 %v1033, %v1032
      %v1065 = vpack.c.bf16 %v1035, %v1034
      %v1066 = vpack.c.bf16 %v1037, %v1036
      %v1067 = vpack.c.bf16 %v1039, %v1038
      %v1068 = vpack.c.bf16 %v1041, %v1040
      %v1069 = vpack.c.bf16 %v1043, %v1042
      %v1070 = vpack.c.bf16 %v1045, %v1044
      %v1071 = vpack.c.bf16 %v1047, %v1046
      %v1072 = vpack.c.bf16 %v1049, %v1048
      %v1073 = vpack.c.bf16 %v1051, %v1050
      %v1074 = vpack.c.bf16 %v1053, %v1052
      %v1075 = vpack.c.bf16 %v1055, %v1054
      %v1076 = vpack.c.bf16 %v1057, %v1056
      %v1077 = vpack.c.bf16 %v1059, %v1058
      %v1079 = vshrl.u32 %v1060, 16
      %v1081 = vrot.slane %v1079, 6
      %v1082 = vshll.u32 %v1060, 16
      %v1084 = vrot.slane %v1082, 7
      %v1085 = vor.u32 %v1081, %v1084
      %v1087 = vshrl.u32 %v1061, 16
      %v1089 = vrot.slane %v1087, 6
      %v1090 = vshll.u32 %v1061, 16
      %v1092 = vrot.slane %v1090, 7
      %v1093 = vor.u32 %v1089, %v1092
      %v1094 = vsel %vm363, %v1085, %v1093
      %v1096 = vshrl.u32 %v1062, 16
      %v1098 = vrot.slane %v1096, 6
      %v1099 = vshll.u32 %v1062, 16
      %v1101 = vrot.slane %v1099, 7
      %v1102 = vor.u32 %v1098, %v1101
      %v1103 = vsel %vm363, %v1093, %v1102
      %v1105 = vshrl.u32 %v1063, 16
      %v1107 = vrot.slane %v1105, 6
      %v1108 = vshll.u32 %v1063, 16
      %v1110 = vrot.slane %v1108, 7
      %v1111 = vor.u32 %v1107, %v1110
      %v1112 = vsel %vm363, %v1102, %v1111
      %v1114 = vshrl.u32 %v1064, 16
      %v1116 = vrot.slane %v1114, 6
      %v1117 = vshll.u32 %v1064, 16
      %v1119 = vrot.slane %v1117, 7
      %v1120 = vor.u32 %v1116, %v1119
      %v1121 = vsel %vm363, %v1111, %v1120
      %v1123 = vshrl.u32 %v1065, 16
      %v1125 = vrot.slane %v1123, 6
      %v1126 = vshll.u32 %v1065, 16
      %v1128 = vrot.slane %v1126, 7
      %v1129 = vor.u32 %v1125, %v1128
      %v1130 = vsel %vm363, %v1120, %v1129
      %v1132 = vshrl.u32 %v1066, 16
      %v1134 = vrot.slane %v1132, 6
      %v1135 = vshll.u32 %v1066, 16
      %v1137 = vrot.slane %v1135, 7
      %v1138 = vor.u32 %v1134, %v1137
      %v1139 = vsel %vm363, %v1129, %v1138
      %v1141 = vshrl.u32 %v1067, 16
      %v1143 = vrot.slane %v1141, 6
      %v1144 = vshll.u32 %v1067, 16
      %v1146 = vrot.slane %v1144, 7
      %v1147 = vor.u32 %v1143, %v1146
      %v1148 = vsel %vm363, %v1138, %v1147
      %v1150 = vshrl.u32 %v1068, 16
      %v1152 = vrot.slane %v1150, 6
      %v1153 = vshll.u32 %v1068, 16
      %v1155 = vrot.slane %v1153, 7
      %v1156 = vor.u32 %v1152, %v1155
      %v1157 = vsel %vm363, %v1147, %v1156
      %v1159 = vshrl.u32 %v1069, 16
      %v1161 = vrot.slane %v1159, 6
      %v1162 = vshll.u32 %v1069, 16
      %v1164 = vrot.slane %v1162, 7
      %v1165 = vor.u32 %v1161, %v1164
      %v1166 = vsel %vm363, %v1156, %v1165
      %v1168 = vshrl.u32 %v1070, 16
      %v1170 = vrot.slane %v1168, 6
      %v1171 = vshll.u32 %v1070, 16
      %v1173 = vrot.slane %v1171, 7
      %v1174 = vor.u32 %v1170, %v1173
      %v1175 = vsel %vm363, %v1165, %v1174
      %v1177 = vshrl.u32 %v1071, 16
      %v1179 = vrot.slane %v1177, 6
      %v1180 = vshll.u32 %v1071, 16
      %v1182 = vrot.slane %v1180, 7
      %v1183 = vor.u32 %v1179, %v1182
      %v1184 = vsel %vm363, %v1174, %v1183
      %v1186 = vshrl.u32 %v1072, 16
      %v1188 = vrot.slane %v1186, 6
      %v1189 = vshll.u32 %v1072, 16
      %v1191 = vrot.slane %v1189, 7
      %v1192 = vor.u32 %v1188, %v1191
      %v1193 = vsel %vm363, %v1183, %v1192
      %v1195 = vshrl.u32 %v1073, 16
      %v1197 = vrot.slane %v1195, 6
      %v1198 = vshll.u32 %v1073, 16
      %v1200 = vrot.slane %v1198, 7
      %v1201 = vor.u32 %v1197, %v1200
      %v1202 = vsel %vm363, %v1192, %v1201
      %v1204 = vshrl.u32 %v1074, 16
      %v1206 = vrot.slane %v1204, 6
      %v1207 = vshll.u32 %v1074, 16
      %v1209 = vrot.slane %v1207, 7
      %v1210 = vor.u32 %v1206, %v1209
      %v1211 = vsel %vm363, %v1201, %v1210
      %v1213 = vshrl.u32 %v1075, 16
      %v1215 = vrot.slane %v1213, 6
      %v1216 = vshll.u32 %v1075, 16
      %v1218 = vrot.slane %v1216, 7
      %v1219 = vor.u32 %v1215, %v1218
      %v1220 = vsel %vm363, %v1210, %v1219
      %v1222 = vshrl.u32 %v1076, 16
      %v1224 = vrot.slane %v1222, 6
      %v1225 = vshll.u32 %v1076, 16
      %v1227 = vrot.slane %v1225, 7
      %v1228 = vor.u32 %v1224, %v1227
      %v1229 = vsel %vm363, %v1219, %v1228
      %v1231 = vshrl.u32 %v1077, 16
      %v1233 = vrot.slane %v1231, 6
      %v1234 = vshll.u32 %v1077, 16
      %v1236 = vrot.slane %v1234, 7
      %v1237 = vor.u32 %v1233, %v1236
      %v1238 = vsel %vm363, %v1228, %v1237
      %v1258 = vld [vmem:[#allocation2 + $0x8] sm:$0xfe]
      %v1259 = vsel %vm370, %v1085, %v1258
      %1260 = vst [vmem:[#allocation2 + $0x8] sm:$0xfe] %v1259
      %1261 = vst [vmem:[#allocation2 + $0x10] sm:$0xff] %v1094
      %1262 = vst [vmem:[#allocation2 + $0x18] sm:$0xff] %v1103
      %1263 = vst [vmem:[#allocation2 + $0x20] sm:$0xff] %v1112
      %1264 = vst [vmem:[#allocation2 + $0x28] sm:$0xff] %v1121
      %1265 = vst [vmem:[#allocation2 + $0x30] sm:$0xff] %v1130
      %1266 = vst [vmem:[#allocation2 + $0x38] sm:$0xff] %v1139
      %1267 = vst [vmem:[#allocation2 + $0x40] sm:$0xff] %v1148
      %1268 = vst [vmem:[#allocation2 + $0x48] sm:$0xff] %v1157
      %1269 = vst [vmem:[#allocation2 + $0x50] sm:$0xff] %v1166
      %1270 = vst [vmem:[#allocation2 + $0x58] sm:$0xff] %v1175
      %1271 = vst [vmem:[#allocation2 + $0x60] sm:$0xff] %v1184
      %1272 = vst [vmem:[#allocation2 + $0x68] sm:$0xff] %v1193
      %1273 = vst [vmem:[#allocation2 + $0x70] sm:$0xff] %v1202
      %1274 = vst [vmem:[#allocation2 + $0x78] sm:$0xff] %v1211
      %1275 = vst [vmem:[#allocation2 + $0x80] sm:$0xff] %v1220
      %1276 = vst [vmem:[#allocation2 + $0x88] sm:$0xff] %v1229
      %1277 = vst [vmem:[#allocation2 + $0x90] sm:$0xff] %v1238
      %v1278 = vld [vmem:[#allocation2 + $0x98] sm:$0x3]
      %v1279 = vsel %vm364, %v1237, %v1278
      %1280 = vst [vmem:[#allocation2 + $0x98] sm:$0x3] %v1279
      %v1281 = vld [vmem:[#allocation2] sm:$0xff]
      %v1282 = vld [vmem:[#allocation2 + $0x8] sm:$0xff]
      %v1283 = vld [vmem:[#allocation2 + $0x10] sm:$0xff]
      %v1284 = vld [vmem:[#allocation2 + $0x18] sm:$0xff]
      %v1285 = vld [vmem:[#allocation2 + $0x20] sm:$0xff]
      %v1286 = vld [vmem:[#allocation2 + $0x28] sm:$0xff]
      %v1287 = vld [vmem:[#allocation2 + $0x30] sm:$0xff]
      %v1288 = vld [vmem:[#allocation2 + $0x38] sm:$0xff]
      %v1289 = vld [vmem:[#allocation2 + $0x40] sm:$0xff]
      %v1290 = vld [vmem:[#allocation2 + $0x48] sm:$0xff]
      %v1291 = vld [vmem:[#allocation2 + $0x50] sm:$0xff]
      %v1292 = vld [vmem:[#allocation2 + $0x58] sm:$0xff]
      %v1293 = vld [vmem:[#allocation2 + $0x60] sm:$0xff]
      %v1294 = vld [vmem:[#allocation2 + $0x68] sm:$0xff]
      %v1295 = vld [vmem:[#allocation2 + $0x70] sm:$0xff]
      %v1296 = vld [vmem:[#allocation2 + $0x78] sm:$0xff]
      %v1297 = vld [vmem:[#allocation2 + $0x80] sm:$0xff]
      %v1298 = vld [vmem:[#allocation2 + $0x88] sm:$0xff]
      %v1299 = vld [vmem:[%s4] sm:$0xf]
      %v1300 = vld [vmem:[%s4 + $0x4] sm:$0xf]
      %v1301 = vld [vmem:[%s4 + $0x8] sm:$0xf]
      %v1302 = vld [vmem:[%s4 + $0xc] sm:$0xf]
      %v1303 = vld [vmem:[%s4 + $0x10] sm:$0xf]
      %v1304 = vld [vmem:[%s4 + $0x14] sm:$0xf]
      %v1305 = vld [vmem:[%s4 + $0x18] sm:$0xf]
      %v1306 = vld [vmem:[%s4 + $0x1c] sm:$0xf]
      %v1307 = vld [vmem:[%s4 + $0x20] sm:$0xf]
      %v1308 = vld [vmem:[%s4 + $0x24] sm:$0xf]
      %v1309 = vld [vmem:[%s4 + $0x28] sm:$0xf]
      %v1310 = vld [vmem:[%s4 + $0x2c] sm:$0xf]
      %v1311 = vld [vmem:[%s4 + $0x30] sm:$0xf]
      %v1312 = vld [vmem:[%s4 + $0x34] sm:$0xf]
      %v1313 = vld [vmem:[%s4 + $0x38] sm:$0xf]
      %v1314 = vld [vmem:[%s4 + $0x3c] sm:$0xf]
      %v1315 = vld [vmem:[#allocation2 + $0x90] sm:$0x1]
      %v1316 = vld [vmem:[%s4 + $0x40] sm:$0xf]
      %v1317 = vld [vmem:[%s4 + $0x44] sm:$0xf]
      %v1318 = vld [vmem:[%s4 + $0x48] sm:$0xf]
      %v1319 = vld [vmem:[%s4 + $0x4c] sm:$0xf]
      %v1320 = vld [vmem:[%s4 + $0x50] sm:$0xf]
      %v1321 = vld [vmem:[%s4 + $0x54] sm:$0xf]
      %v1322 = vld [vmem:[%s4 + $0x58] sm:$0xf]
      %v1323 = vld [vmem:[%s4 + $0x5c] sm:$0xf]
      %v1324 = vld [vmem:[%s4 + $0x60] sm:$0xf]
      %v1325 = vld [vmem:[%s4 + $0x64] sm:$0xf]
      %v1326 = vld [vmem:[%s4 + $0x68] sm:$0xf]
      %v1327 = vld [vmem:[%s4 + $0x6c] sm:$0xf]
      %v1328 = vld [vmem:[%s4 + $0x70] sm:$0xf]
      %v1329 = vld [vmem:[%s4 + $0x74] sm:$0xf]
      %v1330 = vld [vmem:[%s4 + $0x78] sm:$0xf]
      %v1331 = vld [vmem:[%s4 + $0x7c] sm:$0xf]
      %vm1332 = vsmask.f32 7424
      %v1334 = vshrl.u32 %v1281, 16
      %v1336 = vshll.u32 %v1281, 16
      %v1338 = vrot.slane %v1336, 1
      %v1339 = vor.u32 %v1334, %v1338
      %v1341 = vshll.u32 %v1282, 16
      %v1343 = vrot.slane %v1341, 1
      %v1344 = vsel %vm1332, %v1339, %v1343
      %v1345 = vshrl.u32 %v1282, 16
      %v1347 = vor.u32 %v1345, %v1343
      %v1349 = vshll.u32 %v1283, 16
      %v1351 = vrot.slane %v1349, 1
      %v1352 = vsel %vm1332, %v1347, %v1351
      %v1353 = vshrl.u32 %v1283, 16
      %v1355 = vor.u32 %v1353, %v1351
      %v1357 = vshll.u32 %v1284, 16
      %v1359 = vrot.slane %v1357, 1
      %v1360 = vsel %vm1332, %v1355, %v1359
      %v1361 = vshrl.u32 %v1284, 16
      %v1363 = vor.u32 %v1361, %v1359
      %v1365 = vshll.u32 %v1285, 16
      %v1367 = vrot.slane %v1365, 1
      %v1368 = vsel %vm1332, %v1363, %v1367
      %v1369 = vshrl.u32 %v1285, 16
      %v1371 = vor.u32 %v1369, %v1367
      %v1373 = vshll.u32 %v1286, 16
      %v1375 = vrot.slane %v1373, 1
      %v1376 = vsel %vm1332, %v1371, %v1375
      %v1377 = vshrl.u32 %v1286, 16
      %v1379 = vor.u32 %v1377, %v1375
      %v1381 = vshll.u32 %v1287, 16
      %v1383 = vrot.slane %v1381, 1
      %v1384 = vsel %vm1332, %v1379, %v1383
      %v1385 = vshrl.u32 %v1287, 16
      %v1387 = vor.u32 %v1385, %v1383
      %v1389 = vshll.u32 %v1288, 16
      %v1391 = vrot.slane %v1389, 1
      %v1392 = vsel %vm1332, %v1387, %v1391
      %v1393 = vshrl.u32 %v1288, 16
      %v1395 = vor.u32 %v1393, %v1391
      %v1397 = vshll.u32 %v1289, 16
      %v1399 = vrot.slane %v1397, 1
      %v1400 = vsel %vm1332, %v1395, %v1399
      %v1401 = vshrl.u32 %v1289, 16
      %v1403 = vor.u32 %v1401, %v1399
      %v1405 = vshll.u32 %v1290, 16
      %v1407 = vrot.slane %v1405, 1
      %v1408 = vsel %vm1332, %v1403, %v1407
      %v1409 = vshrl.u32 %v1290, 16
      %v1411 = vor.u32 %v1409, %v1407
      %v1413 = vshll.u32 %v1291, 16
      %v1415 = vrot.slane %v1413, 1
      %v1416 = vsel %vm1332, %v1411, %v1415
      %v1417 = vshrl.u32 %v1291, 16
      %v1419 = vor.u32 %v1417, %v1415
      %v1421 = vshll.u32 %v1292, 16
      %v1423 = vrot.slane %v1421, 1
      %v1424 = vsel %vm1332, %v1419, %v1423
      %v1425 = vshrl.u32 %v1292, 16
      %v1427 = vor.u32 %v1425, %v1423
      %v1429 = vshll.u32 %v1293, 16
      %v1431 = vrot.slane %v1429, 1
      %v1432 = vsel %vm1332, %v1427, %v1431
      %v1433 = vshrl.u32 %v1293, 16
      %v1435 = vor.u32 %v1433, %v1431
      %v1437 = vshll.u32 %v1294, 16
      %v1439 = vrot.slane %v1437, 1
      %v1440 = vsel %vm1332, %v1435, %v1439
      %v1441 = vshrl.u32 %v1294, 16
      %v1443 = vor.u32 %v1441, %v1439
      %v1445 = vshll.u32 %v1295, 16
      %v1447 = vrot.slane %v1445, 1
      %v1448 = vsel %vm1332, %v1443, %v1447
      %v1449 = vshrl.u32 %v1295, 16
      %v1451 = vor.u32 %v1449, %v1447
      %v1453 = vshll.u32 %v1296, 16
      %v1455 = vrot.slane %v1453, 1
      %v1456 = vsel %vm1332, %v1451, %v1455
      %v1457 = vshrl.u32 %v1296, 16
      %v1459 = vor.u32 %v1457, %v1455
      %v1461 = vshll.u32 %v1297, 16
      %v1463 = vrot.slane %v1461, 1
      %v1464 = vsel %vm1332, %v1459, %v1463
      %v1465 = vshrl.u32 %v1297, 16
      %v1467 = vor.u32 %v1465, %v1463
      %v1469 = vshll.u32 %v1298, 16
      %v1471 = vrot.slane %v1469, 1
      %v1472 = vsel %vm1332, %v1467, %v1471
      %v1473 = vshrl.u32 %v1298, 16
      %v1475 = vor.u32 %v1473, %v1471
      %v1477 = vshll.u32 %v1315, 16
      %v1479 = vrot.slane %v1477, 1
      %v1480 = vsel %vm1332, %v1475, %v1479
      %v1515 = vunpack.c.l.b16 %v1316
      %v1516 = vunpack.c.l.b16 %v1317
      %v1517 = vunpack.c.l.b16 %v1318
      %v1518 = vunpack.c.l.b16 %v1319
      %v1519 = vunpack.c.l.b16 %v1320
      %v1520 = vunpack.c.l.b16 %v1321
      %v1521 = vunpack.c.l.b16 %v1322
      %v1522 = vunpack.c.l.b16 %v1323
      %v1523 = vunpack.c.l.b16 %v1324
      %v1524 = vunpack.c.l.b16 %v1325
      %v1525 = vunpack.c.l.b16 %v1326
      %v1526 = vunpack.c.l.b16 %v1327
      %v1527 = vunpack.c.l.b16 %v1328
      %v1528 = vunpack.c.l.b16 %v1329
      %v1529 = vunpack.c.l.b16 %v1330
      %v1530 = vunpack.c.l.b16 %v1331
      %v1531 = vpack.c.b16 %v1516, %v1515
      %v1532 = vpack.c.b16 %v1518, %v1517
      %v1533 = vpack.c.b16 %v1520, %v1519
      %v1534 = vpack.c.b16 %v1522, %v1521
      %v1535 = vpack.c.b16 %v1524, %v1523
      %v1536 = vpack.c.b16 %v1526, %v1525
      %v1537 = vpack.c.b16 %v1528, %v1527
      %v1538 = vpack.c.b16 %v1530, %v1529
      %1547 = vmatprep.subr.bf16.mxu0 0
      %1548 = vmatpush1.bf16.msra.mxu0 %v1531
      %1549 = vmatprep.subr.bf16.mxu0 0
      %1550 = vmatpush1.bf16.msra.mxu0 %v1532
      %1551 = vmatprep.subr.bf16.mxu0 0
      %1552 = vmatpush1.bf16.msra.mxu0 %v1533
      %1553 = vmatprep.subr.bf16.mxu0 0
      %1554 = vmatpush1.bf16.msra.mxu0 %v1534
      %1555 = vmatprep.subr.bf16.mxu0 0
      %1556 = vmatpush1.bf16.msra.mxu0 %v1535
      %1557 = vmatprep.subr.bf16.mxu0 0
      %1558 = vmatpush1.bf16.msra.mxu0 %v1536
      %1559 = vmatprep.subr.bf16.mxu0 0
      %1560 = vmatpush1.bf16.msra.mxu0 %v1537
      %1561 = vmatprep.subr.bf16.mxu0 0
      %1562 = vmatpush1.bf16.msra.mxu0 %v1538
      %1563 = vmatprep.subr.bf16.mxu0 0
      %1564 = vmatpush1.bf16.msra.mxu0 0
      %1565 = vmatprep.subr.bf16.mxu0 0
      %1566 = vmatpush1.bf16.msra.mxu0 0
      %1567 = vmatprep.subr.bf16.mxu0 0
      %1568 = vmatpush1.bf16.msra.mxu0 0
      %1569 = vmatprep.subr.bf16.mxu0 0
      %1570 = vmatpush1.bf16.msra.mxu0 0
      %1571 = vmatprep.subr.bf16.mxu0 0
      %1572 = vmatpush1.bf16.msra.mxu0 0
      %1573 = vmatprep.subr.bf16.mxu0 0
      %1574 = vmatpush1.bf16.msra.mxu0 0
      %1575 = vmatprep.subr.bf16.mxu0 0
      %1576 = vmatpush1.bf16.msra.mxu0 0
      %1577 = vmatprep.subr.bf16.mxu0 0
      %1578 = vmatpush1.bf16.msra.mxu0 0
      %1579 = vmatprep.mubr.bf16.mxu0 0
      %1580 = vmatmul.mubr.bf16.gmra.mrb[0].mxu0 %v1344
      %v1581 = vpop.f32.mrb[0].mxu0
      %v1582 = vadd.f32 0.0, %v1581
      %v1583 = vpop.f32.mrb[0].mxu0
      %v1584 = vpop.f32.mrb[0].mxu0
      %v1585 = vadd.f32 0.0, %v1584
      %v1586 = vpop.f32.mrb[0].mxu0
      %1587 = vmatprep.mubr.bf16.mxu0 0
      %1588 = vmatmul.mubr.bf16.gmra.mrb[0].mxu0 %v1352
      %v1589 = vpop.f32.mrb[0].mxu0
      %v1590 = vadd.f32 0.0, %v1589
      %v1591 = vpop.f32.mrb[0].mxu0
      %v1592 = vpop.f32.mrb[0].mxu0
      %v1593 = vadd.f32 0.0, %v1592
      %v1594 = vpop.f32.mrb[0].mxu0
      %1595 = vmatprep.mubr.bf16.mxu0 0
      %1596 = vmatmul.mubr.bf16.gmra.mrb[0].mxu0 %v1360
      %v1597 = vpop.f32.mrb[0].mxu0
      %v1598 = vadd.f32 0.0, %v1597
      %v1599 = vpop.f32.mrb[0].mxu0
      %v1600 = vpop.f32.mrb[0].mxu0
      %v1601 = vadd.f32 0.0, %v1600
      %v1602 = vpop.f32.mrb[0].mxu0
      %1603 = vmatprep.mubr.bf16.mxu0 0
      %1604 = vmatmul.mubr.bf16.gmra.mrb[0].mxu0 %v1368
      %v1605 = vpop.f32.mrb[0].mxu0
      %v1606 = vadd.f32 0.0, %v1605
      %v1607 = vpop.f32.mrb[0].mxu0
      %v1608 = vpop.f32.mrb[0].mxu0
      %v1609 = vadd.f32 0.0, %v1608
      %v1610 = vpop.f32.mrb[0].mxu0
      %1611 = vmatprep.mubr.bf16.mxu0 0
      %1612 = vmatmul.mubr.bf16.gmra.mrb[0].mxu0 %v1376
      %v1613 = vpop.f32.mrb[0].mxu0
      %v1614 = vadd.f32 0.0, %v1613
      %v1615 = vpop.f32.mrb[0].mxu0
      %v1616 = vpop.f32.mrb[0].mxu0
      %v1617 = vadd.f32 0.0, %v1616
      %v1618 = vpop.f32.mrb[0].mxu0
      %1619 = vmatprep.mubr.bf16.mxu0 0
      %1620 = vmatmul.mubr.bf16.gmra.mrb[0].mxu0 %v1384
      %v1621 = vpop.f32.mrb[0].mxu0
      %v1622 = vadd.f32 0.0, %v1621
      %v1623 = vpop.f32.mrb[0].mxu0
      %v1624 = vpop.f32.mrb[0].mxu0
      %v1625 = vadd.f32 0.0, %v1624
      %v1626 = vpop.f32.mrb[0].mxu0
      %1627 = vmatprep.mubr.bf16.mxu0 0
      %1628 = vmatmul.mubr.bf16.gmra.mrb[0].mxu0 %v1392
      %v1629 = vpop.f32.mrb[0].mxu0
      %v1630 = vadd.f32 0.0, %v1629
      %v1631 = vpop.f32.mrb[0].mxu0
      %v1632 = vpop.f32.mrb[0].mxu0
      %v1633 = vadd.f32 0.0, %v1632
      %v1634 = vpop.f32.mrb[0].mxu0
      %1635 = vmatprep.mubr.bf16.mxu0 0
      %1636 = vmatmul.mubr.bf16.gmra.mrb[0].mxu0 %v1400
      %v1637 = vpop.f32.mrb[0].mxu0
      %v1638 = vadd.f32 0.0, %v1637
      %v1639 = vpop.f32.mrb[0].mxu0
      %v1640 = vpop.f32.mrb[0].mxu0
      %v1641 = vadd.f32 0.0, %v1640
      %v1642 = vpop.f32.mrb[0].mxu0
      %1643 = vmatprep.mubr.bf16.mxu0 0
      %1644 = vmatmul.mubr.bf16.gmra.mrb[0].mxu0 %v1408
      %v1645 = vpop.f32.mrb[0].mxu0
      %v1646 = vadd.f32 0.0, %v1645
      %v1647 = vpop.f32.mrb[0].mxu0
      %v1648 = vpop.f32.mrb[0].mxu0
      %v1649 = vadd.f32 0.0, %v1648
      %v1650 = vpop.f32.mrb[0].mxu0
      %1651 = vmatprep.mubr.bf16.mxu0 0
      %1652 = vmatmul.mubr.bf16.gmra.mrb[0].mxu0 %v1416
      %v1653 = vpop.f32.mrb[0].mxu0
      %v1654 = vadd.f32 0.0, %v1653
      %v1655 = vpop.f32.mrb[0].mxu0
      %v1656 = vpop.f32.mrb[0].mxu0
      %v1657 = vadd.f32 0.0, %v1656
      %v1658 = vpop.f32.mrb[0].mxu0
      %1659 = vmatprep.mubr.bf16.mxu0 0
      %1660 = vmatmul.mubr.bf16.gmra.mrb[0].mxu0 %v1424
      %v1661 = vpop.f32.mrb[0].mxu0
      %v1662 = vadd.f32 0.0, %v1661
      %v1663 = vpop.f32.mrb[0].mxu0
      %v1664 = vpop.f32.mrb[0].mxu0
      %v1665 = vadd.f32 0.0, %v1664
      %v1666 = vpop.f32.mrb[0].mxu0
      %1667 = vmatprep.mubr.bf16.mxu0 0
      %1668 = vmatmul.mubr.bf16.gmra.mrb[0].mxu0 %v1432
      %v1669 = vpop.f32.mrb[0].mxu0
      %v1670 = vadd.f32 0.0, %v1669
      %v1671 = vpop.f32.mrb[0].mxu0
      %v1672 = vpop.f32.mrb[0].mxu0
      %v1673 = vadd.f32 0.0, %v1672
      %v1674 = vpop.f32.mrb[0].mxu0
      %1675 = vmatprep.mubr.bf16.mxu0 0
      %1676 = vmatmul.mubr.bf16.gmra.mrb[0].mxu0 %v1440
      %v1677 = vpop.f32.mrb[0].mxu0
      %v1678 = vadd.f32 0.0, %v1677
      %v1679 = vpop.f32.mrb[0].mxu0
      %v1680 = vpop.f32.mrb[0].mxu0
      %v1681 = vadd.f32 0.0, %v1680
      %v1682 = vpop.f32.mrb[0].mxu0
      %1683 = vmatprep.mubr.bf16.mxu0 0
      %1684 = vmatmul.mubr.bf16.gmra.mrb[0].mxu0 %v1448
      %v1685 = vpop.f32.mrb[0].mxu0
      %v1686 = vadd.f32 0.0, %v1685
      %v1687 = vpop.f32.mrb[0].mxu0
      %v1688 = vpop.f32.mrb[0].mxu0
      %v1689 = vadd.f32 0.0, %v1688
      %v1690 = vpop.f32.mrb[0].mxu0
      %1691 = vmatprep.mubr.bf16.mxu0 0
      %1692 = vmatmul.mubr.bf16.gmra.mrb[0].mxu0 %v1456
      %v1693 = vpop.f32.mrb[0].mxu0
      %v1694 = vadd.f32 0.0, %v1693
      %v1695 = vpop.f32.mrb[0].mxu0
      %v1696 = vpop.f32.mrb[0].mxu0
      %v1697 = vadd.f32 0.0, %v1696
      %v1698 = vpop.f32.mrb[0].mxu0
      %1699 = vmatprep.mubr.bf16.mxu0 0
      %1700 = vmatmul.mubr.bf16.gmra.mrb[0].mxu0 %v1464
      %v1701 = vpop.f32.mrb[0].mxu0
      %v1702 = vadd.f32 0.0, %v1701
      %v1703 = vpop.f32.mrb[0].mxu0
      %v1704 = vpop.f32.mrb[0].mxu0
      %v1705 = vadd.f32 0.0, %v1704
      %v1706 = vpop.f32.mrb[0].mxu0
      %1707 = vmatprep.mubr.bf16.mxu0 0
      %1708 = vmatmul.mubr.bf16.gmra.mrb[0].mxu0 %v1472
      %v1709 = vpop.f32.mrb[0].mxu0
      %v1710 = vadd.f32 0.0, %v1709
      %v1711 = vpop.f32.mrb[0].mxu0
      %v1712 = vpop.f32.mrb[0].mxu0
      %v1713 = vadd.f32 0.0, %v1712
      %v1714 = vpop.f32.mrb[0].mxu0
      %1715 = vmatprep.mubr.bf16.mxu0 0
      %1716 = vmatmul.mubr.bf16.gmra.mrb[0].mxu0 %v1480
      %v1717 = vpop.f32.mrb[0].mxu0
      %v1718 = vadd.f32 0.0, %v1717
      %v1719 = vpop.f32.mrb[0].mxu0
      %v1720 = vpop.f32.mrb[0].mxu0
      %v1721 = vadd.f32 0.0, %v1720
      %v1722 = vpop.f32.mrb[0].mxu0
      %1723 = vdwg.mxu0
      %v1740 = vunpack.c.l.b16 %v1299
      %v1741 = vunpack.c.l.b16 %v1300
      %v1742 = vunpack.c.l.b16 %v1301
      %v1743 = vunpack.c.l.b16 %v1302
      %v1744 = vunpack.c.l.b16 %v1303
      %v1745 = vunpack.c.l.b16 %v1304
      %v1746 = vunpack.c.l.b16 %v1305
      %v1747 = vunpack.c.l.b16 %v1306
      %v1748 = vunpack.c.l.b16 %v1307
      %v1749 = vunpack.c.l.b16 %v1308
      %v1750 = vunpack.c.l.b16 %v1309
      %v1751 = vunpack.c.l.b16 %v1310
      %v1752 = vunpack.c.l.b16 %v1311
      %v1753 = vunpack.c.l.b16 %v1312
      %v1754 = vunpack.c.l.b16 %v1313
      %v1755 = vunpack.c.l.b16 %v1314
      %v1756 = vpack.c.b16 %v1741, %v1740
      %v1757 = vpack.c.b16 %v1743, %v1742
      %v1758 = vpack.c.b16 %v1745, %v1744
      %v1759 = vpack.c.b16 %v1747, %v1746
      %v1760 = vpack.c.b16 %v1749, %v1748
      %v1761 = vpack.c.b16 %v1751, %v1750
      %v1762 = vpack.c.b16 %v1753, %v1752
      %v1763 = vpack.c.b16 %v1755, %v1754
      %1772 = vmatprep.subr.bf16.mxu0 0
      %1773 = vmatpush1.bf16.msra.mxu0 %v1756
      %1774 = vmatprep.subr.bf16.mxu0 0
      %1775 = vmatpush1.bf16.msra.mxu0 %v1757
      %1776 = vmatprep.subr.bf16.mxu0 0
      %1777 = vmatpush1.bf16.msra.mxu0 %v1758
      %1778 = vmatprep.subr.bf16.mxu0 0
      %1779 = vmatpush1.bf16.msra.mxu0 %v1759
      %1780 = vmatprep.subr.bf16.mxu0 0
      %1781 = vmatpush1.bf16.msra.mxu0 %v1760
      %1782 = vmatprep.subr.bf16.mxu0 0
      %1783 = vmatpush1.bf16.msra.mxu0 %v1761
      %1784 = vmatprep.subr.bf16.mxu0 0
      %1785 = vmatpush1.bf16.msra.mxu0 %v1762
      %1786 = vmatprep.subr.bf16.mxu0 0
      %1787 = vmatpush1.bf16.msra.mxu0 %v1763
      %1788 = vmatprep.subr.bf16.mxu0 0
      %1789 = vmatpush1.bf16.msra.mxu0 0
      %1790 = vmatprep.subr.bf16.mxu0 0
      %1791 = vmatpush1.bf16.msra.mxu0 0
      %1792 = vmatprep.subr.bf16.mxu0 0
      %1793 = vmatpush1.bf16.msra.mxu0 0
      %1794 = vmatprep.subr.bf16.mxu0 0
      %1795 = vmatpush1.bf16.msra.mxu0 0
      %1796 = vmatprep.subr.bf16.mxu0 0
      %1797 = vmatpush1.bf16.msra.mxu0 0
      %1798 = vmatprep.subr.bf16.mxu0 0
      %1799 = vmatpush1.bf16.msra.mxu0 0
      %1800 = vmatprep.subr.bf16.mxu0 0
      %1801 = vmatpush1.bf16.msra.mxu0 0
      %1802 = vmatprep.subr.bf16.mxu0 0
      %1803 = vmatpush1.bf16.msra.mxu0 0
      %1804 = vmatprep.mubr.bf16.mxu0 0
      %1805 = vmatmul.mubr.bf16.gmra.mrb[0].mxu0 %v1281
      %v1806 = vpop.f32.mrb[0].mxu0
      %v1807 = vadd.f32 %v1582, %v1806
      %v1808 = vpop.f32.mrb[0].mxu0
      %v1809 = vpop.f32.mrb[0].mxu0
      %v1810 = vadd.f32 %v1585, %v1809
      %v1811 = vpop.f32.mrb[0].mxu0
      %1812 = vmatprep.mubr.bf16.mxu0 0
      %1813 = vmatmul.mubr.bf16.gmra.mrb[0].mxu0 %v1282
      %v1814 = vpop.f32.mrb[0].mxu0
      %v1815 = vadd.f32 %v1590, %v1814
      %v1816 = vpop.f32.mrb[0].mxu0
      %v1817 = vpop.f32.mrb[0].mxu0
      %v1818 = vadd.f32 %v1593, %v1817
      %v1819 = vpop.f32.mrb[0].mxu0
      %1820 = vmatprep.mubr.bf16.mxu0 0
      %1821 = vmatmul.mubr.bf16.gmra.mrb[0].mxu0 %v1283
      %v1822 = vpop.f32.mrb[0].mxu0
      %v1823 = vadd.f32 %v1598, %v1822
      %v1824 = vpop.f32.mrb[0].mxu0
      %v1825 = vpop.f32.mrb[0].mxu0
      %v1826 = vadd.f32 %v1601, %v1825
      %v1827 = vpop.f32.mrb[0].mxu0
      %1828 = vmatprep.mubr.bf16.mxu0 0
      %1829 = vmatmul.mubr.bf16.gmra.mrb[0].mxu0 %v1284
      %v1830 = vpop.f32.mrb[0].mxu0
      %v1831 = vadd.f32 %v1606, %v1830
      %v1832 = vpop.f32.mrb[0].mxu0
      %v1833 = vpop.f32.mrb[0].mxu0
      %v1834 = vadd.f32 %v1609, %v1833
      %v1835 = vpop.f32.mrb[0].mxu0
      %1836 = vmatprep.mubr.bf16.mxu0 0
      %1837 = vmatmul.mubr.bf16.gmra.mrb[0].mxu0 %v1285
      %v1838 = vpop.f32.mrb[0].mxu0
      %v1839 = vadd.f32 %v1614, %v1838
      %v1840 = vpop.f32.mrb[0].mxu0
      %v1841 = vpop.f32.mrb[0].mxu0
      %v1842 = vadd.f32 %v1617, %v1841
      %v1843 = vpop.f32.mrb[0].mxu0
      %1844 = vmatprep.mubr.bf16.mxu0 0
      %1845 = vmatmul.mubr.bf16.gmra.mrb[0].mxu0 %v1286
      %v1846 = vpop.f32.mrb[0].mxu0
      %v1847 = vadd.f32 %v1622, %v1846
      %v1848 = vpop.f32.mrb[0].mxu0
      %v1849 = vpop.f32.mrb[0].mxu0
      %v1850 = vadd.f32 %v1625, %v1849
      %v1851 = vpop.f32.mrb[0].mxu0
      %1852 = vmatprep.mubr.bf16.mxu0 0
      %1853 = vmatmul.mubr.bf16.gmra.mrb[0].mxu0 %v1287
      %v1854 = vpop.f32.mrb[0].mxu0
      %v1855 = vadd.f32 %v1630, %v1854
      %v1856 = vpop.f32.mrb[0].mxu0
      %v1857 = vpop.f32.mrb[0].mxu0
      %v1858 = vadd.f32 %v1633, %v1857
      %v1859 = vpop.f32.mrb[0].mxu0
      %1860 = vmatprep.mubr.bf16.mxu0 0
      %1861 = vmatmul.mubr.bf16.gmra.mrb[0].mxu0 %v1288
      %v1862 = vpop.f32.mrb[0].mxu0
      %v1863 = vadd.f32 %v1638, %v1862
      %v1864 = vpop.f32.mrb[0].mxu0
      %v1865 = vpop.f32.mrb[0].mxu0
      %v1866 = vadd.f32 %v1641, %v1865
      %v1867 = vpop.f32.mrb[0].mxu0
      %1868 = vmatprep.mubr.bf16.mxu0 0
      %1869 = vmatmul.mubr.bf16.gmra.mrb[0].mxu0 %v1289
      %v1870 = vpop.f32.mrb[0].mxu0
      %v1871 = vadd.f32 %v1646, %v1870
      %v1872 = vpop.f32.mrb[0].mxu0
      %v1873 = vpop.f32.mrb[0].mxu0
      %v1874 = vadd.f32 %v1649, %v1873
      %v1875 = vpop.f32.mrb[0].mxu0
      %1876 = vmatprep.mubr.bf16.mxu0 0
      %1877 = vmatmul.mubr.bf16.gmra.mrb[0].mxu0 %v1290
      %v1878 = vpop.f32.mrb[0].mxu0
      %v1879 = vadd.f32 %v1654, %v1878
      %v1880 = vpop.f32.mrb[0].mxu0
      %v1881 = vpop.f32.mrb[0].mxu0
      %v1882 = vadd.f32 %v1657, %v1881
      %v1883 = vpop.f32.mrb[0].mxu0
      %1884 = vmatprep.mubr.bf16.mxu0 0
      %1885 = vmatmul.mubr.bf16.gmra.mrb[0].mxu0 %v1291
      %v1886 = vpop.f32.mrb[0].mxu0
      %v1887 = vadd.f32 %v1662, %v1886
      %v1888 = vpop.f32.mrb[0].mxu0
      %v1889 = vpop.f32.mrb[0].mxu0
      %v1890 = vadd.f32 %v1665, %v1889
      %v1891 = vpop.f32.mrb[0].mxu0
      %1892 = vmatprep.mubr.bf16.mxu0 0
      %1893 = vmatmul.mubr.bf16.gmra.mrb[0].mxu0 %v1292
      %v1894 = vpop.f32.mrb[0].mxu0
      %v1895 = vadd.f32 %v1670, %v1894
      %v1896 = vpop.f32.mrb[0].mxu0
      %v1897 = vpop.f32.mrb[0].mxu0
      %v1898 = vadd.f32 %v1673, %v1897
      %v1899 = vpop.f32.mrb[0].mxu0
      %1900 = vmatprep.mubr.bf16.mxu0 0
      %1901 = vmatmul.mubr.bf16.gmra.mrb[0].mxu0 %v1293
      %v1902 = vpop.f32.mrb[0].mxu0
      %v1903 = vadd.f32 %v1678, %v1902
      %v1904 = vpop.f32.mrb[0].mxu0
      %v1905 = vpop.f32.mrb[0].mxu0
      %v1906 = vadd.f32 %v1681, %v1905
      %v1907 = vpop.f32.mrb[0].mxu0
      %1908 = vmatprep.mubr.bf16.mxu0 0
      %1909 = vmatmul.mubr.bf16.gmra.mrb[0].mxu0 %v1294
      %v1910 = vpop.f32.mrb[0].mxu0
      %v1911 = vadd.f32 %v1686, %v1910
      %v1912 = vpop.f32.mrb[0].mxu0
      %v1913 = vpop.f32.mrb[0].mxu0
      %v1914 = vadd.f32 %v1689, %v1913
      %v1915 = vpop.f32.mrb[0].mxu0
      %1916 = vmatprep.mubr.bf16.mxu0 0
      %1917 = vmatmul.mubr.bf16.gmra.mrb[0].mxu0 %v1295
      %v1918 = vpop.f32.mrb[0].mxu0
      %v1919 = vadd.f32 %v1694, %v1918
      %v1920 = vpop.f32.mrb[0].mxu0
      %v1921 = vpop.f32.mrb[0].mxu0
      %v1922 = vadd.f32 %v1697, %v1921
      %v1923 = vpop.f32.mrb[0].mxu0
      %1924 = vmatprep.mubr.bf16.mxu0 0
      %1925 = vmatmul.mubr.bf16.gmra.mrb[0].mxu0 %v1296
      %v1926 = vpop.f32.mrb[0].mxu0
      %v1927 = vadd.f32 %v1702, %v1926
      %v1928 = vpop.f32.mrb[0].mxu0
      %v1929 = vpop.f32.mrb[0].mxu0
      %v1930 = vadd.f32 %v1705, %v1929
      %v1931 = vpop.f32.mrb[0].mxu0
      %1932 = vmatprep.mubr.bf16.mxu0 0
      %1933 = vmatmul.mubr.bf16.gmra.mrb[0].mxu0 %v1297
      %v1934 = vpop.f32.mrb[0].mxu0
      %v1935 = vadd.f32 %v1710, %v1934
      %v1936 = vpop.f32.mrb[0].mxu0
      %v1937 = vpop.f32.mrb[0].mxu0
      %v1938 = vadd.f32 %v1713, %v1937
      %v1939 = vpop.f32.mrb[0].mxu0
      %1940 = vmatprep.mubr.bf16.mxu0 0
      %1941 = vmatmul.mubr.bf16.gmra.mrb[0].mxu0 %v1298
      %v1942 = vpop.f32.mrb[0].mxu0
      %v1943 = vadd.f32 %v1718, %v1942
      %v1944 = vpop.f32.mrb[0].mxu0
      %v1945 = vpop.f32.mrb[0].mxu0
      %v1946 = vadd.f32 %v1721, %v1945
      %v1947 = vpop.f32.mrb[0].mxu0
      %1948 = vdwg.mxu0
      %v1949 = vld [vmem:[#allocation2] sm:$0xfe]
      %v1950 = vld [vmem:[%s4 + $0x80] sm:$0xf]
      %v1951 = vld [vmem:[%s4 + $0x84] sm:$0xf]
      %v1952 = vld [vmem:[%s4 + $0x88] sm:$0xf]
      %v1953 = vld [vmem:[%s4 + $0x8c] sm:$0xf]
      %v1954 = vld [vmem:[%s4 + $0x90] sm:$0xf]
      %v1955 = vld [vmem:[%s4 + $0x94] sm:$0xf]
      %v1956 = vld [vmem:[%s4 + $0x98] sm:$0xf]
      %v1957 = vld [vmem:[%s4 + $0x9c] sm:$0xf]
      %v1958 = vld [vmem:[%s4 + $0xa0] sm:$0xf]
      %v1959 = vld [vmem:[%s4 + $0xa4] sm:$0xf]
      %v1960 = vld [vmem:[%s4 + $0xa8] sm:$0xf]
      %v1961 = vld [vmem:[%s4 + $0xac] sm:$0xf]
      %v1962 = vld [vmem:[%s4 + $0xb0] sm:$0xf]
      %v1963 = vld [vmem:[%s4 + $0xb4] sm:$0xf]
      %v1964 = vld [vmem:[%s4 + $0xb8] sm:$0xf]
      %v1965 = vld [vmem:[%s4 + $0xbc] sm:$0xf]
      %vm1985 = vcmask 1046528
      %v1986 = vrot.slane %v1949, 1
      %v1987 = vrot.slane %v1282, 1
      %v1988 = vsel %vm1985, %v1986, %v1987
      %v1989 = vrot.slane %v1283, 1
      %v1990 = vsel %vm1985, %v1987, %v1989
      %v1991 = vrot.slane %v1284, 1
      %v1992 = vsel %vm1985, %v1989, %v1991
      %v1993 = vrot.slane %v1285, 1
      %v1994 = vsel %vm1985, %v1991, %v1993
      %v1995 = vrot.slane %v1286, 1
      %v1996 = vsel %vm1985, %v1993, %v1995
      %v1997 = vrot.slane %v1287, 1
      %v1998 = vsel %vm1985, %v1995, %v1997
      %v1999 = vrot.slane %v1288, 1
      %v2000 = vsel %vm1985, %v1997, %v1999
      %v2001 = vrot.slane %v1289, 1
      %v2002 = vsel %vm1985, %v1999, %v2001
      %v2003 = vrot.slane %v1290, 1
      %v2004 = vsel %vm1985, %v2001, %v2003
      %v2005 = vrot.slane %v1291, 1
      %v2006 = vsel %vm1985, %v2003, %v2005
      %v2007 = vrot.slane %v1292, 1
      %v2008 = vsel %vm1985, %v2005, %v2007
      %v2009 = vrot.slane %v1293, 1
      %v2010 = vsel %vm1985, %v2007, %v2009
      %v2011 = vrot.slane %v1294, 1
      %v2012 = vsel %vm1985, %v2009, %v2011
      %v2013 = vrot.slane %v1295, 1
      %v2014 = vsel %vm1985, %v2011, %v2013
      %v2015 = vrot.slane %v1296, 1
      %v2016 = vsel %vm1985, %v2013, %v2015
      %v2017 = vrot.slane %v1297, 1
      %v2018 = vsel %vm1985, %v2015, %v2017
      %v2019 = vrot.slane %v1298, 1
      %v2020 = vsel %vm1985, %v2017, %v2019
      %v2021 = vrot.slane %v1315, 1
      %v2022 = vsel %vm1985, %v2019, %v2021
      %v2057 = vunpack.c.l.b16 %v1950
      %v2058 = vunpack.c.l.b16 %v1951
      %v2059 = vunpack.c.l.b16 %v1952
      %v2060 = vunpack.c.l.b16 %v1953
      %v2061 = vunpack.c.l.b16 %v1954
      %v2062 = vunpack.c.l.b16 %v1955
      %v2063 = vunpack.c.l.b16 %v1956
      %v2064 = vunpack.c.l.b16 %v1957
      %v2065 = vunpack.c.l.b16 %v1958
      %v2066 = vunpack.c.l.b16 %v1959
      %v2067 = vunpack.c.l.b16 %v1960
      %v2068 = vunpack.c.l.b16 %v1961
      %v2069 = vunpack.c.l.b16 %v1962
      %v2070 = vunpack.c.l.b16 %v1963
      %v2071 = vunpack.c.l.b16 %v1964
      %v2072 = vunpack.c.l.b16 %v1965
      %v2073 = vpack.c.b16 %v2058, %v2057
      %v2074 = vpack.c.b16 %v2060, %v2059
      %v2075 = vpack.c.b16 %v2062, %v2061
      %v2076 = vpack.c.b16 %v2064, %v2063
      %v2077 = vpack.c.b16 %v2066, %v2065
      %v2078 = vpack.c.b16 %v2068, %v2067
      %v2079 = vpack.c.b16 %v2070, %v2069
      %v2080 = vpack.c.b16 %v2072, %v2071
      %2089 = vmatprep.subr.bf16.mxu0 0
      %2090 = vmatpush1.bf16.msra.mxu0 %v2073
      %2091 = vmatprep.subr.bf16.mxu0 0
      %2092 = vmatpush1.bf16.msra.mxu0 %v2074
      %2093 = vmatprep.subr.bf16.mxu0 0
      %2094 = vmatpush1.bf16.msra.mxu0 %v2075
      %2095 = vmatprep.subr.bf16.mxu0 0
      %2096 = vmatpush1.bf16.msra.mxu0 %v2076
      %2097 = vmatprep.subr.bf16.mxu0 0
      %2098 = vmatpush1.bf16.msra.mxu0 %v2077
      %2099 = vmatprep.subr.bf16.mxu0 0
      %2100 = vmatpush1.bf16.msra.mxu0 %v2078
      %2101 = vmatprep.subr.bf16.mxu0 0
      %2102 = vmatpush1.bf16.msra.mxu0 %v2079
      %2103 = vmatprep.subr.bf16.mxu0 0
      %2104 = vmatpush1.bf16.msra.mxu0 %v2080
      %2105 = vmatprep.subr.bf16.mxu0 0
      %2106 = vmatpush1.bf16.msra.mxu0 0
      %2107 = vmatprep.subr.bf16.mxu0 0
      %2108 = vmatpush1.bf16.msra.mxu0 0
      %2109 = vmatprep.subr.bf16.mxu0 0
      %2110 = vmatpush1.bf16.msra.mxu0 0
      %2111 = vmatprep.subr.bf16.mxu0 0
      %2112 = vmatpush1.bf16.msra.mxu0 0
      %2113 = vmatprep.subr.bf16.mxu0 0
      %2114 = vmatpush1.bf16.msra.mxu0 0
      %2115 = vmatprep.subr.bf16.mxu0 0
      %2116 = vmatpush1.bf16.msra.mxu0 0
      %2117 = vmatprep.subr.bf16.mxu0 0
      %2118 = vmatpush1.bf16.msra.mxu0 0
      %2119 = vmatprep.subr.bf16.mxu0 0
      %2120 = vmatpush1.bf16.msra.mxu0 0
      %2121 = vmatprep.mubr.bf16.mxu0 0
      %2122 = vmatmul.mubr.bf16.gmra.mrb[0].mxu0 %v1988
      %v2123 = vpop.f32.mrb[0].mxu0
      %v2124 = vadd.f32 0.0, %v2123
      %v2125 = vpop.f32.mrb[0].mxu0
      %v2126 = vpop.f32.mrb[0].mxu0
      %v2127 = vadd.f32 0.0, %v2126
      %v2128 = vpop.f32.mrb[0].mxu0
      %2129 = vmatprep.mubr.bf16.mxu0 0
      %2130 = vmatmul.mubr.bf16.gmra.mrb[0].mxu0 %v1990
      %v2131 = vpop.f32.mrb[0].mxu0
      %v2132 = vadd.f32 0.0, %v2131
      %v2133 = vpop.f32.mrb[0].mxu0
      %v2134 = vpop.f32.mrb[0].mxu0
      %v2135 = vadd.f32 0.0, %v2134
      %v2136 = vpop.f32.mrb[0].mxu0
      %2137 = vmatprep.mubr.bf16.mxu0 0
      %2138 = vmatmul.mubr.bf16.gmra.mrb[0].mxu0 %v1992
      %v2139 = vpop.f32.mrb[0].mxu0
      %v2140 = vadd.f32 0.0, %v2139
      %v2141 = vpop.f32.mrb[0].mxu0
      %v2142 = vpop.f32.mrb[0].mxu0
      %v2143 = vadd.f32 0.0, %v2142
      %v2144 = vpop.f32.mrb[0].mxu0
      %2145 = vmatprep.mubr.bf16.mxu0 0
      %2146 = vmatmul.mubr.bf16.gmra.mrb[0].mxu0 %v1994
      %v2147 = vpop.f32.mrb[0].mxu0
      %v2148 = vadd.f32 0.0, %v2147
      %v2149 = vpop.f32.mrb[0].mxu0
      %v2150 = vpop.f32.mrb[0].mxu0
      %v2151 = vadd.f32 0.0, %v2150
      %v2152 = vpop.f32.mrb[0].mxu0
      %2153 = vmatprep.mubr.bf16.mxu0 0
      %2154 = vmatmul.mubr.bf16.gmra.mrb[0].mxu0 %v1996
      %v2155 = vpop.f32.mrb[0].mxu0
      %v2156 = vadd.f32 0.0, %v2155
      %v2157 = vpop.f32.mrb[0].mxu0
      %v2158 = vpop.f32.mrb[0].mxu0
      %v2159 = vadd.f32 0.0, %v2158
      %v2160 = vpop.f32.mrb[0].mxu0
      %2161 = vmatprep.mubr.bf16.mxu0 0
      %2162 = vmatmul.mubr.bf16.gmra.mrb[0].mxu0 %v1998
      %v2163 = vpop.f32.mrb[0].mxu0
      %v2164 = vadd.f32 0.0, %v2163
      %v2165 = vpop.f32.mrb[0].mxu0
      %v2166 = vpop.f32.mrb[0].mxu0
      %v2167 = vadd.f32 0.0, %v2166
      %v2168 = vpop.f32.mrb[0].mxu0
      %2169 = vmatprep.mubr.bf16.mxu0 0
      %2170 = vmatmul.mubr.bf16.gmra.mrb[0].mxu0 %v2000
      %v2171 = vpop.f32.mrb[0].mxu0
      %v2172 = vadd.f32 0.0, %v2171
      %v2173 = vpop.f32.mrb[0].mxu0
      %v2174 = vpop.f32.mrb[0].mxu0
      %v2175 = vadd.f32 0.0, %v2174
      %v2176 = vpop.f32.mrb[0].mxu0
      %2177 = vmatprep.mubr.bf16.mxu0 0
      %2178 = vmatmul.mubr.bf16.gmra.mrb[0].mxu0 %v2002
      %v2179 = vpop.f32.mrb[0].mxu0
      %v2180 = vadd.f32 0.0, %v2179
      %v2181 = vpop.f32.mrb[0].mxu0
      %v2182 = vpop.f32.mrb[0].mxu0
      %v2183 = vadd.f32 0.0, %v2182
      %v2184 = vpop.f32.mrb[0].mxu0
      %2185 = vmatprep.mubr.bf16.mxu0 0
      %2186 = vmatmul.mubr.bf16.gmra.mrb[0].mxu0 %v2004
      %v2187 = vpop.f32.mrb[0].mxu0
      %v2188 = vadd.f32 0.0, %v2187
      %v2189 = vpop.f32.mrb[0].mxu0
      %v2190 = vpop.f32.mrb[0].mxu0
      %v2191 = vadd.f32 0.0, %v2190
      %v2192 = vpop.f32.mrb[0].mxu0
      %2193 = vmatprep.mubr.bf16.mxu0 0
      %2194 = vmatmul.mubr.bf16.gmra.mrb[0].mxu0 %v2006
      %v2195 = vpop.f32.mrb[0].mxu0
      %v2196 = vadd.f32 0.0, %v2195
      %v2197 = vpop.f32.mrb[0].mxu0
      %v2198 = vpop.f32.mrb[0].mxu0
      %v2199 = vadd.f32 0.0, %v2198
      %v2200 = vpop.f32.mrb[0].mxu0
      %2201 = vmatprep.mubr.bf16.mxu0 0
      %2202 = vmatmul.mubr.bf16.gmra.mrb[0].mxu0 %v2008
      %v2203 = vpop.f32.mrb[0].mxu0
      %v2204 = vadd.f32 0.0, %v2203
      %v2205 = vpop.f32.mrb[0].mxu0
      %v2206 = vpop.f32.mrb[0].mxu0
      %v2207 = vadd.f32 0.0, %v2206
      %v2208 = vpop.f32.mrb[0].mxu0
      %2209 = vmatprep.mubr.bf16.mxu0 0
      %2210 = vmatmul.mubr.bf16.gmra.mrb[0].mxu0 %v2010
      %v2211 = vpop.f32.mrb[0].mxu0
      %v2212 = vadd.f32 0.0, %v2211
      %v2213 = vpop.f32.mrb[0].mxu0
      %v2214 = vpop.f32.mrb[0].mxu0
      %v2215 = vadd.f32 0.0, %v2214
      %v2216 = vpop.f32.mrb[0].mxu0
      %2217 = vmatprep.mubr.bf16.mxu0 0
      %2218 = vmatmul.mubr.bf16.gmra.mrb[0].mxu0 %v2012
      %v2219 = vpop.f32.mrb[0].mxu0
      %v2220 = vadd.f32 0.0, %v2219
      %v2221 = vpop.f32.mrb[0].mxu0
      %v2222 = vpop.f32.mrb[0].mxu0
      %v2223 = vadd.f32 0.0, %v2222
      %v2224 = vpop.f32.mrb[0].mxu0
      %2225 = vmatprep.mubr.bf16.mxu0 0
      %2226 = vmatmul.mubr.bf16.gmra.mrb[0].mxu0 %v2014
      %v2227 = vpop.f32.mrb[0].mxu0
      %v2228 = vadd.f32 0.0, %v2227
      %v2229 = vpop.f32.mrb[0].mxu0
      %v2230 = vpop.f32.mrb[0].mxu0
      %v2231 = vadd.f32 0.0, %v2230
      %v2232 = vpop.f32.mrb[0].mxu0
      %2233 = vmatprep.mubr.bf16.mxu0 0
      %2234 = vmatmul.mubr.bf16.gmra.mrb[0].mxu0 %v2016
      %v2235 = vpop.f32.mrb[0].mxu0
      %v2236 = vadd.f32 0.0, %v2235
      %v2237 = vpop.f32.mrb[0].mxu0
      %v2238 = vpop.f32.mrb[0].mxu0
      %v2239 = vadd.f32 0.0, %v2238
      %v2240 = vpop.f32.mrb[0].mxu0
      %2241 = vmatprep.mubr.bf16.mxu0 0
      %2242 = vmatmul.mubr.bf16.gmra.mrb[0].mxu0 %v2018
      %v2243 = vpop.f32.mrb[0].mxu0
      %v2244 = vadd.f32 0.0, %v2243
      %v2245 = vpop.f32.mrb[0].mxu0
      %v2246 = vpop.f32.mrb[0].mxu0
      %v2247 = vadd.f32 0.0, %v2246
      %v2248 = vpop.f32.mrb[0].mxu0
      %2249 = vmatprep.mubr.bf16.mxu0 0
      %2250 = vmatmul.mubr.bf16.gmra.mrb[0].mxu0 %v2020
      %v2251 = vpop.f32.mrb[0].mxu0
      %v2252 = vadd.f32 0.0, %v2251
      %v2253 = vpop.f32.mrb[0].mxu0
      %v2254 = vpop.f32.mrb[0].mxu0
      %v2255 = vadd.f32 0.0, %v2254
      %v2256 = vpop.f32.mrb[0].mxu0
      %2257 = vmatprep.mubr.bf16.mxu0 0
      %2258 = vmatmul.mubr.bf16.gmra.mrb[0].mxu0 %v2022
      %v2259 = vpop.f32.mrb[0].mxu0
      %v2260 = vadd.f32 0.0, %v2259
      %v2261 = vpop.f32.mrb[0].mxu0
      %v2262 = vpop.f32.mrb[0].mxu0
      %v2263 = vadd.f32 0.0, %v2262
      %v2264 = vpop.f32.mrb[0].mxu0
      %2265 = vdwg.mxu0
      %v2266 = vadd.f32 %v1807, %v2124
      %v2267 = vadd.f32 %v1810, %v2127
      %v2268 = vadd.f32 %v1815, %v2132
      %v2269 = vadd.f32 %v1818, %v2135
      %v2270 = vadd.f32 %v1823, %v2140
      %v2271 = vadd.f32 %v1826, %v2143
      %v2272 = vadd.f32 %v1831, %v2148
      %v2273 = vadd.f32 %v1834, %v2151
      %v2274 = vadd.f32 %v1839, %v2156
      %v2275 = vadd.f32 %v1842, %v2159
      %v2276 = vadd.f32 %v1847, %v2164
      %v2277 = vadd.f32 %v1850, %v2167
      %v2278 = vadd.f32 %v1855, %v2172
      %v2279 = vadd.f32 %v1858, %v2175
      %v2280 = vadd.f32 %v1863, %v2180
      %v2281 = vadd.f32 %v1866, %v2183
      %v2282 = vadd.f32 %v1871, %v2188
      %v2283 = vadd.f32 %v1874, %v2191
      %v2284 = vadd.f32 %v1879, %v2196
      %v2285 = vadd.f32 %v1882, %v2199
      %v2286 = vadd.f32 %v1887, %v2204
      %v2287 = vadd.f32 %v1890, %v2207
      %v2288 = vadd.f32 %v1895, %v2212
      %v2289 = vadd.f32 %v1898, %v2215
      %v2290 = vadd.f32 %v1903, %v2220
      %v2291 = vadd.f32 %v1906, %v2223
      %v2292 = vadd.f32 %v1911, %v2228
      %v2293 = vadd.f32 %v1914, %v2231
      %v2294 = vadd.f32 %v1919, %v2236
      %v2295 = vadd.f32 %v1922, %v2239
      %v2296 = vadd.f32 %v1927, %v2244
      %v2297 = vadd.f32 %v1930, %v2247
      %v2298 = vadd.f32 %v1935, %v2252
      %v2299 = vadd.f32 %v1938, %v2255
      %v2300 = vadd.f32 %v1943, %v2260
      %v2301 = vadd.f32 %v1946, %v2263
      %v2302 = vld [vmem:[#allocation2 + $0x8] sm:$0xfe]
      %v2303 = vld [vmem:[#allocation2 + $0x10] sm:$0xff]
      %v2304 = vld [vmem:[#allocation2 + $0x18] sm:$0xff]
      %v2305 = vld [vmem:[#allocation2 + $0x20] sm:$0xff]
      %v2306 = vld [vmem:[#allocation2 + $0x28] sm:$0xff]
      %v2307 = vld [vmem:[#allocation2 + $0x30] sm:$0xff]
      %v2308 = vld [vmem:[#allocation2 + $0x38] sm:$0xff]
      %v2309 = vld [vmem:[#allocation2 + $0x40] sm:$0xff]
      %v2310 = vld [vmem:[#allocation2 + $0x48] sm:$0xff]
      %v2311 = vld [vmem:[#allocation2 + $0x50] sm:$0xff]
      %v2312 = vld [vmem:[#allocation2 + $0x58] sm:$0xff]
      %v2313 = vld [vmem:[#allocation2 + $0x60] sm:$0xff]
      %v2314 = vld [vmem:[#allocation2 + $0x68] sm:$0xff]
      %v2315 = vld [vmem:[#allocation2 + $0x70] sm:$0xff]
      %v2316 = vld [vmem:[#allocation2 + $0x78] sm:$0xff]
      %v2317 = vld [vmem:[#allocation2 + $0x80] sm:$0xff]
      %v2318 = vld [vmem:[#allocation2 + $0x88] sm:$0xff]
      %v2319 = vld [vmem:[#allocation2 + $0x90] sm:$0xff]
      %v2320 = vld [vmem:[#allocation2 + $0x98] sm:$0x1]
      %v2321 = vld [vmem:[%s4 + $0xc0] sm:$0xf]
      %v2322 = vld [vmem:[%s4 + $0xc4] sm:$0xf]
      %v2323 = vld [vmem:[%s4 + $0xc8] sm:$0xf]
      %v2324 = vld [vmem:[%s4 + $0xcc] sm:$0xf]
      %v2325 = vld [vmem:[%s4 + $0xd0] sm:$0xf]
      %v2326 = vld [vmem:[%s4 + $0xd4] sm:$0xf]
      %v2327 = vld [vmem:[%s4 + $0xd8] sm:$0xf]
      %v2328 = vld [vmem:[%s4 + $0xdc] sm:$0xf]
      %v2329 = vld [vmem:[%s4 + $0xe0] sm:$0xf]
      %v2330 = vld [vmem:[%s4 + $0xe4] sm:$0xf]
      %v2331 = vld [vmem:[%s4 + $0xe8] sm:$0xf]
      %v2332 = vld [vmem:[%s4 + $0xec] sm:$0xf]
      %v2333 = vld [vmem:[%s4 + $0xf0] sm:$0xf]
      %v2334 = vld [vmem:[%s4 + $0xf4] sm:$0xf]
      %v2335 = vld [vmem:[%s4 + $0xf8] sm:$0xf]
      %v2336 = vld [vmem:[%s4 + $0xfc] sm:$0xf]
      %v2356 = vrot.slane %v2302, 1
      %v2357 = vrot.slane %v2303, 1
      %v2358 = vsel %vm1985, %v2356, %v2357
      %v2359 = vrot.slane %v2304, 1
      %v2360 = vsel %vm1985, %v2357, %v2359
      %v2361 = vrot.slane %v2305, 1
      %v2362 = vsel %vm1985, %v2359, %v2361
      %v2363 = vrot.slane %v2306, 1
      %v2364 = vsel %vm1985, %v2361, %v2363
      %v2365 = vrot.slane %v2307, 1
      %v2366 = vsel %vm1985, %v2363, %v2365
      %v2367 = vrot.slane %v2308, 1
      %v2368 = vsel %vm1985, %v2365, %v2367
      %v2369 = vrot.slane %v2309, 1
      %v2370 = vsel %vm1985, %v2367, %v2369
      %v2371 = vrot.slane %v2310, 1
      %v2372 = vsel %vm1985, %v2369, %v2371
      %v2373 = vrot.slane %v2311, 1
      %v2374 = vsel %vm1985, %v2371, %v2373
      %v2375 = vrot.slane %v2312, 1
      %v2376 = vsel %vm1985, %v2373, %v2375
      %v2377 = vrot.slane %v2313, 1
      %v2378 = vsel %vm1985, %v2375, %v2377
      %v2379 = vrot.slane %v2314, 1
      %v2380 = vsel %vm1985, %v2377, %v2379
      %v2381 = vrot.slane %v2315, 1
      %v2382 = vsel %vm1985, %v2379, %v2381
      %v2383 = vrot.slane %v2316, 1
      %v2384 = vsel %vm1985, %v2381, %v2383
      %v2385 = vrot.slane %v2317, 1
      %v2386 = vsel %vm1985, %v2383, %v2385
      %v2387 = vrot.slane %v2318, 1
      %v2388 = vsel %vm1985, %v2385, %v2387
      %v2389 = vrot.slane %v2319, 1
      %v2390 = vsel %vm1985, %v2387, %v2389
      %v2391 = vrot.slane %v2320, 1
      %v2392 = vsel %vm1985, %v2389, %v2391
      %v2427 = vunpack.c.l.b16 %v2321
      %v2428 = vunpack.c.l.b16 %v2322
      %v2429 = vunpack.c.l.b16 %v2323
      %v2430 = vunpack.c.l.b16 %v2324
      %v2431 = vunpack.c.l.b16 %v2325
      %v2432 = vunpack.c.l.b16 %v2326
      %v2433 = vunpack.c.l.b16 %v2327
      %v2434 = vunpack.c.l.b16 %v2328
      %v2435 = vunpack.c.l.b16 %v2329
      %v2436 = vunpack.c.l.b16 %v2330
      %v2437 = vunpack.c.l.b16 %v2331
      %v2438 = vunpack.c.l.b16 %v2332
      %v2439 = vunpack.c.l.b16 %v2333
      %v2440 = vunpack.c.l.b16 %v2334
      %v2441 = vunpack.c.l.b16 %v2335
      %v2442 = vunpack.c.l.b16 %v2336
      %v2443 = vpack.c.b16 %v2428, %v2427
      %v2444 = vpack.c.b16 %v2430, %v2429
      %v2445 = vpack.c.b16 %v2432, %v2431
      %v2446 = vpack.c.b16 %v2434, %v2433
      %v2447 = vpack.c.b16 %v2436, %v2435
      %v2448 = vpack.c.b16 %v2438, %v2437
      %v2449 = vpack.c.b16 %v2440, %v2439
      %v2450 = vpack.c.b16 %v2442, %v2441
      %2459 = vmatprep.subr.bf16.mxu0 0
      %2460 = vmatpush1.bf16.msra.mxu0 %v2443
      %2461 = vmatprep.subr.bf16.mxu0 0
      %2462 = vmatpush1.bf16.msra.mxu0 %v2444
      %2463 = vmatprep.subr.bf16.mxu0 0
      %2464 = vmatpush1.bf16.msra.mxu0 %v2445
      %2465 = vmatprep.subr.bf16.mxu0 0
      %2466 = vmatpush1.bf16.msra.mxu0 %v2446
      %2467 = vmatprep.subr.bf16.mxu0 0
      %2468 = vmatpush1.bf16.msra.mxu0 %v2447
      %2469 = vmatprep.subr.bf16.mxu0 0
      %2470 = vmatpush1.bf16.msra.mxu0 %v2448
      %2471 = vmatprep.subr.bf16.mxu0 0
      %2472 = vmatpush1.bf16.msra.mxu0 %v2449
      %2473 = vmatprep.subr.bf16.mxu0 0
      %2474 = vmatpush1.bf16.msra.mxu0 %v2450
      %2475 = vmatprep.subr.bf16.mxu0 0
      %2476 = vmatpush1.bf16.msra.mxu0 0
      %2477 = vmatprep.subr.bf16.mxu0 0
      %2478 = vmatpush1.bf16.msra.mxu0 0
      %2479 = vmatprep.subr.bf16.mxu0 0
      %2480 = vmatpush1.bf16.msra.mxu0 0
      %2481 = vmatprep.subr.bf16.mxu0 0
      %2482 = vmatpush1.bf16.msra.mxu0 0
      %2483 = vmatprep.subr.bf16.mxu0 0
      %2484 = vmatpush1.bf16.msra.mxu0 0
      %2485 = vmatprep.subr.bf16.mxu0 0
      %2486 = vmatpush1.bf16.msra.mxu0 0
      %2487 = vmatprep.subr.bf16.mxu0 0
      %2488 = vmatpush1.bf16.msra.mxu0 0
      %2489 = vmatprep.subr.bf16.mxu0 0
      %2490 = vmatpush1.bf16.msra.mxu0 0
      %2491 = vmatprep.mubr.bf16.mxu0 0
      %2492 = vmatmul.mubr.bf16.gmra.mrb[0].mxu0 %v2358
      %v2493 = vpop.f32.mrb[0].mxu0
      %v2494 = vadd.f32 0.0, %v2493
      %v2495 = vpop.f32.mrb[0].mxu0
      %v2496 = vpop.f32.mrb[0].mxu0
      %v2497 = vadd.f32 0.0, %v2496
      %v2498 = vpop.f32.mrb[0].mxu0
      %2499 = vmatprep.mubr.bf16.mxu0 0
      %2500 = vmatmul.mubr.bf16.gmra.mrb[0].mxu0 %v2360
      %v2501 = vpop.f32.mrb[0].mxu0
      %v2502 = vadd.f32 0.0, %v2501
      %v2503 = vpop.f32.mrb[0].mxu0
      %v2504 = vpop.f32.mrb[0].mxu0
      %v2505 = vadd.f32 0.0, %v2504
      %v2506 = vpop.f32.mrb[0].mxu0
      %2507 = vmatprep.mubr.bf16.mxu0 0
      %2508 = vmatmul.mubr.bf16.gmra.mrb[0].mxu0 %v2362
      %v2509 = vpop.f32.mrb[0].mxu0
      %v2510 = vadd.f32 0.0, %v2509
      %v2511 = vpop.f32.mrb[0].mxu0
      %v2512 = vpop.f32.mrb[0].mxu0
      %v2513 = vadd.f32 0.0, %v2512
      %v2514 = vpop.f32.mrb[0].mxu0
      %2515 = vmatprep.mubr.bf16.mxu0 0
      %2516 = vmatmul.mubr.bf16.gmra.mrb[0].mxu0 %v2364
      %v2517 = vpop.f32.mrb[0].mxu0
      %v2518 = vadd.f32 0.0, %v2517
      %v2519 = vpop.f32.mrb[0].mxu0
      %v2520 = vpop.f32.mrb[0].mxu0
      %v2521 = vadd.f32 0.0, %v2520
      %v2522 = vpop.f32.mrb[0].mxu0
      %2523 = vmatprep.mubr.bf16.mxu0 0
      %2524 = vmatmul.mubr.bf16.gmra.mrb[0].mxu0 %v2366
      %v2525 = vpop.f32.mrb[0].mxu0
      %v2526 = vadd.f32 0.0, %v2525
      %v2527 = vpop.f32.mrb[0].mxu0
      %v2528 = vpop.f32.mrb[0].mxu0
      %v2529 = vadd.f32 0.0, %v2528
      %v2530 = vpop.f32.mrb[0].mxu0
      %2531 = vmatprep.mubr.bf16.mxu0 0
      %2532 = vmatmul.mubr.bf16.gmra.mrb[0].mxu0 %v2368
      %v2533 = vpop.f32.mrb[0].mxu0
      %v2534 = vadd.f32 0.0, %v2533
      %v2535 = vpop.f32.mrb[0].mxu0
      %v2536 = vpop.f32.mrb[0].mxu0
      %v2537 = vadd.f32 0.0, %v2536
      %v2538 = vpop.f32.mrb[0].mxu0
      %2539 = vmatprep.mubr.bf16.mxu0 0
      %2540 = vmatmul.mubr.bf16.gmra.mrb[0].mxu0 %v2370
      %v2541 = vpop.f32.mrb[0].mxu0
      %v2542 = vadd.f32 0.0, %v2541
      %v2543 = vpop.f32.mrb[0].mxu0
      %v2544 = vpop.f32.mrb[0].mxu0
      %v2545 = vadd.f32 0.0, %v2544
      %v2546 = vpop.f32.mrb[0].mxu0
      %2547 = vmatprep.mubr.bf16.mxu0 0
      %2548 = vmatmul.mubr.bf16.gmra.mrb[0].mxu0 %v2372
      %v2549 = vpop.f32.mrb[0].mxu0
      %v2550 = vadd.f32 0.0, %v2549
      %v2551 = vpop.f32.mrb[0].mxu0
      %v2552 = vpop.f32.mrb[0].mxu0
      %v2553 = vadd.f32 0.0, %v2552
      %v2554 = vpop.f32.mrb[0].mxu0
      %2555 = vmatprep.mubr.bf16.mxu0 0
      %2556 = vmatmul.mubr.bf16.gmra.mrb[0].mxu0 %v2374
      %v2557 = vpop.f32.mrb[0].mxu0
      %v2558 = vadd.f32 0.0, %v2557
      %v2559 = vpop.f32.mrb[0].mxu0
      %v2560 = vpop.f32.mrb[0].mxu0
      %v2561 = vadd.f32 0.0, %v2560
      %v2562 = vpop.f32.mrb[0].mxu0
      %2563 = vmatprep.mubr.bf16.mxu0 0
      %2564 = vmatmul.mubr.bf16.gmra.mrb[0].mxu0 %v2376
      %v2565 = vpop.f32.mrb[0].mxu0
      %v2566 = vadd.f32 0.0, %v2565
      %v2567 = vpop.f32.mrb[0].mxu0
      %v2568 = vpop.f32.mrb[0].mxu0
      %v2569 = vadd.f32 0.0, %v2568
      %v2570 = vpop.f32.mrb[0].mxu0
      %2571 = vmatprep.mubr.bf16.mxu0 0
      %2572 = vmatmul.mubr.bf16.gmra.mrb[0].mxu0 %v2378
      %v2573 = vpop.f32.mrb[0].mxu0
      %v2574 = vadd.f32 0.0, %v2573
      %v2575 = vpop.f32.mrb[0].mxu0
      %v2576 = vpop.f32.mrb[0].mxu0
      %v2577 = vadd.f32 0.0, %v2576
      %v2578 = vpop.f32.mrb[0].mxu0
      %2579 = vmatprep.mubr.bf16.mxu0 0
      %2580 = vmatmul.mubr.bf16.gmra.mrb[0].mxu0 %v2380
      %v2581 = vpop.f32.mrb[0].mxu0
      %v2582 = vadd.f32 0.0, %v2581
      %v2583 = vpop.f32.mrb[0].mxu0
      %v2584 = vpop.f32.mrb[0].mxu0
      %v2585 = vadd.f32 0.0, %v2584
      %v2586 = vpop.f32.mrb[0].mxu0
      %2587 = vmatprep.mubr.bf16.mxu0 0
      %2588 = vmatmul.mubr.bf16.gmra.mrb[0].mxu0 %v2382
      %v2589 = vpop.f32.mrb[0].mxu0
      %v2590 = vadd.f32 0.0, %v2589
      %v2591 = vpop.f32.mrb[0].mxu0
      %v2592 = vpop.f32.mrb[0].mxu0
      %v2593 = vadd.f32 0.0, %v2592
      %v2594 = vpop.f32.mrb[0].mxu0
      %2595 = vmatprep.mubr.bf16.mxu0 0
      %2596 = vmatmul.mubr.bf16.gmra.mrb[0].mxu0 %v2384
      %v2597 = vpop.f32.mrb[0].mxu0
      %v2598 = vadd.f32 0.0, %v2597
      %v2599 = vpop.f32.mrb[0].mxu0
      %v2600 = vpop.f32.mrb[0].mxu0
      %v2601 = vadd.f32 0.0, %v2600
      %v2602 = vpop.f32.mrb[0].mxu0
      %2603 = vmatprep.mubr.bf16.mxu0 0
      %2604 = vmatmul.mubr.bf16.gmra.mrb[0].mxu0 %v2386
      %v2605 = vpop.f32.mrb[0].mxu0
      %v2606 = vadd.f32 0.0, %v2605
      %v2607 = vpop.f32.mrb[0].mxu0
      %v2608 = vpop.f32.mrb[0].mxu0
      %v2609 = vadd.f32 0.0, %v2608
      %v2610 = vpop.f32.mrb[0].mxu0
      %2611 = vmatprep.mubr.bf16.mxu0 0
      %2612 = vmatmul.mubr.bf16.gmra.mrb[0].mxu0 %v2388
      %v2613 = vpop.f32.mrb[0].mxu0
      %v2614 = vadd.f32 0.0, %v2613
      %v2615 = vpop.f32.mrb[0].mxu0
      %v2616 = vpop.f32.mrb[0].mxu0
      %v2617 = vadd.f32 0.0, %v2616
      %v2618 = vpop.f32.mrb[0].mxu0
      %2619 = vmatprep.mubr.bf16.mxu0 0
      %2620 = vmatmul.mubr.bf16.gmra.mrb[0].mxu0 %v2390
      %v2621 = vpop.f32.mrb[0].mxu0
      %v2622 = vadd.f32 0.0, %v2621
      %v2623 = vpop.f32.mrb[0].mxu0
      %v2624 = vpop.f32.mrb[0].mxu0
      %v2625 = vadd.f32 0.0, %v2624
      %v2626 = vpop.f32.mrb[0].mxu0
      %2627 = vmatprep.mubr.bf16.mxu0 0
      %2628 = vmatmul.mubr.bf16.gmra.mrb[0].mxu0 %v2392
      %v2629 = vpop.f32.mrb[0].mxu0
      %v2630 = vadd.f32 0.0, %v2629
      %v2631 = vpop.f32.mrb[0].mxu0
      %v2632 = vpop.f32.mrb[0].mxu0
      %v2633 = vadd.f32 0.0, %v2632
      %v2634 = vpop.f32.mrb[0].mxu0
      %2635 = vdwg.mxu0
      %v2636 = vadd.f32 %v2266, %v2494
      %v2637 = vadd.f32 %v2267, %v2497
      %v2638 = vadd.f32 %v2268, %v2502
      %v2639 = vadd.f32 %v2269, %v2505
      %v2640 = vadd.f32 %v2270, %v2510
      %v2641 = vadd.f32 %v2271, %v2513
      %v2642 = vadd.f32 %v2272, %v2518
      %v2643 = vadd.f32 %v2273, %v2521
      %v2644 = vadd.f32 %v2274, %v2526
      %v2645 = vadd.f32 %v2275, %v2529
      %v2646 = vadd.f32 %v2276, %v2534
      %v2647 = vadd.f32 %v2277, %v2537
      %v2648 = vadd.f32 %v2278, %v2542
      %v2649 = vadd.f32 %v2279, %v2545
      %v2650 = vadd.f32 %v2280, %v2550
      %v2651 = vadd.f32 %v2281, %v2553
      %v2652 = vadd.f32 %v2282, %v2558
      %v2653 = vadd.f32 %v2283, %v2561
      %v2654 = vadd.f32 %v2284, %v2566
      %v2655 = vadd.f32 %v2285, %v2569
      %v2656 = vadd.f32 %v2286, %v2574
      %v2657 = vadd.f32 %v2287, %v2577
      %v2658 = vadd.f32 %v2288, %v2582
      %v2659 = vadd.f32 %v2289, %v2585
      %v2660 = vadd.f32 %v2290, %v2590
      %v2661 = vadd.f32 %v2291, %v2593
      %v2662 = vadd.f32 %v2292, %v2598
      %v2663 = vadd.f32 %v2293, %v2601
      %v2664 = vadd.f32 %v2294, %v2606
      %v2665 = vadd.f32 %v2295, %v2609
      %v2666 = vadd.f32 %v2296, %v2614
      %v2667 = vadd.f32 %v2297, %v2617
      %v2668 = vadd.f32 %v2298, %v2622
      %v2669 = vadd.f32 %v2299, %v2625
      %v2670 = vadd.f32 %v2300, %v2630
      %v2671 = vadd.f32 %v2301, %v2633
      %v2672 = vld [vmem:[#allocation2 + $0x98] sm:$0x3]
      %v2673 = vld [vmem:[%s4 + $0x100] sm:$0xf]
      %v2674 = vld [vmem:[%s4 + $0x104] sm:$0xf]
      %v2675 = vld [vmem:[%s4 + $0x108] sm:$0xf]
      %v2676 = vld [vmem:[%s4 + $0x10c] sm:$0xf]
      %v2677 = vld [vmem:[%s4 + $0x110] sm:$0xf]
      %v2678 = vld [vmem:[%s4 + $0x114] sm:$0xf]
      %v2679 = vld [vmem:[%s4 + $0x118] sm:$0xf]
      %v2680 = vld [vmem:[%s4 + $0x11c] sm:$0xf]
      %v2681 = vld [vmem:[%s4 + $0x120] sm:$0xf]
      %v2682 = vld [vmem:[%s4 + $0x124] sm:$0xf]
      %v2683 = vld [vmem:[%s4 + $0x128] sm:$0xf]
      %v2684 = vld [vmem:[%s4 + $0x12c] sm:$0xf]
      %v2685 = vld [vmem:[%s4 + $0x130] sm:$0xf]
      %v2686 = vld [vmem:[%s4 + $0x134] sm:$0xf]
      %v2687 = vld [vmem:[%s4 + $0x138] sm:$0xf]
      %v2688 = vld [vmem:[%s4 + $0x13c] sm:$0xf]
      %vm2689 = vsmask.f32 6400
      %v2691 = vshrl.u32 %v2302, 16
      %v2693 = vrot.slane %v2691, 1
      %v2694 = vshll.u32 %v2302, 16
      %v2696 = vrot.slane %v2694, 2
      %v2697 = vor.u32 %v2693, %v2696
      %v2699 = vshrl.u32 %v2303, 16
      %v2701 = vrot.slane %v2699, 1
      %v2702 = vshll.u32 %v2303, 16
      %v2704 = vrot.slane %v2702, 2
      %v2705 = vor.u32 %v2701, %v2704
      %v2706 = vsel %vm2689, %v2697, %v2705
      %v2708 = vshrl.u32 %v2304, 16
      %v2710 = vrot.slane %v2708, 1
      %v2711 = vshll.u32 %v2304, 16
      %v2713 = vrot.slane %v2711, 2
      %v2714 = vor.u32 %v2710, %v2713
      %v2715 = vsel %vm2689, %v2705, %v2714
      %v2717 = vshrl.u32 %v2305, 16
      %v2719 = vrot.slane %v2717, 1
      %v2720 = vshll.u32 %v2305, 16
      %v2722 = vrot.slane %v2720, 2
      %v2723 = vor.u32 %v2719, %v2722
      %v2724 = vsel %vm2689, %v2714, %v2723
      %v2726 = vshrl.u32 %v2306, 16
      %v2728 = vrot.slane %v2726, 1
      %v2729 = vshll.u32 %v2306, 16
      %v2731 = vrot.slane %v2729, 2
      %v2732 = vor.u32 %v2728, %v2731
      %v2733 = vsel %vm2689, %v2723, %v2732
      %v2735 = vshrl.u32 %v2307, 16
      %v2737 = vrot.slane %v2735, 1
      %v2738 = vshll.u32 %v2307, 16
      %v2740 = vrot.slane %v2738, 2
      %v2741 = vor.u32 %v2737, %v2740
      %v2742 = vsel %vm2689, %v2732, %v2741
      %v2744 = vshrl.u32 %v2308, 16
      %v2746 = vrot.slane %v2744, 1
      %v2747 = vshll.u32 %v2308, 16
      %v2749 = vrot.slane %v2747, 2
      %v2750 = vor.u32 %v2746, %v2749
      %v2751 = vsel %vm2689, %v2741, %v2750
      %v2753 = vshrl.u32 %v2309, 16
      %v2755 = vrot.slane %v2753, 1
      %v2756 = vshll.u32 %v2309, 16
      %v2758 = vrot.slane %v2756, 2
      %v2759 = vor.u32 %v2755, %v2758
      %v2760 = vsel %vm2689, %v2750, %v2759
      %v2762 = vshrl.u32 %v2310, 16
      %v2764 = vrot.slane %v2762, 1
      %v2765 = vshll.u32 %v2310, 16
      %v2767 = vrot.slane %v2765, 2
      %v2768 = vor.u32 %v2764, %v2767
      %v2769 = vsel %vm2689, %v2759, %v2768
      %v2771 = vshrl.u32 %v2311, 16
      %v2773 = vrot.slane %v2771, 1
      %v2774 = vshll.u32 %v2311, 16
      %v2776 = vrot.slane %v2774, 2
      %v2777 = vor.u32 %v2773, %v2776
      %v2778 = vsel %vm2689, %v2768, %v2777
      %v2780 = vshrl.u32 %v2312, 16
      %v2782 = vrot.slane %v2780, 1
      %v2783 = vshll.u32 %v2312, 16
      %v2785 = vrot.slane %v2783, 2
      %v2786 = vor.u32 %v2782, %v2785
      %v2787 = vsel %vm2689, %v2777, %v2786
      %v2789 = vshrl.u32 %v2313, 16
      %v2791 = vrot.slane %v2789, 1
      %v2792 = vshll.u32 %v2313, 16
      %v2794 = vrot.slane %v2792, 2
      %v2795 = vor.u32 %v2791, %v2794
      %v2796 = vsel %vm2689, %v2786, %v2795
      %v2798 = vshrl.u32 %v2314, 16
      %v2800 = vrot.slane %v2798, 1
      %v2801 = vshll.u32 %v2314, 16
      %v2803 = vrot.slane %v2801, 2
      %v2804 = vor.u32 %v2800, %v2803
      %v2805 = vsel %vm2689, %v2795, %v2804
      %v2807 = vshrl.u32 %v2315, 16
      %v2809 = vrot.slane %v2807, 1
      %v2810 = vshll.u32 %v2315, 16
      %v2812 = vrot.slane %v2810, 2
      %v2813 = vor.u32 %v2809, %v2812
      %v2814 = vsel %vm2689, %v2804, %v2813
      %v2816 = vshrl.u32 %v2316, 16
      %v2818 = vrot.slane %v2816, 1
      %v2819 = vshll.u32 %v2316, 16
      %v2821 = vrot.slane %v2819, 2
      %v2822 = vor.u32 %v2818, %v2821
      %v2823 = vsel %vm2689, %v2813, %v2822
      %v2825 = vshrl.u32 %v2317, 16
      %v2827 = vrot.slane %v2825, 1
      %v2828 = vshll.u32 %v2317, 16
      %v2830 = vrot.slane %v2828, 2
      %v2831 = vor.u32 %v2827, %v2830
      %v2832 = vsel %vm2689, %v2822, %v2831
      %v2834 = vshrl.u32 %v2318, 16
      %v2836 = vrot.slane %v2834, 1
      %v2837 = vshll.u32 %v2318, 16
      %v2839 = vrot.slane %v2837, 2
      %v2840 = vor.u32 %v2836, %v2839
      %v2841 = vsel %vm2689, %v2831, %v2840
      %v2843 = vshrl.u32 %v2319, 16
      %v2845 = vrot.slane %v2843, 1
      %v2846 = vshll.u32 %v2319, 16
      %v2848 = vrot.slane %v2846, 2
      %v2849 = vor.u32 %v2845, %v2848
      %v2850 = vsel %vm2689, %v2840, %v2849
      %v2852 = vshrl.u32 %v2672, 16
      %v2854 = vrot.slane %v2852, 1
      %v2855 = vshll.u32 %v2672, 16
      %v2857 = vrot.slane %v2855, 2
      %v2858 = vor.u32 %v2854, %v2857
      %v2859 = vsel %vm2689, %v2849, %v2858
      %v2894 = vunpack.c.l.b16 %v2673
      %v2895 = vunpack.c.l.b16 %v2674
      %v2896 = vunpack.c.l.b16 %v2675
      %v2897 = vunpack.c.l.b16 %v2676
      %v2898 = vunpack.c.l.b16 %v2677
      %v2899 = vunpack.c.l.b16 %v2678
      %v2900 = vunpack.c.l.b16 %v2679
      %v2901 = vunpack.c.l.b16 %v2680
      %v2902 = vunpack.c.l.b16 %v2681
      %v2903 = vunpack.c.l.b16 %v2682
      %v2904 = vunpack.c.l.b16 %v2683
      %v2905 = vunpack.c.l.b16 %v2684
      %v2906 = vunpack.c.l.b16 %v2685
      %v2907 = vunpack.c.l.b16 %v2686
      %v2908 = vunpack.c.l.b16 %v2687
      %v2909 = vunpack.c.l.b16 %v2688
      %v2910 = vpack.c.b16 %v2895, %v2894
      %v2911 = vpack.c.b16 %v2897, %v2896
      %v2912 = vpack.c.b16 %v2899, %v2898
      %v2913 = vpack.c.b16 %v2901, %v2900
      %v2914 = vpack.c.b16 %v2903, %v2902
      %v2915 = vpack.c.b16 %v2905, %v2904
      %v2916 = vpack.c.b16 %v2907, %v2906
      %v2917 = vpack.c.b16 %v2909, %v2908
      %2926 = vmatprep.subr.bf16.mxu0 0
      %2927 = vmatpush1.bf16.msra.mxu0 %v2910
      %2928 = vmatprep.subr.bf16.mxu0 0
      %2929 = vmatpush1.bf16.msra.mxu0 %v2911
      %2930 = vmatprep.subr.bf16.mxu0 0
      %2931 = vmatpush1.bf16.msra.mxu0 %v2912
      %2932 = vmatprep.subr.bf16.mxu0 0
      %2933 = vmatpush1.bf16.msra.mxu0 %v2913
      %2934 = vmatprep.subr.bf16.mxu0 0
      %2935 = vmatpush1.bf16.msra.mxu0 %v2914
      %2936 = vmatprep.subr.bf16.mxu0 0
      %2937 = vmatpush1.bf16.msra.mxu0 %v2915
      %2938 = vmatprep.subr.bf16.mxu0 0
      %2939 = vmatpush1.bf16.msra.mxu0 %v2916
      %2940 = vmatprep.subr.bf16.mxu0 0
      %2941 = vmatpush1.bf16.msra.mxu0 %v2917
      %2942 = vmatprep.subr.bf16.mxu0 0
      %2943 = vmatpush1.bf16.msra.mxu0 0
      %2944 = vmatprep.subr.bf16.mxu0 0
      %2945 = vmatpush1.bf16.msra.mxu0 0
      %2946 = vmatprep.subr.bf16.mxu0 0
      %2947 = vmatpush1.bf16.msra.mxu0 0
      %2948 = vmatprep.subr.bf16.mxu0 0
      %2949 = vmatpush1.bf16.msra.mxu0 0
      %2950 = vmatprep.subr.bf16.mxu0 0
      %2951 = vmatpush1.bf16.msra.mxu0 0
      %2952 = vmatprep.subr.bf16.mxu0 0
      %2953 = vmatpush1.bf16.msra.mxu0 0
      %2954 = vmatprep.subr.bf16.mxu0 0
      %2955 = vmatpush1.bf16.msra.mxu0 0
      %2956 = vmatprep.subr.bf16.mxu0 0
      %2957 = vmatpush1.bf16.msra.mxu0 0
      %2958 = vmatprep.mubr.bf16.mxu0 0
      %2959 = vmatmul.mubr.bf16.gmra.mrb[0].mxu0 %v2706
      %v2960 = vpop.f32.mrb[0].mxu0
      %v2961 = vadd.f32 0.0, %v2960
      %v2962 = vpop.f32.mrb[0].mxu0
      %v2963 = vpop.f32.mrb[0].mxu0
      %v2964 = vadd.f32 0.0, %v2963
      %v2965 = vpop.f32.mrb[0].mxu0
      %2966 = vmatprep.mubr.bf16.mxu0 0
      %2967 = vmatmul.mubr.bf16.gmra.mrb[0].mxu0 %v2715
      %v2968 = vpop.f32.mrb[0].mxu0
      %v2969 = vadd.f32 0.0, %v2968
      %v2970 = vpop.f32.mrb[0].mxu0
      %v2971 = vpop.f32.mrb[0].mxu0
      %v2972 = vadd.f32 0.0, %v2971
      %v2973 = vpop.f32.mrb[0].mxu0
      %2974 = vmatprep.mubr.bf16.mxu0 0
      %2975 = vmatmul.mubr.bf16.gmra.mrb[0].mxu0 %v2724
      %v2976 = vpop.f32.mrb[0].mxu0
      %v2977 = vadd.f32 0.0, %v2976
      %v2978 = vpop.f32.mrb[0].mxu0
      %v2979 = vpop.f32.mrb[0].mxu0
      %v2980 = vadd.f32 0.0, %v2979
      %v2981 = vpop.f32.mrb[0].mxu0
      %2982 = vmatprep.mubr.bf16.mxu0 0
      %2983 = vmatmul.mubr.bf16.gmra.mrb[0].mxu0 %v2733
      %v2984 = vpop.f32.mrb[0].mxu0
      %v2985 = vadd.f32 0.0, %v2984
      %v2986 = vpop.f32.mrb[0].mxu0
      %v2987 = vpop.f32.mrb[0].mxu0
      %v2988 = vadd.f32 0.0, %v2987
      %v2989 = vpop.f32.mrb[0].mxu0
      %2990 = vmatprep.mubr.bf16.mxu0 0
      %2991 = vmatmul.mubr.bf16.gmra.mrb[0].mxu0 %v2742
      %v2992 = vpop.f32.mrb[0].mxu0
      %v2993 = vadd.f32 0.0, %v2992
      %v2994 = vpop.f32.mrb[0].mxu0
      %v2995 = vpop.f32.mrb[0].mxu0
      %v2996 = vadd.f32 0.0, %v2995
      %v2997 = vpop.f32.mrb[0].mxu0
      %2998 = vmatprep.mubr.bf16.mxu0 0
      %2999 = vmatmul.mubr.bf16.gmra.mrb[0].mxu0 %v2751
      %v3000 = vpop.f32.mrb[0].mxu0
      %v3001 = vadd.f32 0.0, %v3000
      %v3002 = vpop.f32.mrb[0].mxu0
      %v3003 = vpop.f32.mrb[0].mxu0
      %v3004 = vadd.f32 0.0, %v3003
      %v3005 = vpop.f32.mrb[0].mxu0
      %3006 = vmatprep.mubr.bf16.mxu0 0
      %3007 = vmatmul.mubr.bf16.gmra.mrb[0].mxu0 %v2760
      %v3008 = vpop.f32.mrb[0].mxu0
      %v3009 = vadd.f32 0.0, %v3008
      %v3010 = vpop.f32.mrb[0].mxu0
      %v3011 = vpop.f32.mrb[0].mxu0
      %v3012 = vadd.f32 0.0, %v3011
      %v3013 = vpop.f32.mrb[0].mxu0
      %3014 = vmatprep.mubr.bf16.mxu0 0
      %3015 = vmatmul.mubr.bf16.gmra.mrb[0].mxu0 %v2769
      %v3016 = vpop.f32.mrb[0].mxu0
      %v3017 = vadd.f32 0.0, %v3016
      %v3018 = vpop.f32.mrb[0].mxu0
      %v3019 = vpop.f32.mrb[0].mxu0
      %v3020 = vadd.f32 0.0, %v3019
      %v3021 = vpop.f32.mrb[0].mxu0
      %3022 = vmatprep.mubr.bf16.mxu0 0
      %3023 = vmatmul.mubr.bf16.gmra.mrb[0].mxu0 %v2778
      %v3024 = vpop.f32.mrb[0].mxu0
      %v3025 = vadd.f32 0.0, %v3024
      %v3026 = vpop.f32.mrb[0].mxu0
      %v3027 = vpop.f32.mrb[0].mxu0
      %v3028 = vadd.f32 0.0, %v3027
      %v3029 = vpop.f32.mrb[0].mxu0
      %3030 = vmatprep.mubr.bf16.mxu0 0
      %3031 = vmatmul.mubr.bf16.gmra.mrb[0].mxu0 %v2787
      %v3032 = vpop.f32.mrb[0].mxu0
      %v3033 = vadd.f32 0.0, %v3032
      %v3034 = vpop.f32.mrb[0].mxu0
      %v3035 = vpop.f32.mrb[0].mxu0
      %v3036 = vadd.f32 0.0, %v3035
      %v3037 = vpop.f32.mrb[0].mxu0
      %3038 = vmatprep.mubr.bf16.mxu0 0
      %3039 = vmatmul.mubr.bf16.gmra.mrb[0].mxu0 %v2796
      %v3040 = vpop.f32.mrb[0].mxu0
      %v3041 = vadd.f32 0.0, %v3040
      %v3042 = vpop.f32.mrb[0].mxu0
      %v3043 = vpop.f32.mrb[0].mxu0
      %v3044 = vadd.f32 0.0, %v3043
      %v3045 = vpop.f32.mrb[0].mxu0
      %3046 = vmatprep.mubr.bf16.mxu0 0
      %3047 = vmatmul.mubr.bf16.gmra.mrb[0].mxu0 %v2805
      %v3048 = vpop.f32.mrb[0].mxu0
      %v3049 = vadd.f32 0.0, %v3048
      %v3050 = vpop.f32.mrb[0].mxu0
      %v3051 = vpop.f32.mrb[0].mxu0
      %v3052 = vadd.f32 0.0, %v3051
      %v3053 = vpop.f32.mrb[0].mxu0
      %3054 = vmatprep.mubr.bf16.mxu0 0
      %3055 = vmatmul.mubr.bf16.gmra.mrb[0].mxu0 %v2814
      %v3056 = vpop.f32.mrb[0].mxu0
      %v3057 = vadd.f32 0.0, %v3056
      %v3058 = vpop.f32.mrb[0].mxu0
      %v3059 = vpop.f32.mrb[0].mxu0
      %v3060 = vadd.f32 0.0, %v3059
      %v3061 = vpop.f32.mrb[0].mxu0
      %3062 = vmatprep.mubr.bf16.mxu0 0
      %3063 = vmatmul.mubr.bf16.gmra.mrb[0].mxu0 %v2823
      %v3064 = vpop.f32.mrb[0].mxu0
      %v3065 = vadd.f32 0.0, %v3064
      %v3066 = vpop.f32.mrb[0].mxu0
      %v3067 = vpop.f32.mrb[0].mxu0
      %v3068 = vadd.f32 0.0, %v3067
      %v3069 = vpop.f32.mrb[0].mxu0
      %3070 = vmatprep.mubr.bf16.mxu0 0
      %3071 = vmatmul.mubr.bf16.gmra.mrb[0].mxu0 %v2832
      %v3072 = vpop.f32.mrb[0].mxu0
      %v3073 = vadd.f32 0.0, %v3072
      %v3074 = vpop.f32.mrb[0].mxu0
      %v3075 = vpop.f32.mrb[0].mxu0
      %v3076 = vadd.f32 0.0, %v3075
      %v3077 = vpop.f32.mrb[0].mxu0
      %3078 = vmatprep.mubr.bf16.mxu0 0
      %3079 = vmatmul.mubr.bf16.gmra.mrb[0].mxu0 %v2841
      %v3080 = vpop.f32.mrb[0].mxu0
      %v3081 = vadd.f32 0.0, %v3080
      %v3082 = vpop.f32.mrb[0].mxu0
      %v3083 = vpop.f32.mrb[0].mxu0
      %v3084 = vadd.f32 0.0, %v3083
      %v3085 = vpop.f32.mrb[0].mxu0
      %3086 = vmatprep.mubr.bf16.mxu0 0
      %3087 = vmatmul.mubr.bf16.gmra.mrb[0].mxu0 %v2850
      %v3088 = vpop.f32.mrb[0].mxu0
      %v3089 = vadd.f32 0.0, %v3088
      %v3090 = vpop.f32.mrb[0].mxu0
      %v3091 = vpop.f32.mrb[0].mxu0
      %v3092 = vadd.f32 0.0, %v3091
      %v3093 = vpop.f32.mrb[0].mxu0
      %3094 = vmatprep.mubr.bf16.mxu0 0
      %3095 = vmatmul.mubr.bf16.gmra.mrb[0].mxu0 %v2859
      %v3096 = vpop.f32.mrb[0].mxu0
      %v3097 = vadd.f32 0.0, %v3096
      %v3098 = vpop.f32.mrb[0].mxu0
      %v3099 = vpop.f32.mrb[0].mxu0
      %v3100 = vadd.f32 0.0, %v3099
      %v3101 = vpop.f32.mrb[0].mxu0
      %3102 = vdwg.mxu0
      %v3103 = vadd.f32 %v2636, %v2961
      %v3104 = vadd.f32 %v2637, %v2964
      %v3105 = vadd.f32 %v2638, %v2969
      %v3106 = vadd.f32 %v2639, %v2972
      %v3107 = vadd.f32 %v2640, %v2977
      %v3108 = vadd.f32 %v2641, %v2980
      %v3109 = vadd.f32 %v2642, %v2985
      %v3110 = vadd.f32 %v2643, %v2988
      %v3111 = vadd.f32 %v2644, %v2993
      %v3112 = vadd.f32 %v2645, %v2996
      %v3113 = vadd.f32 %v2646, %v3001
      %v3114 = vadd.f32 %v2647, %v3004
      %v3115 = vadd.f32 %v2648, %v3009
      %v3116 = vadd.f32 %v2649, %v3012
      %v3117 = vadd.f32 %v2650, %v3017
      %v3118 = vadd.f32 %v2651, %v3020
      %v3119 = vadd.f32 %v2652, %v3025
      %v3120 = vadd.f32 %v2653, %v3028
      %v3121 = vadd.f32 %v2654, %v3033
      %v3122 = vadd.f32 %v2655, %v3036
      %v3123 = vadd.f32 %v2656, %v3041
      %v3124 = vadd.f32 %v2657, %v3044
      %v3125 = vadd.f32 %v2658, %v3049
      %v3126 = vadd.f32 %v2659, %v3052
      %v3127 = vadd.f32 %v2660, %v3057
      %v3128 = vadd.f32 %v2661, %v3060
      %v3129 = vadd.f32 %v2662, %v3065
      %v3130 = vadd.f32 %v2663, %v3068
      %v3131 = vadd.f32 %v2664, %v3073
      %v3132 = vadd.f32 %v2665, %v3076
      %v3133 = vadd.f32 %v2666, %v3081
      %v3134 = vadd.f32 %v2667, %v3084
      %v3135 = vadd.f32 %v2668, %v3089
      %v3136 = vadd.f32 %v2669, %v3092
      %v3137 = vadd.f32 %v2670, %v3097
      %v3138 = vadd.f32 %v2671, %v3100
      %v3139 = vld [vmem:[#allocation2 + $0x8] sm:$0xfc]
      %v3140 = vld [vmem:[%s4 + $0x140] sm:$0xf]
      %v3141 = vld [vmem:[%s4 + $0x144] sm:$0xf]
      %v3142 = vld [vmem:[%s4 + $0x148] sm:$0xf]
      %v3143 = vld [vmem:[%s4 + $0x14c] sm:$0xf]
      %v3144 = vld [vmem:[%s4 + $0x150] sm:$0xf]
      %v3145 = vld [vmem:[%s4 + $0x154] sm:$0xf]
      %v3146 = vld [vmem:[%s4 + $0x158] sm:$0xf]
      %v3147 = vld [vmem:[%s4 + $0x15c] sm:$0xf]
      %v3148 = vld [vmem:[%s4 + $0x160] sm:$0xf]
      %v3149 = vld [vmem:[%s4 + $0x164] sm:$0xf]
      %v3150 = vld [vmem:[%s4 + $0x168] sm:$0xf]
      %v3151 = vld [vmem:[%s4 + $0x16c] sm:$0xf]
      %v3152 = vld [vmem:[%s4 + $0x170] sm:$0xf]
      %v3153 = vld [vmem:[%s4 + $0x174] sm:$0xf]
      %v3154 = vld [vmem:[%s4 + $0x178] sm:$0xf]
      %v3155 = vld [vmem:[%s4 + $0x17c] sm:$0xf]
      %vm3158 = vcmask 1045504
      %v3159 = vrot.slane %v3139, 2
      %v3160 = vrot.slane %v2303, 2
      %v3161 = vsel %vm3158, %v3159, %v3160
      %v3162 = vrot.slane %v2304, 2
      %v3163 = vsel %vm3158, %v3160, %v3162
      %v3164 = vrot.slane %v2305, 2
      %v3165 = vsel %vm3158, %v3162, %v3164
      %v3166 = vrot.slane %v2306, 2
      %v3167 = vsel %vm3158, %v3164, %v3166
      %v3168 = vrot.slane %v2307, 2
      %v3169 = vsel %vm3158, %v3166, %v3168
      %v3170 = vrot.slane %v2308, 2
      %v3171 = vsel %vm3158, %v3168, %v3170
      %v3172 = vrot.slane %v2309, 2
      %v3173 = vsel %vm3158, %v3170, %v3172
      %v3174 = vrot.slane %v2310, 2
      %v3175 = vsel %vm3158, %v3172, %v3174
      %v3176 = vrot.slane %v2311, 2
      %v3177 = vsel %vm3158, %v3174, %v3176
      %v3178 = vrot.slane %v2312, 2
      %v3179 = vsel %vm3158, %v3176, %v3178
      %v3180 = vrot.slane %v2313, 2
      %v3181 = vsel %vm3158, %v3178, %v3180
      %v3182 = vrot.slane %v2314, 2
      %v3183 = vsel %vm3158, %v3180, %v3182
      %v3184 = vrot.slane %v2315, 2
      %v3185 = vsel %vm3158, %v3182, %v3184
      %v3186 = vrot.slane %v2316, 2
      %v3187 = vsel %vm3158, %v3184, %v3186
      %v3188 = vrot.slane %v2317, 2
      %v3189 = vsel %vm3158, %v3186, %v3188
      %v3190 = vrot.slane %v2318, 2
      %v3191 = vsel %vm3158, %v3188, %v3190
      %v3192 = vrot.slane %v2319, 2
      %v3193 = vsel %vm3158, %v3190, %v3192
      %v3194 = vrot.slane %v2672, 2
      %v3195 = vsel %vm3158, %v3192, %v3194
      %v3230 = vunpack.c.l.b16 %v3140
      %v3231 = vunpack.c.l.b16 %v3141
      %v3232 = vunpack.c.l.b16 %v3142
      %v3233 = vunpack.c.l.b16 %v3143
      %v3234 = vunpack.c.l.b16 %v3144
      %v3235 = vunpack.c.l.b16 %v3145
      %v3236 = vunpack.c.l.b16 %v3146
      %v3237 = vunpack.c.l.b16 %v3147
      %v3238 = vunpack.c.l.b16 %v3148
      %v3239 = vunpack.c.l.b16 %v3149
      %v3240 = vunpack.c.l.b16 %v3150
      %v3241 = vunpack.c.l.b16 %v3151
      %v3242 = vunpack.c.l.b16 %v3152
      %v3243 = vunpack.c.l.b16 %v3153
      %v3244 = vunpack.c.l.b16 %v3154
      %v3245 = vunpack.c.l.b16 %v3155
      %v3246 = vpack.c.b16 %v3231, %v3230
      %v3247 = vpack.c.b16 %v3233, %v3232
      %v3248 = vpack.c.b16 %v3235, %v3234
      %v3249 = vpack.c.b16 %v3237, %v3236
      %v3250 = vpack.c.b16 %v3239, %v3238
      %v3251 = vpack.c.b16 %v3241, %v3240
      %v3252 = vpack.c.b16 %v3243, %v3242
      %v3253 = vpack.c.b16 %v3245, %v3244
      %3262 = vmatprep.subr.bf16.mxu0 0
      %3263 = vmatpush1.bf16.msra.mxu0 %v3246
      %3264 = vmatprep.subr.bf16.mxu0 0
      %3265 = vmatpush1.bf16.msra.mxu0 %v3247
      %3266 = vmatprep.subr.bf16.mxu0 0
      %3267 = vmatpush1.bf16.msra.mxu0 %v3248
      %3268 = vmatprep.subr.bf16.mxu0 0
      %3269 = vmatpush1.bf16.msra.mxu0 %v3249
      %3270 = vmatprep.subr.bf16.mxu0 0
      %3271 = vmatpush1.bf16.msra.mxu0 %v3250
      %3272 = vmatprep.subr.bf16.mxu0 0
      %3273 = vmatpush1.bf16.msra.mxu0 %v3251
      %3274 = vmatprep.subr.bf16.mxu0 0
      %3275 = vmatpush1.bf16.msra.mxu0 %v3252
      %3276 = vmatprep.subr.bf16.mxu0 0
      %3277 = vmatpush1.bf16.msra.mxu0 %v3253
      %3278 = vmatprep.subr.bf16.mxu0 0
      %3279 = vmatpush1.bf16.msra.mxu0 0
      %3280 = vmatprep.subr.bf16.mxu0 0
      %3281 = vmatpush1.bf16.msra.mxu0 0
      %3282 = vmatprep.subr.bf16.mxu0 0
      %3283 = vmatpush1.bf16.msra.mxu0 0
      %3284 = vmatprep.subr.bf16.mxu0 0
      %3285 = vmatpush1.bf16.msra.mxu0 0
      %3286 = vmatprep.subr.bf16.mxu0 0
      %3287 = vmatpush1.bf16.msra.mxu0 0
      %3288 = vmatprep.subr.bf16.mxu0 0
      %3289 = vmatpush1.bf16.msra.mxu0 0
      %3290 = vmatprep.subr.bf16.mxu0 0
      %3291 = vmatpush1.bf16.msra.mxu0 0
      %3292 = vmatprep.subr.bf16.mxu0 0
      %3293 = vmatpush1.bf16.msra.mxu0 0
      %3294 = vmatprep.mubr.bf16.mxu0 0
      %3295 = vmatmul.mubr.bf16.gmra.mrb[0].mxu0 %v3161
      %v3296 = vpop.f32.mrb[0].mxu0
      %v3297 = vadd.f32 0.0, %v3296
      %v3298 = vpop.f32.mrb[0].mxu0
      %v3299 = vpop.f32.mrb[0].mxu0
      %v3300 = vadd.f32 0.0, %v3299
      %v3301 = vpop.f32.mrb[0].mxu0
      %3302 = vmatprep.mubr.bf16.mxu0 0
      %3303 = vmatmul.mubr.bf16.gmra.mrb[0].mxu0 %v3163
      %v3304 = vpop.f32.mrb[0].mxu0
      %v3305 = vadd.f32 0.0, %v3304
      %v3306 = vpop.f32.mrb[0].mxu0
      %v3307 = vpop.f32.mrb[0].mxu0
      %v3308 = vadd.f32 0.0, %v3307
      %v3309 = vpop.f32.mrb[0].mxu0
      %3310 = vmatprep.mubr.bf16.mxu0 0
      %3311 = vmatmul.mubr.bf16.gmra.mrb[0].mxu0 %v3165
      %v3312 = vpop.f32.mrb[0].mxu0
      %v3313 = vadd.f32 0.0, %v3312
      %v3314 = vpop.f32.mrb[0].mxu0
      %v3315 = vpop.f32.mrb[0].mxu0
      %v3316 = vadd.f32 0.0, %v3315
      %v3317 = vpop.f32.mrb[0].mxu0
      %3318 = vmatprep.mubr.bf16.mxu0 0
      %3319 = vmatmul.mubr.bf16.gmra.mrb[0].mxu0 %v3167
      %v3320 = vpop.f32.mrb[0].mxu0
      %v3321 = vadd.f32 0.0, %v3320
      %v3322 = vpop.f32.mrb[0].mxu0
      %v3323 = vpop.f32.mrb[0].mxu0
      %v3324 = vadd.f32 0.0, %v3323
      %v3325 = vpop.f32.mrb[0].mxu0
      %3326 = vmatprep.mubr.bf16.mxu0 0
      %3327 = vmatmul.mubr.bf16.gmra.mrb[0].mxu0 %v3169
      %v3328 = vpop.f32.mrb[0].mxu0
      %v3329 = vadd.f32 0.0, %v3328
      %v3330 = vpop.f32.mrb[0].mxu0
      %v3331 = vpop.f32.mrb[0].mxu0
      %v3332 = vadd.f32 0.0, %v3331
      %v3333 = vpop.f32.mrb[0].mxu0
      %3334 = vmatprep.mubr.bf16.mxu0 0
      %3335 = vmatmul.mubr.bf16.gmra.mrb[0].mxu0 %v3171
      %v3336 = vpop.f32.mrb[0].mxu0
      %v3337 = vadd.f32 0.0, %v3336
      %v3338 = vpop.f32.mrb[0].mxu0
      %v3339 = vpop.f32.mrb[0].mxu0
      %v3340 = vadd.f32 0.0, %v3339
      %v3341 = vpop.f32.mrb[0].mxu0
      %3342 = vmatprep.mubr.bf16.mxu0 0
      %3343 = vmatmul.mubr.bf16.gmra.mrb[0].mxu0 %v3173
      %v3344 = vpop.f32.mrb[0].mxu0
      %v3345 = vadd.f32 0.0, %v3344
      %v3346 = vpop.f32.mrb[0].mxu0
      %v3347 = vpop.f32.mrb[0].mxu0
      %v3348 = vadd.f32 0.0, %v3347
      %v3349 = vpop.f32.mrb[0].mxu0
      %3350 = vmatprep.mubr.bf16.mxu0 0
      %3351 = vmatmul.mubr.bf16.gmra.mrb[0].mxu0 %v3175
      %v3352 = vpop.f32.mrb[0].mxu0
      %v3353 = vadd.f32 0.0, %v3352
      %v3354 = vpop.f32.mrb[0].mxu0
      %v3355 = vpop.f32.mrb[0].mxu0
      %v3356 = vadd.f32 0.0, %v3355
      %v3357 = vpop.f32.mrb[0].mxu0
      %3358 = vmatprep.mubr.bf16.mxu0 0
      %3359 = vmatmul.mubr.bf16.gmra.mrb[0].mxu0 %v3177
      %v3360 = vpop.f32.mrb[0].mxu0
      %v3361 = vadd.f32 0.0, %v3360
      %v3362 = vpop.f32.mrb[0].mxu0
      %v3363 = vpop.f32.mrb[0].mxu0
      %v3364 = vadd.f32 0.0, %v3363
      %v3365 = vpop.f32.mrb[0].mxu0
      %3366 = vmatprep.mubr.bf16.mxu0 0
      %3367 = vmatmul.mubr.bf16.gmra.mrb[0].mxu0 %v3179
      %v3368 = vpop.f32.mrb[0].mxu0
      %v3369 = vadd.f32 0.0, %v3368
      %v3370 = vpop.f32.mrb[0].mxu0
      %v3371 = vpop.f32.mrb[0].mxu0
      %v3372 = vadd.f32 0.0, %v3371
      %v3373 = vpop.f32.mrb[0].mxu0
      %3374 = vmatprep.mubr.bf16.mxu0 0
      %3375 = vmatmul.mubr.bf16.gmra.mrb[0].mxu0 %v3181
      %v3376 = vpop.f32.mrb[0].mxu0
      %v3377 = vadd.f32 0.0, %v3376
      %v3378 = vpop.f32.mrb[0].mxu0
      %v3379 = vpop.f32.mrb[0].mxu0
      %v3380 = vadd.f32 0.0, %v3379
      %v3381 = vpop.f32.mrb[0].mxu0
      %3382 = vmatprep.mubr.bf16.mxu0 0
      %3383 = vmatmul.mubr.bf16.gmra.mrb[0].mxu0 %v3183
      %v3384 = vpop.f32.mrb[0].mxu0
      %v3385 = vadd.f32 0.0, %v3384
      %v3386 = vpop.f32.mrb[0].mxu0
      %v3387 = vpop.f32.mrb[0].mxu0
      %v3388 = vadd.f32 0.0, %v3387
      %v3389 = vpop.f32.mrb[0].mxu0
      %3390 = vmatprep.mubr.bf16.mxu0 0
      %3391 = vmatmul.mubr.bf16.gmra.mrb[0].mxu0 %v3185
      %v3392 = vpop.f32.mrb[0].mxu0
      %v3393 = vadd.f32 0.0, %v3392
      %v3394 = vpop.f32.mrb[0].mxu0
      %v3395 = vpop.f32.mrb[0].mxu0
      %v3396 = vadd.f32 0.0, %v3395
      %v3397 = vpop.f32.mrb[0].mxu0
      %3398 = vmatprep.mubr.bf16.mxu0 0
      %3399 = vmatmul.mubr.bf16.gmra.mrb[0].mxu0 %v3187
      %v3400 = vpop.f32.mrb[0].mxu0
      %v3401 = vadd.f32 0.0, %v3400
      %v3402 = vpop.f32.mrb[0].mxu0
      %v3403 = vpop.f32.mrb[0].mxu0
      %v3404 = vadd.f32 0.0, %v3403
      %v3405 = vpop.f32.mrb[0].mxu0
      %3406 = vmatprep.mubr.bf16.mxu0 0
      %3407 = vmatmul.mubr.bf16.gmra.mrb[0].mxu0 %v3189
      %v3408 = vpop.f32.mrb[0].mxu0
      %v3409 = vadd.f32 0.0, %v3408
      %v3410 = vpop.f32.mrb[0].mxu0
      %v3411 = vpop.f32.mrb[0].mxu0
      %v3412 = vadd.f32 0.0, %v3411
      %v3413 = vpop.f32.mrb[0].mxu0
      %3414 = vmatprep.mubr.bf16.mxu0 0
      %3415 = vmatmul.mubr.bf16.gmra.mrb[0].mxu0 %v3191
      %v3416 = vpop.f32.mrb[0].mxu0
      %v3417 = vadd.f32 0.0, %v3416
      %v3418 = vpop.f32.mrb[0].mxu0
      %v3419 = vpop.f32.mrb[0].mxu0
      %v3420 = vadd.f32 0.0, %v3419
      %v3421 = vpop.f32.mrb[0].mxu0
      %3422 = vmatprep.mubr.bf16.mxu0 0
      %3423 = vmatmul.mubr.bf16.gmra.mrb[0].mxu0 %v3193
      %v3424 = vpop.f32.mrb[0].mxu0
      %v3425 = vadd.f32 0.0, %v3424
      %v3426 = vpop.f32.mrb[0].mxu0
      %v3427 = vpop.f32.mrb[0].mxu0
      %v3428 = vadd.f32 0.0, %v3427
      %v3429 = vpop.f32.mrb[0].mxu0
      %3430 = vmatprep.mubr.bf16.mxu0 0
      %3431 = vmatmul.mubr.bf16.gmra.mrb[0].mxu0 %v3195
      %v3432 = vpop.f32.mrb[0].mxu0
      %v3433 = vadd.f32 0.0, %v3432
      %v3434 = vpop.f32.mrb[0].mxu0
      %v3435 = vpop.f32.mrb[0].mxu0
      %v3436 = vadd.f32 0.0, %v3435
      %v3437 = vpop.f32.mrb[0].mxu0
      %3438 = vdwg.mxu0
      %v3439 = vadd.f32 %v3103, %v3297
      %v3440 = vadd.f32 %v3104, %v3300
      %v3441 = vadd.f32 %v3105, %v3305
      %v3442 = vadd.f32 %v3106, %v3308
      %v3443 = vadd.f32 %v3107, %v3313
      %v3444 = vadd.f32 %v3108, %v3316
      %v3445 = vadd.f32 %v3109, %v3321
      %v3446 = vadd.f32 %v3110, %v3324
      %v3447 = vadd.f32 %v3111, %v3329
      %v3448 = vadd.f32 %v3112, %v3332
      %v3449 = vadd.f32 %v3113, %v3337
      %v3450 = vadd.f32 %v3114, %v3340
      %v3451 = vadd.f32 %v3115, %v3345
      %v3452 = vadd.f32 %v3116, %v3348
      %v3453 = vadd.f32 %v3117, %v3353
      %v3454 = vadd.f32 %v3118, %v3356
      %v3455 = vadd.f32 %v3119, %v3361
      %v3456 = vadd.f32 %v3120, %v3364
      %v3457 = vadd.f32 %v3121, %v3369
      %v3458 = vadd.f32 %v3122, %v3372
      %v3459 = vadd.f32 %v3123, %v3377
      %v3460 = vadd.f32 %v3124, %v3380
      %v3461 = vadd.f32 %v3125, %v3385
      %v3462 = vadd.f32 %v3126, %v3388
      %v3463 = vadd.f32 %v3127, %v3393
      %v3464 = vadd.f32 %v3128, %v3396
      %v3465 = vadd.f32 %v3129, %v3401
      %v3466 = vadd.f32 %v3130, %v3404
      %v3467 = vadd.f32 %v3131, %v3409
      %v3468 = vadd.f32 %v3132, %v3412
      %v3469 = vadd.f32 %v3133, %v3417
      %v3470 = vadd.f32 %v3134, %v3420
      %v3471 = vadd.f32 %v3135, %v3425
      %v3472 = vadd.f32 %v3136, %v3428
      %v3473 = vadd.f32 %v3137, %v3433
      %v3474 = vadd.f32 %v3138, %v3436
      %v3475 = vld [vmem:[#allocation2 + $0x10] sm:$0xfc]
      %v3476 = vld [vmem:[#allocation2 + $0x18] sm:$0xff]
      %v3477 = vld [vmem:[#allocation2 + $0x20] sm:$0xff]
      %v3478 = vld [vmem:[#allocation2 + $0x28] sm:$0xff]
      %v3479 = vld [vmem:[#allocation2 + $0x30] sm:$0xff]
      %v3480 = vld [vmem:[#allocation2 + $0x38] sm:$0xff]
      %v3481 = vld [vmem:[#allocation2 + $0x40] sm:$0xff]
      %v3482 = vld [vmem:[#allocation2 + $0x48] sm:$0xff]
      %v3483 = vld [vmem:[#allocation2 + $0x50] sm:$0xff]
      %v3484 = vld [vmem:[#allocation2 + $0x58] sm:$0xff]
      %v3485 = vld [vmem:[#allocation2 + $0x60] sm:$0xff]
      %v3486 = vld [vmem:[#allocation2 + $0x68] sm:$0xff]
      %v3487 = vld [vmem:[#allocation2 + $0x70] sm:$0xff]
      %v3488 = vld [vmem:[#allocation2 + $0x78] sm:$0xff]
      %v3489 = vld [vmem:[#allocation2 + $0x80] sm:$0xff]
      %v3490 = vld [vmem:[#allocation2 + $0x88] sm:$0xff]
      %v3491 = vld [vmem:[#allocation2 + $0x90] sm:$0xff]
      %v3492 = vld [vmem:[#allocation2 + $0x98] sm:$0xff]
      %v3493 = vld [vmem:[#allocation2 + $0xa0] sm:$0x3]
      %v3494 = vld [vmem:[%s4 + $0x180] sm:$0xf]
      %v3495 = vld [vmem:[%s4 + $0x184] sm:$0xf]
      %v3496 = vld [vmem:[%s4 + $0x188] sm:$0xf]
      %v3497 = vld [vmem:[%s4 + $0x18c] sm:$0xf]
      %v3498 = vld [vmem:[%s4 + $0x190] sm:$0xf]
      %v3499 = vld [vmem:[%s4 + $0x194] sm:$0xf]
      %v3500 = vld [vmem:[%s4 + $0x198] sm:$0xf]
      %v3501 = vld [vmem:[%s4 + $0x19c] sm:$0xf]
      %v3502 = vld [vmem:[%s4 + $0x1a0] sm:$0xf]
      %v3503 = vld [vmem:[%s4 + $0x1a4] sm:$0xf]
      %v3504 = vld [vmem:[%s4 + $0x1a8] sm:$0xf]
      %v3505 = vld [vmem:[%s4 + $0x1ac] sm:$0xf]
      %v3506 = vld [vmem:[%s4 + $0x1b0] sm:$0xf]
      %v3507 = vld [vmem:[%s4 + $0x1b4] sm:$0xf]
      %v3508 = vld [vmem:[%s4 + $0x1b8] sm:$0xf]
      %v3509 = vld [vmem:[%s4 + $0x1bc] sm:$0xf]
      %v3529 = vrot.slane %v3475, 2
      %v3530 = vrot.slane %v3476, 2
      %v3531 = vsel %vm3158, %v3529, %v3530
      %v3532 = vrot.slane %v3477, 2
      %v3533 = vsel %vm3158, %v3530, %v3532
      %v3534 = vrot.slane %v3478, 2
      %v3535 = vsel %vm3158, %v3532, %v3534
      %v3536 = vrot.slane %v3479, 2
      %v3537 = vsel %vm3158, %v3534, %v3536
      %v3538 = vrot.slane %v3480, 2
      %v3539 = vsel %vm3158, %v3536, %v3538
      %v3540 = vrot.slane %v3481, 2
      %v3541 = vsel %vm3158, %v3538, %v3540
      %v3542 = vrot.slane %v3482, 2
      %v3543 = vsel %vm3158, %v3540, %v3542
      %v3544 = vrot.slane %v3483, 2
      %v3545 = vsel %vm3158, %v3542, %v3544
      %v3546 = vrot.slane %v3484, 2
      %v3547 = vsel %vm3158, %v3544, %v3546
      %v3548 = vrot.slane %v3485, 2
      %v3549 = vsel %vm3158, %v3546, %v3548
      %v3550 = vrot.slane %v3486, 2
      %v3551 = vsel %vm3158, %v3548, %v3550
      %v3552 = vrot.slane %v3487, 2
      %v3553 = vsel %vm3158, %v3550, %v3552
      %v3554 = vrot.slane %v3488, 2
      %v3555 = vsel %vm3158, %v3552, %v3554
      %v3556 = vrot.slane %v3489, 2
      %v3557 = vsel %vm3158, %v3554, %v3556
      %v3558 = vrot.slane %v3490, 2
      %v3559 = vsel %vm3158, %v3556, %v3558
      %v3560 = vrot.slane %v3491, 2
      %v3561 = vsel %vm3158, %v3558, %v3560
      %v3562 = vrot.slane %v3492, 2
      %v3563 = vsel %vm3158, %v3560, %v3562
      %v3564 = vrot.slane %v3493, 2
      %v3565 = vsel %vm3158, %v3562, %v3564
      %v3600 = vunpack.c.l.b16 %v3494
      %v3601 = vunpack.c.l.b16 %v3495
      %v3602 = vunpack.c.l.b16 %v3496
      %v3603 = vunpack.c.l.b16 %v3497
      %v3604 = vunpack.c.l.b16 %v3498
      %v3605 = vunpack.c.l.b16 %v3499
      %v3606 = vunpack.c.l.b16 %v3500
      %v3607 = vunpack.c.l.b16 %v3501
      %v3608 = vunpack.c.l.b16 %v3502
      %v3609 = vunpack.c.l.b16 %v3503
      %v3610 = vunpack.c.l.b16 %v3504
      %v3611 = vunpack.c.l.b16 %v3505
      %v3612 = vunpack.c.l.b16 %v3506
      %v3613 = vunpack.c.l.b16 %v3507
      %v3614 = vunpack.c.l.b16 %v3508
      %v3615 = vunpack.c.l.b16 %v3509
      %v3616 = vpack.c.b16 %v3601, %v3600
      %v3617 = vpack.c.b16 %v3603, %v3602
      %v3618 = vpack.c.b16 %v3605, %v3604
      %v3619 = vpack.c.b16 %v3607, %v3606
      %v3620 = vpack.c.b16 %v3609, %v3608
      %v3621 = vpack.c.b16 %v3611, %v3610
      %v3622 = vpack.c.b16 %v3613, %v3612
      %v3623 = vpack.c.b16 %v3615, %v3614
      %3632 = vmatprep.subr.bf16.mxu0 0
      %3633 = vmatpush1.bf16.msra.mxu0 %v3616
      %3634 = vmatprep.subr.bf16.mxu0 0
      %3635 = vmatpush1.bf16.msra.mxu0 %v3617
      %3636 = vmatprep.subr.bf16.mxu0 0
      %3637 = vmatpush1.bf16.msra.mxu0 %v3618
      %3638 = vmatprep.subr.bf16.mxu0 0
      %3639 = vmatpush1.bf16.msra.mxu0 %v3619
      %3640 = vmatprep.subr.bf16.mxu0 0
      %3641 = vmatpush1.bf16.msra.mxu0 %v3620
      %3642 = vmatprep.subr.bf16.mxu0 0
      %3643 = vmatpush1.bf16.msra.mxu0 %v3621
      %3644 = vmatprep.subr.bf16.mxu0 0
      %3645 = vmatpush1.bf16.msra.mxu0 %v3622
      %3646 = vmatprep.subr.bf16.mxu0 0
      %3647 = vmatpush1.bf16.msra.mxu0 %v3623
      %3648 = vmatprep.subr.bf16.mxu0 0
      %3649 = vmatpush1.bf16.msra.mxu0 0
      %3650 = vmatprep.subr.bf16.mxu0 0
      %3651 = vmatpush1.bf16.msra.mxu0 0
      %3652 = vmatprep.subr.bf16.mxu0 0
      %3653 = vmatpush1.bf16.msra.mxu0 0
      %3654 = vmatprep.subr.bf16.mxu0 0
      %3655 = vmatpush1.bf16.msra.mxu0 0
      %3656 = vmatprep.subr.bf16.mxu0 0
      %3657 = vmatpush1.bf16.msra.mxu0 0
      %3658 = vmatprep.subr.bf16.mxu0 0
      %3659 = vmatpush1.bf16.msra.mxu0 0
      %3660 = vmatprep.subr.bf16.mxu0 0
      %3661 = vmatpush1.bf16.msra.mxu0 0
      %3662 = vmatprep.subr.bf16.mxu0 0
      %3663 = vmatpush1.bf16.msra.mxu0 0
      %3664 = vmatprep.mubr.bf16.mxu0 0
      %3665 = vmatmul.mubr.bf16.gmra.mrb[0].mxu0 %v3531
      %v3666 = vpop.f32.mrb[0].mxu0
      %v3667 = vadd.f32 0.0, %v3666
      %v3668 = vpop.f32.mrb[0].mxu0
      %v3669 = vpop.f32.mrb[0].mxu0
      %v3670 = vadd.f32 0.0, %v3669
      %v3671 = vpop.f32.mrb[0].mxu0
      %3672 = vmatprep.mubr.bf16.mxu0 0
      %3673 = vmatmul.mubr.bf16.gmra.mrb[0].mxu0 %v3533
      %v3674 = vpop.f32.mrb[0].mxu0
      %v3675 = vadd.f32 0.0, %v3674
      %v3676 = vpop.f32.mrb[0].mxu0
      %v3677 = vpop.f32.mrb[0].mxu0
      %v3678 = vadd.f32 0.0, %v3677
      %v3679 = vpop.f32.mrb[0].mxu0
      %3680 = vmatprep.mubr.bf16.mxu0 0
      %3681 = vmatmul.mubr.bf16.gmra.mrb[0].mxu0 %v3535
      %v3682 = vpop.f32.mrb[0].mxu0
      %v3683 = vadd.f32 0.0, %v3682
      %v3684 = vpop.f32.mrb[0].mxu0
      %v3685 = vpop.f32.mrb[0].mxu0
      %v3686 = vadd.f32 0.0, %v3685
      %v3687 = vpop.f32.mrb[0].mxu0
      %3688 = vmatprep.mubr.bf16.mxu0 0
      %3689 = vmatmul.mubr.bf16.gmra.mrb[0].mxu0 %v3537
      %v3690 = vpop.f32.mrb[0].mxu0
      %v3691 = vadd.f32 0.0, %v3690
      %v3692 = vpop.f32.mrb[0].mxu0
      %v3693 = vpop.f32.mrb[0].mxu0
      %v3694 = vadd.f32 0.0, %v3693
      %v3695 = vpop.f32.mrb[0].mxu0
      %3696 = vmatprep.mubr.bf16.mxu0 0
      %3697 = vmatmul.mubr.bf16.gmra.mrb[0].mxu0 %v3539
      %v3698 = vpop.f32.mrb[0].mxu0
      %v3699 = vadd.f32 0.0, %v3698
      %v3700 = vpop.f32.mrb[0].mxu0
      %v3701 = vpop.f32.mrb[0].mxu0
      %v3702 = vadd.f32 0.0, %v3701
      %v3703 = vpop.f32.mrb[0].mxu0
      %3704 = vmatprep.mubr.bf16.mxu0 0
      %3705 = vmatmul.mubr.bf16.gmra.mrb[0].mxu0 %v3541
      %v3706 = vpop.f32.mrb[0].mxu0
      %v3707 = vadd.f32 0.0, %v3706
      %v3708 = vpop.f32.mrb[0].mxu0
      %v3709 = vpop.f32.mrb[0].mxu0
      %v3710 = vadd.f32 0.0, %v3709
      %v3711 = vpop.f32.mrb[0].mxu0
      %3712 = vmatprep.mubr.bf16.mxu0 0
      %3713 = vmatmul.mubr.bf16.gmra.mrb[0].mxu0 %v3543
      %v3714 = vpop.f32.mrb[0].mxu0
      %v3715 = vadd.f32 0.0, %v3714
      %v3716 = vpop.f32.mrb[0].mxu0
      %v3717 = vpop.f32.mrb[0].mxu0
      %v3718 = vadd.f32 0.0, %v3717
      %v3719 = vpop.f32.mrb[0].mxu0
      %3720 = vmatprep.mubr.bf16.mxu0 0
      %3721 = vmatmul.mubr.bf16.gmra.mrb[0].mxu0 %v3545
      %v3722 = vpop.f32.mrb[0].mxu0
      %v3723 = vadd.f32 0.0, %v3722
      %v3724 = vpop.f32.mrb[0].mxu0
      %v3725 = vpop.f32.mrb[0].mxu0
      %v3726 = vadd.f32 0.0, %v3725
      %v3727 = vpop.f32.mrb[0].mxu0
      %3728 = vmatprep.mubr.bf16.mxu0 0
      %3729 = vmatmul.mubr.bf16.gmra.mrb[0].mxu0 %v3547
      %v3730 = vpop.f32.mrb[0].mxu0
      %v3731 = vadd.f32 0.0, %v3730
      %v3732 = vpop.f32.mrb[0].mxu0
      %v3733 = vpop.f32.mrb[0].mxu0
      %v3734 = vadd.f32 0.0, %v3733
      %v3735 = vpop.f32.mrb[0].mxu0
      %3736 = vmatprep.mubr.bf16.mxu0 0
      %3737 = vmatmul.mubr.bf16.gmra.mrb[0].mxu0 %v3549
      %v3738 = vpop.f32.mrb[0].mxu0
      %v3739 = vadd.f32 0.0, %v3738
      %v3740 = vpop.f32.mrb[0].mxu0
      %v3741 = vpop.f32.mrb[0].mxu0
      %v3742 = vadd.f32 0.0, %v3741
      %v3743 = vpop.f32.mrb[0].mxu0
      %3744 = vmatprep.mubr.bf16.mxu0 0
      %3745 = vmatmul.mubr.bf16.gmra.mrb[0].mxu0 %v3551
      %v3746 = vpop.f32.mrb[0].mxu0
      %v3747 = vadd.f32 0.0, %v3746
      %v3748 = vpop.f32.mrb[0].mxu0
      %v3749 = vpop.f32.mrb[0].mxu0
      %v3750 = vadd.f32 0.0, %v3749
      %v3751 = vpop.f32.mrb[0].mxu0
      %3752 = vmatprep.mubr.bf16.mxu0 0
      %3753 = vmatmul.mubr.bf16.gmra.mrb[0].mxu0 %v3553
      %v3754 = vpop.f32.mrb[0].mxu0
      %v3755 = vadd.f32 0.0, %v3754
      %v3756 = vpop.f32.mrb[0].mxu0
      %v3757 = vpop.f32.mrb[0].mxu0
      %v3758 = vadd.f32 0.0, %v3757
      %v3759 = vpop.f32.mrb[0].mxu0
      %3760 = vmatprep.mubr.bf16.mxu0 0
      %3761 = vmatmul.mubr.bf16.gmra.mrb[0].mxu0 %v3555
      %v3762 = vpop.f32.mrb[0].mxu0
      %v3763 = vadd.f32 0.0, %v3762
      %v3764 = vpop.f32.mrb[0].mxu0
      %v3765 = vpop.f32.mrb[0].mxu0
      %v3766 = vadd.f32 0.0, %v3765
      %v3767 = vpop.f32.mrb[0].mxu0
      %3768 = vmatprep.mubr.bf16.mxu0 0
      %3769 = vmatmul.mubr.bf16.gmra.mrb[0].mxu0 %v3557
      %v3770 = vpop.f32.mrb[0].mxu0
      %v3771 = vadd.f32 0.0, %v3770
      %v3772 = vpop.f32.mrb[0].mxu0
      %v3773 = vpop.f32.mrb[0].mxu0
      %v3774 = vadd.f32 0.0, %v3773
      %v3775 = vpop.f32.mrb[0].mxu0
      %3776 = vmatprep.mubr.bf16.mxu0 0
      %3777 = vmatmul.mubr.bf16.gmra.mrb[0].mxu0 %v3559
      %v3778 = vpop.f32.mrb[0].mxu0
      %v3779 = vadd.f32 0.0, %v3778
      %v3780 = vpop.f32.mrb[0].mxu0
      %v3781 = vpop.f32.mrb[0].mxu0
      %v3782 = vadd.f32 0.0, %v3781
      %v3783 = vpop.f32.mrb[0].mxu0
      %3784 = vmatprep.mubr.bf16.mxu0 0
      %3785 = vmatmul.mubr.bf16.gmra.mrb[0].mxu0 %v3561
      %v3786 = vpop.f32.mrb[0].mxu0
      %v3787 = vadd.f32 0.0, %v3786
      %v3788 = vpop.f32.mrb[0].mxu0
      %v3789 = vpop.f32.mrb[0].mxu0
      %v3790 = vadd.f32 0.0, %v3789
      %v3791 = vpop.f32.mrb[0].mxu0
      %3792 = vmatprep.mubr.bf16.mxu0 0
      %3793 = vmatmul.mubr.bf16.gmra.mrb[0].mxu0 %v3563
      %v3794 = vpop.f32.mrb[0].mxu0
      %v3795 = vadd.f32 0.0, %v3794
      %v3796 = vpop.f32.mrb[0].mxu0
      %v3797 = vpop.f32.mrb[0].mxu0
      %v3798 = vadd.f32 0.0, %v3797
      %v3799 = vpop.f32.mrb[0].mxu0
      %3800 = vmatprep.mubr.bf16.mxu0 0
      %3801 = vmatmul.mubr.bf16.gmra.mrb[0].mxu0 %v3565
      %v3802 = vpop.f32.mrb[0].mxu0
      %v3803 = vadd.f32 0.0, %v3802
      %v3804 = vpop.f32.mrb[0].mxu0
      %v3805 = vpop.f32.mrb[0].mxu0
      %v3806 = vadd.f32 0.0, %v3805
      %v3807 = vpop.f32.mrb[0].mxu0
      %3808 = vdwg.mxu0
      %v3809 = vadd.f32 %v3439, %v3667
      %v3810 = vadd.f32 %v3440, %v3670
      %v3811 = vadd.f32 %v3441, %v3675
      %v3812 = vadd.f32 %v3442, %v3678
      %v3813 = vadd.f32 %v3443, %v3683
      %v3814 = vadd.f32 %v3444, %v3686
      %v3815 = vadd.f32 %v3445, %v3691
      %v3816 = vadd.f32 %v3446, %v3694
      %v3817 = vadd.f32 %v3447, %v3699
      %v3818 = vadd.f32 %v3448, %v3702
      %v3819 = vadd.f32 %v3449, %v3707
      %v3820 = vadd.f32 %v3450, %v3710
      %v3821 = vadd.f32 %v3451, %v3715
      %v3822 = vadd.f32 %v3452, %v3718
      %v3823 = vadd.f32 %v3453, %v3723
      %v3824 = vadd.f32 %v3454, %v3726
      %v3825 = vadd.f32 %v3455, %v3731
      %v3826 = vadd.f32 %v3456, %v3734
      %v3827 = vadd.f32 %v3457, %v3739
      %v3828 = vadd.f32 %v3458, %v3742
      %v3829 = vadd.f32 %v3459, %v3747
      %v3830 = vadd.f32 %v3460, %v3750
      %v3831 = vadd.f32 %v3461, %v3755
      %v3832 = vadd.f32 %v3462, %v3758
      %v3833 = vadd.f32 %v3463, %v3763
      %v3834 = vadd.f32 %v3464, %v3766
      %v3835 = vadd.f32 %v3465, %v3771
      %v3836 = vadd.f32 %v3466, %v3774
      %v3837 = vadd.f32 %v3467, %v3779
      %v3838 = vadd.f32 %v3468, %v3782
      %v3839 = vadd.f32 %v3469, %v3787
      %v3840 = vadd.f32 %v3470, %v3790
      %v3841 = vadd.f32 %v3471, %v3795
      %v3842 = vadd.f32 %v3472, %v3798
      %v3843 = vadd.f32 %v3473, %v3803
      %v3844 = vadd.f32 %v3474, %v3806
      %v3845 = vld [vmem:[#allocation2 + $0xa0] sm:$0x7]
      %v3846 = vld [vmem:[%s4 + $0x1c0] sm:$0xf]
      %v3847 = vld [vmem:[%s4 + $0x1c4] sm:$0xf]
      %v3848 = vld [vmem:[%s4 + $0x1c8] sm:$0xf]
      %v3849 = vld [vmem:[%s4 + $0x1cc] sm:$0xf]
      %v3850 = vld [vmem:[%s4 + $0x1d0] sm:$0xf]
      %v3851 = vld [vmem:[%s4 + $0x1d4] sm:$0xf]
      %v3852 = vld [vmem:[%s4 + $0x1d8] sm:$0xf]
      %v3853 = vld [vmem:[%s4 + $0x1dc] sm:$0xf]
      %v3854 = vld [vmem:[%s4 + $0x1e0] sm:$0xf]
      %v3855 = vld [vmem:[%s4 + $0x1e4] sm:$0xf]
      %v3856 = vld [vmem:[%s4 + $0x1e8] sm:$0xf]
      %v3857 = vld [vmem:[%s4 + $0x1ec] sm:$0xf]
      %v3858 = vld [vmem:[%s4 + $0x1f0] sm:$0xf]
      %v3859 = vld [vmem:[%s4 + $0x1f4] sm:$0xf]
      %v3860 = vld [vmem:[%s4 + $0x1f8] sm:$0xf]
      %v3861 = vld [vmem:[%s4 + $0x1fc] sm:$0xf]
      %vm3862 = vsmask.f32 5376
      %v3864 = vshrl.u32 %v3475, 16
      %v3866 = vrot.slane %v3864, 2
      %v3867 = vshll.u32 %v3475, 16
      %v3869 = vrot.slane %v3867, 3
      %v3870 = vor.u32 %v3866, %v3869
      %v3872 = vshrl.u32 %v3476, 16
      %v3874 = vrot.slane %v3872, 2
      %v3875 = vshll.u32 %v3476, 16
      %v3877 = vrot.slane %v3875, 3
      %v3878 = vor.u32 %v3874, %v3877
      %v3879 = vsel %vm3862, %v3870, %v3878
      %v3881 = vshrl.u32 %v3477, 16
      %v3883 = vrot.slane %v3881, 2
      %v3884 = vshll.u32 %v3477, 16
      %v3886 = vrot.slane %v3884, 3
      %v3887 = vor.u32 %v3883, %v3886
      %v3888 = vsel %vm3862, %v3878, %v3887
      %v3890 = vshrl.u32 %v3478, 16
      %v3892 = vrot.slane %v3890, 2
      %v3893 = vshll.u32 %v3478, 16
      %v3895 = vrot.slane %v3893, 3
      %v3896 = vor.u32 %v3892, %v3895
      %v3897 = vsel %vm3862, %v3887, %v3896
      %v3899 = vshrl.u32 %v3479, 16
      %v3901 = vrot.slane %v3899, 2
      %v3902 = vshll.u32 %v3479, 16
      %v3904 = vrot.slane %v3902, 3
      %v3905 = vor.u32 %v3901, %v3904
      %v3906 = vsel %vm3862, %v3896, %v3905
      %v3908 = vshrl.u32 %v3480, 16
      %v3910 = vrot.slane %v3908, 2
      %v3911 = vshll.u32 %v3480, 16
      %v3913 = vrot.slane %v3911, 3
      %v3914 = vor.u32 %v3910, %v3913
      %v3915 = vsel %vm3862, %v3905, %v3914
      %v3917 = vshrl.u32 %v3481, 16
      %v3919 = vrot.slane %v3917, 2
      %v3920 = vshll.u32 %v3481, 16
      %v3922 = vrot.slane %v3920, 3
      %v3923 = vor.u32 %v3919, %v3922
      %v3924 = vsel %vm3862, %v3914, %v3923
      %v3926 = vshrl.u32 %v3482, 16
      %v3928 = vrot.slane %v3926, 2
      %v3929 = vshll.u32 %v3482, 16
      %v3931 = vrot.slane %v3929, 3
      %v3932 = vor.u32 %v3928, %v3931
      %v3933 = vsel %vm3862, %v3923, %v3932
      %v3935 = vshrl.u32 %v3483, 16
      %v3937 = vrot.slane %v3935, 2
      %v3938 = vshll.u32 %v3483, 16
      %v3940 = vrot.slane %v3938, 3
      %v3941 = vor.u32 %v3937, %v3940
      %v3942 = vsel %vm3862, %v3932, %v3941
      %v3944 = vshrl.u32 %v3484, 16
      %v3946 = vrot.slane %v3944, 2
      %v3947 = vshll.u32 %v3484, 16
      %v3949 = vrot.slane %v3947, 3
      %v3950 = vor.u32 %v3946, %v3949
      %v3951 = vsel %vm3862, %v3941, %v3950
      %v3953 = vshrl.u32 %v3485, 16
      %v3955 = vrot.slane %v3953, 2
      %v3956 = vshll.u32 %v3485, 16
      %v3958 = vrot.slane %v3956, 3
      %v3959 = vor.u32 %v3955, %v3958
      %v3960 = vsel %vm3862, %v3950, %v3959
      %v3962 = vshrl.u32 %v3486, 16
      %v3964 = vrot.slane %v3962, 2
      %v3965 = vshll.u32 %v3486, 16
      %v3967 = vrot.slane %v3965, 3
      %v3968 = vor.u32 %v3964, %v3967
      %v3969 = vsel %vm3862, %v3959, %v3968
      %v3971 = vshrl.u32 %v3487, 16
      %v3973 = vrot.slane %v3971, 2
      %v3974 = vshll.u32 %v3487, 16
      %v3976 = vrot.slane %v3974, 3
      %v3977 = vor.u32 %v3973, %v3976
      %v3978 = vsel %vm3862, %v3968, %v3977
      %v3980 = vshrl.u32 %v3488, 16
      %v3982 = vrot.slane %v3980, 2
      %v3983 = vshll.u32 %v3488, 16
      %v3985 = vrot.slane %v3983, 3
      %v3986 = vor.u32 %v3982, %v3985
      %v3987 = vsel %vm3862, %v3977, %v3986
      %v3989 = vshrl.u32 %v3489, 16
      %v3991 = vrot.slane %v3989, 2
      %v3992 = vshll.u32 %v3489, 16
      %v3994 = vrot.slane %v3992, 3
      %v3995 = vor.u32 %v3991, %v3994
      %v3996 = vsel %vm3862, %v3986, %v3995
      %v3998 = vshrl.u32 %v3490, 16
      %v4000 = vrot.slane %v3998, 2
      %v4001 = vshll.u32 %v3490, 16
      %v4003 = vrot.slane %v4001, 3
      %v4004 = vor.u32 %v4000, %v4003
      %v4005 = vsel %vm3862, %v3995, %v4004
      %v4007 = vshrl.u32 %v3491, 16
      %v4009 = vrot.slane %v4007, 2
      %v4010 = vshll.u32 %v3491, 16
      %v4012 = vrot.slane %v4010, 3
      %v4013 = vor.u32 %v4009, %v4012
      %v4014 = vsel %vm3862, %v4004, %v4013
      %v4016 = vshrl.u32 %v3492, 16
      %v4018 = vrot.slane %v4016, 2
      %v4019 = vshll.u32 %v3492, 16
      %v4021 = vrot.slane %v4019, 3
      %v4022 = vor.u32 %v4018, %v4021
      %v4023 = vsel %vm3862, %v4013, %v4022
      %v4025 = vshrl.u32 %v3845, 16
      %v4027 = vrot.slane %v4025, 2
      %v4028 = vshll.u32 %v3845, 16
      %v4030 = vrot.slane %v4028, 3
      %v4031 = vor.u32 %v4027, %v4030
      %v4032 = vsel %vm3862, %v4022, %v4031
      %v4067 = vunpack.c.l.b16 %v3846
      %v4068 = vunpack.c.l.b16 %v3847
      %v4069 = vunpack.c.l.b16 %v3848
      %v4070 = vunpack.c.l.b16 %v3849
      %v4071 = vunpack.c.l.b16 %v3850
      %v4072 = vunpack.c.l.b16 %v3851
      %v4073 = vunpack.c.l.b16 %v3852
      %v4074 = vunpack.c.l.b16 %v3853
      %v4075 = vunpack.c.l.b16 %v3854
      %v4076 = vunpack.c.l.b16 %v3855
      %v4077 = vunpack.c.l.b16 %v3856
      %v4078 = vunpack.c.l.b16 %v3857
      %v4079 = vunpack.c.l.b16 %v3858
      %v4080 = vunpack.c.l.b16 %v3859
      %v4081 = vunpack.c.l.b16 %v3860
      %v4082 = vunpack.c.l.b16 %v3861
      %v4083 = vpack.c.b16 %v4068, %v4067
      %v4084 = vpack.c.b16 %v4070, %v4069
      %v4085 = vpack.c.b16 %v4072, %v4071
      %v4086 = vpack.c.b16 %v4074, %v4073
      %v4087 = vpack.c.b16 %v4076, %v4075
      %v4088 = vpack.c.b16 %v4078, %v4077
      %v4089 = vpack.c.b16 %v4080, %v4079
      %v4090 = vpack.c.b16 %v4082, %v4081
      %4099 = vmatprep.subr.bf16.mxu0 0
      %4100 = vmatpush1.bf16.msra.mxu0 %v4083
      %4101 = vmatprep.subr.bf16.mxu0 0
      %4102 = vmatpush1.bf16.msra.mxu0 %v4084
      %4103 = vmatprep.subr.bf16.mxu0 0
      %4104 = vmatpush1.bf16.msra.mxu0 %v4085
      %4105 = vmatprep.subr.bf16.mxu0 0
      %4106 = vmatpush1.bf16.msra.mxu0 %v4086
      %4107 = vmatprep.subr.bf16.mxu0 0
      %4108 = vmatpush1.bf16.msra.mxu0 %v4087
      %4109 = vmatprep.subr.bf16.mxu0 0
      %4110 = vmatpush1.bf16.msra.mxu0 %v4088
      %4111 = vmatprep.subr.bf16.mxu0 0
      %4112 = vmatpush1.bf16.msra.mxu0 %v4089
      %4113 = vmatprep.subr.bf16.mxu0 0
      %4114 = vmatpush1.bf16.msra.mxu0 %v4090
      %4115 = vmatprep.subr.bf16.mxu0 0
      %4116 = vmatpush1.bf16.msra.mxu0 0
      %4117 = vmatprep.subr.bf16.mxu0 0
      %4118 = vmatpush1.bf16.msra.mxu0 0
      %4119 = vmatprep.subr.bf16.mxu0 0
      %4120 = vmatpush1.bf16.msra.mxu0 0
      %4121 = vmatprep.subr.bf16.mxu0 0
      %4122 = vmatpush1.bf16.msra.mxu0 0
      %4123 = vmatprep.subr.bf16.mxu0 0
      %4124 = vmatpush1.bf16.msra.mxu0 0
      %4125 = vmatprep.subr.bf16.mxu0 0
      %4126 = vmatpush1.bf16.msra.mxu0 0
      %4127 = vmatprep.subr.bf16.mxu0 0
      %4128 = vmatpush1.bf16.msra.mxu0 0
      %4129 = vmatprep.subr.bf16.mxu0 0
      %4130 = vmatpush1.bf16.msra.mxu0 0
      %4131 = vmatprep.mubr.bf16.mxu0 0
      %4132 = vmatmul.mubr.bf16.gmra.mrb[0].mxu0 %v3879
      %v4133 = vpop.f32.mrb[0].mxu0
      %v4134 = vadd.f32 0.0, %v4133
      %v4135 = vpop.f32.mrb[0].mxu0
      %v4136 = vpop.f32.mrb[0].mxu0
      %v4137 = vadd.f32 0.0, %v4136
      %v4138 = vpop.f32.mrb[0].mxu0
      %4139 = vmatprep.mubr.bf16.mxu0 0
      %4140 = vmatmul.mubr.bf16.gmra.mrb[0].mxu0 %v3888
      %v4141 = vpop.f32.mrb[0].mxu0
      %v4142 = vadd.f32 0.0, %v4141
      %v4143 = vpop.f32.mrb[0].mxu0
      %v4144 = vpop.f32.mrb[0].mxu0
      %v4145 = vadd.f32 0.0, %v4144
      %v4146 = vpop.f32.mrb[0].mxu0
      %4147 = vmatprep.mubr.bf16.mxu0 0
      %4148 = vmatmul.mubr.bf16.gmra.mrb[0].mxu0 %v3897
      %v4149 = vpop.f32.mrb[0].mxu0
      %v4150 = vadd.f32 0.0, %v4149
      %v4151 = vpop.f32.mrb[0].mxu0
      %v4152 = vpop.f32.mrb[0].mxu0
      %v4153 = vadd.f32 0.0, %v4152
      %v4154 = vpop.f32.mrb[0].mxu0
      %4155 = vmatprep.mubr.bf16.mxu0 0
      %4156 = vmatmul.mubr.bf16.gmra.mrb[0].mxu0 %v3906
      %v4157 = vpop.f32.mrb[0].mxu0
      %v4158 = vadd.f32 0.0, %v4157
      %v4159 = vpop.f32.mrb[0].mxu0
      %v4160 = vpop.f32.mrb[0].mxu0
      %v4161 = vadd.f32 0.0, %v4160
      %v4162 = vpop.f32.mrb[0].mxu0
      %4163 = vmatprep.mubr.bf16.mxu0 0
      %4164 = vmatmul.mubr.bf16.gmra.mrb[0].mxu0 %v3915
      %v4165 = vpop.f32.mrb[0].mxu0
      %v4166 = vadd.f32 0.0, %v4165
      %v4167 = vpop.f32.mrb[0].mxu0
      %v4168 = vpop.f32.mrb[0].mxu0
      %v4169 = vadd.f32 0.0, %v4168
      %v4170 = vpop.f32.mrb[0].mxu0
      %4171 = vmatprep.mubr.bf16.mxu0 0
      %4172 = vmatmul.mubr.bf16.gmra.mrb[0].mxu0 %v3924
      %v4173 = vpop.f32.mrb[0].mxu0
      %v4174 = vadd.f32 0.0, %v4173
      %v4175 = vpop.f32.mrb[0].mxu0
      %v4176 = vpop.f32.mrb[0].mxu0
      %v4177 = vadd.f32 0.0, %v4176
      %v4178 = vpop.f32.mrb[0].mxu0
      %4179 = vmatprep.mubr.bf16.mxu0 0
      %4180 = vmatmul.mubr.bf16.gmra.mrb[0].mxu0 %v3933
      %v4181 = vpop.f32.mrb[0].mxu0
      %v4182 = vadd.f32 0.0, %v4181
      %v4183 = vpop.f32.mrb[0].mxu0
      %v4184 = vpop.f32.mrb[0].mxu0
      %v4185 = vadd.f32 0.0, %v4184
      %v4186 = vpop.f32.mrb[0].mxu0
      %4187 = vmatprep.mubr.bf16.mxu0 0
      %4188 = vmatmul.mubr.bf16.gmra.mrb[0].mxu0 %v3942
      %v4189 = vpop.f32.mrb[0].mxu0
      %v4190 = vadd.f32 0.0, %v4189
      %v4191 = vpop.f32.mrb[0].mxu0
      %v4192 = vpop.f32.mrb[0].mxu0
      %v4193 = vadd.f32 0.0, %v4192
      %v4194 = vpop.f32.mrb[0].mxu0
      %4195 = vmatprep.mubr.bf16.mxu0 0
      %4196 = vmatmul.mubr.bf16.gmra.mrb[0].mxu0 %v3951
      %v4197 = vpop.f32.mrb[0].mxu0
      %v4198 = vadd.f32 0.0, %v4197
      %v4199 = vpop.f32.mrb[0].mxu0
      %v4200 = vpop.f32.mrb[0].mxu0
      %v4201 = vadd.f32 0.0, %v4200
      %v4202 = vpop.f32.mrb[0].mxu0
      %4203 = vmatprep.mubr.bf16.mxu0 0
      %4204 = vmatmul.mubr.bf16.gmra.mrb[0].mxu0 %v3960
      %v4205 = vpop.f32.mrb[0].mxu0
      %v4206 = vadd.f32 0.0, %v4205
      %v4207 = vpop.f32.mrb[0].mxu0
      %v4208 = vpop.f32.mrb[0].mxu0
      %v4209 = vadd.f32 0.0, %v4208
      %v4210 = vpop.f32.mrb[0].mxu0
      %4211 = vmatprep.mubr.bf16.mxu0 0
      %4212 = vmatmul.mubr.bf16.gmra.mrb[0].mxu0 %v3969
      %v4213 = vpop.f32.mrb[0].mxu0
      %v4214 = vadd.f32 0.0, %v4213
      %v4215 = vpop.f32.mrb[0].mxu0
      %v4216 = vpop.f32.mrb[0].mxu0
      %v4217 = vadd.f32 0.0, %v4216
      %v4218 = vpop.f32.mrb[0].mxu0
      %4219 = vmatprep.mubr.bf16.mxu0 0
      %4220 = vmatmul.mubr.bf16.gmra.mrb[0].mxu0 %v3978
      %v4221 = vpop.f32.mrb[0].mxu0
      %v4222 = vadd.f32 0.0, %v4221
      %v4223 = vpop.f32.mrb[0].mxu0
      %v4224 = vpop.f32.mrb[0].mxu0
      %v4225 = vadd.f32 0.0, %v4224
      %v4226 = vpop.f32.mrb[0].mxu0
      %4227 = vmatprep.mubr.bf16.mxu0 0
      %4228 = vmatmul.mubr.bf16.gmra.mrb[0].mxu0 %v3987
      %v4229 = vpop.f32.mrb[0].mxu0
      %v4230 = vadd.f32 0.0, %v4229
      %v4231 = vpop.f32.mrb[0].mxu0
      %v4232 = vpop.f32.mrb[0].mxu0
      %v4233 = vadd.f32 0.0, %v4232
      %v4234 = vpop.f32.mrb[0].mxu0
      %4235 = vmatprep.mubr.bf16.mxu0 0
      %4236 = vmatmul.mubr.bf16.gmra.mrb[0].mxu0 %v3996
      %v4237 = vpop.f32.mrb[0].mxu0
      %v4238 = vadd.f32 0.0, %v4237
      %v4239 = vpop.f32.mrb[0].mxu0
      %v4240 = vpop.f32.mrb[0].mxu0
      %v4241 = vadd.f32 0.0, %v4240
      %v4242 = vpop.f32.mrb[0].mxu0
      %4243 = vmatprep.mubr.bf16.mxu0 0
      %4244 = vmatmul.mubr.bf16.gmra.mrb[0].mxu0 %v4005
      %v4245 = vpop.f32.mrb[0].mxu0
      %v4246 = vadd.f32 0.0, %v4245
      %v4247 = vpop.f32.mrb[0].mxu0
      %v4248 = vpop.f32.mrb[0].mxu0
      %v4249 = vadd.f32 0.0, %v4248
      %v4250 = vpop.f32.mrb[0].mxu0
      %4251 = vmatprep.mubr.bf16.mxu0 0
      %4252 = vmatmul.mubr.bf16.gmra.mrb[0].mxu0 %v4014
      %v4253 = vpop.f32.mrb[0].mxu0
      %v4254 = vadd.f32 0.0, %v4253
      %v4255 = vpop.f32.mrb[0].mxu0
      %v4256 = vpop.f32.mrb[0].mxu0
      %v4257 = vadd.f32 0.0, %v4256
      %v4258 = vpop.f32.mrb[0].mxu0
      %4259 = vmatprep.mubr.bf16.mxu0 0
      %4260 = vmatmul.mubr.bf16.gmra.mrb[0].mxu0 %v4023
      %v4261 = vpop.f32.mrb[0].mxu0
      %v4262 = vadd.f32 0.0, %v4261
      %v4263 = vpop.f32.mrb[0].mxu0
      %v4264 = vpop.f32.mrb[0].mxu0
      %v4265 = vadd.f32 0.0, %v4264
      %v4266 = vpop.f32.mrb[0].mxu0
      %4267 = vmatprep.mubr.bf16.mxu0 0
      %4268 = vmatmul.mubr.bf16.gmra.mrb[0].mxu0 %v4032
      %v4269 = vpop.f32.mrb[0].mxu0
      %v4270 = vadd.f32 0.0, %v4269
      %v4271 = vpop.f32.mrb[0].mxu0
      %v4272 = vpop.f32.mrb[0].mxu0
      %v4273 = vadd.f32 0.0, %v4272
      %v4274 = vpop.f32.mrb[0].mxu0
      %4275 = vdwg.mxu0
      %v4276 = vadd.f32 %v3809, %v4134
      %v4277 = vadd.f32 %v3810, %v4137
      %v4278 = vadd.f32 %v3811, %v4142
      %v4279 = vadd.f32 %v3812, %v4145
      %v4280 = vadd.f32 %v3813, %v4150
      %v4281 = vadd.f32 %v3814, %v4153
      %v4282 = vadd.f32 %v3815, %v4158
      %v4283 = vadd.f32 %v3816, %v4161
      %v4284 = vadd.f32 %v3817, %v4166
      %v4285 = vadd.f32 %v3818, %v4169
      %v4286 = vadd.f32 %v3819, %v4174
      %v4287 = vadd.f32 %v3820, %v4177
      %v4288 = vadd.f32 %v3821, %v4182
      %v4289 = vadd.f32 %v3822, %v4185
      %v4290 = vadd.f32 %v3823, %v4190
      %v4291 = vadd.f32 %v3824, %v4193
      %v4292 = vadd.f32 %v3825, %v4198
      %v4293 = vadd.f32 %v3826, %v4201
      %v4294 = vadd.f32 %v3827, %v4206
      %v4295 = vadd.f32 %v3828, %v4209
      %v4296 = vadd.f32 %v3829, %v4214
      %v4297 = vadd.f32 %v3830, %v4217
      %v4298 = vadd.f32 %v3831, %v4222
      %v4299 = vadd.f32 %v3832, %v4225
      %v4300 = vadd.f32 %v3833, %v4230
      %v4301 = vadd.f32 %v3834, %v4233
      %v4302 = vadd.f32 %v3835, %v4238
      %v4303 = vadd.f32 %v3836, %v4241
      %v4304 = vadd.f32 %v3837, %v4246
      %v4305 = vadd.f32 %v3838, %v4249
      %v4306 = vadd.f32 %v3839, %v4254
      %v4307 = vadd.f32 %v3840, %v4257
      %v4308 = vadd.f32 %v3841, %v4262
      %v4309 = vadd.f32 %v3842, %v4265
      %v4310 = vadd.f32 %v3843, %v4270
      %v4311 = vadd.f32 %v3844, %v4273
      %v4312 = vld [vmem:[#allocation2 + $0x10] sm:$0xf8]
      %v4313 = vld [vmem:[%s4 + $0x200] sm:$0xf]
      %v4314 = vld [vmem:[%s4 + $0x204] sm:$0xf]
      %v4315 = vld [vmem:[%s4 + $0x208] sm:$0xf]
      %v4316 = vld [vmem:[%s4 + $0x20c] sm:$0xf]
      %v4317 = vld [vmem:[%s4 + $0x210] sm:$0xf]
      %v4318 = vld [vmem:[%s4 + $0x214] sm:$0xf]
      %v4319 = vld [vmem:[%s4 + $0x218] sm:$0xf]
      %v4320 = vld [vmem:[%s4 + $0x21c] sm:$0xf]
      %v4321 = vld [vmem:[%s4 + $0x220] sm:$0xf]
      %v4322 = vld [vmem:[%s4 + $0x224] sm:$0xf]
      %v4323 = vld [vmem:[%s4 + $0x228] sm:$0xf]
      %v4324 = vld [vmem:[%s4 + $0x22c] sm:$0xf]
      %v4325 = vld [vmem:[%s4 + $0x230] sm:$0xf]
      %v4326 = vld [vmem:[%s4 + $0x234] sm:$0xf]
      %v4327 = vld [vmem:[%s4 + $0x238] sm:$0xf]
      %v4328 = vld [vmem:[%s4 + $0x23c] sm:$0xf]
      %vm4331 = vcmask 1044480
      %v4332 = vrot.slane %v4312, 3
      %v4333 = vrot.slane %v3476, 3
      %v4334 = vsel %vm4331, %v4332, %v4333
      %v4335 = vrot.slane %v3477, 3
      %v4336 = vsel %vm4331, %v4333, %v4335
      %v4337 = vrot.slane %v3478, 3
      %v4338 = vsel %vm4331, %v4335, %v4337
      %v4339 = vrot.slane %v3479, 3
      %v4340 = vsel %vm4331, %v4337, %v4339
      %v4341 = vrot.slane %v3480, 3
      %v4342 = vsel %vm4331, %v4339, %v4341
      %v4343 = vrot.slane %v3481, 3
      %v4344 = vsel %vm4331, %v4341, %v4343
      %v4345 = vrot.slane %v3482, 3
      %v4346 = vsel %vm4331, %v4343, %v4345
      %v4347 = vrot.slane %v3483, 3
      %v4348 = vsel %vm4331, %v4345, %v4347
      %v4349 = vrot.slane %v3484, 3
      %v4350 = vsel %vm4331, %v4347, %v4349
      %v4351 = vrot.slane %v3485, 3
      %v4352 = vsel %vm4331, %v4349, %v4351
      %v4353 = vrot.slane %v3486, 3
      %v4354 = vsel %vm4331, %v4351, %v4353
      %v4355 = vrot.slane %v3487, 3
      %v4356 = vsel %vm4331, %v4353, %v4355
      %v4357 = vrot.slane %v3488, 3
      %v4358 = vsel %vm4331, %v4355, %v4357
      %v4359 = vrot.slane %v3489, 3
      %v4360 = vsel %vm4331, %v4357, %v4359
      %v4361 = vrot.slane %v3490, 3
      %v4362 = vsel %vm4331, %v4359, %v4361
      %v4363 = vrot.slane %v3491, 3
      %v4364 = vsel %vm4331, %v4361, %v4363
      %v4365 = vrot.slane %v3492, 3
      %v4366 = vsel %vm4331, %v4363, %v4365
      %v4367 = vrot.slane %v3845, 3
      %v4368 = vsel %vm4331, %v4365, %v4367
      %v4403 = vunpack.c.l.b16 %v4313
      %v4404 = vunpack.c.l.b16 %v4314
      %v4405 = vunpack.c.l.b16 %v4315
      %v4406 = vunpack.c.l.b16 %v4316
      %v4407 = vunpack.c.l.b16 %v4317
      %v4408 = vunpack.c.l.b16 %v4318
      %v4409 = vunpack.c.l.b16 %v4319
      %v4410 = vunpack.c.l.b16 %v4320
      %v4411 = vunpack.c.l.b16 %v4321
      %v4412 = vunpack.c.l.b16 %v4322
      %v4413 = vunpack.c.l.b16 %v4323
      %v4414 = vunpack.c.l.b16 %v4324
      %v4415 = vunpack.c.l.b16 %v4325
      %v4416 = vunpack.c.l.b16 %v4326
      %v4417 = vunpack.c.l.b16 %v4327
      %v4418 = vunpack.c.l.b16 %v4328
      %v4419 = vpack.c.b16 %v4404, %v4403
      %v4420 = vpack.c.b16 %v4406, %v4405
      %v4421 = vpack.c.b16 %v4408, %v4407
      %v4422 = vpack.c.b16 %v4410, %v4409
      %v4423 = vpack.c.b16 %v4412, %v4411
      %v4424 = vpack.c.b16 %v4414, %v4413
      %v4425 = vpack.c.b16 %v4416, %v4415
      %v4426 = vpack.c.b16 %v4418, %v4417
      %4435 = vmatprep.subr.bf16.mxu0 0
      %4436 = vmatpush1.bf16.msra.mxu0 %v4419
      %4437 = vmatprep.subr.bf16.mxu0 0
      %4438 = vmatpush1.bf16.msra.mxu0 %v4420
      %4439 = vmatprep.subr.bf16.mxu0 0
      %4440 = vmatpush1.bf16.msra.mxu0 %v4421
      %4441 = vmatprep.subr.bf16.mxu0 0
      %4442 = vmatpush1.bf16.msra.mxu0 %v4422
      %4443 = vmatprep.subr.bf16.mxu0 0
      %4444 = vmatpush1.bf16.msra.mxu0 %v4423
      %4445 = vmatprep.subr.bf16.mxu0 0
      %4446 = vmatpush1.bf16.msra.mxu0 %v4424
      %4447 = vmatprep.subr.bf16.mxu0 0
      %4448 = vmatpush1.bf16.msra.mxu0 %v4425
      %4449 = vmatprep.subr.bf16.mxu0 0
      %4450 = vmatpush1.bf16.msra.mxu0 %v4426
      %4451 = vmatprep.subr.bf16.mxu0 0
      %4452 = vmatpush1.bf16.msra.mxu0 0
      %4453 = vmatprep.subr.bf16.mxu0 0
      %4454 = vmatpush1.bf16.msra.mxu0 0
      %4455 = vmatprep.subr.bf16.mxu0 0
      %4456 = vmatpush1.bf16.msra.mxu0 0
      %4457 = vmatprep.subr.bf16.mxu0 0
      %4458 = vmatpush1.bf16.msra.mxu0 0
      %4459 = vmatprep.subr.bf16.mxu0 0
      %4460 = vmatpush1.bf16.msra.mxu0 0
      %4461 = vmatprep.subr.bf16.mxu0 0
      %4462 = vmatpush1.bf16.msra.mxu0 0
      %4463 = vmatprep.subr.bf16.mxu0 0
      %4464 = vmatpush1.bf16.msra.mxu0 0
      %4465 = vmatprep.subr.bf16.mxu0 0
      %4466 = vmatpush1.bf16.msra.mxu0 0
      %4467 = vmatprep.mubr.bf16.mxu0 0
      %4468 = vmatmul.mubr.bf16.gmra.mrb[0].mxu0 %v4334
      %v4469 = vpop.f32.mrb[0].mxu0
      %v4470 = vadd.f32 0.0, %v4469
      %v4471 = vpop.f32.mrb[0].mxu0
      %v4472 = vpop.f32.mrb[0].mxu0
      %v4473 = vadd.f32 0.0, %v4472
      %v4474 = vpop.f32.mrb[0].mxu0
      %4475 = vmatprep.mubr.bf16.mxu0 0
      %4476 = vmatmul.mubr.bf16.gmra.mrb[0].mxu0 %v4336
      %v4477 = vpop.f32.mrb[0].mxu0
      %v4478 = vadd.f32 0.0, %v4477
      %v4479 = vpop.f32.mrb[0].mxu0
      %v4480 = vpop.f32.mrb[0].mxu0
      %v4481 = vadd.f32 0.0, %v4480
      %v4482 = vpop.f32.mrb[0].mxu0
      %4483 = vmatprep.mubr.bf16.mxu0 0
      %4484 = vmatmul.mubr.bf16.gmra.mrb[0].mxu0 %v4338
      %v4485 = vpop.f32.mrb[0].mxu0
      %v4486 = vadd.f32 0.0, %v4485
      %v4487 = vpop.f32.mrb[0].mxu0
      %v4488 = vpop.f32.mrb[0].mxu0
      %v4489 = vadd.f32 0.0, %v4488
      %v4490 = vpop.f32.mrb[0].mxu0
      %4491 = vmatprep.mubr.bf16.mxu0 0
      %4492 = vmatmul.mubr.bf16.gmra.mrb[0].mxu0 %v4340
      %v4493 = vpop.f32.mrb[0].mxu0
      %v4494 = vadd.f32 0.0, %v4493
      %v4495 = vpop.f32.mrb[0].mxu0
      %v4496 = vpop.f32.mrb[0].mxu0
      %v4497 = vadd.f32 0.0, %v4496
      %v4498 = vpop.f32.mrb[0].mxu0
      %4499 = vmatprep.mubr.bf16.mxu0 0
      %4500 = vmatmul.mubr.bf16.gmra.mrb[0].mxu0 %v4342
      %v4501 = vpop.f32.mrb[0].mxu0
      %v4502 = vadd.f32 0.0, %v4501
      %v4503 = vpop.f32.mrb[0].mxu0
      %v4504 = vpop.f32.mrb[0].mxu0
      %v4505 = vadd.f32 0.0, %v4504
      %v4506 = vpop.f32.mrb[0].mxu0
      %4507 = vmatprep.mubr.bf16.mxu0 0
      %4508 = vmatmul.mubr.bf16.gmra.mrb[0].mxu0 %v4344
      %v4509 = vpop.f32.mrb[0].mxu0
      %v4510 = vadd.f32 0.0, %v4509
      %v4511 = vpop.f32.mrb[0].mxu0
      %v4512 = vpop.f32.mrb[0].mxu0
      %v4513 = vadd.f32 0.0, %v4512
      %v4514 = vpop.f32.mrb[0].mxu0
      %4515 = vmatprep.mubr.bf16.mxu0 0
      %4516 = vmatmul.mubr.bf16.gmra.mrb[0].mxu0 %v4346
      %v4517 = vpop.f32.mrb[0].mxu0
      %v4518 = vadd.f32 0.0, %v4517
      %v4519 = vpop.f32.mrb[0].mxu0
      %v4520 = vpop.f32.mrb[0].mxu0
      %v4521 = vadd.f32 0.0, %v4520
      %v4522 = vpop.f32.mrb[0].mxu0
      %4523 = vmatprep.mubr.bf16.mxu0 0
      %4524 = vmatmul.mubr.bf16.gmra.mrb[0].mxu0 %v4348
      %v4525 = vpop.f32.mrb[0].mxu0
      %v4526 = vadd.f32 0.0, %v4525
      %v4527 = vpop.f32.mrb[0].mxu0
      %v4528 = vpop.f32.mrb[0].mxu0
      %v4529 = vadd.f32 0.0, %v4528
      %v4530 = vpop.f32.mrb[0].mxu0
      %4531 = vmatprep.mubr.bf16.mxu0 0
      %4532 = vmatmul.mubr.bf16.gmra.mrb[0].mxu0 %v4350
      %v4533 = vpop.f32.mrb[0].mxu0
      %v4534 = vadd.f32 0.0, %v4533
      %v4535 = vpop.f32.mrb[0].mxu0
      %v4536 = vpop.f32.mrb[0].mxu0
      %v4537 = vadd.f32 0.0, %v4536
      %v4538 = vpop.f32.mrb[0].mxu0
      %4539 = vmatprep.mubr.bf16.mxu0 0
      %4540 = vmatmul.mubr.bf16.gmra.mrb[0].mxu0 %v4352
      %v4541 = vpop.f32.mrb[0].mxu0
      %v4542 = vadd.f32 0.0, %v4541
      %v4543 = vpop.f32.mrb[0].mxu0
      %v4544 = vpop.f32.mrb[0].mxu0
      %v4545 = vadd.f32 0.0, %v4544
      %v4546 = vpop.f32.mrb[0].mxu0
      %4547 = vmatprep.mubr.bf16.mxu0 0
      %4548 = vmatmul.mubr.bf16.gmra.mrb[0].mxu0 %v4354
      %v4549 = vpop.f32.mrb[0].mxu0
      %v4550 = vadd.f32 0.0, %v4549
      %v4551 = vpop.f32.mrb[0].mxu0
      %v4552 = vpop.f32.mrb[0].mxu0
      %v4553 = vadd.f32 0.0, %v4552
      %v4554 = vpop.f32.mrb[0].mxu0
      %4555 = vmatprep.mubr.bf16.mxu0 0
      %4556 = vmatmul.mubr.bf16.gmra.mrb[0].mxu0 %v4356
      %v4557 = vpop.f32.mrb[0].mxu0
      %v4558 = vadd.f32 0.0, %v4557
      %v4559 = vpop.f32.mrb[0].mxu0
      %v4560 = vpop.f32.mrb[0].mxu0
      %v4561 = vadd.f32 0.0, %v4560
      %v4562 = vpop.f32.mrb[0].mxu0
      %4563 = vmatprep.mubr.bf16.mxu0 0
      %4564 = vmatmul.mubr.bf16.gmra.mrb[0].mxu0 %v4358
      %v4565 = vpop.f32.mrb[0].mxu0
      %v4566 = vadd.f32 0.0, %v4565
      %v4567 = vpop.f32.mrb[0].mxu0
      %v4568 = vpop.f32.mrb[0].mxu0
      %v4569 = vadd.f32 0.0, %v4568
      %v4570 = vpop.f32.mrb[0].mxu0
      %4571 = vmatprep.mubr.bf16.mxu0 0
      %4572 = vmatmul.mubr.bf16.gmra.mrb[0].mxu0 %v4360
      %v4573 = vpop.f32.mrb[0].mxu0
      %v4574 = vadd.f32 0.0, %v4573
      %v4575 = vpop.f32.mrb[0].mxu0
      %v4576 = vpop.f32.mrb[0].mxu0
      %v4577 = vadd.f32 0.0, %v4576
      %v4578 = vpop.f32.mrb[0].mxu0
      %4579 = vmatprep.mubr.bf16.mxu0 0
      %4580 = vmatmul.mubr.bf16.gmra.mrb[0].mxu0 %v4362
      %v4581 = vpop.f32.mrb[0].mxu0
      %v4582 = vadd.f32 0.0, %v4581
      %v4583 = vpop.f32.mrb[0].mxu0
      %v4584 = vpop.f32.mrb[0].mxu0
      %v4585 = vadd.f32 0.0, %v4584
      %v4586 = vpop.f32.mrb[0].mxu0
      %4587 = vmatprep.mubr.bf16.mxu0 0
      %4588 = vmatmul.mubr.bf16.gmra.mrb[0].mxu0 %v4364
      %v4589 = vpop.f32.mrb[0].mxu0
      %v4590 = vadd.f32 0.0, %v4589
      %v4591 = vpop.f32.mrb[0].mxu0
      %v4592 = vpop.f32.mrb[0].mxu0
      %v4593 = vadd.f32 0.0, %v4592
      %v4594 = vpop.f32.mrb[0].mxu0
      %4595 = vmatprep.mubr.bf16.mxu0 0
      %4596 = vmatmul.mubr.bf16.gmra.mrb[0].mxu0 %v4366
      %v4597 = vpop.f32.mrb[0].mxu0
      %v4598 = vadd.f32 0.0, %v4597
      %v4599 = vpop.f32.mrb[0].mxu0
      %v4600 = vpop.f32.mrb[0].mxu0
      %v4601 = vadd.f32 0.0, %v4600
      %v4602 = vpop.f32.mrb[0].mxu0
      %4603 = vmatprep.mubr.bf16.mxu0 0
      %4604 = vmatmul.mubr.bf16.gmra.mrb[0].mxu0 %v4368
      %v4605 = vpop.f32.mrb[0].mxu0
      %v4606 = vadd.f32 0.0, %v4605
      %v4607 = vpop.f32.mrb[0].mxu0
      %v4608 = vpop.f32.mrb[0].mxu0
      %v4609 = vadd.f32 0.0, %v4608
      %v4610 = vpop.f32.mrb[0].mxu0
      %4611 = vdwg.mxu0
      %v4612 = vadd.f32 %v4276, %v4470
      %v4613 = vadd.f32 %v4277, %v4473
      %v4614 = vadd.f32 %v4278, %v4478
      %v4615 = vadd.f32 %v4279, %v4481
      %v4616 = vadd.f32 %v4280, %v4486
      %v4617 = vadd.f32 %v4281, %v4489
      %v4618 = vadd.f32 %v4282, %v4494
      %v4619 = vadd.f32 %v4283, %v4497
      %v4620 = vadd.f32 %v4284, %v4502
      %v4621 = vadd.f32 %v4285, %v4505
      %v4622 = vadd.f32 %v4286, %v4510
      %v4623 = vadd.f32 %v4287, %v4513
      %v4624 = vadd.f32 %v4288, %v4518
      %v4625 = vadd.f32 %v4289, %v4521
      %v4626 = vadd.f32 %v4290, %v4526
      %v4627 = vadd.f32 %v4291, %v4529
      %v4628 = vadd.f32 %v4292, %v4534
      %v4629 = vadd.f32 %v4293, %v4537
      %v4630 = vadd.f32 %v4294, %v4542
      %v4631 = vadd.f32 %v4295, %v4545
      %v4632 = vadd.f32 %v4296, %v4550
      %v4633 = vadd.f32 %v4297, %v4553
      %v4634 = vadd.f32 %v4298, %v4558
      %v4635 = vadd.f32 %v4299, %v4561
      %v4636 = vadd.f32 %v4300, %v4566
      %v4637 = vadd.f32 %v4301, %v4569
      %v4638 = vadd.f32 %v4302, %v4574
      %v4639 = vadd.f32 %v4303, %v4577
      %v4640 = vadd.f32 %v4304, %v4582
      %v4641 = vadd.f32 %v4305, %v4585
      %v4642 = vadd.f32 %v4306, %v4590
      %v4643 = vadd.f32 %v4307, %v4593
      %v4644 = vadd.f32 %v4308, %v4598
      %v4645 = vadd.f32 %v4309, %v4601
      %v4646 = vadd.f32 %v4310, %v4606
      %v4647 = vadd.f32 %v4311, %v4609
      %v4648 = vld [vmem:[%s5] sm:$0x1]
      %v4650 = vlaneseq
      %v4651 = vshrl.u32 %v4650, 7
      %v4652 = vsub.s32 0, %v4651
      %v4653 = vrot.slane %v4648, %v4652
      %v4655 = vadd.f32 %v4612, %v4653
      %v4656 = vadd.f32 %v4613, %v4653
      %v4657 = vadd.f32 %v4614, %v4653
      %v4658 = vadd.f32 %v4615, %v4653
      %v4659 = vadd.f32 %v4616, %v4653
      %v4660 = vadd.f32 %v4617, %v4653
      %v4661 = vadd.f32 %v4618, %v4653
      %v4662 = vadd.f32 %v4619, %v4653
      %v4663 = vadd.f32 %v4620, %v4653
      %v4664 = vadd.f32 %v4621, %v4653
      %v4665 = vadd.f32 %v4622, %v4653
      %v4666 = vadd.f32 %v4623, %v4653
      %v4667 = vadd.f32 %v4624, %v4653
      %v4668 = vadd.f32 %v4625, %v4653
      %v4669 = vadd.f32 %v4626, %v4653
      %v4670 = vadd.f32 %v4627, %v4653
      %v4671 = vadd.f32 %v4628, %v4653
      %v4672 = vadd.f32 %v4629, %v4653
      %v4673 = vadd.f32 %v4630, %v4653
      %v4674 = vadd.f32 %v4631, %v4653
      %v4675 = vadd.f32 %v4632, %v4653
      %v4676 = vadd.f32 %v4633, %v4653
      %v4677 = vadd.f32 %v4634, %v4653
      %v4678 = vadd.f32 %v4635, %v4653
      %v4679 = vadd.f32 %v4636, %v4653
      %v4680 = vadd.f32 %v4637, %v4653
      %v4681 = vadd.f32 %v4638, %v4653
      %v4682 = vadd.f32 %v4639, %v4653
      %v4683 = vadd.f32 %v4640, %v4653
      %v4684 = vadd.f32 %v4641, %v4653
      %v4685 = vadd.f32 %v4642, %v4653
      %v4686 = vadd.f32 %v4643, %v4653
      %v4687 = vadd.f32 %v4644, %v4653
      %v4688 = vadd.f32 %v4645, %v4653
      %v4689 = vadd.f32 %v4646, %v4653
      %v4690 = vadd.f32 %v4647, %v4653
      %v4691 = vmax.f32 %v4655, 0.0
      %v4692 = vmax.f32 %v4656, 0.0
      %v4693 = vmax.f32 %v4657, 0.0
      %v4694 = vmax.f32 %v4658, 0.0
      %v4695 = vmax.f32 %v4659, 0.0
      %v4696 = vmax.f32 %v4660, 0.0
      %v4697 = vmax.f32 %v4661, 0.0
      %v4698 = vmax.f32 %v4662, 0.0
      %v4699 = vmax.f32 %v4663, 0.0
      %v4700 = vmax.f32 %v4664, 0.0
      %v4701 = vmax.f32 %v4665, 0.0
      %v4702 = vmax.f32 %v4666, 0.0
      %v4703 = vmax.f32 %v4667, 0.0
      %v4704 = vmax.f32 %v4668, 0.0
      %v4705 = vmax.f32 %v4669, 0.0
      %v4706 = vmax.f32 %v4670, 0.0
      %v4707 = vmax.f32 %v4671, 0.0
      %v4708 = vmax.f32 %v4672, 0.0
      %v4709 = vmax.f32 %v4673, 0.0
      %v4710 = vmax.f32 %v4674, 0.0
      %v4711 = vmax.f32 %v4675, 0.0
      %v4712 = vmax.f32 %v4676, 0.0
      %v4713 = vmax.f32 %v4677, 0.0
      %v4714 = vmax.f32 %v4678, 0.0
      %v4715 = vmax.f32 %v4679, 0.0
      %v4716 = vmax.f32 %v4680, 0.0
      %v4717 = vmax.f32 %v4681, 0.0
      %v4718 = vmax.f32 %v4682, 0.0
      %v4719 = vmax.f32 %v4683, 0.0
      %v4720 = vmax.f32 %v4684, 0.0
      %v4721 = vmax.f32 %v4685, 0.0
      %v4722 = vmax.f32 %v4686, 0.0
      %v4723 = vmax.f32 %v4687, 0.0
      %v4724 = vmax.f32 %v4688, 0.0
      %v4725 = vmax.f32 %v4689, 0.0
      %v4726 = vmax.f32 %v4690, 0.0
      %v4727 = vmul.f32 %v4691, %v847
      %v4728 = vmul.f32 %v4692, %v852
      %v4729 = vmul.f32 %v4693, %v857
      %v4730 = vmul.f32 %v4694, %v862
      %v4731 = vmul.f32 %v4695, %v867
      %v4732 = vmul.f32 %v4696, %v872
      %v4733 = vmul.f32 %v4697, %v877
      %v4734 = vmul.f32 %v4698, %v882
      %v4735 = vmul.f32 %v4699, %v887
      %v4736 = vmul.f32 %v4700, %v892
      %v4737 = vmul.f32 %v4701, %v897
      %v4738 = vmul.f32 %v4702, %v902
      %v4739 = vmul.f32 %v4703, %v907
      %v4740 = vmul.f32 %v4704, %v912
      %v4741 = vmul.f32 %v4705, %v917
      %v4742 = vmul.f32 %v4706, %v922
      %v4743 = vmul.f32 %v4707, %v927
      %v4744 = vmul.f32 %v4708, %v932
      %v4745 = vmul.f32 %v4709, %v937
      %v4746 = vmul.f32 %v4710, %v942
      %v4747 = vmul.f32 %v4711, %v947
      %v4748 = vmul.f32 %v4712, %v952
      %v4749 = vmul.f32 %v4713, %v957
      %v4750 = vmul.f32 %v4714, %v962
      %v4751 = vmul.f32 %v4715, %v967
      %v4752 = vmul.f32 %v4716, %v972
      %v4753 = vmul.f32 %v4717, %v977
      %v4754 = vmul.f32 %v4718, %v982
      %v4755 = vmul.f32 %v4719, %v987
      %v4756 = vmul.f32 %v4720, %v992
      %v4757 = vmul.f32 %v4721, %v997
      %v4758 = vmul.f32 %v4722, %v1002
      %v4759 = vmul.f32 %v4723, %v1007
      %v4760 = vmul.f32 %v4724, %v1012
      %v4761 = vmul.f32 %v4725, %v1017
      %v4762 = vmul.f32 %v4726, %v1022
      %v4763 = vpack.c.bf16 %v4728, %v4727
      %v4764 = vpack.c.bf16 %v4730, %v4729
      %v4765 = vpack.c.bf16 %v4732, %v4731
      %v4766 = vpack.c.bf16 %v4734, %v4733
      %v4767 = vpack.c.bf16 %v4736, %v4735
      %v4768 = vpack.c.bf16 %v4738, %v4737
      %v4769 = vpack.c.bf16 %v4740, %v4739
      %v4770 = vpack.c.bf16 %v4742, %v4741
      %v4771 = vpack.c.bf16 %v4744, %v4743
      %v4772 = vpack.c.bf16 %v4746, %v4745
      %v4773 = vpack.c.bf16 %v4748, %v4747
      %v4774 = vpack.c.bf16 %v4750, %v4749
      %v4775 = vpack.c.bf16 %v4752, %v4751
      %v4776 = vpack.c.bf16 %v4754, %v4753
      %v4777 = vpack.c.bf16 %v4756, %v4755
      %v4778 = vpack.c.bf16 %v4758, %v4757
      %v4779 = vpack.c.bf16 %v4760, %v4759
      %v4780 = vpack.c.bf16 %v4762, %v4761
      %v4782 = vshrl.u32 %v4763, 16
      %v4784 = vrot.slane %v4782, 6
      %v4785 = vshll.u32 %v4763, 16
      %v4787 = vrot.slane %v4785, 7
      %v4788 = vor.u32 %v4784, %v4787
      %v4790 = vshrl.u32 %v4764, 16
      %v4792 = vrot.slane %v4790, 6
      %v4793 = vshll.u32 %v4764, 16
      %v4795 = vrot.slane %v4793, 7
      %v4796 = vor.u32 %v4792, %v4795
      %v4797 = vsel %vm363, %v4788, %v4796
      %v4799 = vshrl.u32 %v4765, 16
      %v4801 = vrot.slane %v4799, 6
      %v4802 = vshll.u32 %v4765, 16
      %v4804 = vrot.slane %v4802, 7
      %v4805 = vor.u32 %v4801, %v4804
      %v4806 = vsel %vm363, %v4796, %v4805
      %v4808 = vshrl.u32 %v4766, 16
      %v4810 = vrot.slane %v4808, 6
      %v4811 = vshll.u32 %v4766, 16
      %v4813 = vrot.slane %v4811, 7
      %v4814 = vor.u32 %v4810, %v4813
      %v4815 = vsel %vm363, %v4805, %v4814
      %v4817 = vshrl.u32 %v4767, 16
      %v4819 = vrot.slane %v4817, 6
      %v4820 = vshll.u32 %v4767, 16
      %v4822 = vrot.slane %v4820, 7
      %v4823 = vor.u32 %v4819, %v4822
      %v4824 = vsel %vm363, %v4814, %v4823
      %v4826 = vshrl.u32 %v4768, 16
      %v4828 = vrot.slane %v4826, 6
      %v4829 = vshll.u32 %v4768, 16
      %v4831 = vrot.slane %v4829, 7
      %v4832 = vor.u32 %v4828, %v4831
      %v4833 = vsel %vm363, %v4823, %v4832
      %v4835 = vshrl.u32 %v4769, 16
      %v4837 = vrot.slane %v4835, 6
      %v4838 = vshll.u32 %v4769, 16
      %v4840 = vrot.slane %v4838, 7
      %v4841 = vor.u32 %v4837, %v4840
      %v4842 = vsel %vm363, %v4832, %v4841
      %v4844 = vshrl.u32 %v4770, 16
      %v4846 = vrot.slane %v4844, 6
      %v4847 = vshll.u32 %v4770, 16
      %v4849 = vrot.slane %v4847, 7
      %v4850 = vor.u32 %v4846, %v4849
      %v4851 = vsel %vm363, %v4841, %v4850
      %v4853 = vshrl.u32 %v4771, 16
      %v4855 = vrot.slane %v4853, 6
      %v4856 = vshll.u32 %v4771, 16
      %v4858 = vrot.slane %v4856, 7
      %v4859 = vor.u32 %v4855, %v4858
      %v4860 = vsel %vm363, %v4850, %v4859
      %v4862 = vshrl.u32 %v4772, 16
      %v4864 = vrot.slane %v4862, 6
      %v4865 = vshll.u32 %v4772, 16
      %v4867 = vrot.slane %v4865, 7
      %v4868 = vor.u32 %v4864, %v4867
      %v4869 = vsel %vm363, %v4859, %v4868
      %v4871 = vshrl.u32 %v4773, 16
      %v4873 = vrot.slane %v4871, 6
      %v4874 = vshll.u32 %v4773, 16
      %v4876 = vrot.slane %v4874, 7
      %v4877 = vor.u32 %v4873, %v4876
      %v4878 = vsel %vm363, %v4868, %v4877
      %v4880 = vshrl.u32 %v4774, 16
      %v4882 = vrot.slane %v4880, 6
      %v4883 = vshll.u32 %v4774, 16
      %v4885 = vrot.slane %v4883, 7
      %v4886 = vor.u32 %v4882, %v4885
      %v4887 = vsel %vm363, %v4877, %v4886
      %v4889 = vshrl.u32 %v4775, 16
      %v4891 = vrot.slane %v4889, 6
      %v4892 = vshll.u32 %v4775, 16
      %v4894 = vrot.slane %v4892, 7
      %v4895 = vor.u32 %v4891, %v4894
      %v4896 = vsel %vm363, %v4886, %v4895
      %v4898 = vshrl.u32 %v4776, 16
      %v4900 = vrot.slane %v4898, 6
      %v4901 = vshll.u32 %v4776, 16
      %v4903 = vrot.slane %v4901, 7
      %v4904 = vor.u32 %v4900, %v4903
      %v4905 = vsel %vm363, %v4895, %v4904
      %v4907 = vshrl.u32 %v4777, 16
      %v4909 = vrot.slane %v4907, 6
      %v4910 = vshll.u32 %v4777, 16
      %v4912 = vrot.slane %v4910, 7
      %v4913 = vor.u32 %v4909, %v4912
      %v4914 = vsel %vm363, %v4904, %v4913
      %v4916 = vshrl.u32 %v4778, 16
      %v4918 = vrot.slane %v4916, 6
      %v4919 = vshll.u32 %v4778, 16
      %v4921 = vrot.slane %v4919, 7
      %v4922 = vor.u32 %v4918, %v4921
      %v4923 = vsel %vm363, %v4913, %v4922
      %v4925 = vshrl.u32 %v4779, 16
      %v4927 = vrot.slane %v4925, 6
      %v4928 = vshll.u32 %v4779, 16
      %v4930 = vrot.slane %v4928, 7
      %v4931 = vor.u32 %v4927, %v4930
      %v4932 = vsel %vm363, %v4922, %v4931
      %v4934 = vshrl.u32 %v4780, 16
      %v4936 = vrot.slane %v4934, 6
      %v4937 = vshll.u32 %v4780, 16
      %v4939 = vrot.slane %v4937, 7
      %v4940 = vor.u32 %v4936, %v4939
      %v4941 = vsel %vm363, %v4931, %v4940
      %v4961 = vld [vmem:[#allocation3 + $0x8] sm:$0xfe]
      %v4962 = vsel %vm370, %v4788, %v4961
      %4963 = vst [vmem:[#allocation3 + $0x8] sm:$0xfe] %v4962
      %4964 = vst [vmem:[#allocation3 + $0x10] sm:$0xff] %v4797
      %4965 = vst [vmem:[#allocation3 + $0x18] sm:$0xff] %v4806
      %4966 = vst [vmem:[#allocation3 + $0x20] sm:$0xff] %v4815
      %4967 = vst [vmem:[#allocation3 + $0x28] sm:$0xff] %v4824
      %4968 = vst [vmem:[#allocation3 + $0x30] sm:$0xff] %v4833
      %4969 = vst [vmem:[#allocation3 + $0x38] sm:$0xff] %v4842
      %4970 = vst [vmem:[#allocation3 + $0x40] sm:$0xff] %v4851
      %4971 = vst [vmem:[#allocation3 + $0x48] sm:$0xff] %v4860
      %4972 = vst [vmem:[#allocation3 + $0x50] sm:$0xff] %v4869
      %4973 = vst [vmem:[#allocation3 + $0x58] sm:$0xff] %v4878
      %4974 = vst [vmem:[#allocation3 + $0x60] sm:$0xff] %v4887
      %4975 = vst [vmem:[#allocation3 + $0x68] sm:$0xff] %v4896
      %4976 = vst [vmem:[#allocation3 + $0x70] sm:$0xff] %v4905
      %4977 = vst [vmem:[#allocation3 + $0x78] sm:$0xff] %v4914
      %4978 = vst [vmem:[#allocation3 + $0x80] sm:$0xff] %v4923
      %4979 = vst [vmem:[#allocation3 + $0x88] sm:$0xff] %v4932
      %4980 = vst [vmem:[#allocation3 + $0x90] sm:$0xff] %v4941
      %v4981 = vld [vmem:[#allocation3 + $0x98] sm:$0x3]
      %v4982 = vsel %vm364, %v4940, %v4981
      %4983 = vst [vmem:[#allocation3 + $0x98] sm:$0x3] %v4982
      %v4984 = vld [vmem:[#allocation3] sm:$0xff]
      %v4985 = vld [vmem:[#allocation3 + $0x8] sm:$0xff]
      %v4986 = vld [vmem:[#allocation3 + $0x10] sm:$0xff]
      %v4987 = vld [vmem:[#allocation3 + $0x18] sm:$0xff]
      %v4988 = vld [vmem:[#allocation3 + $0x20] sm:$0xff]
      %v4989 = vld [vmem:[#allocation3 + $0x28] sm:$0xff]
      %v4990 = vld [vmem:[#allocation3 + $0x30] sm:$0xff]
      %v4991 = vld [vmem:[#allocation3 + $0x38] sm:$0xff]
      %v4992 = vld [vmem:[#allocation3 + $0x40] sm:$0xff]
      %v4993 = vld [vmem:[#allocation3 + $0x48] sm:$0xff]
      %v4994 = vld [vmem:[#allocation3 + $0x50] sm:$0xff]
      %v4995 = vld [vmem:[#allocation3 + $0x58] sm:$0xff]
      %v4996 = vld [vmem:[#allocation3 + $0x60] sm:$0xff]
      %v4997 = vld [vmem:[#allocation3 + $0x68] sm:$0xff]
      %v4998 = vld [vmem:[#allocation3 + $0x70] sm:$0xff]
      %v4999 = vld [vmem:[#allocation3 + $0x78] sm:$0xff]
      %v5000 = vld [vmem:[#allocation3 + $0x80] sm:$0xff]
      %v5001 = vld [vmem:[#allocation3 + $0x88] sm:$0xff]
      %v5002 = vld [vmem:[%s6] sm:$0xf]
      %v5003 = vld [vmem:[%s6 + $0x4] sm:$0xf]
      %v5004 = vld [vmem:[%s6 + $0x8] sm:$0xf]
      %v5005 = vld [vmem:[%s6 + $0xc] sm:$0xf]
      %v5006 = vld [vmem:[%s6 + $0x10] sm:$0xf]
      %v5007 = vld [vmem:[%s6 + $0x14] sm:$0xf]
      %v5008 = vld [vmem:[%s6 + $0x18] sm:$0xf]
      %v5009 = vld [vmem:[%s6 + $0x1c] sm:$0xf]
      %v5010 = vld [vmem:[%s6 + $0x20] sm:$0xf]
      %v5011 = vld [vmem:[%s6 + $0x24] sm:$0xf]
      %v5012 = vld [vmem:[%s6 + $0x28] sm:$0xf]
      %v5013 = vld [vmem:[%s6 + $0x2c] sm:$0xf]
      %v5014 = vld [vmem:[%s6 + $0x30] sm:$0xf]
      %v5015 = vld [vmem:[%s6 + $0x34] sm:$0xf]
      %v5016 = vld [vmem:[%s6 + $0x38] sm:$0xf]
      %v5017 = vld [vmem:[%s6 + $0x3c] sm:$0xf]
      %v5018 = vld [vmem:[#allocation3 + $0x90] sm:$0x1]
      %v5019 = vld [vmem:[%s6 + $0x40] sm:$0xf]
      %v5020 = vld [vmem:[%s6 + $0x44] sm:$0xf]
      %v5021 = vld [vmem:[%s6 + $0x48] sm:$0xf]
      %v5022 = vld [vmem:[%s6 + $0x4c] sm:$0xf]
      %v5023 = vld [vmem:[%s6 + $0x50] sm:$0xf]
      %v5024 = vld [vmem:[%s6 + $0x54] sm:$0xf]
      %v5025 = vld [vmem:[%s6 + $0x58] sm:$0xf]
      %v5026 = vld [vmem:[%s6 + $0x5c] sm:$0xf]
      %v5027 = vld [vmem:[%s6 + $0x60] sm:$0xf]
      %v5028 = vld [vmem:[%s6 + $0x64] sm:$0xf]
      %v5029 = vld [vmem:[%s6 + $0x68] sm:$0xf]
      %v5030 = vld [vmem:[%s6 + $0x6c] sm:$0xf]
      %v5031 = vld [vmem:[%s6 + $0x70] sm:$0xf]
      %v5032 = vld [vmem:[%s6 + $0x74] sm:$0xf]
      %v5033 = vld [vmem:[%s6 + $0x78] sm:$0xf]
      %v5034 = vld [vmem:[%s6 + $0x7c] sm:$0xf]
      %v5036 = vshrl.u32 %v4984, 16
      %v5038 = vshll.u32 %v4984, 16
      %v5040 = vrot.slane %v5038, 1
      %v5041 = vor.u32 %v5036, %v5040
      %v5043 = vshll.u32 %v4985, 16
      %v5045 = vrot.slane %v5043, 1
      %v5046 = vsel %vm1332, %v5041, %v5045
      %v5047 = vshrl.u32 %v4985, 16
      %v5049 = vor.u32 %v5047, %v5045
      %v5051 = vshll.u32 %v4986, 16
      %v5053 = vrot.slane %v5051, 1
      %v5054 = vsel %vm1332, %v5049, %v5053
      %v5055 = vshrl.u32 %v4986, 16
      %v5057 = vor.u32 %v5055, %v5053
      %v5059 = vshll.u32 %v4987, 16
      %v5061 = vrot.slane %v5059, 1
      %v5062 = vsel %vm1332, %v5057, %v5061
      %v5063 = vshrl.u32 %v4987, 16
      %v5065 = vor.u32 %v5063, %v5061
      %v5067 = vshll.u32 %v4988, 16
      %v5069 = vrot.slane %v5067, 1
      %v5070 = vsel %vm1332, %v5065, %v5069
      %v5071 = vshrl.u32 %v4988, 16
      %v5073 = vor.u32 %v5071, %v5069
      %v5075 = vshll.u32 %v4989, 16
      %v5077 = vrot.slane %v5075, 1
      %v5078 = vsel %vm1332, %v5073, %v5077
      %v5079 = vshrl.u32 %v4989, 16
      %v5081 = vor.u32 %v5079, %v5077
      %v5083 = vshll.u32 %v4990, 16
      %v5085 = vrot.slane %v5083, 1
      %v5086 = vsel %vm1332, %v5081, %v5085
      %v5087 = vshrl.u32 %v4990, 16
      %v5089 = vor.u32 %v5087, %v5085
      %v5091 = vshll.u32 %v4991, 16
      %v5093 = vrot.slane %v5091, 1
      %v5094 = vsel %vm1332, %v5089, %v5093
      %v5095 = vshrl.u32 %v4991, 16
      %v5097 = vor.u32 %v5095, %v5093
      %v5099 = vshll.u32 %v4992, 16
      %v5101 = vrot.slane %v5099, 1
      %v5102 = vsel %vm1332, %v5097, %v5101
      %v5103 = vshrl.u32 %v4992, 16
      %v5105 = vor.u32 %v5103, %v5101
      %v5107 = vshll.u32 %v4993, 16
      %v5109 = vrot.slane %v5107, 1
      %v5110 = vsel %vm1332, %v5105, %v5109
      %v5111 = vshrl.u32 %v4993, 16
      %v5113 = vor.u32 %v5111, %v5109
      %v5115 = vshll.u32 %v4994, 16
      %v5117 = vrot.slane %v5115, 1
      %v5118 = vsel %vm1332, %v5113, %v5117
      %v5119 = vshrl.u32 %v4994, 16
      %v5121 = vor.u32 %v5119, %v5117
      %v5123 = vshll.u32 %v4995, 16
      %v5125 = vrot.slane %v5123, 1
      %v5126 = vsel %vm1332, %v5121, %v5125
      %v5127 = vshrl.u32 %v4995, 16
      %v5129 = vor.u32 %v5127, %v5125
      %v5131 = vshll.u32 %v4996, 16
      %v5133 = vrot.slane %v5131, 1
      %v5134 = vsel %vm1332, %v5129, %v5133
      %v5135 = vshrl.u32 %v4996, 16
      %v5137 = vor.u32 %v5135, %v5133
      %v5139 = vshll.u32 %v4997, 16
      %v5141 = vrot.slane %v5139, 1
      %v5142 = vsel %vm1332, %v5137, %v5141
      %v5143 = vshrl.u32 %v4997, 16
      %v5145 = vor.u32 %v5143, %v5141
      %v5147 = vshll.u32 %v4998, 16
      %v5149 = vrot.slane %v5147, 1
      %v5150 = vsel %vm1332, %v5145, %v5149
      %v5151 = vshrl.u32 %v4998, 16
      %v5153 = vor.u32 %v5151, %v5149
      %v5155 = vshll.u32 %v4999, 16
      %v5157 = vrot.slane %v5155, 1
      %v5158 = vsel %vm1332, %v5153, %v5157
      %v5159 = vshrl.u32 %v4999, 16
      %v5161 = vor.u32 %v5159, %v5157
      %v5163 = vshll.u32 %v5000, 16
      %v5165 = vrot.slane %v5163, 1
      %v5166 = vsel %vm1332, %v5161, %v5165
      %v5167 = vshrl.u32 %v5000, 16
      %v5169 = vor.u32 %v5167, %v5165
      %v5171 = vshll.u32 %v5001, 16
      %v5173 = vrot.slane %v5171, 1
      %v5174 = vsel %vm1332, %v5169, %v5173
      %v5175 = vshrl.u32 %v5001, 16
      %v5177 = vor.u32 %v5175, %v5173
      %v5179 = vshll.u32 %v5018, 16
      %v5181 = vrot.slane %v5179, 1
      %v5182 = vsel %vm1332, %v5177, %v5181
      %v5217 = vunpack.c.l.b16 %v5019
      %v5218 = vunpack.c.l.b16 %v5020
      %v5219 = vunpack.c.l.b16 %v5021
      %v5220 = vunpack.c.l.b16 %v5022
      %v5221 = vunpack.c.l.b16 %v5023
      %v5222 = vunpack.c.l.b16 %v5024
      %v5223 = vunpack.c.l.b16 %v5025
      %v5224 = vunpack.c.l.b16 %v5026
      %v5225 = vunpack.c.l.b16 %v5027
      %v5226 = vunpack.c.l.b16 %v5028
      %v5227 = vunpack.c.l.b16 %v5029
      %v5228 = vunpack.c.l.b16 %v5030
      %v5229 = vunpack.c.l.b16 %v5031
      %v5230 = vunpack.c.l.b16 %v5032
      %v5231 = vunpack.c.l.b16 %v5033
      %v5232 = vunpack.c.l.b16 %v5034
      %v5233 = vpack.c.b16 %v5218, %v5217
      %v5234 = vpack.c.b16 %v5220, %v5219
      %v5235 = vpack.c.b16 %v5222, %v5221
      %v5236 = vpack.c.b16 %v5224, %v5223
      %v5237 = vpack.c.b16 %v5226, %v5225
      %v5238 = vpack.c.b16 %v5228, %v5227
      %v5239 = vpack.c.b16 %v5230, %v5229
      %v5240 = vpack.c.b16 %v5232, %v5231
      %5249 = vmatprep.subr.bf16.mxu0 0
      %5250 = vmatpush1.bf16.msra.mxu0 %v5233
      %5251 = vmatprep.subr.bf16.mxu0 0
      %5252 = vmatpush1.bf16.msra.mxu0 %v5234
      %5253 = vmatprep.subr.bf16.mxu0 0
      %5254 = vmatpush1.bf16.msra.mxu0 %v5235
      %5255 = vmatprep.subr.bf16.mxu0 0
      %5256 = vmatpush1.bf16.msra.mxu0 %v5236
      %5257 = vmatprep.subr.bf16.mxu0 0
      %5258 = vmatpush1.bf16.msra.mxu0 %v5237
      %5259 = vmatprep.subr.bf16.mxu0 0
      %5260 = vmatpush1.bf16.msra.mxu0 %v5238
      %5261 = vmatprep.subr.bf16.mxu0 0
      %5262 = vmatpush1.bf16.msra.mxu0 %v5239
      %5263 = vmatprep.subr.bf16.mxu0 0
      %5264 = vmatpush1.bf16.msra.mxu0 %v5240
      %5265 = vmatprep.subr.bf16.mxu0 0
      %5266 = vmatpush1.bf16.msra.mxu0 0
      %5267 = vmatprep.subr.bf16.mxu0 0
      %5268 = vmatpush1.bf16.msra.mxu0 0
      %5269 = vmatprep.subr.bf16.mxu0 0
      %5270 = vmatpush1.bf16.msra.mxu0 0
      %5271 = vmatprep.subr.bf16.mxu0 0
      %5272 = vmatpush1.bf16.msra.mxu0 0
      %5273 = vmatprep.subr.bf16.mxu0 0
      %5274 = vmatpush1.bf16.msra.mxu0 0
      %5275 = vmatprep.subr.bf16.mxu0 0
      %5276 = vmatpush1.bf16.msra.mxu0 0
      %5277 = vmatprep.subr.bf16.mxu0 0
      %5278 = vmatpush1.bf16.msra.mxu0 0
      %5279 = vmatprep.subr.bf16.mxu0 0
      %5280 = vmatpush1.bf16.msra.mxu0 0
      %5281 = vmatprep.mubr.bf16.mxu0 0
      %5282 = vmatmul.mubr.bf16.gmra.mrb[0].mxu0 %v5046
      %v5283 = vpop.f32.mrb[0].mxu0
      %v5284 = vadd.f32 0.0, %v5283
      %v5285 = vpop.f32.mrb[0].mxu0
      %v5286 = vpop.f32.mrb[0].mxu0
      %v5287 = vadd.f32 0.0, %v5286
      %v5288 = vpop.f32.mrb[0].mxu0
      %5289 = vmatprep.mubr.bf16.mxu0 0
      %5290 = vmatmul.mubr.bf16.gmra.mrb[0].mxu0 %v5054
      %v5291 = vpop.f32.mrb[0].mxu0
      %v5292 = vadd.f32 0.0, %v5291
      %v5293 = vpop.f32.mrb[0].mxu0
      %v5294 = vpop.f32.mrb[0].mxu0
      %v5295 = vadd.f32 0.0, %v5294
      %v5296 = vpop.f32.mrb[0].mxu0
      %5297 = vmatprep.mubr.bf16.mxu0 0
      %5298 = vmatmul.mubr.bf16.gmra.mrb[0].mxu0 %v5062
      %v5299 = vpop.f32.mrb[0].mxu0
      %v5300 = vadd.f32 0.0, %v5299
      %v5301 = vpop.f32.mrb[0].mxu0
      %v5302 = vpop.f32.mrb[0].mxu0
      %v5303 = vadd.f32 0.0, %v5302
      %v5304 = vpop.f32.mrb[0].mxu0
      %5305 = vmatprep.mubr.bf16.mxu0 0
      %5306 = vmatmul.mubr.bf16.gmra.mrb[0].mxu0 %v5070
      %v5307 = vpop.f32.mrb[0].mxu0
      %v5308 = vadd.f32 0.0, %v5307
      %v5309 = vpop.f32.mrb[0].mxu0
      %v5310 = vpop.f32.mrb[0].mxu0
      %v5311 = vadd.f32 0.0, %v5310
      %v5312 = vpop.f32.mrb[0].mxu0
      %5313 = vmatprep.mubr.bf16.mxu0 0
      %5314 = vmatmul.mubr.bf16.gmra.mrb[0].mxu0 %v5078
      %v5315 = vpop.f32.mrb[0].mxu0
      %v5316 = vadd.f32 0.0, %v5315
      %v5317 = vpop.f32.mrb[0].mxu0
      %v5318 = vpop.f32.mrb[0].mxu0
      %v5319 = vadd.f32 0.0, %v5318
      %v5320 = vpop.f32.mrb[0].mxu0
      %5321 = vmatprep.mubr.bf16.mxu0 0
      %5322 = vmatmul.mubr.bf16.gmra.mrb[0].mxu0 %v5086
      %v5323 = vpop.f32.mrb[0].mxu0
      %v5324 = vadd.f32 0.0, %v5323
      %v5325 = vpop.f32.mrb[0].mxu0
      %v5326 = vpop.f32.mrb[0].mxu0
      %v5327 = vadd.f32 0.0, %v5326
      %v5328 = vpop.f32.mrb[0].mxu0
      %5329 = vmatprep.mubr.bf16.mxu0 0
      %5330 = vmatmul.mubr.bf16.gmra.mrb[0].mxu0 %v5094
      %v5331 = vpop.f32.mrb[0].mxu0
      %v5332 = vadd.f32 0.0, %v5331
      %v5333 = vpop.f32.mrb[0].mxu0
      %v5334 = vpop.f32.mrb[0].mxu0
      %v5335 = vadd.f32 0.0, %v5334
      %v5336 = vpop.f32.mrb[0].mxu0
      %5337 = vmatprep.mubr.bf16.mxu0 0
      %5338 = vmatmul.mubr.bf16.gmra.mrb[0].mxu0 %v5102
      %v5339 = vpop.f32.mrb[0].mxu0
      %v5340 = vadd.f32 0.0, %v5339
      %v5341 = vpop.f32.mrb[0].mxu0
      %v5342 = vpop.f32.mrb[0].mxu0
      %v5343 = vadd.f32 0.0, %v5342
      %v5344 = vpop.f32.mrb[0].mxu0
      %5345 = vmatprep.mubr.bf16.mxu0 0
      %5346 = vmatmul.mubr.bf16.gmra.mrb[0].mxu0 %v5110
      %v5347 = vpop.f32.mrb[0].mxu0
      %v5348 = vadd.f32 0.0, %v5347
      %v5349 = vpop.f32.mrb[0].mxu0
      %v5350 = vpop.f32.mrb[0].mxu0
      %v5351 = vadd.f32 0.0, %v5350
      %v5352 = vpop.f32.mrb[0].mxu0
      %5353 = vmatprep.mubr.bf16.mxu0 0
      %5354 = vmatmul.mubr.bf16.gmra.mrb[0].mxu0 %v5118
      %v5355 = vpop.f32.mrb[0].mxu0
      %v5356 = vadd.f32 0.0, %v5355
      %v5357 = vpop.f32.mrb[0].mxu0
      %v5358 = vpop.f32.mrb[0].mxu0
      %v5359 = vadd.f32 0.0, %v5358
      %v5360 = vpop.f32.mrb[0].mxu0
      %5361 = vmatprep.mubr.bf16.mxu0 0
      %5362 = vmatmul.mubr.bf16.gmra.mrb[0].mxu0 %v5126
      %v5363 = vpop.f32.mrb[0].mxu0
      %v5364 = vadd.f32 0.0, %v5363
      %v5365 = vpop.f32.mrb[0].mxu0
      %v5366 = vpop.f32.mrb[0].mxu0
      %v5367 = vadd.f32 0.0, %v5366
      %v5368 = vpop.f32.mrb[0].mxu0
      %5369 = vmatprep.mubr.bf16.mxu0 0
      %5370 = vmatmul.mubr.bf16.gmra.mrb[0].mxu0 %v5134
      %v5371 = vpop.f32.mrb[0].mxu0
      %v5372 = vadd.f32 0.0, %v5371
      %v5373 = vpop.f32.mrb[0].mxu0
      %v5374 = vpop.f32.mrb[0].mxu0
      %v5375 = vadd.f32 0.0, %v5374
      %v5376 = vpop.f32.mrb[0].mxu0
      %5377 = vmatprep.mubr.bf16.mxu0 0
      %5378 = vmatmul.mubr.bf16.gmra.mrb[0].mxu0 %v5142
      %v5379 = vpop.f32.mrb[0].mxu0
      %v5380 = vadd.f32 0.0, %v5379
      %v5381 = vpop.f32.mrb[0].mxu0
      %v5382 = vpop.f32.mrb[0].mxu0
      %v5383 = vadd.f32 0.0, %v5382
      %v5384 = vpop.f32.mrb[0].mxu0
      %5385 = vmatprep.mubr.bf16.mxu0 0
      %5386 = vmatmul.mubr.bf16.gmra.mrb[0].mxu0 %v5150
      %v5387 = vpop.f32.mrb[0].mxu0
      %v5388 = vadd.f32 0.0, %v5387
      %v5389 = vpop.f32.mrb[0].mxu0
      %v5390 = vpop.f32.mrb[0].mxu0
      %v5391 = vadd.f32 0.0, %v5390
      %v5392 = vpop.f32.mrb[0].mxu0
      %5393 = vmatprep.mubr.bf16.mxu0 0
      %5394 = vmatmul.mubr.bf16.gmra.mrb[0].mxu0 %v5158
      %v5395 = vpop.f32.mrb[0].mxu0
      %v5396 = vadd.f32 0.0, %v5395
      %v5397 = vpop.f32.mrb[0].mxu0
      %v5398 = vpop.f32.mrb[0].mxu0
      %v5399 = vadd.f32 0.0, %v5398
      %v5400 = vpop.f32.mrb[0].mxu0
      %5401 = vmatprep.mubr.bf16.mxu0 0
      %5402 = vmatmul.mubr.bf16.gmra.mrb[0].mxu0 %v5166
      %v5403 = vpop.f32.mrb[0].mxu0
      %v5404 = vadd.f32 0.0, %v5403
      %v5405 = vpop.f32.mrb[0].mxu0
      %v5406 = vpop.f32.mrb[0].mxu0
      %v5407 = vadd.f32 0.0, %v5406
      %v5408 = vpop.f32.mrb[0].mxu0
      %5409 = vmatprep.mubr.bf16.mxu0 0
      %5410 = vmatmul.mubr.bf16.gmra.mrb[0].mxu0 %v5174
      %v5411 = vpop.f32.mrb[0].mxu0
      %v5412 = vadd.f32 0.0, %v5411
      %v5413 = vpop.f32.mrb[0].mxu0
      %v5414 = vpop.f32.mrb[0].mxu0
      %v5415 = vadd.f32 0.0, %v5414
      %v5416 = vpop.f32.mrb[0].mxu0
      %5417 = vmatprep.mubr.bf16.mxu0 0
      %5418 = vmatmul.mubr.bf16.gmra.mrb[0].mxu0 %v5182
      %v5419 = vpop.f32.mrb[0].mxu0
      %v5420 = vadd.f32 0.0, %v5419
      %v5421 = vpop.f32.mrb[0].mxu0
      %v5422 = vpop.f32.mrb[0].mxu0
      %v5423 = vadd.f32 0.0, %v5422
      %v5424 = vpop.f32.mrb[0].mxu0
      %5425 = vdwg.mxu0
      %v5442 = vunpack.c.l.b16 %v5002
      %v5443 = vunpack.c.l.b16 %v5003
      %v5444 = vunpack.c.l.b16 %v5004
      %v5445 = vunpack.c.l.b16 %v5005
      %v5446 = vunpack.c.l.b16 %v5006
      %v5447 = vunpack.c.l.b16 %v5007
      %v5448 = vunpack.c.l.b16 %v5008
      %v5449 = vunpack.c.l.b16 %v5009
      %v5450 = vunpack.c.l.b16 %v5010
      %v5451 = vunpack.c.l.b16 %v5011
      %v5452 = vunpack.c.l.b16 %v5012
      %v5453 = vunpack.c.l.b16 %v5013
      %v5454 = vunpack.c.l.b16 %v5014
      %v5455 = vunpack.c.l.b16 %v5015
      %v5456 = vunpack.c.l.b16 %v5016
      %v5457 = vunpack.c.l.b16 %v5017
      %v5458 = vpack.c.b16 %v5443, %v5442
      %v5459 = vpack.c.b16 %v5445, %v5444
      %v5460 = vpack.c.b16 %v5447, %v5446
      %v5461 = vpack.c.b16 %v5449, %v5448
      %v5462 = vpack.c.b16 %v5451, %v5450
      %v5463 = vpack.c.b16 %v5453, %v5452
      %v5464 = vpack.c.b16 %v5455, %v5454
      %v5465 = vpack.c.b16 %v5457, %v5456
      %5474 = vmatprep.subr.bf16.mxu0 0
      %5475 = vmatpush1.bf16.msra.mxu0 %v5458
      %5476 = vmatprep.subr.bf16.mxu0 0
      %5477 = vmatpush1.bf16.msra.mxu0 %v5459
      %5478 = vmatprep.subr.bf16.mxu0 0
      %5479 = vmatpush1.bf16.msra.mxu0 %v5460
      %5480 = vmatprep.subr.bf16.mxu0 0
      %5481 = vmatpush1.bf16.msra.mxu0 %v5461
      %5482 = vmatprep.subr.bf16.mxu0 0
      %5483 = vmatpush1.bf16.msra.mxu0 %v5462
      %5484 = vmatprep.subr.bf16.mxu0 0
      %5485 = vmatpush1.bf16.msra.mxu0 %v5463
      %5486 = vmatprep.subr.bf16.mxu0 0
      %5487 = vmatpush1.bf16.msra.mxu0 %v5464
      %5488 = vmatprep.subr.bf16.mxu0 0
      %5489 = vmatpush1.bf16.msra.mxu0 %v5465
      %5490 = vmatprep.subr.bf16.mxu0 0
      %5491 = vmatpush1.bf16.msra.mxu0 0
      %5492 = vmatprep.subr.bf16.mxu0 0
      %5493 = vmatpush1.bf16.msra.mxu0 0
      %5494 = vmatprep.subr.bf16.mxu0 0
      %5495 = vmatpush1.bf16.msra.mxu0 0
      %5496 = vmatprep.subr.bf16.mxu0 0
      %5497 = vmatpush1.bf16.msra.mxu0 0
      %5498 = vmatprep.subr.bf16.mxu0 0
      %5499 = vmatpush1.bf16.msra.mxu0 0
      %5500 = vmatprep.subr.bf16.mxu0 0
      %5501 = vmatpush1.bf16.msra.mxu0 0
      %5502 = vmatprep.subr.bf16.mxu0 0
      %5503 = vmatpush1.bf16.msra.mxu0 0
      %5504 = vmatprep.subr.bf16.mxu0 0
      %5505 = vmatpush1.bf16.msra.mxu0 0
      %5506 = vmatprep.mubr.bf16.mxu0 0
      %5507 = vmatmul.mubr.bf16.gmra.mrb[0].mxu0 %v4984
      %v5508 = vpop.f32.mrb[0].mxu0
      %v5509 = vadd.f32 %v5284, %v5508
      %v5510 = vpop.f32.mrb[0].mxu0
      %v5511 = vpop.f32.mrb[0].mxu0
      %v5512 = vadd.f32 %v5287, %v5511
      %v5513 = vpop.f32.mrb[0].mxu0
      %5514 = vmatprep.mubr.bf16.mxu0 0
      %5515 = vmatmul.mubr.bf16.gmra.mrb[0].mxu0 %v4985
      %v5516 = vpop.f32.mrb[0].mxu0
      %v5517 = vadd.f32 %v5292, %v5516
      %v5518 = vpop.f32.mrb[0].mxu0
      %v5519 = vpop.f32.mrb[0].mxu0
      %v5520 = vadd.f32 %v5295, %v5519
      %v5521 = vpop.f32.mrb[0].mxu0
      %5522 = vmatprep.mubr.bf16.mxu0 0
      %5523 = vmatmul.mubr.bf16.gmra.mrb[0].mxu0 %v4986
      %v5524 = vpop.f32.mrb[0].mxu0
      %v5525 = vadd.f32 %v5300, %v5524
      %v5526 = vpop.f32.mrb[0].mxu0
      %v5527 = vpop.f32.mrb[0].mxu0
      %v5528 = vadd.f32 %v5303, %v5527
      %v5529 = vpop.f32.mrb[0].mxu0
      %5530 = vmatprep.mubr.bf16.mxu0 0
      %5531 = vmatmul.mubr.bf16.gmra.mrb[0].mxu0 %v4987
      %v5532 = vpop.f32.mrb[0].mxu0
      %v5533 = vadd.f32 %v5308, %v5532
      %v5534 = vpop.f32.mrb[0].mxu0
      %v5535 = vpop.f32.mrb[0].mxu0
      %v5536 = vadd.f32 %v5311, %v5535
      %v5537 = vpop.f32.mrb[0].mxu0
      %5538 = vmatprep.mubr.bf16.mxu0 0
      %5539 = vmatmul.mubr.bf16.gmra.mrb[0].mxu0 %v4988
      %v5540 = vpop.f32.mrb[0].mxu0
      %v5541 = vadd.f32 %v5316, %v5540
      %v5542 = vpop.f32.mrb[0].mxu0
      %v5543 = vpop.f32.mrb[0].mxu0
      %v5544 = vadd.f32 %v5319, %v5543
      %v5545 = vpop.f32.mrb[0].mxu0
      %5546 = vmatprep.mubr.bf16.mxu0 0
      %5547 = vmatmul.mubr.bf16.gmra.mrb[0].mxu0 %v4989
      %v5548 = vpop.f32.mrb[0].mxu0
      %v5549 = vadd.f32 %v5324, %v5548
      %v5550 = vpop.f32.mrb[0].mxu0
      %v5551 = vpop.f32.mrb[0].mxu0
      %v5552 = vadd.f32 %v5327, %v5551
      %v5553 = vpop.f32.mrb[0].mxu0
      %5554 = vmatprep.mubr.bf16.mxu0 0
      %5555 = vmatmul.mubr.bf16.gmra.mrb[0].mxu0 %v4990
      %v5556 = vpop.f32.mrb[0].mxu0
      %v5557 = vadd.f32 %v5332, %v5556
      %v5558 = vpop.f32.mrb[0].mxu0
      %v5559 = vpop.f32.mrb[0].mxu0
      %v5560 = vadd.f32 %v5335, %v5559
      %v5561 = vpop.f32.mrb[0].mxu0
      %5562 = vmatprep.mubr.bf16.mxu0 0
      %5563 = vmatmul.mubr.bf16.gmra.mrb[0].mxu0 %v4991
      %v5564 = vpop.f32.mrb[0].mxu0
      %v5565 = vadd.f32 %v5340, %v5564
      %v5566 = vpop.f32.mrb[0].mxu0
      %v5567 = vpop.f32.mrb[0].mxu0
      %v5568 = vadd.f32 %v5343, %v5567
      %v5569 = vpop.f32.mrb[0].mxu0
      %5570 = vmatprep.mubr.bf16.mxu0 0
      %5571 = vmatmul.mubr.bf16.gmra.mrb[0].mxu0 %v4992
      %v5572 = vpop.f32.mrb[0].mxu0
      %v5573 = vadd.f32 %v5348, %v5572
      %v5574 = vpop.f32.mrb[0].mxu0
      %v5575 = vpop.f32.mrb[0].mxu0
      %v5576 = vadd.f32 %v5351, %v5575
      %v5577 = vpop.f32.mrb[0].mxu0
      %5578 = vmatprep.mubr.bf16.mxu0 0
      %5579 = vmatmul.mubr.bf16.gmra.mrb[0].mxu0 %v4993
      %v5580 = vpop.f32.mrb[0].mxu0
      %v5581 = vadd.f32 %v5356, %v5580
      %v5582 = vpop.f32.mrb[0].mxu0
      %v5583 = vpop.f32.mrb[0].mxu0
      %v5584 = vadd.f32 %v5359, %v5583
      %v5585 = vpop.f32.mrb[0].mxu0
      %5586 = vmatprep.mubr.bf16.mxu0 0
      %5587 = vmatmul.mubr.bf16.gmra.mrb[0].mxu0 %v4994
      %v5588 = vpop.f32.mrb[0].mxu0
      %v5589 = vadd.f32 %v5364, %v5588
      %v5590 = vpop.f32.mrb[0].mxu0
      %v5591 = vpop.f32.mrb[0].mxu0
      %v5592 = vadd.f32 %v5367, %v5591
      %v5593 = vpop.f32.mrb[0].mxu0
      %5594 = vmatprep.mubr.bf16.mxu0 0
      %5595 = vmatmul.mubr.bf16.gmra.mrb[0].mxu0 %v4995
      %v5596 = vpop.f32.mrb[0].mxu0
      %v5597 = vadd.f32 %v5372, %v5596
      %v5598 = vpop.f32.mrb[0].mxu0
      %v5599 = vpop.f32.mrb[0].mxu0
      %v5600 = vadd.f32 %v5375, %v5599
      %v5601 = vpop.f32.mrb[0].mxu0
      %5602 = vmatprep.mubr.bf16.mxu0 0
      %5603 = vmatmul.mubr.bf16.gmra.mrb[0].mxu0 %v4996
      %v5604 = vpop.f32.mrb[0].mxu0
      %v5605 = vadd.f32 %v5380, %v5604
      %v5606 = vpop.f32.mrb[0].mxu0
      %v5607 = vpop.f32.mrb[0].mxu0
      %v5608 = vadd.f32 %v5383, %v5607
      %v5609 = vpop.f32.mrb[0].mxu0
      %5610 = vmatprep.mubr.bf16.mxu0 0
      %5611 = vmatmul.mubr.bf16.gmra.mrb[0].mxu0 %v4997
      %v5612 = vpop.f32.mrb[0].mxu0
      %v5613 = vadd.f32 %v5388, %v5612
      %v5614 = vpop.f32.mrb[0].mxu0
      %v5615 = vpop.f32.mrb[0].mxu0
      %v5616 = vadd.f32 %v5391, %v5615
      %v5617 = vpop.f32.mrb[0].mxu0
      %5618 = vmatprep.mubr.bf16.mxu0 0
      %5619 = vmatmul.mubr.bf16.gmra.mrb[0].mxu0 %v4998
      %v5620 = vpop.f32.mrb[0].mxu0
      %v5621 = vadd.f32 %v5396, %v5620
      %v5622 = vpop.f32.mrb[0].mxu0
      %v5623 = vpop.f32.mrb[0].mxu0
      %v5624 = vadd.f32 %v5399, %v5623
      %v5625 = vpop.f32.mrb[0].mxu0
      %5626 = vmatprep.mubr.bf16.mxu0 0
      %5627 = vmatmul.mubr.bf16.gmra.mrb[0].mxu0 %v4999
      %v5628 = vpop.f32.mrb[0].mxu0
      %v5629 = vadd.f32 %v5404, %v5628
      %v5630 = vpop.f32.mrb[0].mxu0
      %v5631 = vpop.f32.mrb[0].mxu0
      %v5632 = vadd.f32 %v5407, %v5631
      %v5633 = vpop.f32.mrb[0].mxu0
      %5634 = vmatprep.mubr.bf16.mxu0 0
      %5635 = vmatmul.mubr.bf16.gmra.mrb[0].mxu0 %v5000
      %v5636 = vpop.f32.mrb[0].mxu0
      %v5637 = vadd.f32 %v5412, %v5636
      %v5638 = vpop.f32.mrb[0].mxu0
      %v5639 = vpop.f32.mrb[0].mxu0
      %v5640 = vadd.f32 %v5415, %v5639
      %v5641 = vpop.f32.mrb[0].mxu0
      %5642 = vmatprep.mubr.bf16.mxu0 0
      %5643 = vmatmul.mubr.bf16.gmra.mrb[0].mxu0 %v5001
      %v5644 = vpop.f32.mrb[0].mxu0
      %v5645 = vadd.f32 %v5420, %v5644
      %v5646 = vpop.f32.mrb[0].mxu0
      %v5647 = vpop.f32.mrb[0].mxu0
      %v5648 = vadd.f32 %v5423, %v5647
      %v5649 = vpop.f32.mrb[0].mxu0
      %5650 = vdwg.mxu0
      %v5651 = vld [vmem:[#allocation3] sm:$0xfe]
      %v5652 = vld [vmem:[%s6 + $0x80] sm:$0xf]
      %v5653 = vld [vmem:[%s6 + $0x84] sm:$0xf]
      %v5654 = vld [vmem:[%s6 + $0x88] sm:$0xf]
      %v5655 = vld [vmem:[%s6 + $0x8c] sm:$0xf]
      %v5656 = vld [vmem:[%s6 + $0x90] sm:$0xf]
      %v5657 = vld [vmem:[%s6 + $0x94] sm:$0xf]
      %v5658 = vld [vmem:[%s6 + $0x98] sm:$0xf]
      %v5659 = vld [vmem:[%s6 + $0x9c] sm:$0xf]
      %v5660 = vld [vmem:[%s6 + $0xa0] sm:$0xf]
      %v5661 = vld [vmem:[%s6 + $0xa4] sm:$0xf]
      %v5662 = vld [vmem:[%s6 + $0xa8] sm:$0xf]
      %v5663 = vld [vmem:[%s6 + $0xac] sm:$0xf]
      %v5664 = vld [vmem:[%s6 + $0xb0] sm:$0xf]
      %v5665 = vld [vmem:[%s6 + $0xb4] sm:$0xf]
      %v5666 = vld [vmem:[%s6 + $0xb8] sm:$0xf]
      %v5667 = vld [vmem:[%s6 + $0xbc] sm:$0xf]
      %v5687 = vrot.slane %v5651, 1
      %v5688 = vrot.slane %v4985, 1
      %v5689 = vsel %vm1985, %v5687, %v5688
      %v5690 = vrot.slane %v4986, 1
      %v5691 = vsel %vm1985, %v5688, %v5690
      %v5692 = vrot.slane %v4987, 1
      %v5693 = vsel %vm1985, %v5690, %v5692
      %v5694 = vrot.slane %v4988, 1
      %v5695 = vsel %vm1985, %v5692, %v5694
      %v5696 = vrot.slane %v4989, 1
      %v5697 = vsel %vm1985, %v5694, %v5696
      %v5698 = vrot.slane %v4990, 1
      %v5699 = vsel %vm1985, %v5696, %v5698
      %v5700 = vrot.slane %v4991, 1
      %v5701 = vsel %vm1985, %v5698, %v5700
      %v5702 = vrot.slane %v4992, 1
      %v5703 = vsel %vm1985, %v5700, %v5702
      %v5704 = vrot.slane %v4993, 1
      %v5705 = vsel %vm1985, %v5702, %v5704
      %v5706 = vrot.slane %v4994, 1
      %v5707 = vsel %vm1985, %v5704, %v5706
      %v5708 = vrot.slane %v4995, 1
      %v5709 = vsel %vm1985, %v5706, %v5708
      %v5710 = vrot.slane %v4996, 1
      %v5711 = vsel %vm1985, %v5708, %v5710
      %v5712 = vrot.slane %v4997, 1
      %v5713 = vsel %vm1985, %v5710, %v5712
      %v5714 = vrot.slane %v4998, 1
      %v5715 = vsel %vm1985, %v5712, %v5714
      %v5716 = vrot.slane %v4999, 1
      %v5717 = vsel %vm1985, %v5714, %v5716
      %v5718 = vrot.slane %v5000, 1
      %v5719 = vsel %vm1985, %v5716, %v5718
      %v5720 = vrot.slane %v5001, 1
      %v5721 = vsel %vm1985, %v5718, %v5720
      %v5722 = vrot.slane %v5018, 1
      %v5723 = vsel %vm1985, %v5720, %v5722
      %v5758 = vunpack.c.l.b16 %v5652
      %v5759 = vunpack.c.l.b16 %v5653
      %v5760 = vunpack.c.l.b16 %v5654
      %v5761 = vunpack.c.l.b16 %v5655
      %v5762 = vunpack.c.l.b16 %v5656
      %v5763 = vunpack.c.l.b16 %v5657
      %v5764 = vunpack.c.l.b16 %v5658
      %v5765 = vunpack.c.l.b16 %v5659
      %v5766 = vunpack.c.l.b16 %v5660
      %v5767 = vunpack.c.l.b16 %v5661
      %v5768 = vunpack.c.l.b16 %v5662
      %v5769 = vunpack.c.l.b16 %v5663
      %v5770 = vunpack.c.l.b16 %v5664
      %v5771 = vunpack.c.l.b16 %v5665
      %v5772 = vunpack.c.l.b16 %v5666
      %v5773 = vunpack.c.l.b16 %v5667
      %v5774 = vpack.c.b16 %v5759, %v5758
      %v5775 = vpack.c.b16 %v5761, %v5760
      %v5776 = vpack.c.b16 %v5763, %v5762
      %v5777 = vpack.c.b16 %v5765, %v5764
      %v5778 = vpack.c.b16 %v5767, %v5766
      %v5779 = vpack.c.b16 %v5769, %v5768
      %v5780 = vpack.c.b16 %v5771, %v5770
      %v5781 = vpack.c.b16 %v5773, %v5772
      %5790 = vmatprep.subr.bf16.mxu0 0
      %5791 = vmatpush1.bf16.msra.mxu0 %v5774
      %5792 = vmatprep.subr.bf16.mxu0 0
      %5793 = vmatpush1.bf16.msra.mxu0 %v5775
      %5794 = vmatprep.subr.bf16.mxu0 0
      %5795 = vmatpush1.bf16.msra.mxu0 %v5776
      %5796 = vmatprep.subr.bf16.mxu0 0
      %5797 = vmatpush1.bf16.msra.mxu0 %v5777
      %5798 = vmatprep.subr.bf16.mxu0 0
      %5799 = vmatpush1.bf16.msra.mxu0 %v5778
      %5800 = vmatprep.subr.bf16.mxu0 0
      %5801 = vmatpush1.bf16.msra.mxu0 %v5779
      %5802 = vmatprep.subr.bf16.mxu0 0
      %5803 = vmatpush1.bf16.msra.mxu0 %v5780
      %5804 = vmatprep.subr.bf16.mxu0 0
      %5805 = vmatpush1.bf16.msra.mxu0 %v5781
      %5806 = vmatprep.subr.bf16.mxu0 0
      %5807 = vmatpush1.bf16.msra.mxu0 0
      %5808 = vmatprep.subr.bf16.mxu0 0
      %5809 = vmatpush1.bf16.msra.mxu0 0
      %5810 = vmatprep.subr.bf16.mxu0 0
      %5811 = vmatpush1.bf16.msra.mxu0 0
      %5812 = vmatprep.subr.bf16.mxu0 0
      %5813 = vmatpush1.bf16.msra.mxu0 0
      %5814 = vmatprep.subr.bf16.mxu0 0
      %5815 = vmatpush1.bf16.msra.mxu0 0
      %5816 = vmatprep.subr.bf16.mxu0 0
      %5817 = vmatpush1.bf16.msra.mxu0 0
      %5818 = vmatprep.subr.bf16.mxu0 0
      %5819 = vmatpush1.bf16.msra.mxu0 0
      %5820 = vmatprep.subr.bf16.mxu0 0
      %5821 = vmatpush1.bf16.msra.mxu0 0
      %5822 = vmatprep.mubr.bf16.mxu0 0
      %5823 = vmatmul.mubr.bf16.gmra.mrb[0].mxu0 %v5689
      %v5824 = vpop.f32.mrb[0].mxu0
      %v5825 = vadd.f32 0.0, %v5824
      %v5826 = vpop.f32.mrb[0].mxu0
      %v5827 = vpop.f32.mrb[0].mxu0
      %v5828 = vadd.f32 0.0, %v5827
      %v5829 = vpop.f32.mrb[0].mxu0
      %5830 = vmatprep.mubr.bf16.mxu0 0
      %5831 = vmatmul.mubr.bf16.gmra.mrb[0].mxu0 %v5691
      %v5832 = vpop.f32.mrb[0].mxu0
      %v5833 = vadd.f32 0.0, %v5832
      %v5834 = vpop.f32.mrb[0].mxu0
      %v5835 = vpop.f32.mrb[0].mxu0
      %v5836 = vadd.f32 0.0, %v5835
      %v5837 = vpop.f32.mrb[0].mxu0
      %5838 = vmatprep.mubr.bf16.mxu0 0
      %5839 = vmatmul.mubr.bf16.gmra.mrb[0].mxu0 %v5693
      %v5840 = vpop.f32.mrb[0].mxu0
      %v5841 = vadd.f32 0.0, %v5840
      %v5842 = vpop.f32.mrb[0].mxu0
      %v5843 = vpop.f32.mrb[0].mxu0
      %v5844 = vadd.f32 0.0, %v5843
      %v5845 = vpop.f32.mrb[0].mxu0
      %5846 = vmatprep.mubr.bf16.mxu0 0
      %5847 = vmatmul.mubr.bf16.gmra.mrb[0].mxu0 %v5695
      %v5848 = vpop.f32.mrb[0].mxu0
      %v5849 = vadd.f32 0.0, %v5848
      %v5850 = vpop.f32.mrb[0].mxu0
      %v5851 = vpop.f32.mrb[0].mxu0
      %v5852 = vadd.f32 0.0, %v5851
      %v5853 = vpop.f32.mrb[0].mxu0
      %5854 = vmatprep.mubr.bf16.mxu0 0
      %5855 = vmatmul.mubr.bf16.gmra.mrb[0].mxu0 %v5697
      %v5856 = vpop.f32.mrb[0].mxu0
      %v5857 = vadd.f32 0.0, %v5856
      %v5858 = vpop.f32.mrb[0].mxu0
      %v5859 = vpop.f32.mrb[0].mxu0
      %v5860 = vadd.f32 0.0, %v5859
      %v5861 = vpop.f32.mrb[0].mxu0
      %5862 = vmatprep.mubr.bf16.mxu0 0
      %5863 = vmatmul.mubr.bf16.gmra.mrb[0].mxu0 %v5699
      %v5864 = vpop.f32.mrb[0].mxu0
      %v5865 = vadd.f32 0.0, %v5864
      %v5866 = vpop.f32.mrb[0].mxu0
      %v5867 = vpop.f32.mrb[0].mxu0
      %v5868 = vadd.f32 0.0, %v5867
      %v5869 = vpop.f32.mrb[0].mxu0
      %5870 = vmatprep.mubr.bf16.mxu0 0
      %5871 = vmatmul.mubr.bf16.gmra.mrb[0].mxu0 %v5701
      %v5872 = vpop.f32.mrb[0].mxu0
      %v5873 = vadd.f32 0.0, %v5872
      %v5874 = vpop.f32.mrb[0].mxu0
      %v5875 = vpop.f32.mrb[0].mxu0
      %v5876 = vadd.f32 0.0, %v5875
      %v5877 = vpop.f32.mrb[0].mxu0
      %5878 = vmatprep.mubr.bf16.mxu0 0
      %5879 = vmatmul.mubr.bf16.gmra.mrb[0].mxu0 %v5703
      %v5880 = vpop.f32.mrb[0].mxu0
      %v5881 = vadd.f32 0.0, %v5880
      %v5882 = vpop.f32.mrb[0].mxu0
      %v5883 = vpop.f32.mrb[0].mxu0
      %v5884 = vadd.f32 0.0, %v5883
      %v5885 = vpop.f32.mrb[0].mxu0
      %5886 = vmatprep.mubr.bf16.mxu0 0
      %5887 = vmatmul.mubr.bf16.gmra.mrb[0].mxu0 %v5705
      %v5888 = vpop.f32.mrb[0].mxu0
      %v5889 = vadd.f32 0.0, %v5888
      %v5890 = vpop.f32.mrb[0].mxu0
      %v5891 = vpop.f32.mrb[0].mxu0
      %v5892 = vadd.f32 0.0, %v5891
      %v5893 = vpop.f32.mrb[0].mxu0
      %5894 = vmatprep.mubr.bf16.mxu0 0
      %5895 = vmatmul.mubr.bf16.gmra.mrb[0].mxu0 %v5707
      %v5896 = vpop.f32.mrb[0].mxu0
      %v5897 = vadd.f32 0.0, %v5896
      %v5898 = vpop.f32.mrb[0].mxu0
      %v5899 = vpop.f32.mrb[0].mxu0
      %v5900 = vadd.f32 0.0, %v5899
      %v5901 = vpop.f32.mrb[0].mxu0
      %5902 = vmatprep.mubr.bf16.mxu0 0
      %5903 = vmatmul.mubr.bf16.gmra.mrb[0].mxu0 %v5709
      %v5904 = vpop.f32.mrb[0].mxu0
      %v5905 = vadd.f32 0.0, %v5904
      %v5906 = vpop.f32.mrb[0].mxu0
      %v5907 = vpop.f32.mrb[0].mxu0
      %v5908 = vadd.f32 0.0, %v5907
      %v5909 = vpop.f32.mrb[0].mxu0
      %5910 = vmatprep.mubr.bf16.mxu0 0
      %5911 = vmatmul.mubr.bf16.gmra.mrb[0].mxu0 %v5711
      %v5912 = vpop.f32.mrb[0].mxu0
      %v5913 = vadd.f32 0.0, %v5912
      %v5914 = vpop.f32.mrb[0].mxu0
      %v5915 = vpop.f32.mrb[0].mxu0
      %v5916 = vadd.f32 0.0, %v5915
      %v5917 = vpop.f32.mrb[0].mxu0
      %5918 = vmatprep.mubr.bf16.mxu0 0
      %5919 = vmatmul.mubr.bf16.gmra.mrb[0].mxu0 %v5713
      %v5920 = vpop.f32.mrb[0].mxu0
      %v5921 = vadd.f32 0.0, %v5920
      %v5922 = vpop.f32.mrb[0].mxu0
      %v5923 = vpop.f32.mrb[0].mxu0
      %v5924 = vadd.f32 0.0, %v5923
      %v5925 = vpop.f32.mrb[0].mxu0
      %5926 = vmatprep.mubr.bf16.mxu0 0
      %5927 = vmatmul.mubr.bf16.gmra.mrb[0].mxu0 %v5715
      %v5928 = vpop.f32.mrb[0].mxu0
      %v5929 = vadd.f32 0.0, %v5928
      %v5930 = vpop.f32.mrb[0].mxu0
      %v5931 = vpop.f32.mrb[0].mxu0
      %v5932 = vadd.f32 0.0, %v5931
      %v5933 = vpop.f32.mrb[0].mxu0
      %5934 = vmatprep.mubr.bf16.mxu0 0
      %5935 = vmatmul.mubr.bf16.gmra.mrb[0].mxu0 %v5717
      %v5936 = vpop.f32.mrb[0].mxu0
      %v5937 = vadd.f32 0.0, %v5936
      %v5938 = vpop.f32.mrb[0].mxu0
      %v5939 = vpop.f32.mrb[0].mxu0
      %v5940 = vadd.f32 0.0, %v5939
      %v5941 = vpop.f32.mrb[0].mxu0
      %5942 = vmatprep.mubr.bf16.mxu0 0
      %5943 = vmatmul.mubr.bf16.gmra.mrb[0].mxu0 %v5719
      %v5944 = vpop.f32.mrb[0].mxu0
      %v5945 = vadd.f32 0.0, %v5944
      %v5946 = vpop.f32.mrb[0].mxu0
      %v5947 = vpop.f32.mrb[0].mxu0
      %v5948 = vadd.f32 0.0, %v5947
      %v5949 = vpop.f32.mrb[0].mxu0
      %5950 = vmatprep.mubr.bf16.mxu0 0
      %5951 = vmatmul.mubr.bf16.gmra.mrb[0].mxu0 %v5721
      %v5952 = vpop.f32.mrb[0].mxu0
      %v5953 = vadd.f32 0.0, %v5952
      %v5954 = vpop.f32.mrb[0].mxu0
      %v5955 = vpop.f32.mrb[0].mxu0
      %v5956 = vadd.f32 0.0, %v5955
      %v5957 = vpop.f32.mrb[0].mxu0
      %5958 = vmatprep.mubr.bf16.mxu0 0
      %5959 = vmatmul.mubr.bf16.gmra.mrb[0].mxu0 %v5723
      %v5960 = vpop.f32.mrb[0].mxu0
      %v5961 = vadd.f32 0.0, %v5960
      %v5962 = vpop.f32.mrb[0].mxu0
      %v5963 = vpop.f32.mrb[0].mxu0
      %v5964 = vadd.f32 0.0, %v5963
      %v5965 = vpop.f32.mrb[0].mxu0
      %5966 = vdwg.mxu0
      %v5967 = vadd.f32 %v5509, %v5825
      %v5968 = vadd.f32 %v5512, %v5828
      %v5969 = vadd.f32 %v5517, %v5833
      %v5970 = vadd.f32 %v5520, %v5836
      %v5971 = vadd.f32 %v5525, %v5841
      %v5972 = vadd.f32 %v5528, %v5844
      %v5973 = vadd.f32 %v5533, %v5849
      %v5974 = vadd.f32 %v5536, %v5852
      %v5975 = vadd.f32 %v5541, %v5857
      %v5976 = vadd.f32 %v5544, %v5860
      %v5977 = vadd.f32 %v5549, %v5865
      %v5978 = vadd.f32 %v5552, %v5868
      %v5979 = vadd.f32 %v5557, %v5873
      %v5980 = vadd.f32 %v5560, %v5876
      %v5981 = vadd.f32 %v5565, %v5881
      %v5982 = vadd.f32 %v5568, %v5884
      %v5983 = vadd.f32 %v5573, %v5889
      %v5984 = vadd.f32 %v5576, %v5892
      %v5985 = vadd.f32 %v5581, %v5897
      %v5986 = vadd.f32 %v5584, %v5900
      %v5987 = vadd.f32 %v5589, %v5905
      %v5988 = vadd.f32 %v5592, %v5908
      %v5989 = vadd.f32 %v5597, %v5913
      %v5990 = vadd.f32 %v5600, %v5916
      %v5991 = vadd.f32 %v5605, %v5921
      %v5992 = vadd.f32 %v5608, %v5924
      %v5993 = vadd.f32 %v5613, %v5929
      %v5994 = vadd.f32 %v5616, %v5932
      %v5995 = vadd.f32 %v5621, %v5937
      %v5996 = vadd.f32 %v5624, %v5940
      %v5997 = vadd.f32 %v5629, %v5945
      %v5998 = vadd.f32 %v5632, %v5948
      %v5999 = vadd.f32 %v5637, %v5953
      %v6000 = vadd.f32 %v5640, %v5956
      %v6001 = vadd.f32 %v5645, %v5961
      %v6002 = vadd.f32 %v5648, %v5964
      %v6003 = vld [vmem:[#allocation3 + $0x8] sm:$0xfe]
      %v6004 = vld [vmem:[#allocation3 + $0x10] sm:$0xff]
      %v6005 = vld [vmem:[#allocation3 + $0x18] sm:$0xff]
      %v6006 = vld [vmem:[#allocation3 + $0x20] sm:$0xff]
      %v6007 = vld [vmem:[#allocation3 + $0x28] sm:$0xff]
      %v6008 = vld [vmem:[#allocation3 + $0x30] sm:$0xff]
      %v6009 = vld [vmem:[#allocation3 + $0x38] sm:$0xff]
      %v6010 = vld [vmem:[#allocation3 + $0x40] sm:$0xff]
      %v6011 = vld [vmem:[#allocation3 + $0x48] sm:$0xff]
      %v6012 = vld [vmem:[#allocation3 + $0x50] sm:$0xff]
      %v6013 = vld [vmem:[#allocation3 + $0x58] sm:$0xff]
      %v6014 = vld [vmem:[#allocation3 + $0x60] sm:$0xff]
      %v6015 = vld [vmem:[#allocation3 + $0x68] sm:$0xff]
      %v6016 = vld [vmem:[#allocation3 + $0x70] sm:$0xff]
      %v6017 = vld [vmem:[#allocation3 + $0x78] sm:$0xff]
      %v6018 = vld [vmem:[#allocation3 + $0x80] sm:$0xff]
      %v6019 = vld [vmem:[#allocation3 + $0x88] sm:$0xff]
      %v6020 = vld [vmem:[#allocation3 + $0x90] sm:$0xff]
      %v6021 = vld [vmem:[#allocation3 + $0x98] sm:$0x1]
      %v6022 = vld [vmem:[%s6 + $0xc0] sm:$0xf]
      %v6023 = vld [vmem:[%s6 + $0xc4] sm:$0xf]
      %v6024 = vld [vmem:[%s6 + $0xc8] sm:$0xf]
      %v6025 = vld [vmem:[%s6 + $0xcc] sm:$0xf]
      %v6026 = vld [vmem:[%s6 + $0xd0] sm:$0xf]
      %v6027 = vld [vmem:[%s6 + $0xd4] sm:$0xf]
      %v6028 = vld [vmem:[%s6 + $0xd8] sm:$0xf]
      %v6029 = vld [vmem:[%s6 + $0xdc] sm:$0xf]
      %v6030 = vld [vmem:[%s6 + $0xe0] sm:$0xf]
      %v6031 = vld [vmem:[%s6 + $0xe4] sm:$0xf]
      %v6032 = vld [vmem:[%s6 + $0xe8] sm:$0xf]
      %v6033 = vld [vmem:[%s6 + $0xec] sm:$0xf]
      %v6034 = vld [vmem:[%s6 + $0xf0] sm:$0xf]
      %v6035 = vld [vmem:[%s6 + $0xf4] sm:$0xf]
      %v6036 = vld [vmem:[%s6 + $0xf8] sm:$0xf]
      %v6037 = vld [vmem:[%s6 + $0xfc] sm:$0xf]
      %v6057 = vrot.slane %v6003, 1
      %v6058 = vrot.slane %v6004, 1
      %v6059 = vsel %vm1985, %v6057, %v6058
      %v6060 = vrot.slane %v6005, 1
      %v6061 = vsel %vm1985, %v6058, %v6060
      %v6062 = vrot.slane %v6006, 1
      %v6063 = vsel %vm1985, %v6060, %v6062
      %v6064 = vrot.slane %v6007, 1
      %v6065 = vsel %vm1985, %v6062, %v6064
      %v6066 = vrot.slane %v6008, 1
      %v6067 = vsel %vm1985, %v6064, %v6066
      %v6068 = vrot.slane %v6009, 1
      %v6069 = vsel %vm1985, %v6066, %v6068
      %v6070 = vrot.slane %v6010, 1
      %v6071 = vsel %vm1985, %v6068, %v6070
      %v6072 = vrot.slane %v6011, 1
      %v6073 = vsel %vm1985, %v6070, %v6072
      %v6074 = vrot.slane %v6012, 1
      %v6075 = vsel %vm1985, %v6072, %v6074
      %v6076 = vrot.slane %v6013, 1
      %v6077 = vsel %vm1985, %v6074, %v6076
      %v6078 = vrot.slane %v6014, 1
      %v6079 = vsel %vm1985, %v6076, %v6078
      %v6080 = vrot.slane %v6015, 1
      %v6081 = vsel %vm1985, %v6078, %v6080
      %v6082 = vrot.slane %v6016, 1
      %v6083 = vsel %vm1985, %v6080, %v6082
      %v6084 = vrot.slane %v6017, 1
      %v6085 = vsel %vm1985, %v6082, %v6084
      %v6086 = vrot.slane %v6018, 1
      %v6087 = vsel %vm1985, %v6084, %v6086
      %v6088 = vrot.slane %v6019, 1
      %v6089 = vsel %vm1985, %v6086, %v6088
      %v6090 = vrot.slane %v6020, 1
      %v6091 = vsel %vm1985, %v6088, %v6090
      %v6092 = vrot.slane %v6021, 1
      %v6093 = vsel %vm1985, %v6090, %v6092
      %v6128 = vunpack.c.l.b16 %v6022
      %v6129 = vunpack.c.l.b16 %v6023
      %v6130 = vunpack.c.l.b16 %v6024
      %v6131 = vunpack.c.l.b16 %v6025
      %v6132 = vunpack.c.l.b16 %v6026
      %v6133 = vunpack.c.l.b16 %v6027
      %v6134 = vunpack.c.l.b16 %v6028
      %v6135 = vunpack.c.l.b16 %v6029
      %v6136 = vunpack.c.l.b16 %v6030
      %v6137 = vunpack.c.l.b16 %v6031
      %v6138 = vunpack.c.l.b16 %v6032
      %v6139 = vunpack.c.l.b16 %v6033
      %v6140 = vunpack.c.l.b16 %v6034
      %v6141 = vunpack.c.l.b16 %v6035
      %v6142 = vunpack.c.l.b16 %v6036
      %v6143 = vunpack.c.l.b16 %v6037
      %v6144 = vpack.c.b16 %v6129, %v6128
      %v6145 = vpack.c.b16 %v6131, %v6130
      %v6146 = vpack.c.b16 %v6133, %v6132
      %v6147 = vpack.c.b16 %v6135, %v6134
      %v6148 = vpack.c.b16 %v6137, %v6136
      %v6149 = vpack.c.b16 %v6139, %v6138
      %v6150 = vpack.c.b16 %v6141, %v6140
      %v6151 = vpack.c.b16 %v6143, %v6142
      %6160 = vmatprep.subr.bf16.mxu0 0
      %6161 = vmatpush1.bf16.msra.mxu0 %v6144
      %6162 = vmatprep.subr.bf16.mxu0 0
      %6163 = vmatpush1.bf16.msra.mxu0 %v6145
      %6164 = vmatprep.subr.bf16.mxu0 0
      %6165 = vmatpush1.bf16.msra.mxu0 %v6146
      %6166 = vmatprep.subr.bf16.mxu0 0
      %6167 = vmatpush1.bf16.msra.mxu0 %v6147
      %6168 = vmatprep.subr.bf16.mxu0 0
      %6169 = vmatpush1.bf16.msra.mxu0 %v6148
      %6170 = vmatprep.subr.bf16.mxu0 0
      %6171 = vmatpush1.bf16.msra.mxu0 %v6149
      %6172 = vmatprep.subr.bf16.mxu0 0
      %6173 = vmatpush1.bf16.msra.mxu0 %v6150
      %6174 = vmatprep.subr.bf16.mxu0 0
      %6175 = vmatpush1.bf16.msra.mxu0 %v6151
      %6176 = vmatprep.subr.bf16.mxu0 0
      %6177 = vmatpush1.bf16.msra.mxu0 0
      %6178 = vmatprep.subr.bf16.mxu0 0
      %6179 = vmatpush1.bf16.msra.mxu0 0
      %6180 = vmatprep.subr.bf16.mxu0 0
      %6181 = vmatpush1.bf16.msra.mxu0 0
      %6182 = vmatprep.subr.bf16.mxu0 0
      %6183 = vmatpush1.bf16.msra.mxu0 0
      %6184 = vmatprep.subr.bf16.mxu0 0
      %6185 = vmatpush1.bf16.msra.mxu0 0
      %6186 = vmatprep.subr.bf16.mxu0 0
      %6187 = vmatpush1.bf16.msra.mxu0 0
      %6188 = vmatprep.subr.bf16.mxu0 0
      %6189 = vmatpush1.bf16.msra.mxu0 0
      %6190 = vmatprep.subr.bf16.mxu0 0
      %6191 = vmatpush1.bf16.msra.mxu0 0
      %6192 = vmatprep.mubr.bf16.mxu0 0
      %6193 = vmatmul.mubr.bf16.gmra.mrb[0].mxu0 %v6059
      %v6194 = vpop.f32.mrb[0].mxu0
      %v6195 = vadd.f32 0.0, %v6194
      %v6196 = vpop.f32.mrb[0].mxu0
      %v6197 = vpop.f32.mrb[0].mxu0
      %v6198 = vadd.f32 0.0, %v6197
      %v6199 = vpop.f32.mrb[0].mxu0
      %6200 = vmatprep.mubr.bf16.mxu0 0
      %6201 = vmatmul.mubr.bf16.gmra.mrb[0].mxu0 %v6061
      %v6202 = vpop.f32.mrb[0].mxu0
      %v6203 = vadd.f32 0.0, %v6202
      %v6204 = vpop.f32.mrb[0].mxu0
      %v6205 = vpop.f32.mrb[0].mxu0
      %v6206 = vadd.f32 0.0, %v6205
      %v6207 = vpop.f32.mrb[0].mxu0
      %6208 = vmatprep.mubr.bf16.mxu0 0
      %6209 = vmatmul.mubr.bf16.gmra.mrb[0].mxu0 %v6063
      %v6210 = vpop.f32.mrb[0].mxu0
      %v6211 = vadd.f32 0.0, %v6210
      %v6212 = vpop.f32.mrb[0].mxu0
      %v6213 = vpop.f32.mrb[0].mxu0
      %v6214 = vadd.f32 0.0, %v6213
      %v6215 = vpop.f32.mrb[0].mxu0
      %6216 = vmatprep.mubr.bf16.mxu0 0
      %6217 = vmatmul.mubr.bf16.gmra.mrb[0].mxu0 %v6065
      %v6218 = vpop.f32.mrb[0].mxu0
      %v6219 = vadd.f32 0.0, %v6218
      %v6220 = vpop.f32.mrb[0].mxu0
      %v6221 = vpop.f32.mrb[0].mxu0
      %v6222 = vadd.f32 0.0, %v6221
      %v6223 = vpop.f32.mrb[0].mxu0
      %6224 = vmatprep.mubr.bf16.mxu0 0
      %6225 = vmatmul.mubr.bf16.gmra.mrb[0].mxu0 %v6067
      %v6226 = vpop.f32.mrb[0].mxu0
      %v6227 = vadd.f32 0.0, %v6226
      %v6228 = vpop.f32.mrb[0].mxu0
      %v6229 = vpop.f32.mrb[0].mxu0
      %v6230 = vadd.f32 0.0, %v6229
      %v6231 = vpop.f32.mrb[0].mxu0
      %6232 = vmatprep.mubr.bf16.mxu0 0
      %6233 = vmatmul.mubr.bf16.gmra.mrb[0].mxu0 %v6069
      %v6234 = vpop.f32.mrb[0].mxu0
      %v6235 = vadd.f32 0.0, %v6234
      %v6236 = vpop.f32.mrb[0].mxu0
      %v6237 = vpop.f32.mrb[0].mxu0
      %v6238 = vadd.f32 0.0, %v6237
      %v6239 = vpop.f32.mrb[0].mxu0
      %6240 = vmatprep.mubr.bf16.mxu0 0
      %6241 = vmatmul.mubr.bf16.gmra.mrb[0].mxu0 %v6071
      %v6242 = vpop.f32.mrb[0].mxu0
      %v6243 = vadd.f32 0.0, %v6242
      %v6244 = vpop.f32.mrb[0].mxu0
      %v6245 = vpop.f32.mrb[0].mxu0
      %v6246 = vadd.f32 0.0, %v6245
      %v6247 = vpop.f32.mrb[0].mxu0
      %6248 = vmatprep.mubr.bf16.mxu0 0
      %6249 = vmatmul.mubr.bf16.gmra.mrb[0].mxu0 %v6073
      %v6250 = vpop.f32.mrb[0].mxu0
      %v6251 = vadd.f32 0.0, %v6250
      %v6252 = vpop.f32.mrb[0].mxu0
      %v6253 = vpop.f32.mrb[0].mxu0
      %v6254 = vadd.f32 0.0, %v6253
      %v6255 = vpop.f32.mrb[0].mxu0
      %6256 = vmatprep.mubr.bf16.mxu0 0
      %6257 = vmatmul.mubr.bf16.gmra.mrb[0].mxu0 %v6075
      %v6258 = vpop.f32.mrb[0].mxu0
      %v6259 = vadd.f32 0.0, %v6258
      %v6260 = vpop.f32.mrb[0].mxu0
      %v6261 = vpop.f32.mrb[0].mxu0
      %v6262 = vadd.f32 0.0, %v6261
      %v6263 = vpop.f32.mrb[0].mxu0
      %6264 = vmatprep.mubr.bf16.mxu0 0
      %6265 = vmatmul.mubr.bf16.gmra.mrb[0].mxu0 %v6077
      %v6266 = vpop.f32.mrb[0].mxu0
      %v6267 = vadd.f32 0.0, %v6266
      %v6268 = vpop.f32.mrb[0].mxu0
      %v6269 = vpop.f32.mrb[0].mxu0
      %v6270 = vadd.f32 0.0, %v6269
      %v6271 = vpop.f32.mrb[0].mxu0
      %6272 = vmatprep.mubr.bf16.mxu0 0
      %6273 = vmatmul.mubr.bf16.gmra.mrb[0].mxu0 %v6079
      %v6274 = vpop.f32.mrb[0].mxu0
      %v6275 = vadd.f32 0.0, %v6274
      %v6276 = vpop.f32.mrb[0].mxu0
      %v6277 = vpop.f32.mrb[0].mxu0
      %v6278 = vadd.f32 0.0, %v6277
      %v6279 = vpop.f32.mrb[0].mxu0
      %6280 = vmatprep.mubr.bf16.mxu0 0
      %6281 = vmatmul.mubr.bf16.gmra.mrb[0].mxu0 %v6081
      %v6282 = vpop.f32.mrb[0].mxu0
      %v6283 = vadd.f32 0.0, %v6282
      %v6284 = vpop.f32.mrb[0].mxu0
      %v6285 = vpop.f32.mrb[0].mxu0
      %v6286 = vadd.f32 0.0, %v6285
      %v6287 = vpop.f32.mrb[0].mxu0
      %6288 = vmatprep.mubr.bf16.mxu0 0
      %6289 = vmatmul.mubr.bf16.gmra.mrb[0].mxu0 %v6083
      %v6290 = vpop.f32.mrb[0].mxu0
      %v6291 = vadd.f32 0.0, %v6290
      %v6292 = vpop.f32.mrb[0].mxu0
      %v6293 = vpop.f32.mrb[0].mxu0
      %v6294 = vadd.f32 0.0, %v6293
      %v6295 = vpop.f32.mrb[0].mxu0
      %6296 = vmatprep.mubr.bf16.mxu0 0
      %6297 = vmatmul.mubr.bf16.gmra.mrb[0].mxu0 %v6085
      %v6298 = vpop.f32.mrb[0].mxu0
      %v6299 = vadd.f32 0.0, %v6298
      %v6300 = vpop.f32.mrb[0].mxu0
      %v6301 = vpop.f32.mrb[0].mxu0
      %v6302 = vadd.f32 0.0, %v6301
      %v6303 = vpop.f32.mrb[0].mxu0
      %6304 = vmatprep.mubr.bf16.mxu0 0
      %6305 = vmatmul.mubr.bf16.gmra.mrb[0].mxu0 %v6087
      %v6306 = vpop.f32.mrb[0].mxu0
      %v6307 = vadd.f32 0.0, %v6306
      %v6308 = vpop.f32.mrb[0].mxu0
      %v6309 = vpop.f32.mrb[0].mxu0
      %v6310 = vadd.f32 0.0, %v6309
      %v6311 = vpop.f32.mrb[0].mxu0
      %6312 = vmatprep.mubr.bf16.mxu0 0
      %6313 = vmatmul.mubr.bf16.gmra.mrb[0].mxu0 %v6089
      %v6314 = vpop.f32.mrb[0].mxu0
      %v6315 = vadd.f32 0.0, %v6314
      %v6316 = vpop.f32.mrb[0].mxu0
      %v6317 = vpop.f32.mrb[0].mxu0
      %v6318 = vadd.f32 0.0, %v6317
      %v6319 = vpop.f32.mrb[0].mxu0
      %6320 = vmatprep.mubr.bf16.mxu0 0
      %6321 = vmatmul.mubr.bf16.gmra.mrb[0].mxu0 %v6091
      %v6322 = vpop.f32.mrb[0].mxu0
      %v6323 = vadd.f32 0.0, %v6322
      %v6324 = vpop.f32.mrb[0].mxu0
      %v6325 = vpop.f32.mrb[0].mxu0
      %v6326 = vadd.f32 0.0, %v6325
      %v6327 = vpop.f32.mrb[0].mxu0
      %6328 = vmatprep.mubr.bf16.mxu0 0
      %6329 = vmatmul.mubr.bf16.gmra.mrb[0].mxu0 %v6093
      %v6330 = vpop.f32.mrb[0].mxu0
      %v6331 = vadd.f32 0.0, %v6330
      %v6332 = vpop.f32.mrb[0].mxu0
      %v6333 = vpop.f32.mrb[0].mxu0
      %v6334 = vadd.f32 0.0, %v6333
      %v6335 = vpop.f32.mrb[0].mxu0
      %6336 = vdwg.mxu0
      %v6337 = vadd.f32 %v5967, %v6195
      %v6338 = vadd.f32 %v5968, %v6198
      %v6339 = vadd.f32 %v5969, %v6203
      %v6340 = vadd.f32 %v5970, %v6206
      %v6341 = vadd.f32 %v5971, %v6211
      %v6342 = vadd.f32 %v5972, %v6214
      %v6343 = vadd.f32 %v5973, %v6219
      %v6344 = vadd.f32 %v5974, %v6222
      %v6345 = vadd.f32 %v5975, %v6227
      %v6346 = vadd.f32 %v5976, %v6230
      %v6347 = vadd.f32 %v5977, %v6235
      %v6348 = vadd.f32 %v5978, %v6238
      %v6349 = vadd.f32 %v5979, %v6243
      %v6350 = vadd.f32 %v5980, %v6246
      %v6351 = vadd.f32 %v5981, %v6251
      %v6352 = vadd.f32 %v5982, %v6254
      %v6353 = vadd.f32 %v5983, %v6259
      %v6354 = vadd.f32 %v5984, %v6262
      %v6355 = vadd.f32 %v5985, %v6267
      %v6356 = vadd.f32 %v5986, %v6270
      %v6357 = vadd.f32 %v5987, %v6275
      %v6358 = vadd.f32 %v5988, %v6278
      %v6359 = vadd.f32 %v5989, %v6283
      %v6360 = vadd.f32 %v5990, %v6286
      %v6361 = vadd.f32 %v5991, %v6291
      %v6362 = vadd.f32 %v5992, %v6294
      %v6363 = vadd.f32 %v5993, %v6299
      %v6364 = vadd.f32 %v5994, %v6302
      %v6365 = vadd.f32 %v5995, %v6307
      %v6366 = vadd.f32 %v5996, %v6310
      %v6367 = vadd.f32 %v5997, %v6315
      %v6368 = vadd.f32 %v5998, %v6318
      %v6369 = vadd.f32 %v5999, %v6323
      %v6370 = vadd.f32 %v6000, %v6326
      %v6371 = vadd.f32 %v6001, %v6331
      %v6372 = vadd.f32 %v6002, %v6334
      %v6373 = vld [vmem:[#allocation3 + $0x98] sm:$0x3]
      %v6374 = vld [vmem:[%s6 + $0x100] sm:$0xf]
      %v6375 = vld [vmem:[%s6 + $0x104] sm:$0xf]
      %v6376 = vld [vmem:[%s6 + $0x108] sm:$0xf]
      %v6377 = vld [vmem:[%s6 + $0x10c] sm:$0xf]
      %v6378 = vld [vmem:[%s6 + $0x110] sm:$0xf]
      %v6379 = vld [vmem:[%s6 + $0x114] sm:$0xf]
      %v6380 = vld [vmem:[%s6 + $0x118] sm:$0xf]
      %v6381 = vld [vmem:[%s6 + $0x11c] sm:$0xf]
      %v6382 = vld [vmem:[%s6 + $0x120] sm:$0xf]
      %v6383 = vld [vmem:[%s6 + $0x124] sm:$0xf]
      %v6384 = vld [vmem:[%s6 + $0x128] sm:$0xf]
      %v6385 = vld [vmem:[%s6 + $0x12c] sm:$0xf]
      %v6386 = vld [vmem:[%s6 + $0x130] sm:$0xf]
      %v6387 = vld [vmem:[%s6 + $0x134] sm:$0xf]
      %v6388 = vld [vmem:[%s6 + $0x138] sm:$0xf]
      %v6389 = vld [vmem:[%s6 + $0x13c] sm:$0xf]
      %v6391 = vshrl.u32 %v6003, 16
      %v6393 = vrot.slane %v6391, 1
      %v6394 = vshll.u32 %v6003, 16
      %v6396 = vrot.slane %v6394, 2
      %v6397 = vor.u32 %v6393, %v6396
      %v6399 = vshrl.u32 %v6004, 16
      %v6401 = vrot.slane %v6399, 1
      %v6402 = vshll.u32 %v6004, 16
      %v6404 = vrot.slane %v6402, 2
      %v6405 = vor.u32 %v6401, %v6404
      %v6406 = vsel %vm2689, %v6397, %v6405
      %v6408 = vshrl.u32 %v6005, 16
      %v6410 = vrot.slane %v6408, 1
      %v6411 = vshll.u32 %v6005, 16
      %v6413 = vrot.slane %v6411, 2
      %v6414 = vor.u32 %v6410, %v6413
      %v6415 = vsel %vm2689, %v6405, %v6414
      %v6417 = vshrl.u32 %v6006, 16
      %v6419 = vrot.slane %v6417, 1
      %v6420 = vshll.u32 %v6006, 16
      %v6422 = vrot.slane %v6420, 2
      %v6423 = vor.u32 %v6419, %v6422
      %v6424 = vsel %vm2689, %v6414, %v6423
      %v6426 = vshrl.u32 %v6007, 16
      %v6428 = vrot.slane %v6426, 1
      %v6429 = vshll.u32 %v6007, 16
      %v6431 = vrot.slane %v6429, 2
      %v6432 = vor.u32 %v6428, %v6431
      %v6433 = vsel %vm2689, %v6423, %v6432
      %v6435 = vshrl.u32 %v6008, 16
      %v6437 = vrot.slane %v6435, 1
      %v6438 = vshll.u32 %v6008, 16
      %v6440 = vrot.slane %v6438, 2
      %v6441 = vor.u32 %v6437, %v6440
      %v6442 = vsel %vm2689, %v6432, %v6441
      %v6444 = vshrl.u32 %v6009, 16
      %v6446 = vrot.slane %v6444, 1
      %v6447 = vshll.u32 %v6009, 16
      %v6449 = vrot.slane %v6447, 2
      %v6450 = vor.u32 %v6446, %v6449
      %v6451 = vsel %vm2689, %v6441, %v6450
      %v6453 = vshrl.u32 %v6010, 16
      %v6455 = vrot.slane %v6453, 1
      %v6456 = vshll.u32 %v6010, 16
      %v6458 = vrot.slane %v6456, 2
      %v6459 = vor.u32 %v6455, %v6458
      %v6460 = vsel %vm2689, %v6450, %v6459
      %v6462 = vshrl.u32 %v6011, 16
      %v6464 = vrot.slane %v6462, 1
      %v6465 = vshll.u32 %v6011, 16
      %v6467 = vrot.slane %v6465, 2
      %v6468 = vor.u32 %v6464, %v6467
      %v6469 = vsel %vm2689, %v6459, %v6468
      %v6471 = vshrl.u32 %v6012, 16
      %v6473 = vrot.slane %v6471, 1
      %v6474 = vshll.u32 %v6012, 16
      %v6476 = vrot.slane %v6474, 2
      %v6477 = vor.u32 %v6473, %v6476
      %v6478 = vsel %vm2689, %v6468, %v6477
      %v6480 = vshrl.u32 %v6013, 16
      %v6482 = vrot.slane %v6480, 1
      %v6483 = vshll.u32 %v6013, 16
      %v6485 = vrot.slane %v6483, 2
      %v6486 = vor.u32 %v6482, %v6485
      %v6487 = vsel %vm2689, %v6477, %v6486
      %v6489 = vshrl.u32 %v6014, 16
      %v6491 = vrot.slane %v6489, 1
      %v6492 = vshll.u32 %v6014, 16
      %v6494 = vrot.slane %v6492, 2
      %v6495 = vor.u32 %v6491, %v6494
      %v6496 = vsel %vm2689, %v6486, %v6495
      %v6498 = vshrl.u32 %v6015, 16
      %v6500 = vrot.slane %v6498, 1
      %v6501 = vshll.u32 %v6015, 16
      %v6503 = vrot.slane %v6501, 2
      %v6504 = vor.u32 %v6500, %v6503
      %v6505 = vsel %vm2689, %v6495, %v6504
      %v6507 = vshrl.u32 %v6016, 16
      %v6509 = vrot.slane %v6507, 1
      %v6510 = vshll.u32 %v6016, 16
      %v6512 = vrot.slane %v6510, 2
      %v6513 = vor.u32 %v6509, %v6512
      %v6514 = vsel %vm2689, %v6504, %v6513
      %v6516 = vshrl.u32 %v6017, 16
      %v6518 = vrot.slane %v6516, 1
      %v6519 = vshll.u32 %v6017, 16
      %v6521 = vrot.slane %v6519, 2
      %v6522 = vor.u32 %v6518, %v6521
      %v6523 = vsel %vm2689, %v6513, %v6522
      %v6525 = vshrl.u32 %v6018, 16
      %v6527 = vrot.slane %v6525, 1
      %v6528 = vshll.u32 %v6018, 16
      %v6530 = vrot.slane %v6528, 2
      %v6531 = vor.u32 %v6527, %v6530
      %v6532 = vsel %vm2689, %v6522, %v6531
      %v6534 = vshrl.u32 %v6019, 16
      %v6536 = vrot.slane %v6534, 1
      %v6537 = vshll.u32 %v6019, 16
      %v6539 = vrot.slane %v6537, 2
      %v6540 = vor.u32 %v6536, %v6539
      %v6541 = vsel %vm2689, %v6531, %v6540
      %v6543 = vshrl.u32 %v6020, 16
      %v6545 = vrot.slane %v6543, 1
      %v6546 = vshll.u32 %v6020, 16
      %v6548 = vrot.slane %v6546, 2
      %v6549 = vor.u32 %v6545, %v6548
      %v6550 = vsel %vm2689, %v6540, %v6549
      %v6552 = vshrl.u32 %v6373, 16
      %v6554 = vrot.slane %v6552, 1
      %v6555 = vshll.u32 %v6373, 16
      %v6557 = vrot.slane %v6555, 2
      %v6558 = vor.u32 %v6554, %v6557
      %v6559 = vsel %vm2689, %v6549, %v6558
      %v6594 = vunpack.c.l.b16 %v6374
      %v6595 = vunpack.c.l.b16 %v6375
      %v6596 = vunpack.c.l.b16 %v6376
      %v6597 = vunpack.c.l.b16 %v6377
      %v6598 = vunpack.c.l.b16 %v6378
      %v6599 = vunpack.c.l.b16 %v6379
      %v6600 = vunpack.c.l.b16 %v6380
      %v6601 = vunpack.c.l.b16 %v6381
      %v6602 = vunpack.c.l.b16 %v6382
      %v6603 = vunpack.c.l.b16 %v6383
      %v6604 = vunpack.c.l.b16 %v6384
      %v6605 = vunpack.c.l.b16 %v6385
      %v6606 = vunpack.c.l.b16 %v6386
      %v6607 = vunpack.c.l.b16 %v6387
      %v6608 = vunpack.c.l.b16 %v6388
      %v6609 = vunpack.c.l.b16 %v6389
      %v6610 = vpack.c.b16 %v6595, %v6594
      %v6611 = vpack.c.b16 %v6597, %v6596
      %v6612 = vpack.c.b16 %v6599, %v6598
      %v6613 = vpack.c.b16 %v6601, %v6600
      %v6614 = vpack.c.b16 %v6603, %v6602
      %v6615 = vpack.c.b16 %v6605, %v6604
      %v6616 = vpack.c.b16 %v6607, %v6606
      %v6617 = vpack.c.b16 %v6609, %v6608
      %6626 = vmatprep.subr.bf16.mxu0 0
      %6627 = vmatpush1.bf16.msra.mxu0 %v6610
      %6628 = vmatprep.subr.bf16.mxu0 0
      %6629 = vmatpush1.bf16.msra.mxu0 %v6611
      %6630 = vmatprep.subr.bf16.mxu0 0
      %6631 = vmatpush1.bf16.msra.mxu0 %v6612
      %6632 = vmatprep.subr.bf16.mxu0 0
      %6633 = vmatpush1.bf16.msra.mxu0 %v6613
      %6634 = vmatprep.subr.bf16.mxu0 0
      %6635 = vmatpush1.bf16.msra.mxu0 %v6614
      %6636 = vmatprep.subr.bf16.mxu0 0
      %6637 = vmatpush1.bf16.msra.mxu0 %v6615
      %6638 = vmatprep.subr.bf16.mxu0 0
      %6639 = vmatpush1.bf16.msra.mxu0 %v6616
      %6640 = vmatprep.subr.bf16.mxu0 0
      %6641 = vmatpush1.bf16.msra.mxu0 %v6617
      %6642 = vmatprep.subr.bf16.mxu0 0
      %6643 = vmatpush1.bf16.msra.mxu0 0
      %6644 = vmatprep.subr.bf16.mxu0 0
      %6645 = vmatpush1.bf16.msra.mxu0 0
      %6646 = vmatprep.subr.bf16.mxu0 0
      %6647 = vmatpush1.bf16.msra.mxu0 0
      %6648 = vmatprep.subr.bf16.mxu0 0
      %6649 = vmatpush1.bf16.msra.mxu0 0
      %6650 = vmatprep.subr.bf16.mxu0 0
      %6651 = vmatpush1.bf16.msra.mxu0 0
      %6652 = vmatprep.subr.bf16.mxu0 0
      %6653 = vmatpush1.bf16.msra.mxu0 0
      %6654 = vmatprep.subr.bf16.mxu0 0
      %6655 = vmatpush1.bf16.msra.mxu0 0
      %6656 = vmatprep.subr.bf16.mxu0 0
      %6657 = vmatpush1.bf16.msra.mxu0 0
      %6658 = vmatprep.mubr.bf16.mxu0 0
      %6659 = vmatmul.mubr.bf16.gmra.mrb[0].mxu0 %v6406
      %v6660 = vpop.f32.mrb[0].mxu0
      %v6661 = vadd.f32 0.0, %v6660
      %v6662 = vpop.f32.mrb[0].mxu0
      %v6663 = vpop.f32.mrb[0].mxu0
      %v6664 = vadd.f32 0.0, %v6663
      %v6665 = vpop.f32.mrb[0].mxu0
      %6666 = vmatprep.mubr.bf16.mxu0 0
      %6667 = vmatmul.mubr.bf16.gmra.mrb[0].mxu0 %v6415
      %v6668 = vpop.f32.mrb[0].mxu0
      %v6669 = vadd.f32 0.0, %v6668
      %v6670 = vpop.f32.mrb[0].mxu0
      %v6671 = vpop.f32.mrb[0].mxu0
      %v6672 = vadd.f32 0.0, %v6671
      %v6673 = vpop.f32.mrb[0].mxu0
      %6674 = vmatprep.mubr.bf16.mxu0 0
      %6675 = vmatmul.mubr.bf16.gmra.mrb[0].mxu0 %v6424
      %v6676 = vpop.f32.mrb[0].mxu0
      %v6677 = vadd.f32 0.0, %v6676
      %v6678 = vpop.f32.mrb[0].mxu0
      %v6679 = vpop.f32.mrb[0].mxu0
      %v6680 = vadd.f32 0.0, %v6679
      %v6681 = vpop.f32.mrb[0].mxu0
      %6682 = vmatprep.mubr.bf16.mxu0 0
      %6683 = vmatmul.mubr.bf16.gmra.mrb[0].mxu0 %v6433
      %v6684 = vpop.f32.mrb[0].mxu0
      %v6685 = vadd.f32 0.0, %v6684
      %v6686 = vpop.f32.mrb[0].mxu0
      %v6687 = vpop.f32.mrb[0].mxu0
      %v6688 = vadd.f32 0.0, %v6687
      %v6689 = vpop.f32.mrb[0].mxu0
      %6690 = vmatprep.mubr.bf16.mxu0 0
      %6691 = vmatmul.mubr.bf16.gmra.mrb[0].mxu0 %v6442
      %v6692 = vpop.f32.mrb[0].mxu0
      %v6693 = vadd.f32 0.0, %v6692
      %v6694 = vpop.f32.mrb[0].mxu0
      %v6695 = vpop.f32.mrb[0].mxu0
      %v6696 = vadd.f32 0.0, %v6695
      %v6697 = vpop.f32.mrb[0].mxu0
      %6698 = vmatprep.mubr.bf16.mxu0 0
      %6699 = vmatmul.mubr.bf16.gmra.mrb[0].mxu0 %v6451
      %v6700 = vpop.f32.mrb[0].mxu0
      %v6701 = vadd.f32 0.0, %v6700
      %v6702 = vpop.f32.mrb[0].mxu0
      %v6703 = vpop.f32.mrb[0].mxu0
      %v6704 = vadd.f32 0.0, %v6703
      %v6705 = vpop.f32.mrb[0].mxu0
      %6706 = vmatprep.mubr.bf16.mxu0 0
      %6707 = vmatmul.mubr.bf16.gmra.mrb[0].mxu0 %v6460
      %v6708 = vpop.f32.mrb[0].mxu0
      %v6709 = vadd.f32 0.0, %v6708
      %v6710 = vpop.f32.mrb[0].mxu0
      %v6711 = vpop.f32.mrb[0].mxu0
      %v6712 = vadd.f32 0.0, %v6711
      %v6713 = vpop.f32.mrb[0].mxu0
      %6714 = vmatprep.mubr.bf16.mxu0 0
      %6715 = vmatmul.mubr.bf16.gmra.mrb[0].mxu0 %v6469
      %v6716 = vpop.f32.mrb[0].mxu0
      %v6717 = vadd.f32 0.0, %v6716
      %v6718 = vpop.f32.mrb[0].mxu0
      %v6719 = vpop.f32.mrb[0].mxu0
      %v6720 = vadd.f32 0.0, %v6719
      %v6721 = vpop.f32.mrb[0].mxu0
      %6722 = vmatprep.mubr.bf16.mxu0 0
      %6723 = vmatmul.mubr.bf16.gmra.mrb[0].mxu0 %v6478
      %v6724 = vpop.f32.mrb[0].mxu0
      %v6725 = vadd.f32 0.0, %v6724
      %v6726 = vpop.f32.mrb[0].mxu0
      %v6727 = vpop.f32.mrb[0].mxu0
      %v6728 = vadd.f32 0.0, %v6727
      %v6729 = vpop.f32.mrb[0].mxu0
      %6730 = vmatprep.mubr.bf16.mxu0 0
      %6731 = vmatmul.mubr.bf16.gmra.mrb[0].mxu0 %v6487
      %v6732 = vpop.f32.mrb[0].mxu0
      %v6733 = vadd.f32 0.0, %v6732
      %v6734 = vpop.f32.mrb[0].mxu0
      %v6735 = vpop.f32.mrb[0].mxu0
      %v6736 = vadd.f32 0.0, %v6735
      %v6737 = vpop.f32.mrb[0].mxu0
      %6738 = vmatprep.mubr.bf16.mxu0 0
      %6739 = vmatmul.mubr.bf16.gmra.mrb[0].mxu0 %v6496
      %v6740 = vpop.f32.mrb[0].mxu0
      %v6741 = vadd.f32 0.0, %v6740
      %v6742 = vpop.f32.mrb[0].mxu0
      %v6743 = vpop.f32.mrb[0].mxu0
      %v6744 = vadd.f32 0.0, %v6743
      %v6745 = vpop.f32.mrb[0].mxu0
      %6746 = vmatprep.mubr.bf16.mxu0 0
      %6747 = vmatmul.mubr.bf16.gmra.mrb[0].mxu0 %v6505
      %v6748 = vpop.f32.mrb[0].mxu0
      %v6749 = vadd.f32 0.0, %v6748
      %v6750 = vpop.f32.mrb[0].mxu0
      %v6751 = vpop.f32.mrb[0].mxu0
      %v6752 = vadd.f32 0.0, %v6751
      %v6753 = vpop.f32.mrb[0].mxu0
      %6754 = vmatprep.mubr.bf16.mxu0 0
      %6755 = vmatmul.mubr.bf16.gmra.mrb[0].mxu0 %v6514
      %v6756 = vpop.f32.mrb[0].mxu0
      %v6757 = vadd.f32 0.0, %v6756
      %v6758 = vpop.f32.mrb[0].mxu0
      %v6759 = vpop.f32.mrb[0].mxu0
      %v6760 = vadd.f32 0.0, %v6759
      %v6761 = vpop.f32.mrb[0].mxu0
      %6762 = vmatprep.mubr.bf16.mxu0 0
      %6763 = vmatmul.mubr.bf16.gmra.mrb[0].mxu0 %v6523
      %v6764 = vpop.f32.mrb[0].mxu0
      %v6765 = vadd.f32 0.0, %v6764
      %v6766 = vpop.f32.mrb[0].mxu0
      %v6767 = vpop.f32.mrb[0].mxu0
      %v6768 = vadd.f32 0.0, %v6767
      %v6769 = vpop.f32.mrb[0].mxu0
      %6770 = vmatprep.mubr.bf16.mxu0 0
      %6771 = vmatmul.mubr.bf16.gmra.mrb[0].mxu0 %v6532
      %v6772 = vpop.f32.mrb[0].mxu0
      %v6773 = vadd.f32 0.0, %v6772
      %v6774 = vpop.f32.mrb[0].mxu0
      %v6775 = vpop.f32.mrb[0].mxu0
      %v6776 = vadd.f32 0.0, %v6775
      %v6777 = vpop.f32.mrb[0].mxu0
      %6778 = vmatprep.mubr.bf16.mxu0 0
      %6779 = vmatmul.mubr.bf16.gmra.mrb[0].mxu0 %v6541
      %v6780 = vpop.f32.mrb[0].mxu0
      %v6781 = vadd.f32 0.0, %v6780
      %v6782 = vpop.f32.mrb[0].mxu0
      %v6783 = vpop.f32.mrb[0].mxu0
      %v6784 = vadd.f32 0.0, %v6783
      %v6785 = vpop.f32.mrb[0].mxu0
      %6786 = vmatprep.mubr.bf16.mxu0 0
      %6787 = vmatmul.mubr.bf16.gmra.mrb[0].mxu0 %v6550
      %v6788 = vpop.f32.mrb[0].mxu0
      %v6789 = vadd.f32 0.0, %v6788
      %v6790 = vpop.f32.mrb[0].mxu0
      %v6791 = vpop.f32.mrb[0].mxu0
      %v6792 = vadd.f32 0.0, %v6791
      %v6793 = vpop.f32.mrb[0].mxu0
      %6794 = vmatprep.mubr.bf16.mxu0 0
      %6795 = vmatmul.mubr.bf16.gmra.mrb[0].mxu0 %v6559
      %v6796 = vpop.f32.mrb[0].mxu0
      %v6797 = vadd.f32 0.0, %v6796
      %v6798 = vpop.f32.mrb[0].mxu0
      %v6799 = vpop.f32.mrb[0].mxu0
      %v6800 = vadd.f32 0.0, %v6799
      %v6801 = vpop.f32.mrb[0].mxu0
      %6802 = vdwg.mxu0
      %v6803 = vadd.f32 %v6337, %v6661
      %v6804 = vadd.f32 %v6338, %v6664
      %v6805 = vadd.f32 %v6339, %v6669
      %v6806 = vadd.f32 %v6340, %v6672
      %v6807 = vadd.f32 %v6341, %v6677
      %v6808 = vadd.f32 %v6342, %v6680
      %v6809 = vadd.f32 %v6343, %v6685
      %v6810 = vadd.f32 %v6344, %v6688
      %v6811 = vadd.f32 %v6345, %v6693
      %v6812 = vadd.f32 %v6346, %v6696
      %v6813 = vadd.f32 %v6347, %v6701
      %v6814 = vadd.f32 %v6348, %v6704
      %v6815 = vadd.f32 %v6349, %v6709
      %v6816 = vadd.f32 %v6350, %v6712
      %v6817 = vadd.f32 %v6351, %v6717
      %v6818 = vadd.f32 %v6352, %v6720
      %v6819 = vadd.f32 %v6353, %v6725
      %v6820 = vadd.f32 %v6354, %v6728
      %v6821 = vadd.f32 %v6355, %v6733
      %v6822 = vadd.f32 %v6356, %v6736
      %v6823 = vadd.f32 %v6357, %v6741
      %v6824 = vadd.f32 %v6358, %v6744
      %v6825 = vadd.f32 %v6359, %v6749
      %v6826 = vadd.f32 %v6360, %v6752
      %v6827 = vadd.f32 %v6361, %v6757
      %v6828 = vadd.f32 %v6362, %v6760
      %v6829 = vadd.f32 %v6363, %v6765
      %v6830 = vadd.f32 %v6364, %v6768
      %v6831 = vadd.f32 %v6365, %v6773
      %v6832 = vadd.f32 %v6366, %v6776
      %v6833 = vadd.f32 %v6367, %v6781
      %v6834 = vadd.f32 %v6368, %v6784
      %v6835 = vadd.f32 %v6369, %v6789
      %v6836 = vadd.f32 %v6370, %v6792
      %v6837 = vadd.f32 %v6371, %v6797
      %v6838 = vadd.f32 %v6372, %v6800
      %v6839 = vld [vmem:[#allocation3 + $0x8] sm:$0xfc]
      %v6840 = vld [vmem:[%s6 + $0x140] sm:$0xf]
      %v6841 = vld [vmem:[%s6 + $0x144] sm:$0xf]
      %v6842 = vld [vmem:[%s6 + $0x148] sm:$0xf]
      %v6843 = vld [vmem:[%s6 + $0x14c] sm:$0xf]
      %v6844 = vld [vmem:[%s6 + $0x150] sm:$0xf]
      %v6845 = vld [vmem:[%s6 + $0x154] sm:$0xf]
      %v6846 = vld [vmem:[%s6 + $0x158] sm:$0xf]
      %v6847 = vld [vmem:[%s6 + $0x15c] sm:$0xf]
      %v6848 = vld [vmem:[%s6 + $0x160] sm:$0xf]
      %v6849 = vld [vmem:[%s6 + $0x164] sm:$0xf]
      %v6850 = vld [vmem:[%s6 + $0x168] sm:$0xf]
      %v6851 = vld [vmem:[%s6 + $0x16c] sm:$0xf]
      %v6852 = vld [vmem:[%s6 + $0x170] sm:$0xf]
      %v6853 = vld [vmem:[%s6 + $0x174] sm:$0xf]
      %v6854 = vld [vmem:[%s6 + $0x178] sm:$0xf]
      %v6855 = vld [vmem:[%s6 + $0x17c] sm:$0xf]
      %v6858 = vrot.slane %v6839, 2
      %v6859 = vrot.slane %v6004, 2
      %v6860 = vsel %vm3158, %v6858, %v6859
      %v6861 = vrot.slane %v6005, 2
      %v6862 = vsel %vm3158, %v6859, %v6861
      %v6863 = vrot.slane %v6006, 2
      %v6864 = vsel %vm3158, %v6861, %v6863
      %v6865 = vrot.slane %v6007, 2
      %v6866 = vsel %vm3158, %v6863, %v6865
      %v6867 = vrot.slane %v6008, 2
      %v6868 = vsel %vm3158, %v6865, %v6867
      %v6869 = vrot.slane %v6009, 2
      %v6870 = vsel %vm3158, %v6867, %v6869
      %v6871 = vrot.slane %v6010, 2
      %v6872 = vsel %vm3158, %v6869, %v6871
      %v6873 = vrot.slane %v6011, 2
      %v6874 = vsel %vm3158, %v6871, %v6873
      %v6875 = vrot.slane %v6012, 2
      %v6876 = vsel %vm3158, %v6873, %v6875
      %v6877 = vrot.slane %v6013, 2
      %v6878 = vsel %vm3158, %v6875, %v6877
      %v6879 = vrot.slane %v6014, 2
      %v6880 = vsel %vm3158, %v6877, %v6879
      %v6881 = vrot.slane %v6015, 2
      %v6882 = vsel %vm3158, %v6879, %v6881
      %v6883 = vrot.slane %v6016, 2
      %v6884 = vsel %vm3158, %v6881, %v6883
      %v6885 = vrot.slane %v6017, 2
      %v6886 = vsel %vm3158, %v6883, %v6885
      %v6887 = vrot.slane %v6018, 2
      %v6888 = vsel %vm3158, %v6885, %v6887
      %v6889 = vrot.slane %v6019, 2
      %v6890 = vsel %vm3158, %v6887, %v6889
      %v6891 = vrot.slane %v6020, 2
      %v6892 = vsel %vm3158, %v6889, %v6891
      %v6893 = vrot.slane %v6373, 2
      %v6894 = vsel %vm3158, %v6891, %v6893
      %v6929 = vunpack.c.l.b16 %v6840
      %v6930 = vunpack.c.l.b16 %v6841
      %v6931 = vunpack.c.l.b16 %v6842
      %v6932 = vunpack.c.l.b16 %v6843
      %v6933 = vunpack.c.l.b16 %v6844
      %v6934 = vunpack.c.l.b16 %v6845
      %v6935 = vunpack.c.l.b16 %v6846
      %v6936 = vunpack.c.l.b16 %v6847
      %v6937 = vunpack.c.l.b16 %v6848
      %v6938 = vunpack.c.l.b16 %v6849
      %v6939 = vunpack.c.l.b16 %v6850
      %v6940 = vunpack.c.l.b16 %v6851
      %v6941 = vunpack.c.l.b16 %v6852
      %v6942 = vunpack.c.l.b16 %v6853
      %v6943 = vunpack.c.l.b16 %v6854
      %v6944 = vunpack.c.l.b16 %v6855
      %v6945 = vpack.c.b16 %v6930, %v6929
      %v6946 = vpack.c.b16 %v6932, %v6931
      %v6947 = vpack.c.b16 %v6934, %v6933
      %v6948 = vpack.c.b16 %v6936, %v6935
      %v6949 = vpack.c.b16 %v6938, %v6937
      %v6950 = vpack.c.b16 %v6940, %v6939
      %v6951 = vpack.c.b16 %v6942, %v6941
      %v6952 = vpack.c.b16 %v6944, %v6943
      %6961 = vmatprep.subr.bf16.mxu0 0
      %6962 = vmatpush1.bf16.msra.mxu0 %v6945
      %6963 = vmatprep.subr.bf16.mxu0 0
      %6964 = vmatpush1.bf16.msra.mxu0 %v6946
      %6965 = vmatprep.subr.bf16.mxu0 0
      %6966 = vmatpush1.bf16.msra.mxu0 %v6947
      %6967 = vmatprep.subr.bf16.mxu0 0
      %6968 = vmatpush1.bf16.msra.mxu0 %v6948
      %6969 = vmatprep.subr.bf16.mxu0 0
      %6970 = vmatpush1.bf16.msra.mxu0 %v6949
      %6971 = vmatprep.subr.bf16.mxu0 0
      %6972 = vmatpush1.bf16.msra.mxu0 %v6950
      %6973 = vmatprep.subr.bf16.mxu0 0
      %6974 = vmatpush1.bf16.msra.mxu0 %v6951
      %6975 = vmatprep.subr.bf16.mxu0 0
      %6976 = vmatpush1.bf16.msra.mxu0 %v6952
      %6977 = vmatprep.subr.bf16.mxu0 0
      %6978 = vmatpush1.bf16.msra.mxu0 0
      %6979 = vmatprep.subr.bf16.mxu0 0
      %6980 = vmatpush1.bf16.msra.mxu0 0
      %6981 = vmatprep.subr.bf16.mxu0 0
      %6982 = vmatpush1.bf16.msra.mxu0 0
      %6983 = vmatprep.subr.bf16.mxu0 0
      %6984 = vmatpush1.bf16.msra.mxu0 0
      %6985 = vmatprep.subr.bf16.mxu0 0
      %6986 = vmatpush1.bf16.msra.mxu0 0
      %6987 = vmatprep.subr.bf16.mxu0 0
      %6988 = vmatpush1.bf16.msra.mxu0 0
      %6989 = vmatprep.subr.bf16.mxu0 0
      %6990 = vmatpush1.bf16.msra.mxu0 0
      %6991 = vmatprep.subr.bf16.mxu0 0
      %6992 = vmatpush1.bf16.msra.mxu0 0
      %6993 = vmatprep.mubr.bf16.mxu0 0
      %6994 = vmatmul.mubr.bf16.gmra.mrb[0].mxu0 %v6860
      %v6995 = vpop.f32.mrb[0].mxu0
      %v6996 = vadd.f32 0.0, %v6995
      %v6997 = vpop.f32.mrb[0].mxu0
      %v6998 = vpop.f32.mrb[0].mxu0
      %v6999 = vadd.f32 0.0, %v6998
      %v7000 = vpop.f32.mrb[0].mxu0
      %7001 = vmatprep.mubr.bf16.mxu0 0
      %7002 = vmatmul.mubr.bf16.gmra.mrb[0].mxu0 %v6862
      %v7003 = vpop.f32.mrb[0].mxu0
      %v7004 = vadd.f32 0.0, %v7003
      %v7005 = vpop.f32.mrb[0].mxu0
      %v7006 = vpop.f32.mrb[0].mxu0
      %v7007 = vadd.f32 0.0, %v7006
      %v7008 = vpop.f32.mrb[0].mxu0
      %7009 = vmatprep.mubr.bf16.mxu0 0
      %7010 = vmatmul.mubr.bf16.gmra.mrb[0].mxu0 %v6864
      %v7011 = vpop.f32.mrb[0].mxu0
      %v7012 = vadd.f32 0.0, %v7011
      %v7013 = vpop.f32.mrb[0].mxu0
      %v7014 = vpop.f32.mrb[0].mxu0
      %v7015 = vadd.f32 0.0, %v7014
      %v7016 = vpop.f32.mrb[0].mxu0
      %7017 = vmatprep.mubr.bf16.mxu0 0
      %7018 = vmatmul.mubr.bf16.gmra.mrb[0].mxu0 %v6866
      %v7019 = vpop.f32.mrb[0].mxu0
      %v7020 = vadd.f32 0.0, %v7019
      %v7021 = vpop.f32.mrb[0].mxu0
      %v7022 = vpop.f32.mrb[0].mxu0
      %v7023 = vadd.f32 0.0, %v7022
      %v7024 = vpop.f32.mrb[0].mxu0
      %7025 = vmatprep.mubr.bf16.mxu0 0
      %7026 = vmatmul.mubr.bf16.gmra.mrb[0].mxu0 %v6868
      %v7027 = vpop.f32.mrb[0].mxu0
      %v7028 = vadd.f32 0.0, %v7027
      %v7029 = vpop.f32.mrb[0].mxu0
      %v7030 = vpop.f32.mrb[0].mxu0
      %v7031 = vadd.f32 0.0, %v7030
      %v7032 = vpop.f32.mrb[0].mxu0
      %7033 = vmatprep.mubr.bf16.mxu0 0
      %7034 = vmatmul.mubr.bf16.gmra.mrb[0].mxu0 %v6870
      %v7035 = vpop.f32.mrb[0].mxu0
      %v7036 = vadd.f32 0.0, %v7035
      %v7037 = vpop.f32.mrb[0].mxu0
      %v7038 = vpop.f32.mrb[0].mxu0
      %v7039 = vadd.f32 0.0, %v7038
      %v7040 = vpop.f32.mrb[0].mxu0
      %7041 = vmatprep.mubr.bf16.mxu0 0
      %7042 = vmatmul.mubr.bf16.gmra.mrb[0].mxu0 %v6872
      %v7043 = vpop.f32.mrb[0].mxu0
      %v7044 = vadd.f32 0.0, %v7043
      %v7045 = vpop.f32.mrb[0].mxu0
      %v7046 = vpop.f32.mrb[0].mxu0
      %v7047 = vadd.f32 0.0, %v7046
      %v7048 = vpop.f32.mrb[0].mxu0
      %7049 = vmatprep.mubr.bf16.mxu0 0
      %7050 = vmatmul.mubr.bf16.gmra.mrb[0].mxu0 %v6874
      %v7051 = vpop.f32.mrb[0].mxu0
      %v7052 = vadd.f32 0.0, %v7051
      %v7053 = vpop.f32.mrb[0].mxu0
      %v7054 = vpop.f32.mrb[0].mxu0
      %v7055 = vadd.f32 0.0, %v7054
      %v7056 = vpop.f32.mrb[0].mxu0
      %7057 = vmatprep.mubr.bf16.mxu0 0
      %7058 = vmatmul.mubr.bf16.gmra.mrb[0].mxu0 %v6876
      %v7059 = vpop.f32.mrb[0].mxu0
      %v7060 = vadd.f32 0.0, %v7059
      %v7061 = vpop.f32.mrb[0].mxu0
      %v7062 = vpop.f32.mrb[0].mxu0
      %v7063 = vadd.f32 0.0, %v7062
      %v7064 = vpop.f32.mrb[0].mxu0
      %7065 = vmatprep.mubr.bf16.mxu0 0
      %7066 = vmatmul.mubr.bf16.gmra.mrb[0].mxu0 %v6878
      %v7067 = vpop.f32.mrb[0].mxu0
      %v7068 = vadd.f32 0.0, %v7067
      %v7069 = vpop.f32.mrb[0].mxu0
      %v7070 = vpop.f32.mrb[0].mxu0
      %v7071 = vadd.f32 0.0, %v7070
      %v7072 = vpop.f32.mrb[0].mxu0
      %7073 = vmatprep.mubr.bf16.mxu0 0
      %7074 = vmatmul.mubr.bf16.gmra.mrb[0].mxu0 %v6880
      %v7075 = vpop.f32.mrb[0].mxu0
      %v7076 = vadd.f32 0.0, %v7075
      %v7077 = vpop.f32.mrb[0].mxu0
      %v7078 = vpop.f32.mrb[0].mxu0
      %v7079 = vadd.f32 0.0, %v7078
      %v7080 = vpop.f32.mrb[0].mxu0
      %7081 = vmatprep.mubr.bf16.mxu0 0
      %7082 = vmatmul.mubr.bf16.gmra.mrb[0].mxu0 %v6882
      %v7083 = vpop.f32.mrb[0].mxu0
      %v7084 = vadd.f32 0.0, %v7083
      %v7085 = vpop.f32.mrb[0].mxu0
      %v7086 = vpop.f32.mrb[0].mxu0
      %v7087 = vadd.f32 0.0, %v7086
      %v7088 = vpop.f32.mrb[0].mxu0
      %7089 = vmatprep.mubr.bf16.mxu0 0
      %7090 = vmatmul.mubr.bf16.gmra.mrb[0].mxu0 %v6884
      %v7091 = vpop.f32.mrb[0].mxu0
      %v7092 = vadd.f32 0.0, %v7091
      %v7093 = vpop.f32.mrb[0].mxu0
      %v7094 = vpop.f32.mrb[0].mxu0
      %v7095 = vadd.f32 0.0, %v7094
      %v7096 = vpop.f32.mrb[0].mxu0
      %7097 = vmatprep.mubr.bf16.mxu0 0
      %7098 = vmatmul.mubr.bf16.gmra.mrb[0].mxu0 %v6886
      %v7099 = vpop.f32.mrb[0].mxu0
      %v7100 = vadd.f32 0.0, %v7099
      %v7101 = vpop.f32.mrb[0].mxu0
      %v7102 = vpop.f32.mrb[0].mxu0
      %v7103 = vadd.f32 0.0, %v7102
      %v7104 = vpop.f32.mrb[0].mxu0
      %7105 = vmatprep.mubr.bf16.mxu0 0
      %7106 = vmatmul.mubr.bf16.gmra.mrb[0].mxu0 %v6888
      %v7107 = vpop.f32.mrb[0].mxu0
      %v7108 = vadd.f32 0.0, %v7107
      %v7109 = vpop.f32.mrb[0].mxu0
      %v7110 = vpop.f32.mrb[0].mxu0
      %v7111 = vadd.f32 0.0, %v7110
      %v7112 = vpop.f32.mrb[0].mxu0
      %7113 = vmatprep.mubr.bf16.mxu0 0
      %7114 = vmatmul.mubr.bf16.gmra.mrb[0].mxu0 %v6890
      %v7115 = vpop.f32.mrb[0].mxu0
      %v7116 = vadd.f32 0.0, %v7115
      %v7117 = vpop.f32.mrb[0].mxu0
      %v7118 = vpop.f32.mrb[0].mxu0
      %v7119 = vadd.f32 0.0, %v7118
      %v7120 = vpop.f32.mrb[0].mxu0
      %7121 = vmatprep.mubr.bf16.mxu0 0
      %7122 = vmatmul.mubr.bf16.gmra.mrb[0].mxu0 %v6892
      %v7123 = vpop.f32.mrb[0].mxu0
      %v7124 = vadd.f32 0.0, %v7123
      %v7125 = vpop.f32.mrb[0].mxu0
      %v7126 = vpop.f32.mrb[0].mxu0
      %v7127 = vadd.f32 0.0, %v7126
      %v7128 = vpop.f32.mrb[0].mxu0
      %7129 = vmatprep.mubr.bf16.mxu0 0
      %7130 = vmatmul.mubr.bf16.gmra.mrb[0].mxu0 %v6894
      %v7131 = vpop.f32.mrb[0].mxu0
      %v7132 = vadd.f32 0.0, %v7131
      %v7133 = vpop.f32.mrb[0].mxu0
      %v7134 = vpop.f32.mrb[0].mxu0
      %v7135 = vadd.f32 0.0, %v7134
      %v7136 = vpop.f32.mrb[0].mxu0
      %7137 = vdwg.mxu0
      %v7138 = vadd.f32 %v6803, %v6996
      %v7139 = vadd.f32 %v6804, %v6999
      %v7140 = vadd.f32 %v6805, %v7004
      %v7141 = vadd.f32 %v6806, %v7007
      %v7142 = vadd.f32 %v6807, %v7012
      %v7143 = vadd.f32 %v6808, %v7015
      %v7144 = vadd.f32 %v6809, %v7020
      %v7145 = vadd.f32 %v6810, %v7023
      %v7146 = vadd.f32 %v6811, %v7028
      %v7147 = vadd.f32 %v6812, %v7031
      %v7148 = vadd.f32 %v6813, %v7036
      %v7149 = vadd.f32 %v6814, %v7039
      %v7150 = vadd.f32 %v6815, %v7044
      %v7151 = vadd.f32 %v6816, %v7047
      %v7152 = vadd.f32 %v6817, %v7052
      %v7153 = vadd.f32 %v6818, %v7055
      %v7154 = vadd.f32 %v6819, %v7060
      %v7155 = vadd.f32 %v6820, %v7063
      %v7156 = vadd.f32 %v6821, %v7068
      %v7157 = vadd.f32 %v6822, %v7071
      %v7158 = vadd.f32 %v6823, %v7076
      %v7159 = vadd.f32 %v6824, %v7079
      %v7160 = vadd.f32 %v6825, %v7084
      %v7161 = vadd.f32 %v6826, %v7087
      %v7162 = vadd.f32 %v6827, %v7092
      %v7163 = vadd.f32 %v6828, %v7095
      %v7164 = vadd.f32 %v6829, %v7100
      %v7165 = vadd.f32 %v6830, %v7103
      %v7166 = vadd.f32 %v6831, %v7108
      %v7167 = vadd.f32 %v6832, %v7111
      %v7168 = vadd.f32 %v6833, %v7116
      %v7169 = vadd.f32 %v6834, %v7119
      %v7170 = vadd.f32 %v6835, %v7124
      %v7171 = vadd.f32 %v6836, %v7127
      %v7172 = vadd.f32 %v6837, %v7132
      %v7173 = vadd.f32 %v6838, %v7135
      %v7174 = vld [vmem:[#allocation3 + $0x10] sm:$0xfc]
      %v7175 = vld [vmem:[#allocation3 + $0x18] sm:$0xff]
      %v7176 = vld [vmem:[#allocation3 + $0x20] sm:$0xff]
      %v7177 = vld [vmem:[#allocation3 + $0x28] sm:$0xff]
      %v7178 = vld [vmem:[#allocation3 + $0x30] sm:$0xff]
      %v7179 = vld [vmem:[#allocation3 + $0x38] sm:$0xff]
      %v7180 = vld [vmem:[#allocation3 + $0x40] sm:$0xff]
      %v7181 = vld [vmem:[#allocation3 + $0x48] sm:$0xff]
      %v7182 = vld [vmem:[#allocation3 + $0x50] sm:$0xff]
      %v7183 = vld [vmem:[#allocation3 + $0x58] sm:$0xff]
      %v7184 = vld [vmem:[#allocation3 + $0x60] sm:$0xff]
      %v7185 = vld [vmem:[#allocation3 + $0x68] sm:$0xff]
      %v7186 = vld [vmem:[#allocation3 + $0x70] sm:$0xff]
      %v7187 = vld [vmem:[#allocation3 + $0x78] sm:$0xff]
      %v7188 = vld [vmem:[#allocation3 + $0x80] sm:$0xff]
      %v7189 = vld [vmem:[#allocation3 + $0x88] sm:$0xff]
      %v7190 = vld [vmem:[#allocation3 + $0x90] sm:$0xff]
      %v7191 = vld [vmem:[#allocation3 + $0x98] sm:$0xff]
      %v7192 = vld [vmem:[#allocation3 + $0xa0] sm:$0x3]
      %v7193 = vld [vmem:[%s6 + $0x180] sm:$0xf]
      %v7194 = vld [vmem:[%s6 + $0x184] sm:$0xf]
      %v7195 = vld [vmem:[%s6 + $0x188] sm:$0xf]
      %v7196 = vld [vmem:[%s6 + $0x18c] sm:$0xf]
      %v7197 = vld [vmem:[%s6 + $0x190] sm:$0xf]
      %v7198 = vld [vmem:[%s6 + $0x194] sm:$0xf]
      %v7199 = vld [vmem:[%s6 + $0x198] sm:$0xf]
      %v7200 = vld [vmem:[%s6 + $0x19c] sm:$0xf]
      %v7201 = vld [vmem:[%s6 + $0x1a0] sm:$0xf]
      %v7202 = vld [vmem:[%s6 + $0x1a4] sm:$0xf]
      %v7203 = vld [vmem:[%s6 + $0x1a8] sm:$0xf]
      %v7204 = vld [vmem:[%s6 + $0x1ac] sm:$0xf]
      %v7205 = vld [vmem:[%s6 + $0x1b0] sm:$0xf]
      %v7206 = vld [vmem:[%s6 + $0x1b4] sm:$0xf]
      %v7207 = vld [vmem:[%s6 + $0x1b8] sm:$0xf]
      %v7208 = vld [vmem:[%s6 + $0x1bc] sm:$0xf]
      %v7228 = vrot.slane %v7174, 2
      %v7229 = vrot.slane %v7175, 2
      %v7230 = vsel %vm3158, %v7228, %v7229
      %v7231 = vrot.slane %v7176, 2
      %v7232 = vsel %vm3158, %v7229, %v7231
      %v7233 = vrot.slane %v7177, 2
      %v7234 = vsel %vm3158, %v7231, %v7233
      %v7235 = vrot.slane %v7178, 2
      %v7236 = vsel %vm3158, %v7233, %v7235
      %v7237 = vrot.slane %v7179, 2
      %v7238 = vsel %vm3158, %v7235, %v7237
      %v7239 = vrot.slane %v7180, 2
      %v7240 = vsel %vm3158, %v7237, %v7239
      %v7241 = vrot.slane %v7181, 2
      %v7242 = vsel %vm3158, %v7239, %v7241
      %v7243 = vrot.slane %v7182, 2
      %v7244 = vsel %vm3158, %v7241, %v7243
      %v7245 = vrot.slane %v7183, 2
      %v7246 = vsel %vm3158, %v7243, %v7245
      %v7247 = vrot.slane %v7184, 2
      %v7248 = vsel %vm3158, %v7245, %v7247
      %v7249 = vrot.slane %v7185, 2
      %v7250 = vsel %vm3158, %v7247, %v7249
      %v7251 = vrot.slane %v7186, 2
      %v7252 = vsel %vm3158, %v7249, %v7251
      %v7253 = vrot.slane %v7187, 2
      %v7254 = vsel %vm3158, %v7251, %v7253
      %v7255 = vrot.slane %v7188, 2
      %v7256 = vsel %vm3158, %v7253, %v7255
      %v7257 = vrot.slane %v7189, 2
      %v7258 = vsel %vm3158, %v7255, %v7257
      %v7259 = vrot.slane %v7190, 2
      %v7260 = vsel %vm3158, %v7257, %v7259
      %v7261 = vrot.slane %v7191, 2
      %v7262 = vsel %vm3158, %v7259, %v7261
      %v7263 = vrot.slane %v7192, 2
      %v7264 = vsel %vm3158, %v7261, %v7263
      %v7299 = vunpack.c.l.b16 %v7193
      %v7300 = vunpack.c.l.b16 %v7194
      %v7301 = vunpack.c.l.b16 %v7195
      %v7302 = vunpack.c.l.b16 %v7196
      %v7303 = vunpack.c.l.b16 %v7197
      %v7304 = vunpack.c.l.b16 %v7198
      %v7305 = vunpack.c.l.b16 %v7199
      %v7306 = vunpack.c.l.b16 %v7200
      %v7307 = vunpack.c.l.b16 %v7201
      %v7308 = vunpack.c.l.b16 %v7202
      %v7309 = vunpack.c.l.b16 %v7203
      %v7310 = vunpack.c.l.b16 %v7204
      %v7311 = vunpack.c.l.b16 %v7205
      %v7312 = vunpack.c.l.b16 %v7206
      %v7313 = vunpack.c.l.b16 %v7207
      %v7314 = vunpack.c.l.b16 %v7208
      %v7315 = vpack.c.b16 %v7300, %v7299
      %v7316 = vpack.c.b16 %v7302, %v7301
      %v7317 = vpack.c.b16 %v7304, %v7303
      %v7318 = vpack.c.b16 %v7306, %v7305
      %v7319 = vpack.c.b16 %v7308, %v7307
      %v7320 = vpack.c.b16 %v7310, %v7309
      %v7321 = vpack.c.b16 %v7312, %v7311
      %v7322 = vpack.c.b16 %v7314, %v7313
      %7331 = vmatprep.subr.bf16.mxu0 0
      %7332 = vmatpush1.bf16.msra.mxu0 %v7315
      %7333 = vmatprep.subr.bf16.mxu0 0
      %7334 = vmatpush1.bf16.msra.mxu0 %v7316
      %7335 = vmatprep.subr.bf16.mxu0 0
      %7336 = vmatpush1.bf16.msra.mxu0 %v7317
      %7337 = vmatprep.subr.bf16.mxu0 0
      %7338 = vmatpush1.bf16.msra.mxu0 %v7318
      %7339 = vmatprep.subr.bf16.mxu0 0
      %7340 = vmatpush1.bf16.msra.mxu0 %v7319
      %7341 = vmatprep.subr.bf16.mxu0 0
      %7342 = vmatpush1.bf16.msra.mxu0 %v7320
      %7343 = vmatprep.subr.bf16.mxu0 0
      %7344 = vmatpush1.bf16.msra.mxu0 %v7321
      %7345 = vmatprep.subr.bf16.mxu0 0
      %7346 = vmatpush1.bf16.msra.mxu0 %v7322
      %7347 = vmatprep.subr.bf16.mxu0 0
      %7348 = vmatpush1.bf16.msra.mxu0 0
      %7349 = vmatprep.subr.bf16.mxu0 0
      %7350 = vmatpush1.bf16.msra.mxu0 0
      %7351 = vmatprep.subr.bf16.mxu0 0
      %7352 = vmatpush1.bf16.msra.mxu0 0
      %7353 = vmatprep.subr.bf16.mxu0 0
      %7354 = vmatpush1.bf16.msra.mxu0 0
      %7355 = vmatprep.subr.bf16.mxu0 0
      %7356 = vmatpush1.bf16.msra.mxu0 0
      %7357 = vmatprep.subr.bf16.mxu0 0
      %7358 = vmatpush1.bf16.msra.mxu0 0
      %7359 = vmatprep.subr.bf16.mxu0 0
      %7360 = vmatpush1.bf16.msra.mxu0 0
      %7361 = vmatprep.subr.bf16.mxu0 0
      %7362 = vmatpush1.bf16.msra.mxu0 0
      %7363 = vmatprep.mubr.bf16.mxu0 0
      %7364 = vmatmul.mubr.bf16.gmra.mrb[0].mxu0 %v7230
      %v7365 = vpop.f32.mrb[0].mxu0
      %v7366 = vadd.f32 0.0, %v7365
      %v7367 = vpop.f32.mrb[0].mxu0
      %v7368 = vpop.f32.mrb[0].mxu0
      %v7369 = vadd.f32 0.0, %v7368
      %v7370 = vpop.f32.mrb[0].mxu0
      %7371 = vmatprep.mubr.bf16.mxu0 0
      %7372 = vmatmul.mubr.bf16.gmra.mrb[0].mxu0 %v7232
      %v7373 = vpop.f32.mrb[0].mxu0
      %v7374 = vadd.f32 0.0, %v7373
      %v7375 = vpop.f32.mrb[0].mxu0
      %v7376 = vpop.f32.mrb[0].mxu0
      %v7377 = vadd.f32 0.0, %v7376
      %v7378 = vpop.f32.mrb[0].mxu0
      %7379 = vmatprep.mubr.bf16.mxu0 0
      %7380 = vmatmul.mubr.bf16.gmra.mrb[0].mxu0 %v7234
      %v7381 = vpop.f32.mrb[0].mxu0
      %v7382 = vadd.f32 0.0, %v7381
      %v7383 = vpop.f32.mrb[0].mxu0
      %v7384 = vpop.f32.mrb[0].mxu0
      %v7385 = vadd.f32 0.0, %v7384
      %v7386 = vpop.f32.mrb[0].mxu0
      %7387 = vmatprep.mubr.bf16.mxu0 0
      %7388 = vmatmul.mubr.bf16.gmra.mrb[0].mxu0 %v7236
      %v7389 = vpop.f32.mrb[0].mxu0
      %v7390 = vadd.f32 0.0, %v7389
      %v7391 = vpop.f32.mrb[0].mxu0
      %v7392 = vpop.f32.mrb[0].mxu0
      %v7393 = vadd.f32 0.0, %v7392
      %v7394 = vpop.f32.mrb[0].mxu0
      %7395 = vmatprep.mubr.bf16.mxu0 0
      %7396 = vmatmul.mubr.bf16.gmra.mrb[0].mxu0 %v7238
      %v7397 = vpop.f32.mrb[0].mxu0
      %v7398 = vadd.f32 0.0, %v7397
      %v7399 = vpop.f32.mrb[0].mxu0
      %v7400 = vpop.f32.mrb[0].mxu0
      %v7401 = vadd.f32 0.0, %v7400
      %v7402 = vpop.f32.mrb[0].mxu0
      %7403 = vmatprep.mubr.bf16.mxu0 0
      %7404 = vmatmul.mubr.bf16.gmra.mrb[0].mxu0 %v7240
      %v7405 = vpop.f32.mrb[0].mxu0
      %v7406 = vadd.f32 0.0, %v7405
      %v7407 = vpop.f32.mrb[0].mxu0
      %v7408 = vpop.f32.mrb[0].mxu0
      %v7409 = vadd.f32 0.0, %v7408
      %v7410 = vpop.f32.mrb[0].mxu0
      %7411 = vmatprep.mubr.bf16.mxu0 0
      %7412 = vmatmul.mubr.bf16.gmra.mrb[0].mxu0 %v7242
      %v7413 = vpop.f32.mrb[0].mxu0
      %v7414 = vadd.f32 0.0, %v7413
      %v7415 = vpop.f32.mrb[0].mxu0
      %v7416 = vpop.f32.mrb[0].mxu0
      %v7417 = vadd.f32 0.0, %v7416
      %v7418 = vpop.f32.mrb[0].mxu0
      %7419 = vmatprep.mubr.bf16.mxu0 0
      %7420 = vmatmul.mubr.bf16.gmra.mrb[0].mxu0 %v7244
      %v7421 = vpop.f32.mrb[0].mxu0
      %v7422 = vadd.f32 0.0, %v7421
      %v7423 = vpop.f32.mrb[0].mxu0
      %v7424 = vpop.f32.mrb[0].mxu0
      %v7425 = vadd.f32 0.0, %v7424
      %v7426 = vpop.f32.mrb[0].mxu0
      %7427 = vmatprep.mubr.bf16.mxu0 0
      %7428 = vmatmul.mubr.bf16.gmra.mrb[0].mxu0 %v7246
      %v7429 = vpop.f32.mrb[0].mxu0
      %v7430 = vadd.f32 0.0, %v7429
      %v7431 = vpop.f32.mrb[0].mxu0
      %v7432 = vpop.f32.mrb[0].mxu0
      %v7433 = vadd.f32 0.0, %v7432
      %v7434 = vpop.f32.mrb[0].mxu0
      %7435 = vmatprep.mubr.bf16.mxu0 0
      %7436 = vmatmul.mubr.bf16.gmra.mrb[0].mxu0 %v7248
      %v7437 = vpop.f32.mrb[0].mxu0
      %v7438 = vadd.f32 0.0, %v7437
      %v7439 = vpop.f32.mrb[0].mxu0
      %v7440 = vpop.f32.mrb[0].mxu0
      %v7441 = vadd.f32 0.0, %v7440
      %v7442 = vpop.f32.mrb[0].mxu0
      %7443 = vmatprep.mubr.bf16.mxu0 0
      %7444 = vmatmul.mubr.bf16.gmra.mrb[0].mxu0 %v7250
      %v7445 = vpop.f32.mrb[0].mxu0
      %v7446 = vadd.f32 0.0, %v7445
      %v7447 = vpop.f32.mrb[0].mxu0
      %v7448 = vpop.f32.mrb[0].mxu0
      %v7449 = vadd.f32 0.0, %v7448
      %v7450 = vpop.f32.mrb[0].mxu0
      %7451 = vmatprep.mubr.bf16.mxu0 0
      %7452 = vmatmul.mubr.bf16.gmra.mrb[0].mxu0 %v7252
      %v7453 = vpop.f32.mrb[0].mxu0
      %v7454 = vadd.f32 0.0, %v7453
      %v7455 = vpop.f32.mrb[0].mxu0
      %v7456 = vpop.f32.mrb[0].mxu0
      %v7457 = vadd.f32 0.0, %v7456
      %v7458 = vpop.f32.mrb[0].mxu0
      %7459 = vmatprep.mubr.bf16.mxu0 0
      %7460 = vmatmul.mubr.bf16.gmra.mrb[0].mxu0 %v7254
      %v7461 = vpop.f32.mrb[0].mxu0
      %v7462 = vadd.f32 0.0, %v7461
      %v7463 = vpop.f32.mrb[0].mxu0
      %v7464 = vpop.f32.mrb[0].mxu0
      %v7465 = vadd.f32 0.0, %v7464
      %v7466 = vpop.f32.mrb[0].mxu0
      %7467 = vmatprep.mubr.bf16.mxu0 0
      %7468 = vmatmul.mubr.bf16.gmra.mrb[0].mxu0 %v7256
      %v7469 = vpop.f32.mrb[0].mxu0
      %v7470 = vadd.f32 0.0, %v7469
      %v7471 = vpop.f32.mrb[0].mxu0
      %v7472 = vpop.f32.mrb[0].mxu0
      %v7473 = vadd.f32 0.0, %v7472
      %v7474 = vpop.f32.mrb[0].mxu0
      %7475 = vmatprep.mubr.bf16.mxu0 0
      %7476 = vmatmul.mubr.bf16.gmra.mrb[0].mxu0 %v7258
      %v7477 = vpop.f32.mrb[0].mxu0
      %v7478 = vadd.f32 0.0, %v7477
      %v7479 = vpop.f32.mrb[0].mxu0
      %v7480 = vpop.f32.mrb[0].mxu0
      %v7481 = vadd.f32 0.0, %v7480
      %v7482 = vpop.f32.mrb[0].mxu0
      %7483 = vmatprep.mubr.bf16.mxu0 0
      %7484 = vmatmul.mubr.bf16.gmra.mrb[0].mxu0 %v7260
      %v7485 = vpop.f32.mrb[0].mxu0
      %v7486 = vadd.f32 0.0, %v7485
      %v7487 = vpop.f32.mrb[0].mxu0
      %v7488 = vpop.f32.mrb[0].mxu0
      %v7489 = vadd.f32 0.0, %v7488
      %v7490 = vpop.f32.mrb[0].mxu0
      %7491 = vmatprep.mubr.bf16.mxu0 0
      %7492 = vmatmul.mubr.bf16.gmra.mrb[0].mxu0 %v7262
      %v7493 = vpop.f32.mrb[0].mxu0
      %v7494 = vadd.f32 0.0, %v7493
      %v7495 = vpop.f32.mrb[0].mxu0
      %v7496 = vpop.f32.mrb[0].mxu0
      %v7497 = vadd.f32 0.0, %v7496
      %v7498 = vpop.f32.mrb[0].mxu0
      %7499 = vmatprep.mubr.bf16.mxu0 0
      %7500 = vmatmul.mubr.bf16.gmra.mrb[0].mxu0 %v7264
      %v7501 = vpop.f32.mrb[0].mxu0
      %v7502 = vadd.f32 0.0, %v7501
      %v7503 = vpop.f32.mrb[0].mxu0
      %v7504 = vpop.f32.mrb[0].mxu0
      %v7505 = vadd.f32 0.0, %v7504
      %v7506 = vpop.f32.mrb[0].mxu0
      %7507 = vdwg.mxu0
      %v7508 = vadd.f32 %v7138, %v7366
      %v7509 = vadd.f32 %v7139, %v7369
      %v7510 = vadd.f32 %v7140, %v7374
      %v7511 = vadd.f32 %v7141, %v7377
      %v7512 = vadd.f32 %v7142, %v7382
      %v7513 = vadd.f32 %v7143, %v7385
      %v7514 = vadd.f32 %v7144, %v7390
      %v7515 = vadd.f32 %v7145, %v7393
      %v7516 = vadd.f32 %v7146, %v7398
      %v7517 = vadd.f32 %v7147, %v7401
      %v7518 = vadd.f32 %v7148, %v7406
      %v7519 = vadd.f32 %v7149, %v7409
      %v7520 = vadd.f32 %v7150, %v7414
      %v7521 = vadd.f32 %v7151, %v7417
      %v7522 = vadd.f32 %v7152, %v7422
      %v7523 = vadd.f32 %v7153, %v7425
      %v7524 = vadd.f32 %v7154, %v7430
      %v7525 = vadd.f32 %v7155, %v7433
      %v7526 = vadd.f32 %v7156, %v7438
      %v7527 = vadd.f32 %v7157, %v7441
      %v7528 = vadd.f32 %v7158, %v7446
      %v7529 = vadd.f32 %v7159, %v7449
      %v7530 = vadd.f32 %v7160, %v7454
      %v7531 = vadd.f32 %v7161, %v7457
      %v7532 = vadd.f32 %v7162, %v7462
      %v7533 = vadd.f32 %v7163, %v7465
      %v7534 = vadd.f32 %v7164, %v7470
      %v7535 = vadd.f32 %v7165, %v7473
      %v7536 = vadd.f32 %v7166, %v7478
      %v7537 = vadd.f32 %v7167, %v7481
      %v7538 = vadd.f32 %v7168, %v7486
      %v7539 = vadd.f32 %v7169, %v7489
      %v7540 = vadd.f32 %v7170, %v7494
      %v7541 = vadd.f32 %v7171, %v7497
      %v7542 = vadd.f32 %v7172, %v7502
      %v7543 = vadd.f32 %v7173, %v7505
      %v7544 = vld [vmem:[#allocation3 + $0xa0] sm:$0x7]
      %v7545 = vld [vmem:[%s6 + $0x1c0] sm:$0xf]
      %v7546 = vld [vmem:[%s6 + $0x1c4] sm:$0xf]
      %v7547 = vld [vmem:[%s6 + $0x1c8] sm:$0xf]
      %v7548 = vld [vmem:[%s6 + $0x1cc] sm:$0xf]
      %v7549 = vld [vmem:[%s6 + $0x1d0] sm:$0xf]
      %v7550 = vld [vmem:[%s6 + $0x1d4] sm:$0xf]
      %v7551 = vld [vmem:[%s6 + $0x1d8] sm:$0xf]
      %v7552 = vld [vmem:[%s6 + $0x1dc] sm:$0xf]
      %v7553 = vld [vmem:[%s6 + $0x1e0] sm:$0xf]
      %v7554 = vld [vmem:[%s6 + $0x1e4] sm:$0xf]
      %v7555 = vld [vmem:[%s6 + $0x1e8] sm:$0xf]
      %v7556 = vld [vmem:[%s6 + $0x1ec] sm:$0xf]
      %v7557 = vld [vmem:[%s6 + $0x1f0] sm:$0xf]
      %v7558 = vld [vmem:[%s6 + $0x1f4] sm:$0xf]
      %v7559 = vld [vmem:[%s6 + $0x1f8] sm:$0xf]
      %v7560 = vld [vmem:[%s6 + $0x1fc] sm:$0xf]
      %v7562 = vshrl.u32 %v7174, 16
      %v7564 = vrot.slane %v7562, 2
      %v7565 = vshll.u32 %v7174, 16
      %v7567 = vrot.slane %v7565, 3
      %v7568 = vor.u32 %v7564, %v7567
      %v7570 = vshrl.u32 %v7175, 16
      %v7572 = vrot.slane %v7570, 2
      %v7573 = vshll.u32 %v7175, 16
      %v7575 = vrot.slane %v7573, 3
      %v7576 = vor.u32 %v7572, %v7575
      %v7577 = vsel %vm3862, %v7568, %v7576
      %v7579 = vshrl.u32 %v7176, 16
      %v7581 = vrot.slane %v7579, 2
      %v7582 = vshll.u32 %v7176, 16
      %v7584 = vrot.slane %v7582, 3
      %v7585 = vor.u32 %v7581, %v7584
      %v7586 = vsel %vm3862, %v7576, %v7585
      %v7588 = vshrl.u32 %v7177, 16
      %v7590 = vrot.slane %v7588, 2
      %v7591 = vshll.u32 %v7177, 16
      %v7593 = vrot.slane %v7591, 3
      %v7594 = vor.u32 %v7590, %v7593
      %v7595 = vsel %vm3862, %v7585, %v7594
      %v7597 = vshrl.u32 %v7178, 16
      %v7599 = vrot.slane %v7597, 2
      %v7600 = vshll.u32 %v7178, 16
      %v7602 = vrot.slane %v7600, 3
      %v7603 = vor.u32 %v7599, %v7602
      %v7604 = vsel %vm3862, %v7594, %v7603
      %v7606 = vshrl.u32 %v7179, 16
      %v7608 = vrot.slane %v7606, 2
      %v7609 = vshll.u32 %v7179, 16
      %v7611 = vrot.slane %v7609, 3
      %v7612 = vor.u32 %v7608, %v7611
      %v7613 = vsel %vm3862, %v7603, %v7612
      %v7615 = vshrl.u32 %v7180, 16
      %v7617 = vrot.slane %v7615, 2
      %v7618 = vshll.u32 %v7180, 16
      %v7620 = vrot.slane %v7618, 3
      %v7621 = vor.u32 %v7617, %v7620
      %v7622 = vsel %vm3862, %v7612, %v7621
      %v7624 = vshrl.u32 %v7181, 16
      %v7626 = vrot.slane %v7624, 2
      %v7627 = vshll.u32 %v7181, 16
      %v7629 = vrot.slane %v7627, 3
      %v7630 = vor.u32 %v7626, %v7629
      %v7631 = vsel %vm3862, %v7621, %v7630
      %v7633 = vshrl.u32 %v7182, 16
      %v7635 = vrot.slane %v7633, 2
      %v7636 = vshll.u32 %v7182, 16
      %v7638 = vrot.slane %v7636, 3
      %v7639 = vor.u32 %v7635, %v7638
      %v7640 = vsel %vm3862, %v7630, %v7639
      %v7642 = vshrl.u32 %v7183, 16
      %v7644 = vrot.slane %v7642, 2
      %v7645 = vshll.u32 %v7183, 16
      %v7647 = vrot.slane %v7645, 3
      %v7648 = vor.u32 %v7644, %v7647
      %v7649 = vsel %vm3862, %v7639, %v7648
      %v7651 = vshrl.u32 %v7184, 16
      %v7653 = vrot.slane %v7651, 2
      %v7654 = vshll.u32 %v7184, 16
      %v7656 = vrot.slane %v7654, 3
      %v7657 = vor.u32 %v7653, %v7656
      %v7658 = vsel %vm3862, %v7648, %v7657
      %v7660 = vshrl.u32 %v7185, 16
      %v7662 = vrot.slane %v7660, 2
      %v7663 = vshll.u32 %v7185, 16
      %v7665 = vrot.slane %v7663, 3
      %v7666 = vor.u32 %v7662, %v7665
      %v7667 = vsel %vm3862, %v7657, %v7666
      %v7669 = vshrl.u32 %v7186, 16
      %v7671 = vrot.slane %v7669, 2
      %v7672 = vshll.u32 %v7186, 16
      %v7674 = vrot.slane %v7672, 3
      %v7675 = vor.u32 %v7671, %v7674
      %v7676 = vsel %vm3862, %v7666, %v7675
      %v7678 = vshrl.u32 %v7187, 16
      %v7680 = vrot.slane %v7678, 2
      %v7681 = vshll.u32 %v7187, 16
      %v7683 = vrot.slane %v7681, 3
      %v7684 = vor.u32 %v7680, %v7683
      %v7685 = vsel %vm3862, %v7675, %v7684
      %v7687 = vshrl.u32 %v7188, 16
      %v7689 = vrot.slane %v7687, 2
      %v7690 = vshll.u32 %v7188, 16
      %v7692 = vrot.slane %v7690, 3
      %v7693 = vor.u32 %v7689, %v7692
      %v7694 = vsel %vm3862, %v7684, %v7693
      %v7696 = vshrl.u32 %v7189, 16
      %v7698 = vrot.slane %v7696, 2
      %v7699 = vshll.u32 %v7189, 16
      %v7701 = vrot.slane %v7699, 3
      %v7702 = vor.u32 %v7698, %v7701
      %v7703 = vsel %vm3862, %v7693, %v7702
      %v7705 = vshrl.u32 %v7190, 16
      %v7707 = vrot.slane %v7705, 2
      %v7708 = vshll.u32 %v7190, 16
      %v7710 = vrot.slane %v7708, 3
      %v7711 = vor.u32 %v7707, %v7710
      %v7712 = vsel %vm3862, %v7702, %v7711
      %v7714 = vshrl.u32 %v7191, 16
      %v7716 = vrot.slane %v7714, 2
      %v7717 = vshll.u32 %v7191, 16
      %v7719 = vrot.slane %v7717, 3
      %v7720 = vor.u32 %v7716, %v7719
      %v7721 = vsel %vm3862, %v7711, %v7720
      %v7723 = vshrl.u32 %v7544, 16
      %v7725 = vrot.slane %v7723, 2
      %v7726 = vshll.u32 %v7544, 16
      %v7728 = vrot.slane %v7726, 3
      %v7729 = vor.u32 %v7725, %v7728
      %v7730 = vsel %vm3862, %v7720, %v7729
      %v7765 = vunpack.c.l.b16 %v7545
      %v7766 = vunpack.c.l.b16 %v7546
      %v7767 = vunpack.c.l.b16 %v7547
      %v7768 = vunpack.c.l.b16 %v7548
      %v7769 = vunpack.c.l.b16 %v7549
      %v7770 = vunpack.c.l.b16 %v7550
      %v7771 = vunpack.c.l.b16 %v7551
      %v7772 = vunpack.c.l.b16 %v7552
      %v7773 = vunpack.c.l.b16 %v7553
      %v7774 = vunpack.c.l.b16 %v7554
      %v7775 = vunpack.c.l.b16 %v7555
      %v7776 = vunpack.c.l.b16 %v7556
      %v7777 = vunpack.c.l.b16 %v7557
      %v7778 = vunpack.c.l.b16 %v7558
      %v7779 = vunpack.c.l.b16 %v7559
      %v7780 = vunpack.c.l.b16 %v7560
      %v7781 = vpack.c.b16 %v7766, %v7765
      %v7782 = vpack.c.b16 %v7768, %v7767
      %v7783 = vpack.c.b16 %v7770, %v7769
      %v7784 = vpack.c.b16 %v7772, %v7771
      %v7785 = vpack.c.b16 %v7774, %v7773
      %v7786 = vpack.c.b16 %v7776, %v7775
      %v7787 = vpack.c.b16 %v7778, %v7777
      %v7788 = vpack.c.b16 %v7780, %v7779
      %7797 = vmatprep.subr.bf16.mxu0 0
      %7798 = vmatpush1.bf16.msra.mxu0 %v7781
      %7799 = vmatprep.subr.bf16.mxu0 0
      %7800 = vmatpush1.bf16.msra.mxu0 %v7782
      %7801 = vmatprep.subr.bf16.mxu0 0
      %7802 = vmatpush1.bf16.msra.mxu0 %v7783
      %7803 = vmatprep.subr.bf16.mxu0 0
      %7804 = vmatpush1.bf16.msra.mxu0 %v7784
      %7805 = vmatprep.subr.bf16.mxu0 0
      %7806 = vmatpush1.bf16.msra.mxu0 %v7785
      %7807 = vmatprep.subr.bf16.mxu0 0
      %7808 = vmatpush1.bf16.msra.mxu0 %v7786
      %7809 = vmatprep.subr.bf16.mxu0 0
      %7810 = vmatpush1.bf16.msra.mxu0 %v7787
      %7811 = vmatprep.subr.bf16.mxu0 0
      %7812 = vmatpush1.bf16.msra.mxu0 %v7788
      %7813 = vmatprep.subr.bf16.mxu0 0
      %7814 = vmatpush1.bf16.msra.mxu0 0
      %7815 = vmatprep.subr.bf16.mxu0 0
      %7816 = vmatpush1.bf16.msra.mxu0 0
      %7817 = vmatprep.subr.bf16.mxu0 0
      %7818 = vmatpush1.bf16.msra.mxu0 0
      %7819 = vmatprep.subr.bf16.mxu0 0
      %7820 = vmatpush1.bf16.msra.mxu0 0
      %7821 = vmatprep.subr.bf16.mxu0 0
      %7822 = vmatpush1.bf16.msra.mxu0 0
      %7823 = vmatprep.subr.bf16.mxu0 0
      %7824 = vmatpush1.bf16.msra.mxu0 0
      %7825 = vmatprep.subr.bf16.mxu0 0
      %7826 = vmatpush1.bf16.msra.mxu0 0
      %7827 = vmatprep.subr.bf16.mxu0 0
      %7828 = vmatpush1.bf16.msra.mxu0 0
      %7829 = vmatprep.mubr.bf16.mxu0 0
      %7830 = vmatmul.mubr.bf16.gmra.mrb[0].mxu0 %v7577
      %v7831 = vpop.f32.mrb[0].mxu0
      %v7832 = vadd.f32 0.0, %v7831
      %v7833 = vpop.f32.mrb[0].mxu0
      %v7834 = vpop.f32.mrb[0].mxu0
      %v7835 = vadd.f32 0.0, %v7834
      %v7836 = vpop.f32.mrb[0].mxu0
      %7837 = vmatprep.mubr.bf16.mxu0 0
      %7838 = vmatmul.mubr.bf16.gmra.mrb[0].mxu0 %v7586
      %v7839 = vpop.f32.mrb[0].mxu0
      %v7840 = vadd.f32 0.0, %v7839
      %v7841 = vpop.f32.mrb[0].mxu0
      %v7842 = vpop.f32.mrb[0].mxu0
      %v7843 = vadd.f32 0.0, %v7842
      %v7844 = vpop.f32.mrb[0].mxu0
      %7845 = vmatprep.mubr.bf16.mxu0 0
      %7846 = vmatmul.mubr.bf16.gmra.mrb[0].mxu0 %v7595
      %v7847 = vpop.f32.mrb[0].mxu0
      %v7848 = vadd.f32 0.0, %v7847
      %v7849 = vpop.f32.mrb[0].mxu0
      %v7850 = vpop.f32.mrb[0].mxu0
      %v7851 = vadd.f32 0.0, %v7850
      %v7852 = vpop.f32.mrb[0].mxu0
      %7853 = vmatprep.mubr.bf16.mxu0 0
      %7854 = vmatmul.mubr.bf16.gmra.mrb[0].mxu0 %v7604
      %v7855 = vpop.f32.mrb[0].mxu0
      %v7856 = vadd.f32 0.0, %v7855
      %v7857 = vpop.f32.mrb[0].mxu0
      %v7858 = vpop.f32.mrb[0].mxu0
      %v7859 = vadd.f32 0.0, %v7858
      %v7860 = vpop.f32.mrb[0].mxu0
      %7861 = vmatprep.mubr.bf16.mxu0 0
      %7862 = vmatmul.mubr.bf16.gmra.mrb[0].mxu0 %v7613
      %v7863 = vpop.f32.mrb[0].mxu0
      %v7864 = vadd.f32 0.0, %v7863
      %v7865 = vpop.f32.mrb[0].mxu0
      %v7866 = vpop.f32.mrb[0].mxu0
      %v7867 = vadd.f32 0.0, %v7866
      %v7868 = vpop.f32.mrb[0].mxu0
      %7869 = vmatprep.mubr.bf16.mxu0 0
      %7870 = vmatmul.mubr.bf16.gmra.mrb[0].mxu0 %v7622
      %v7871 = vpop.f32.mrb[0].mxu0
      %v7872 = vadd.f32 0.0, %v7871
      %v7873 = vpop.f32.mrb[0].mxu0
      %v7874 = vpop.f32.mrb[0].mxu0
      %v7875 = vadd.f32 0.0, %v7874
      %v7876 = vpop.f32.mrb[0].mxu0
      %7877 = vmatprep.mubr.bf16.mxu0 0
      %7878 = vmatmul.mubr.bf16.gmra.mrb[0].mxu0 %v7631
      %v7879 = vpop.f32.mrb[0].mxu0
      %v7880 = vadd.f32 0.0, %v7879
      %v7881 = vpop.f32.mrb[0].mxu0
      %v7882 = vpop.f32.mrb[0].mxu0
      %v7883 = vadd.f32 0.0, %v7882
      %v7884 = vpop.f32.mrb[0].mxu0
      %7885 = vmatprep.mubr.bf16.mxu0 0
      %7886 = vmatmul.mubr.bf16.gmra.mrb[0].mxu0 %v7640
      %v7887 = vpop.f32.mrb[0].mxu0
      %v7888 = vadd.f32 0.0, %v7887
      %v7889 = vpop.f32.mrb[0].mxu0
      %v7890 = vpop.f32.mrb[0].mxu0
      %v7891 = vadd.f32 0.0, %v7890
      %v7892 = vpop.f32.mrb[0].mxu0
      %7893 = vmatprep.mubr.bf16.mxu0 0
      %7894 = vmatmul.mubr.bf16.gmra.mrb[0].mxu0 %v7649
      %v7895 = vpop.f32.mrb[0].mxu0
      %v7896 = vadd.f32 0.0, %v7895
      %v7897 = vpop.f32.mrb[0].mxu0
      %v7898 = vpop.f32.mrb[0].mxu0
      %v7899 = vadd.f32 0.0, %v7898
      %v7900 = vpop.f32.mrb[0].mxu0
      %7901 = vmatprep.mubr.bf16.mxu0 0
      %7902 = vmatmul.mubr.bf16.gmra.mrb[0].mxu0 %v7658
      %v7903 = vpop.f32.mrb[0].mxu0
      %v7904 = vadd.f32 0.0, %v7903
      %v7905 = vpop.f32.mrb[0].mxu0
      %v7906 = vpop.f32.mrb[0].mxu0
      %v7907 = vadd.f32 0.0, %v7906
      %v7908 = vpop.f32.mrb[0].mxu0
      %7909 = vmatprep.mubr.bf16.mxu0 0
      %7910 = vmatmul.mubr.bf16.gmra.mrb[0].mxu0 %v7667
      %v7911 = vpop.f32.mrb[0].mxu0
      %v7912 = vadd.f32 0.0, %v7911
      %v7913 = vpop.f32.mrb[0].mxu0
      %v7914 = vpop.f32.mrb[0].mxu0
      %v7915 = vadd.f32 0.0, %v7914
      %v7916 = vpop.f32.mrb[0].mxu0
      %7917 = vmatprep.mubr.bf16.mxu0 0
      %7918 = vmatmul.mubr.bf16.gmra.mrb[0].mxu0 %v7676
      %v7919 = vpop.f32.mrb[0].mxu0
      %v7920 = vadd.f32 0.0, %v7919
      %v7921 = vpop.f32.mrb[0].mxu0
      %v7922 = vpop.f32.mrb[0].mxu0
      %v7923 = vadd.f32 0.0, %v7922
      %v7924 = vpop.f32.mrb[0].mxu0
      %7925 = vmatprep.mubr.bf16.mxu0 0
      %7926 = vmatmul.mubr.bf16.gmra.mrb[0].mxu0 %v7685
      %v7927 = vpop.f32.mrb[0].mxu0
      %v7928 = vadd.f32 0.0, %v7927
      %v7929 = vpop.f32.mrb[0].mxu0
      %v7930 = vpop.f32.mrb[0].mxu0
      %v7931 = vadd.f32 0.0, %v7930
      %v7932 = vpop.f32.mrb[0].mxu0
      %7933 = vmatprep.mubr.bf16.mxu0 0
      %7934 = vmatmul.mubr.bf16.gmra.mrb[0].mxu0 %v7694
      %v7935 = vpop.f32.mrb[0].mxu0
      %v7936 = vadd.f32 0.0, %v7935
      %v7937 = vpop.f32.mrb[0].mxu0
      %v7938 = vpop.f32.mrb[0].mxu0
      %v7939 = vadd.f32 0.0, %v7938
      %v7940 = vpop.f32.mrb[0].mxu0
      %7941 = vmatprep.mubr.bf16.mxu0 0
      %7942 = vmatmul.mubr.bf16.gmra.mrb[0].mxu0 %v7703
      %v7943 = vpop.f32.mrb[0].mxu0
      %v7944 = vadd.f32 0.0, %v7943
      %v7945 = vpop.f32.mrb[0].mxu0
      %v7946 = vpop.f32.mrb[0].mxu0
      %v7947 = vadd.f32 0.0, %v7946
      %v7948 = vpop.f32.mrb[0].mxu0
      %7949 = vmatprep.mubr.bf16.mxu0 0
      %7950 = vmatmul.mubr.bf16.gmra.mrb[0].mxu0 %v7712
      %v7951 = vpop.f32.mrb[0].mxu0
      %v7952 = vadd.f32 0.0, %v7951
      %v7953 = vpop.f32.mrb[0].mxu0
      %v7954 = vpop.f32.mrb[0].mxu0
      %v7955 = vadd.f32 0.0, %v7954
      %v7956 = vpop.f32.mrb[0].mxu0
      %7957 = vmatprep.mubr.bf16.mxu0 0
      %7958 = vmatmul.mubr.bf16.gmra.mrb[0].mxu0 %v7721
      %v7959 = vpop.f32.mrb[0].mxu0
      %v7960 = vadd.f32 0.0, %v7959
      %v7961 = vpop.f32.mrb[0].mxu0
      %v7962 = vpop.f32.mrb[0].mxu0
      %v7963 = vadd.f32 0.0, %v7962
      %v7964 = vpop.f32.mrb[0].mxu0
      %7965 = vmatprep.mubr.bf16.mxu0 0
      %7966 = vmatmul.mubr.bf16.gmra.mrb[0].mxu0 %v7730
      %v7967 = vpop.f32.mrb[0].mxu0
      %v7968 = vadd.f32 0.0, %v7967
      %v7969 = vpop.f32.mrb[0].mxu0
      %v7970 = vpop.f32.mrb[0].mxu0
      %v7971 = vadd.f32 0.0, %v7970
      %v7972 = vpop.f32.mrb[0].mxu0
      %7973 = vdwg.mxu0
      %v7974 = vadd.f32 %v7508, %v7832
      %v7975 = vadd.f32 %v7509, %v7835
      %v7976 = vadd.f32 %v7510, %v7840
      %v7977 = vadd.f32 %v7511, %v7843
      %v7978 = vadd.f32 %v7512, %v7848
      %v7979 = vadd.f32 %v7513, %v7851
      %v7980 = vadd.f32 %v7514, %v7856
      %v7981 = vadd.f32 %v7515, %v7859
      %v7982 = vadd.f32 %v7516, %v7864
      %v7983 = vadd.f32 %v7517, %v7867
      %v7984 = vadd.f32 %v7518, %v7872
      %v7985 = vadd.f32 %v7519, %v7875
      %v7986 = vadd.f32 %v7520, %v7880
      %v7987 = vadd.f32 %v7521, %v7883
      %v7988 = vadd.f32 %v7522, %v7888
      %v7989 = vadd.f32 %v7523, %v7891
      %v7990 = vadd.f32 %v7524, %v7896
      %v7991 = vadd.f32 %v7525, %v7899
      %v7992 = vadd.f32 %v7526, %v7904
      %v7993 = vadd.f32 %v7527, %v7907
      %v7994 = vadd.f32 %v7528, %v7912
      %v7995 = vadd.f32 %v7529, %v7915
      %v7996 = vadd.f32 %v7530, %v7920
      %v7997 = vadd.f32 %v7531, %v7923
      %v7998 = vadd.f32 %v7532, %v7928
      %v7999 = vadd.f32 %v7533, %v7931
      %v8000 = vadd.f32 %v7534, %v7936
      %v8001 = vadd.f32 %v7535, %v7939
      %v8002 = vadd.f32 %v7536, %v7944
      %v8003 = vadd.f32 %v7537, %v7947
      %v8004 = vadd.f32 %v7538, %v7952
      %v8005 = vadd.f32 %v7539, %v7955
      %v8006 = vadd.f32 %v7540, %v7960
      %v8007 = vadd.f32 %v7541, %v7963
      %v8008 = vadd.f32 %v7542, %v7968
      %v8009 = vadd.f32 %v7543, %v7971
      %v8010 = vld [vmem:[#allocation3 + $0x10] sm:$0xf8]
      %v8011 = vld [vmem:[%s6 + $0x200] sm:$0xf]
      %v8012 = vld [vmem:[%s6 + $0x204] sm:$0xf]
      %v8013 = vld [vmem:[%s6 + $0x208] sm:$0xf]
      %v8014 = vld [vmem:[%s6 + $0x20c] sm:$0xf]
      %v8015 = vld [vmem:[%s6 + $0x210] sm:$0xf]
      %v8016 = vld [vmem:[%s6 + $0x214] sm:$0xf]
      %v8017 = vld [vmem:[%s6 + $0x218] sm:$0xf]
      %v8018 = vld [vmem:[%s6 + $0x21c] sm:$0xf]
      %v8019 = vld [vmem:[%s6 + $0x220] sm:$0xf]
      %v8020 = vld [vmem:[%s6 + $0x224] sm:$0xf]
      %v8021 = vld [vmem:[%s6 + $0x228] sm:$0xf]
      %v8022 = vld [vmem:[%s6 + $0x22c] sm:$0xf]
      %v8023 = vld [vmem:[%s6 + $0x230] sm:$0xf]
      %v8024 = vld [vmem:[%s6 + $0x234] sm:$0xf]
      %v8025 = vld [vmem:[%s6 + $0x238] sm:$0xf]
      %v8026 = vld [vmem:[%s6 + $0x23c] sm:$0xf]
      %v8029 = vrot.slane %v8010, 3
      %v8030 = vrot.slane %v7175, 3
      %v8031 = vsel %vm4331, %v8029, %v8030
      %v8032 = vrot.slane %v7176, 3
      %v8033 = vsel %vm4331, %v8030, %v8032
      %v8034 = vrot.slane %v7177, 3
      %v8035 = vsel %vm4331, %v8032, %v8034
      %v8036 = vrot.slane %v7178, 3
      %v8037 = vsel %vm4331, %v8034, %v8036
      %v8038 = vrot.slane %v7179, 3
      %v8039 = vsel %vm4331, %v8036, %v8038
      %v8040 = vrot.slane %v7180, 3
      %v8041 = vsel %vm4331, %v8038, %v8040
      %v8042 = vrot.slane %v7181, 3
      %v8043 = vsel %vm4331, %v8040, %v8042
      %v8044 = vrot.slane %v7182, 3
      %v8045 = vsel %vm4331, %v8042, %v8044
      %v8046 = vrot.slane %v7183, 3
      %v8047 = vsel %vm4331, %v8044, %v8046
      %v8048 = vrot.slane %v7184, 3
      %v8049 = vsel %vm4331, %v8046, %v8048
      %v8050 = vrot.slane %v7185, 3
      %v8051 = vsel %vm4331, %v8048, %v8050
      %v8052 = vrot.slane %v7186, 3
      %v8053 = vsel %vm4331, %v8050, %v8052
      %v8054 = vrot.slane %v7187, 3
      %v8055 = vsel %vm4331, %v8052, %v8054
      %v8056 = vrot.slane %v7188, 3
      %v8057 = vsel %vm4331, %v8054, %v8056
      %v8058 = vrot.slane %v7189, 3
      %v8059 = vsel %vm4331, %v8056, %v8058
      %v8060 = vrot.slane %v7190, 3
      %v8061 = vsel %vm4331, %v8058, %v8060
      %v8062 = vrot.slane %v7191, 3
      %v8063 = vsel %vm4331, %v8060, %v8062
      %v8064 = vrot.slane %v7544, 3
      %v8065 = vsel %vm4331, %v8062, %v8064
      %v8100 = vunpack.c.l.b16 %v8011
      %v8101 = vunpack.c.l.b16 %v8012
      %v8102 = vunpack.c.l.b16 %v8013
      %v8103 = vunpack.c.l.b16 %v8014
      %v8104 = vunpack.c.l.b16 %v8015
      %v8105 = vunpack.c.l.b16 %v8016
      %v8106 = vunpack.c.l.b16 %v8017
      %v8107 = vunpack.c.l.b16 %v8018
      %v8108 = vunpack.c.l.b16 %v8019
      %v8109 = vunpack.c.l.b16 %v8020
      %v8110 = vunpack.c.l.b16 %v8021
      %v8111 = vunpack.c.l.b16 %v8022
      %v8112 = vunpack.c.l.b16 %v8023
      %v8113 = vunpack.c.l.b16 %v8024
      %v8114 = vunpack.c.l.b16 %v8025
      %v8115 = vunpack.c.l.b16 %v8026
      %v8116 = vpack.c.b16 %v8101, %v8100
      %v8117 = vpack.c.b16 %v8103, %v8102
      %v8118 = vpack.c.b16 %v8105, %v8104
      %v8119 = vpack.c.b16 %v8107, %v8106
      %v8120 = vpack.c.b16 %v8109, %v8108
      %v8121 = vpack.c.b16 %v8111, %v8110
      %v8122 = vpack.c.b16 %v8113, %v8112
      %v8123 = vpack.c.b16 %v8115, %v8114
      %8132 = vmatprep.subr.bf16.mxu0 0
      %8133 = vmatpush1.bf16.msra.mxu0 %v8116
      %8134 = vmatprep.subr.bf16.mxu0 0
      %8135 = vmatpush1.bf16.msra.mxu0 %v8117
      %8136 = vmatprep.subr.bf16.mxu0 0
      %8137 = vmatpush1.bf16.msra.mxu0 %v8118
      %8138 = vmatprep.subr.bf16.mxu0 0
      %8139 = vmatpush1.bf16.msra.mxu0 %v8119
      %8140 = vmatprep.subr.bf16.mxu0 0
      %8141 = vmatpush1.bf16.msra.mxu0 %v8120
      %8142 = vmatprep.subr.bf16.mxu0 0
      %8143 = vmatpush1.bf16.msra.mxu0 %v8121
      %8144 = vmatprep.subr.bf16.mxu0 0
      %8145 = vmatpush1.bf16.msra.mxu0 %v8122
      %8146 = vmatprep.subr.bf16.mxu0 0
      %8147 = vmatpush1.bf16.msra.mxu0 %v8123
      %8148 = vmatprep.subr.bf16.mxu0 0
      %8149 = vmatpush1.bf16.msra.mxu0 0
      %8150 = vmatprep.subr.bf16.mxu0 0
      %8151 = vmatpush1.bf16.msra.mxu0 0
      %8152 = vmatprep.subr.bf16.mxu0 0
      %8153 = vmatpush1.bf16.msra.mxu0 0
      %8154 = vmatprep.subr.bf16.mxu0 0
      %8155 = vmatpush1.bf16.msra.mxu0 0
      %8156 = vmatprep.subr.bf16.mxu0 0
      %8157 = vmatpush1.bf16.msra.mxu0 0
      %8158 = vmatprep.subr.bf16.mxu0 0
      %8159 = vmatpush1.bf16.msra.mxu0 0
      %8160 = vmatprep.subr.bf16.mxu0 0
      %8161 = vmatpush1.bf16.msra.mxu0 0
      %8162 = vmatprep.subr.bf16.mxu0 0
      %8163 = vmatpush1.bf16.msra.mxu0 0
      %8164 = vmatprep.mubr.bf16.mxu0 0
      %8165 = vmatmul.mubr.bf16.gmra.mrb[0].mxu0 %v8031
      %v8166 = vpop.f32.mrb[0].mxu0
      %v8167 = vadd.f32 0.0, %v8166
      %v8168 = vpop.f32.mrb[0].mxu0
      %v8169 = vpop.f32.mrb[0].mxu0
      %v8170 = vadd.f32 0.0, %v8169
      %v8171 = vpop.f32.mrb[0].mxu0
      %8172 = vmatprep.mubr.bf16.mxu0 0
      %8173 = vmatmul.mubr.bf16.gmra.mrb[0].mxu0 %v8033
      %v8174 = vpop.f32.mrb[0].mxu0
      %v8175 = vadd.f32 0.0, %v8174
      %v8176 = vpop.f32.mrb[0].mxu0
      %v8177 = vpop.f32.mrb[0].mxu0
      %v8178 = vadd.f32 0.0, %v8177
      %v8179 = vpop.f32.mrb[0].mxu0
      %8180 = vmatprep.mubr.bf16.mxu0 0
      %8181 = vmatmul.mubr.bf16.gmra.mrb[0].mxu0 %v8035
      %v8182 = vpop.f32.mrb[0].mxu0
      %v8183 = vadd.f32 0.0, %v8182
      %v8184 = vpop.f32.mrb[0].mxu0
      %v8185 = vpop.f32.mrb[0].mxu0
      %v8186 = vadd.f32 0.0, %v8185
      %v8187 = vpop.f32.mrb[0].mxu0
      %8188 = vmatprep.mubr.bf16.mxu0 0
      %8189 = vmatmul.mubr.bf16.gmra.mrb[0].mxu0 %v8037
      %v8190 = vpop.f32.mrb[0].mxu0
      %v8191 = vadd.f32 0.0, %v8190
      %v8192 = vpop.f32.mrb[0].mxu0
      %v8193 = vpop.f32.mrb[0].mxu0
      %v8194 = vadd.f32 0.0, %v8193
      %v8195 = vpop.f32.mrb[0].mxu0
      %8196 = vmatprep.mubr.bf16.mxu0 0
      %8197 = vmatmul.mubr.bf16.gmra.mrb[0].mxu0 %v8039
      %v8198 = vpop.f32.mrb[0].mxu0
      %v8199 = vadd.f32 0.0, %v8198
      %v8200 = vpop.f32.mrb[0].mxu0
      %v8201 = vpop.f32.mrb[0].mxu0
      %v8202 = vadd.f32 0.0, %v8201
      %v8203 = vpop.f32.mrb[0].mxu0
      %8204 = vmatprep.mubr.bf16.mxu0 0
      %8205 = vmatmul.mubr.bf16.gmra.mrb[0].mxu0 %v8041
      %v8206 = vpop.f32.mrb[0].mxu0
      %v8207 = vadd.f32 0.0, %v8206
      %v8208 = vpop.f32.mrb[0].mxu0
      %v8209 = vpop.f32.mrb[0].mxu0
      %v8210 = vadd.f32 0.0, %v8209
      %v8211 = vpop.f32.mrb[0].mxu0
      %8212 = vmatprep.mubr.bf16.mxu0 0
      %8213 = vmatmul.mubr.bf16.gmra.mrb[0].mxu0 %v8043
      %v8214 = vpop.f32.mrb[0].mxu0
      %v8215 = vadd.f32 0.0, %v8214
      %v8216 = vpop.f32.mrb[0].mxu0
      %v8217 = vpop.f32.mrb[0].mxu0
      %v8218 = vadd.f32 0.0, %v8217
      %v8219 = vpop.f32.mrb[0].mxu0
      %8220 = vmatprep.mubr.bf16.mxu0 0
      %8221 = vmatmul.mubr.bf16.gmra.mrb[0].mxu0 %v8045
      %v8222 = vpop.f32.mrb[0].mxu0
      %v8223 = vadd.f32 0.0, %v8222
      %v8224 = vpop.f32.mrb[0].mxu0
      %v8225 = vpop.f32.mrb[0].mxu0
      %v8226 = vadd.f32 0.0, %v8225
      %v8227 = vpop.f32.mrb[0].mxu0
      %8228 = vmatprep.mubr.bf16.mxu0 0
      %8229 = vmatmul.mubr.bf16.gmra.mrb[0].mxu0 %v8047
      %v8230 = vpop.f32.mrb[0].mxu0
      %v8231 = vadd.f32 0.0, %v8230
      %v8232 = vpop.f32.mrb[0].mxu0
      %v8233 = vpop.f32.mrb[0].mxu0
      %v8234 = vadd.f32 0.0, %v8233
      %v8235 = vpop.f32.mrb[0].mxu0
      %8236 = vmatprep.mubr.bf16.mxu0 0
      %8237 = vmatmul.mubr.bf16.gmra.mrb[0].mxu0 %v8049
      %v8238 = vpop.f32.mrb[0].mxu0
      %v8239 = vadd.f32 0.0, %v8238
      %v8240 = vpop.f32.mrb[0].mxu0
      %v8241 = vpop.f32.mrb[0].mxu0
      %v8242 = vadd.f32 0.0, %v8241
      %v8243 = vpop.f32.mrb[0].mxu0
      %8244 = vmatprep.mubr.bf16.mxu0 0
      %8245 = vmatmul.mubr.bf16.gmra.mrb[0].mxu0 %v8051
      %v8246 = vpop.f32.mrb[0].mxu0
      %v8247 = vadd.f32 0.0, %v8246
      %v8248 = vpop.f32.mrb[0].mxu0
      %v8249 = vpop.f32.mrb[0].mxu0
      %v8250 = vadd.f32 0.0, %v8249
      %v8251 = vpop.f32.mrb[0].mxu0
      %8252 = vmatprep.mubr.bf16.mxu0 0
      %8253 = vmatmul.mubr.bf16.gmra.mrb[0].mxu0 %v8053
      %v8254 = vpop.f32.mrb[0].mxu0
      %v8255 = vadd.f32 0.0, %v8254
      %v8256 = vpop.f32.mrb[0].mxu0
      %v8257 = vpop.f32.mrb[0].mxu0
      %v8258 = vadd.f32 0.0, %v8257
      %v8259 = vpop.f32.mrb[0].mxu0
      %8260 = vmatprep.mubr.bf16.mxu0 0
      %8261 = vmatmul.mubr.bf16.gmra.mrb[0].mxu0 %v8055
      %v8262 = vpop.f32.mrb[0].mxu0
      %v8263 = vadd.f32 0.0, %v8262
      %v8264 = vpop.f32.mrb[0].mxu0
      %v8265 = vpop.f32.mrb[0].mxu0
      %v8266 = vadd.f32 0.0, %v8265
      %v8267 = vpop.f32.mrb[0].mxu0
      %8268 = vmatprep.mubr.bf16.mxu0 0
      %8269 = vmatmul.mubr.bf16.gmra.mrb[0].mxu0 %v8057
      %v8270 = vpop.f32.mrb[0].mxu0
      %v8271 = vadd.f32 0.0, %v8270
      %v8272 = vpop.f32.mrb[0].mxu0
      %v8273 = vpop.f32.mrb[0].mxu0
      %v8274 = vadd.f32 0.0, %v8273
      %v8275 = vpop.f32.mrb[0].mxu0
      %8276 = vmatprep.mubr.bf16.mxu0 0
      %8277 = vmatmul.mubr.bf16.gmra.mrb[0].mxu0 %v8059
      %v8278 = vpop.f32.mrb[0].mxu0
      %v8279 = vadd.f32 0.0, %v8278
      %v8280 = vpop.f32.mrb[0].mxu0
      %v8281 = vpop.f32.mrb[0].mxu0
      %v8282 = vadd.f32 0.0, %v8281
      %v8283 = vpop.f32.mrb[0].mxu0
      %8284 = vmatprep.mubr.bf16.mxu0 0
      %8285 = vmatmul.mubr.bf16.gmra.mrb[0].mxu0 %v8061
      %v8286 = vpop.f32.mrb[0].mxu0
      %v8287 = vadd.f32 0.0, %v8286
      %v8288 = vpop.f32.mrb[0].mxu0
      %v8289 = vpop.f32.mrb[0].mxu0
      %v8290 = vadd.f32 0.0, %v8289
      %v8291 = vpop.f32.mrb[0].mxu0
      %8292 = vmatprep.mubr.bf16.mxu0 0
      %8293 = vmatmul.mubr.bf16.gmra.mrb[0].mxu0 %v8063
      %v8294 = vpop.f32.mrb[0].mxu0
      %v8295 = vadd.f32 0.0, %v8294
      %v8296 = vpop.f32.mrb[0].mxu0
      %v8297 = vpop.f32.mrb[0].mxu0
      %v8298 = vadd.f32 0.0, %v8297
      %v8299 = vpop.f32.mrb[0].mxu0
      %8300 = vmatprep.mubr.bf16.mxu0 0
      %8301 = vmatmul.mubr.bf16.gmra.mrb[0].mxu0 %v8065
      %v8302 = vpop.f32.mrb[0].mxu0
      %v8303 = vadd.f32 0.0, %v8302
      %v8304 = vpop.f32.mrb[0].mxu0
      %v8305 = vpop.f32.mrb[0].mxu0
      %v8306 = vadd.f32 0.0, %v8305
      %v8307 = vpop.f32.mrb[0].mxu0
      %8308 = vdwg.mxu0
      %v8309 = vadd.f32 %v7974, %v8167
      %v8310 = vadd.f32 %v7975, %v8170
      %v8311 = vadd.f32 %v7976, %v8175
      %v8312 = vadd.f32 %v7977, %v8178
      %v8313 = vadd.f32 %v7978, %v8183
      %v8314 = vadd.f32 %v7979, %v8186
      %v8315 = vadd.f32 %v7980, %v8191
      %v8316 = vadd.f32 %v7981, %v8194
      %v8317 = vadd.f32 %v7982, %v8199
      %v8318 = vadd.f32 %v7983, %v8202
      %v8319 = vadd.f32 %v7984, %v8207
      %v8320 = vadd.f32 %v7985, %v8210
      %v8321 = vadd.f32 %v7986, %v8215
      %v8322 = vadd.f32 %v7987, %v8218
      %v8323 = vadd.f32 %v7988, %v8223
      %v8324 = vadd.f32 %v7989, %v8226
      %v8325 = vadd.f32 %v7990, %v8231
      %v8326 = vadd.f32 %v7991, %v8234
      %v8327 = vadd.f32 %v7992, %v8239
      %v8328 = vadd.f32 %v7993, %v8242
      %v8329 = vadd.f32 %v7994, %v8247
      %v8330 = vadd.f32 %v7995, %v8250
      %v8331 = vadd.f32 %v7996, %v8255
      %v8332 = vadd.f32 %v7997, %v8258
      %v8333 = vadd.f32 %v7998, %v8263
      %v8334 = vadd.f32 %v7999, %v8266
      %v8335 = vadd.f32 %v8000, %v8271
      %v8336 = vadd.f32 %v8001, %v8274
      %v8337 = vadd.f32 %v8002, %v8279
      %v8338 = vadd.f32 %v8003, %v8282
      %v8339 = vadd.f32 %v8004, %v8287
      %v8340 = vadd.f32 %v8005, %v8290
      %v8341 = vadd.f32 %v8006, %v8295
      %v8342 = vadd.f32 %v8007, %v8298
      %v8343 = vadd.f32 %v8008, %v8303
      %v8344 = vadd.f32 %v8009, %v8306
      %v8345 = vld [vmem:[%s7] sm:$0x1]
      %v8347 = vlaneseq
      %v8348 = vshrl.u32 %v8347, 7
      %v8349 = vsub.s32 0, %v8348
      %v8350 = vrot.slane %v8345, %v8349
      %v8352 = vadd.f32 %v8309, %v8350
      %v8353 = vadd.f32 %v8310, %v8350
      %v8354 = vadd.f32 %v8311, %v8350
      %v8355 = vadd.f32 %v8312, %v8350
      %v8356 = vadd.f32 %v8313, %v8350
      %v8357 = vadd.f32 %v8314, %v8350
      %v8358 = vadd.f32 %v8315, %v8350
      %v8359 = vadd.f32 %v8316, %v8350
      %v8360 = vadd.f32 %v8317, %v8350
      %v8361 = vadd.f32 %v8318, %v8350
      %v8362 = vadd.f32 %v8319, %v8350
      %v8363 = vadd.f32 %v8320, %v8350
      %v8364 = vadd.f32 %v8321, %v8350
      %v8365 = vadd.f32 %v8322, %v8350
      %v8366 = vadd.f32 %v8323, %v8350
      %v8367 = vadd.f32 %v8324, %v8350
      %v8368 = vadd.f32 %v8325, %v8350
      %v8369 = vadd.f32 %v8326, %v8350
      %v8370 = vadd.f32 %v8327, %v8350
      %v8371 = vadd.f32 %v8328, %v8350
      %v8372 = vadd.f32 %v8329, %v8350
      %v8373 = vadd.f32 %v8330, %v8350
      %v8374 = vadd.f32 %v8331, %v8350
      %v8375 = vadd.f32 %v8332, %v8350
      %v8376 = vadd.f32 %v8333, %v8350
      %v8377 = vadd.f32 %v8334, %v8350
      %v8378 = vadd.f32 %v8335, %v8350
      %v8379 = vadd.f32 %v8336, %v8350
      %v8380 = vadd.f32 %v8337, %v8350
      %v8381 = vadd.f32 %v8338, %v8350
      %v8382 = vadd.f32 %v8339, %v8350
      %v8383 = vadd.f32 %v8340, %v8350
      %v8384 = vadd.f32 %v8341, %v8350
      %v8385 = vadd.f32 %v8342, %v8350
      %v8386 = vadd.f32 %v8343, %v8350
      %v8387 = vadd.f32 %v8344, %v8350
      %v8388 = vmax.f32 %v8352, 0.0
      %v8389 = vmax.f32 %v8353, 0.0
      %v8390 = vmax.f32 %v8354, 0.0
      %v8391 = vmax.f32 %v8355, 0.0
      %v8392 = vmax.f32 %v8356, 0.0
      %v8393 = vmax.f32 %v8357, 0.0
      %v8394 = vmax.f32 %v8358, 0.0
      %v8395 = vmax.f32 %v8359, 0.0
      %v8396 = vmax.f32 %v8360, 0.0
      %v8397 = vmax.f32 %v8361, 0.0
      %v8398 = vmax.f32 %v8362, 0.0
      %v8399 = vmax.f32 %v8363, 0.0
      %v8400 = vmax.f32 %v8364, 0.0
      %v8401 = vmax.f32 %v8365, 0.0
      %v8402 = vmax.f32 %v8366, 0.0
      %v8403 = vmax.f32 %v8367, 0.0
      %v8404 = vmax.f32 %v8368, 0.0
      %v8405 = vmax.f32 %v8369, 0.0
      %v8406 = vmax.f32 %v8370, 0.0
      %v8407 = vmax.f32 %v8371, 0.0
      %v8408 = vmax.f32 %v8372, 0.0
      %v8409 = vmax.f32 %v8373, 0.0
      %v8410 = vmax.f32 %v8374, 0.0
      %v8411 = vmax.f32 %v8375, 0.0
      %v8412 = vmax.f32 %v8376, 0.0
      %v8413 = vmax.f32 %v8377, 0.0
      %v8414 = vmax.f32 %v8378, 0.0
      %v8415 = vmax.f32 %v8379, 0.0
      %v8416 = vmax.f32 %v8380, 0.0
      %v8417 = vmax.f32 %v8381, 0.0
      %v8418 = vmax.f32 %v8382, 0.0
      %v8419 = vmax.f32 %v8383, 0.0
      %v8420 = vmax.f32 %v8384, 0.0
      %v8421 = vmax.f32 %v8385, 0.0
      %v8422 = vmax.f32 %v8386, 0.0
      %v8423 = vmax.f32 %v8387, 0.0
      %v8424 = vmul.f32 %v8388, %v847
      %v8425 = vmul.f32 %v8389, %v852
      %v8426 = vmul.f32 %v8390, %v857
      %v8427 = vmul.f32 %v8391, %v862
      %v8428 = vmul.f32 %v8392, %v867
      %v8429 = vmul.f32 %v8393, %v872
      %v8430 = vmul.f32 %v8394, %v877
      %v8431 = vmul.f32 %v8395, %v882
      %v8432 = vmul.f32 %v8396, %v887
      %v8433 = vmul.f32 %v8397, %v892
      %v8434 = vmul.f32 %v8398, %v897
      %v8435 = vmul.f32 %v8399, %v902
      %v8436 = vmul.f32 %v8400, %v907
      %v8437 = vmul.f32 %v8401, %v912
      %v8438 = vmul.f32 %v8402, %v917
      %v8439 = vmul.f32 %v8403, %v922
      %v8440 = vmul.f32 %v8404, %v927
      %v8441 = vmul.f32 %v8405, %v932
      %v8442 = vmul.f32 %v8406, %v937
      %v8443 = vmul.f32 %v8407, %v942
      %v8444 = vmul.f32 %v8408, %v947
      %v8445 = vmul.f32 %v8409, %v952
      %v8446 = vmul.f32 %v8410, %v957
      %v8447 = vmul.f32 %v8411, %v962
      %v8448 = vmul.f32 %v8412, %v967
      %v8449 = vmul.f32 %v8413, %v972
      %v8450 = vmul.f32 %v8414, %v977
      %v8451 = vmul.f32 %v8415, %v982
      %v8452 = vmul.f32 %v8416, %v987
      %v8453 = vmul.f32 %v8417, %v992
      %v8454 = vmul.f32 %v8418, %v997
      %v8455 = vmul.f32 %v8419, %v1002
      %v8456 = vmul.f32 %v8420, %v1007
      %v8457 = vmul.f32 %v8421, %v1012
      %v8458 = vmul.f32 %v8422, %v1017
      %v8459 = vmul.f32 %v8423, %v1022
      %v8460 = vpack.c.bf16 %v8425, %v8424
      %v8461 = vpack.c.bf16 %v8427, %v8426
      %v8462 = vpack.c.bf16 %v8429, %v8428
      %v8463 = vpack.c.bf16 %v8431, %v8430
      %v8464 = vpack.c.bf16 %v8433, %v8432
      %v8465 = vpack.c.bf16 %v8435, %v8434
      %v8466 = vpack.c.bf16 %v8437, %v8436
      %v8467 = vpack.c.bf16 %v8439, %v8438
      %v8468 = vpack.c.bf16 %v8441, %v8440
      %v8469 = vpack.c.bf16 %v8443, %v8442
      %v8470 = vpack.c.bf16 %v8445, %v8444
      %v8471 = vpack.c.bf16 %v8447, %v8446
      %v8472 = vpack.c.bf16 %v8449, %v8448
      %v8473 = vpack.c.bf16 %v8451, %v8450
      %v8474 = vpack.c.bf16 %v8453, %v8452
      %v8475 = vpack.c.bf16 %v8455, %v8454
      %v8476 = vpack.c.bf16 %v8457, %v8456
      %v8477 = vpack.c.bf16 %v8459, %v8458
      %v8479 = vshrl.u32 %v8460, 16
      %v8481 = vrot.slane %v8479, 6
      %v8482 = vshll.u32 %v8460, 16
      %v8484 = vrot.slane %v8482, 7
      %v8485 = vor.u32 %v8481, %v8484
      %v8487 = vshrl.u32 %v8461, 16
      %v8489 = vrot.slane %v8487, 6
      %v8490 = vshll.u32 %v8461, 16
      %v8492 = vrot.slane %v8490, 7
      %v8493 = vor.u32 %v8489, %v8492
      %v8494 = vsel %vm363, %v8485, %v8493
      %v8496 = vshrl.u32 %v8462, 16
      %v8498 = vrot.slane %v8496, 6
      %v8499 = vshll.u32 %v8462, 16
      %v8501 = vrot.slane %v8499, 7
      %v8502 = vor.u32 %v8498, %v8501
      %v8503 = vsel %vm363, %v8493, %v8502
      %v8505 = vshrl.u32 %v8463, 16
      %v8507 = vrot.slane %v8505, 6
      %v8508 = vshll.u32 %v8463, 16
      %v8510 = vrot.slane %v8508, 7
      %v8511 = vor.u32 %v8507, %v8510
      %v8512 = vsel %vm363, %v8502, %v8511
      %v8514 = vshrl.u32 %v8464, 16
      %v8516 = vrot.slane %v8514, 6
      %v8517 = vshll.u32 %v8464, 16
      %v8519 = vrot.slane %v8517, 7
      %v8520 = vor.u32 %v8516, %v8519
      %v8521 = vsel %vm363, %v8511, %v8520
      %v8523 = vshrl.u32 %v8465, 16
      %v8525 = vrot.slane %v8523, 6
      %v8526 = vshll.u32 %v8465, 16
      %v8528 = vrot.slane %v8526, 7
      %v8529 = vor.u32 %v8525, %v8528
      %v8530 = vsel %vm363, %v8520, %v8529
      %v8532 = vshrl.u32 %v8466, 16
      %v8534 = vrot.slane %v8532, 6
      %v8535 = vshll.u32 %v8466, 16
      %v8537 = vrot.slane %v8535, 7
      %v8538 = vor.u32 %v8534, %v8537
      %v8539 = vsel %vm363, %v8529, %v8538
      %v8541 = vshrl.u32 %v8467, 16
      %v8543 = vrot.slane %v8541, 6
      %v8544 = vshll.u32 %v8467, 16
      %v8546 = vrot.slane %v8544, 7
      %v8547 = vor.u32 %v8543, %v8546
      %v8548 = vsel %vm363, %v8538, %v8547
      %v8550 = vshrl.u32 %v8468, 16
      %v8552 = vrot.slane %v8550, 6
      %v8553 = vshll.u32 %v8468, 16
      %v8555 = vrot.slane %v8553, 7
      %v8556 = vor.u32 %v8552, %v8555
      %v8557 = vsel %vm363, %v8547, %v8556
      %v8559 = vshrl.u32 %v8469, 16
      %v8561 = vrot.slane %v8559, 6
      %v8562 = vshll.u32 %v8469, 16
      %v8564 = vrot.slane %v8562, 7
      %v8565 = vor.u32 %v8561, %v8564
      %v8566 = vsel %vm363, %v8556, %v8565
      %v8568 = vshrl.u32 %v8470, 16
      %v8570 = vrot.slane %v8568, 6
      %v8571 = vshll.u32 %v8470, 16
      %v8573 = vrot.slane %v8571, 7
      %v8574 = vor.u32 %v8570, %v8573
      %v8575 = vsel %vm363, %v8565, %v8574
      %v8577 = vshrl.u32 %v8471, 16
      %v8579 = vrot.slane %v8577, 6
      %v8580 = vshll.u32 %v8471, 16
      %v8582 = vrot.slane %v8580, 7
      %v8583 = vor.u32 %v8579, %v8582
      %v8584 = vsel %vm363, %v8574, %v8583
      %v8586 = vshrl.u32 %v8472, 16
      %v8588 = vrot.slane %v8586, 6
      %v8589 = vshll.u32 %v8472, 16
      %v8591 = vrot.slane %v8589, 7
      %v8592 = vor.u32 %v8588, %v8591
      %v8593 = vsel %vm363, %v8583, %v8592
      %v8595 = vshrl.u32 %v8473, 16
      %v8597 = vrot.slane %v8595, 6
      %v8598 = vshll.u32 %v8473, 16
      %v8600 = vrot.slane %v8598, 7
      %v8601 = vor.u32 %v8597, %v8600
      %v8602 = vsel %vm363, %v8592, %v8601
      %v8604 = vshrl.u32 %v8474, 16
      %v8606 = vrot.slane %v8604, 6
      %v8607 = vshll.u32 %v8474, 16
      %v8609 = vrot.slane %v8607, 7
      %v8610 = vor.u32 %v8606, %v8609
      %v8611 = vsel %vm363, %v8601, %v8610
      %v8613 = vshrl.u32 %v8475, 16
      %v8615 = vrot.slane %v8613, 6
      %v8616 = vshll.u32 %v8475, 16
      %v8618 = vrot.slane %v8616, 7
      %v8619 = vor.u32 %v8615, %v8618
      %v8620 = vsel %vm363, %v8610, %v8619
      %v8622 = vshrl.u32 %v8476, 16
      %v8624 = vrot.slane %v8622, 6
      %v8625 = vshll.u32 %v8476, 16
      %v8627 = vrot.slane %v8625, 7
      %v8628 = vor.u32 %v8624, %v8627
      %v8629 = vsel %vm363, %v8619, %v8628
      %v8631 = vshrl.u32 %v8477, 16
      %v8633 = vrot.slane %v8631, 6
      %v8634 = vshll.u32 %v8477, 16
      %v8636 = vrot.slane %v8634, 7
      %v8637 = vor.u32 %v8633, %v8636
      %v8638 = vsel %vm363, %v8628, %v8637
      %v8658 = vld [vmem:[#allocation4 + $0x8] sm:$0xfe]
      %v8659 = vsel %vm370, %v8485, %v8658
      %8660 = vst [vmem:[#allocation4 + $0x8] sm:$0xfe] %v8659
      %8661 = vst [vmem:[#allocation4 + $0x10] sm:$0xff] %v8494
      %8662 = vst [vmem:[#allocation4 + $0x18] sm:$0xff] %v8503
      %8663 = vst [vmem:[#allocation4 + $0x20] sm:$0xff] %v8512
      %8664 = vst [vmem:[#allocation4 + $0x28] sm:$0xff] %v8521
      %8665 = vst [vmem:[#allocation4 + $0x30] sm:$0xff] %v8530
      %8666 = vst [vmem:[#allocation4 + $0x38] sm:$0xff] %v8539
      %8667 = vst [vmem:[#allocation4 + $0x40] sm:$0xff] %v8548
      %8668 = vst [vmem:[#allocation4 + $0x48] sm:$0xff] %v8557
      %8669 = vst [vmem:[#allocation4 + $0x50] sm:$0xff] %v8566
      %8670 = vst [vmem:[#allocation4 + $0x58] sm:$0xff] %v8575
      %8671 = vst [vmem:[#allocation4 + $0x60] sm:$0xff] %v8584
      %8672 = vst [vmem:[#allocation4 + $0x68] sm:$0xff] %v8593
      %8673 = vst [vmem:[#allocation4 + $0x70] sm:$0xff] %v8602
      %8674 = vst [vmem:[#allocation4 + $0x78] sm:$0xff] %v8611
      %8675 = vst [vmem:[#allocation4 + $0x80] sm:$0xff] %v8620
      %8676 = vst [vmem:[#allocation4 + $0x88] sm:$0xff] %v8629
      %8677 = vst [vmem:[#allocation4 + $0x90] sm:$0xff] %v8638
      %v8678 = vld [vmem:[#allocation4 + $0x98] sm:$0x3]
      %v8679 = vsel %vm364, %v8637, %v8678
      %8680 = vst [vmem:[#allocation4 + $0x98] sm:$0x3] %v8679
      %v8681 = vld [vmem:[#allocation4] sm:$0xff]
      %v8682 = vld [vmem:[#allocation4 + $0x8] sm:$0xff]
      %v8683 = vld [vmem:[#allocation4 + $0x10] sm:$0xff]
      %v8684 = vld [vmem:[#allocation4 + $0x18] sm:$0xff]
      %v8685 = vld [vmem:[#allocation4 + $0x20] sm:$0xff]
      %v8686 = vld [vmem:[#allocation4 + $0x28] sm:$0xff]
      %v8687 = vld [vmem:[#allocation4 + $0x30] sm:$0xff]
      %v8688 = vld [vmem:[#allocation4 + $0x38] sm:$0xff]
      %v8689 = vld [vmem:[#allocation4 + $0x40] sm:$0xff]
      %v8690 = vld [vmem:[#allocation4 + $0x48] sm:$0xff]
      %v8691 = vld [vmem:[#allocation4 + $0x50] sm:$0xff]
      %v8692 = vld [vmem:[#allocation4 + $0x58] sm:$0xff]
      %v8693 = vld [vmem:[#allocation4 + $0x60] sm:$0xff]
      %v8694 = vld [vmem:[#allocation4 + $0x68] sm:$0xff]
      %v8695 = vld [vmem:[#allocation4 + $0x70] sm:$0xff]
      %v8696 = vld [vmem:[#allocation4 + $0x78] sm:$0xff]
      %v8697 = vld [vmem:[#allocation4 + $0x80] sm:$0xff]
      %v8698 = vld [vmem:[#allocation4 + $0x88] sm:$0xff]
      %v8699 = vld [vmem:[%s8] sm:$0xf]
      %v8700 = vld [vmem:[%s8 + $0x4] sm:$0xf]
      %v8701 = vld [vmem:[%s8 + $0x8] sm:$0xf]
      %v8702 = vld [vmem:[%s8 + $0xc] sm:$0xf]
      %v8703 = vld [vmem:[%s8 + $0x10] sm:$0xf]
      %v8704 = vld [vmem:[%s8 + $0x14] sm:$0xf]
      %v8705 = vld [vmem:[%s8 + $0x18] sm:$0xf]
      %v8706 = vld [vmem:[%s8 + $0x1c] sm:$0xf]
      %v8707 = vld [vmem:[%s8 + $0x20] sm:$0xf]
      %v8708 = vld [vmem:[%s8 + $0x24] sm:$0xf]
      %v8709 = vld [vmem:[%s8 + $0x28] sm:$0xf]
      %v8710 = vld [vmem:[%s8 + $0x2c] sm:$0xf]
      %v8711 = vld [vmem:[%s8 + $0x30] sm:$0xf]
      %v8712 = vld [vmem:[%s8 + $0x34] sm:$0xf]
      %v8713 = vld [vmem:[%s8 + $0x38] sm:$0xf]
      %v8714 = vld [vmem:[%s8 + $0x3c] sm:$0xf]
      %v8715 = vld [vmem:[#allocation4 + $0x90] sm:$0x1]
      %v8716 = vld [vmem:[%s8 + $0x40] sm:$0xf]
      %v8717 = vld [vmem:[%s8 + $0x44] sm:$0xf]
      %v8718 = vld [vmem:[%s8 + $0x48] sm:$0xf]
      %v8719 = vld [vmem:[%s8 + $0x4c] sm:$0xf]
      %v8720 = vld [vmem:[%s8 + $0x50] sm:$0xf]
      %v8721 = vld [vmem:[%s8 + $0x54] sm:$0xf]
      %v8722 = vld [vmem:[%s8 + $0x58] sm:$0xf]
      %v8723 = vld [vmem:[%s8 + $0x5c] sm:$0xf]
      %v8724 = vld [vmem:[%s8 + $0x60] sm:$0xf]
      %v8725 = vld [vmem:[%s8 + $0x64] sm:$0xf]
      %v8726 = vld [vmem:[%s8 + $0x68] sm:$0xf]
      %v8727 = vld [vmem:[%s8 + $0x6c] sm:$0xf]
      %v8728 = vld [vmem:[%s8 + $0x70] sm:$0xf]
      %v8729 = vld [vmem:[%s8 + $0x74] sm:$0xf]
      %v8730 = vld [vmem:[%s8 + $0x78] sm:$0xf]
      %v8731 = vld [vmem:[%s8 + $0x7c] sm:$0xf]
      %v8733 = vshrl.u32 %v8681, 16
      %v8735 = vshll.u32 %v8681, 16
      %v8737 = vrot.slane %v8735, 1
      %v8738 = vor.u32 %v8733, %v8737
      %v8740 = vshll.u32 %v8682, 16
      %v8742 = vrot.slane %v8740, 1
      %v8743 = vsel %vm1332, %v8738, %v8742
      %v8744 = vshrl.u32 %v8682, 16
      %v8746 = vor.u32 %v8744, %v8742
      %v8748 = vshll.u32 %v8683, 16
      %v8750 = vrot.slane %v8748, 1
      %v8751 = vsel %vm1332, %v8746, %v8750
      %v8752 = vshrl.u32 %v8683, 16
      %v8754 = vor.u32 %v8752, %v8750
      %v8756 = vshll.u32 %v8684, 16
      %v8758 = vrot.slane %v8756, 1
      %v8759 = vsel %vm1332, %v8754, %v8758
      %v8760 = vshrl.u32 %v8684, 16
      %v8762 = vor.u32 %v8760, %v8758
      %v8764 = vshll.u32 %v8685, 16
      %v8766 = vrot.slane %v8764, 1
      %v8767 = vsel %vm1332, %v8762, %v8766
      %v8768 = vshrl.u32 %v8685, 16
      %v8770 = vor.u32 %v8768, %v8766
      %v8772 = vshll.u32 %v8686, 16
      %v8774 = vrot.slane %v8772, 1
      %v8775 = vsel %vm1332, %v8770, %v8774
      %v8776 = vshrl.u32 %v8686, 16
      %v8778 = vor.u32 %v8776, %v8774
      %v8780 = vshll.u32 %v8687, 16
      %v8782 = vrot.slane %v8780, 1
      %v8783 = vsel %vm1332, %v8778, %v8782
      %v8784 = vshrl.u32 %v8687, 16
      %v8786 = vor.u32 %v8784, %v8782
      %v8788 = vshll.u32 %v8688, 16
      %v8790 = vrot.slane %v8788, 1
      %v8791 = vsel %vm1332, %v8786, %v8790
      %v8792 = vshrl.u32 %v8688, 16
      %v8794 = vor.u32 %v8792, %v8790
      %v8796 = vshll.u32 %v8689, 16
      %v8798 = vrot.slane %v8796, 1
      %v8799 = vsel %vm1332, %v8794, %v8798
      %v8800 = vshrl.u32 %v8689, 16
      %v8802 = vor.u32 %v8800, %v8798
      %v8804 = vshll.u32 %v8690, 16
      %v8806 = vrot.slane %v8804, 1
      %v8807 = vsel %vm1332, %v8802, %v8806
      %v8808 = vshrl.u32 %v8690, 16
      %v8810 = vor.u32 %v8808, %v8806
      %v8812 = vshll.u32 %v8691, 16
      %v8814 = vrot.slane %v8812, 1
      %v8815 = vsel %vm1332, %v8810, %v8814
      %v8816 = vshrl.u32 %v8691, 16
      %v8818 = vor.u32 %v8816, %v8814
      %v8820 = vshll.u32 %v8692, 16
      %v8822 = vrot.slane %v8820, 1
      %v8823 = vsel %vm1332, %v8818, %v8822
      %v8824 = vshrl.u32 %v8692, 16
      %v8826 = vor.u32 %v8824, %v8822
      %v8828 = vshll.u32 %v8693, 16
      %v8830 = vrot.slane %v8828, 1
      %v8831 = vsel %vm1332, %v8826, %v8830
      %v8832 = vshrl.u32 %v8693, 16
      %v8834 = vor.u32 %v8832, %v8830
      %v8836 = vshll.u32 %v8694, 16
      %v8838 = vrot.slane %v8836, 1
      %v8839 = vsel %vm1332, %v8834, %v8838
      %v8840 = vshrl.u32 %v8694, 16
      %v8842 = vor.u32 %v8840, %v8838
      %v8844 = vshll.u32 %v8695, 16
      %v8846 = vrot.slane %v8844, 1
      %v8847 = vsel %vm1332, %v8842, %v8846
      %v8848 = vshrl.u32 %v8695, 16
      %v8850 = vor.u32 %v8848, %v8846
      %v8852 = vshll.u32 %v8696, 16
      %v8854 = vrot.slane %v8852, 1
      %v8855 = vsel %vm1332, %v8850, %v8854
      %v8856 = vshrl.u32 %v8696, 16
      %v8858 = vor.u32 %v8856, %v8854
      %v8860 = vshll.u32 %v8697, 16
      %v8862 = vrot.slane %v8860, 1
      %v8863 = vsel %vm1332, %v8858, %v8862
      %v8864 = vshrl.u32 %v8697, 16
      %v8866 = vor.u32 %v8864, %v8862
      %v8868 = vshll.u32 %v8698, 16
      %v8870 = vrot.slane %v8868, 1
      %v8871 = vsel %vm1332, %v8866, %v8870
      %v8872 = vshrl.u32 %v8698, 16
      %v8874 = vor.u32 %v8872, %v8870
      %v8876 = vshll.u32 %v8715, 16
      %v8878 = vrot.slane %v8876, 1
      %v8879 = vsel %vm1332, %v8874, %v8878
      %v8914 = vunpack.c.l.b16 %v8716
      %v8915 = vunpack.c.l.b16 %v8717
      %v8916 = vunpack.c.l.b16 %v8718
      %v8917 = vunpack.c.l.b16 %v8719
      %v8918 = vunpack.c.l.b16 %v8720
      %v8919 = vunpack.c.l.b16 %v8721
      %v8920 = vunpack.c.l.b16 %v8722
      %v8921 = vunpack.c.l.b16 %v8723
      %v8922 = vunpack.c.l.b16 %v8724
      %v8923 = vunpack.c.l.b16 %v8725
      %v8924 = vunpack.c.l.b16 %v8726
      %v8925 = vunpack.c.l.b16 %v8727
      %v8926 = vunpack.c.l.b16 %v8728
      %v8927 = vunpack.c.l.b16 %v8729
      %v8928 = vunpack.c.l.b16 %v8730
      %v8929 = vunpack.c.l.b16 %v8731
      %v8930 = vpack.c.b16 %v8915, %v8914
      %v8931 = vpack.c.b16 %v8917, %v8916
      %v8932 = vpack.c.b16 %v8919, %v8918
      %v8933 = vpack.c.b16 %v8921, %v8920
      %v8934 = vpack.c.b16 %v8923, %v8922
      %v8935 = vpack.c.b16 %v8925, %v8924
      %v8936 = vpack.c.b16 %v8927, %v8926
      %v8937 = vpack.c.b16 %v8929, %v8928
      %8946 = vmatprep.subr.bf16.mxu0 0
      %8947 = vmatpush1.bf16.msra.mxu0 %v8930
      %8948 = vmatprep.subr.bf16.mxu0 0
      %8949 = vmatpush1.bf16.msra.mxu0 %v8931
      %8950 = vmatprep.subr.bf16.mxu0 0
      %8951 = vmatpush1.bf16.msra.mxu0 %v8932
      %8952 = vmatprep.subr.bf16.mxu0 0
      %8953 = vmatpush1.bf16.msra.mxu0 %v8933
      %8954 = vmatprep.subr.bf16.mxu0 0
      %8955 = vmatpush1.bf16.msra.mxu0 %v8934
      %8956 = vmatprep.subr.bf16.mxu0 0
      %8957 = vmatpush1.bf16.msra.mxu0 %v8935
      %8958 = vmatprep.subr.bf16.mxu0 0
      %8959 = vmatpush1.bf16.msra.mxu0 %v8936
      %8960 = vmatprep.subr.bf16.mxu0 0
      %8961 = vmatpush1.bf16.msra.mxu0 %v8937
      %8962 = vmatprep.subr.bf16.mxu0 0
      %8963 = vmatpush1.bf16.msra.mxu0 0
      %8964 = vmatprep.subr.bf16.mxu0 0
      %8965 = vmatpush1.bf16.msra.mxu0 0
      %8966 = vmatprep.subr.bf16.mxu0 0
      %8967 = vmatpush1.bf16.msra.mxu0 0
      %8968 = vmatprep.subr.bf16.mxu0 0
      %8969 = vmatpush1.bf16.msra.mxu0 0
      %8970 = vmatprep.subr.bf16.mxu0 0
      %8971 = vmatpush1.bf16.msra.mxu0 0
      %8972 = vmatprep.subr.bf16.mxu0 0
      %8973 = vmatpush1.bf16.msra.mxu0 0
      %8974 = vmatprep.subr.bf16.mxu0 0
      %8975 = vmatpush1.bf16.msra.mxu0 0
      %8976 = vmatprep.subr.bf16.mxu0 0
      %8977 = vmatpush1.bf16.msra.mxu0 0
      %8978 = vmatprep.mubr.bf16.mxu0 0
      %8979 = vmatmul.mubr.bf16.gmra.mrb[0].mxu0 %v8743
      %v8980 = vpop.f32.mrb[0].mxu0
      %v8981 = vadd.f32 0.0, %v8980
      %v8982 = vpop.f32.mrb[0].mxu0
      %v8983 = vpop.f32.mrb[0].mxu0
      %v8984 = vadd.f32 0.0, %v8983
      %v8985 = vpop.f32.mrb[0].mxu0
      %8986 = vmatprep.mubr.bf16.mxu0 0
      %8987 = vmatmul.mubr.bf16.gmra.mrb[0].mxu0 %v8751
      %v8988 = vpop.f32.mrb[0].mxu0
      %v8989 = vadd.f32 0.0, %v8988
      %v8990 = vpop.f32.mrb[0].mxu0
      %v8991 = vpop.f32.mrb[0].mxu0
      %v8992 = vadd.f32 0.0, %v8991
      %v8993 = vpop.f32.mrb[0].mxu0
      %8994 = vmatprep.mubr.bf16.mxu0 0
      %8995 = vmatmul.mubr.bf16.gmra.mrb[0].mxu0 %v8759
      %v8996 = vpop.f32.mrb[0].mxu0
      %v8997 = vadd.f32 0.0, %v8996
      %v8998 = vpop.f32.mrb[0].mxu0
      %v8999 = vpop.f32.mrb[0].mxu0
      %v9000 = vadd.f32 0.0, %v8999
      %v9001 = vpop.f32.mrb[0].mxu0
      %9002 = vmatprep.mubr.bf16.mxu0 0
      %9003 = vmatmul.mubr.bf16.gmra.mrb[0].mxu0 %v8767
      %v9004 = vpop.f32.mrb[0].mxu0
      %v9005 = vadd.f32 0.0, %v9004
      %v9006 = vpop.f32.mrb[0].mxu0
      %v9007 = vpop.f32.mrb[0].mxu0
      %v9008 = vadd.f32 0.0, %v9007
      %v9009 = vpop.f32.mrb[0].mxu0
      %9010 = vmatprep.mubr.bf16.mxu0 0
      %9011 = vmatmul.mubr.bf16.gmra.mrb[0].mxu0 %v8775
      %v9012 = vpop.f32.mrb[0].mxu0
      %v9013 = vadd.f32 0.0, %v9012
      %v9014 = vpop.f32.mrb[0].mxu0
      %v9015 = vpop.f32.mrb[0].mxu0
      %v9016 = vadd.f32 0.0, %v9015
      %v9017 = vpop.f32.mrb[0].mxu0
      %9018 = vmatprep.mubr.bf16.mxu0 0
      %9019 = vmatmul.mubr.bf16.gmra.mrb[0].mxu0 %v8783
      %v9020 = vpop.f32.mrb[0].mxu0
      %v9021 = vadd.f32 0.0, %v9020
      %v9022 = vpop.f32.mrb[0].mxu0
      %v9023 = vpop.f32.mrb[0].mxu0
      %v9024 = vadd.f32 0.0, %v9023
      %v9025 = vpop.f32.mrb[0].mxu0
      %9026 = vmatprep.mubr.bf16.mxu0 0
      %9027 = vmatmul.mubr.bf16.gmra.mrb[0].mxu0 %v8791
      %v9028 = vpop.f32.mrb[0].mxu0
      %v9029 = vadd.f32 0.0, %v9028
      %v9030 = vpop.f32.mrb[0].mxu0
      %v9031 = vpop.f32.mrb[0].mxu0
      %v9032 = vadd.f32 0.0, %v9031
      %v9033 = vpop.f32.mrb[0].mxu0
      %9034 = vmatprep.mubr.bf16.mxu0 0
      %9035 = vmatmul.mubr.bf16.gmra.mrb[0].mxu0 %v8799
      %v9036 = vpop.f32.mrb[0].mxu0
      %v9037 = vadd.f32 0.0, %v9036
      %v9038 = vpop.f32.mrb[0].mxu0
      %v9039 = vpop.f32.mrb[0].mxu0
      %v9040 = vadd.f32 0.0, %v9039
      %v9041 = vpop.f32.mrb[0].mxu0
      %9042 = vmatprep.mubr.bf16.mxu0 0
      %9043 = vmatmul.mubr.bf16.gmra.mrb[0].mxu0 %v8807
      %v9044 = vpop.f32.mrb[0].mxu0
      %v9045 = vadd.f32 0.0, %v9044
      %v9046 = vpop.f32.mrb[0].mxu0
      %v9047 = vpop.f32.mrb[0].mxu0
      %v9048 = vadd.f32 0.0, %v9047
      %v9049 = vpop.f32.mrb[0].mxu0
      %9050 = vmatprep.mubr.bf16.mxu0 0
      %9051 = vmatmul.mubr.bf16.gmra.mrb[0].mxu0 %v8815
      %v9052 = vpop.f32.mrb[0].mxu0
      %v9053 = vadd.f32 0.0, %v9052
      %v9054 = vpop.f32.mrb[0].mxu0
      %v9055 = vpop.f32.mrb[0].mxu0
      %v9056 = vadd.f32 0.0, %v9055
      %v9057 = vpop.f32.mrb[0].mxu0
      %9058 = vmatprep.mubr.bf16.mxu0 0
      %9059 = vmatmul.mubr.bf16.gmra.mrb[0].mxu0 %v8823
      %v9060 = vpop.f32.mrb[0].mxu0
      %v9061 = vadd.f32 0.0, %v9060
      %v9062 = vpop.f32.mrb[0].mxu0
      %v9063 = vpop.f32.mrb[0].mxu0
      %v9064 = vadd.f32 0.0, %v9063
      %v9065 = vpop.f32.mrb[0].mxu0
      %9066 = vmatprep.mubr.bf16.mxu0 0
      %9067 = vmatmul.mubr.bf16.gmra.mrb[0].mxu0 %v8831
      %v9068 = vpop.f32.mrb[0].mxu0
      %v9069 = vadd.f32 0.0, %v9068
      %v9070 = vpop.f32.mrb[0].mxu0
      %v9071 = vpop.f32.mrb[0].mxu0
      %v9072 = vadd.f32 0.0, %v9071
      %v9073 = vpop.f32.mrb[0].mxu0
      %9074 = vmatprep.mubr.bf16.mxu0 0
      %9075 = vmatmul.mubr.bf16.gmra.mrb[0].mxu0 %v8839
      %v9076 = vpop.f32.mrb[0].mxu0
      %v9077 = vadd.f32 0.0, %v9076
      %v9078 = vpop.f32.mrb[0].mxu0
      %v9079 = vpop.f32.mrb[0].mxu0
      %v9080 = vadd.f32 0.0, %v9079
      %v9081 = vpop.f32.mrb[0].mxu0
      %9082 = vmatprep.mubr.bf16.mxu0 0
      %9083 = vmatmul.mubr.bf16.gmra.mrb[0].mxu0 %v8847
      %v9084 = vpop.f32.mrb[0].mxu0
      %v9085 = vadd.f32 0.0, %v9084
      %v9086 = vpop.f32.mrb[0].mxu0
      %v9087 = vpop.f32.mrb[0].mxu0
      %v9088 = vadd.f32 0.0, %v9087
      %v9089 = vpop.f32.mrb[0].mxu0
      %9090 = vmatprep.mubr.bf16.mxu0 0
      %9091 = vmatmul.mubr.bf16.gmra.mrb[0].mxu0 %v8855
      %v9092 = vpop.f32.mrb[0].mxu0
      %v9093 = vadd.f32 0.0, %v9092
      %v9094 = vpop.f32.mrb[0].mxu0
      %v9095 = vpop.f32.mrb[0].mxu0
      %v9096 = vadd.f32 0.0, %v9095
      %v9097 = vpop.f32.mrb[0].mxu0
      %9098 = vmatprep.mubr.bf16.mxu0 0
      %9099 = vmatmul.mubr.bf16.gmra.mrb[0].mxu0 %v8863
      %v9100 = vpop.f32.mrb[0].mxu0
      %v9101 = vadd.f32 0.0, %v9100
      %v9102 = vpop.f32.mrb[0].mxu0
      %v9103 = vpop.f32.mrb[0].mxu0
      %v9104 = vadd.f32 0.0, %v9103
      %v9105 = vpop.f32.mrb[0].mxu0
      %9106 = vmatprep.mubr.bf16.mxu0 0
      %9107 = vmatmul.mubr.bf16.gmra.mrb[0].mxu0 %v8871
      %v9108 = vpop.f32.mrb[0].mxu0
      %v9109 = vadd.f32 0.0, %v9108
      %v9110 = vpop.f32.mrb[0].mxu0
      %v9111 = vpop.f32.mrb[0].mxu0
      %v9112 = vadd.f32 0.0, %v9111
      %v9113 = vpop.f32.mrb[0].mxu0
      %9114 = vmatprep.mubr.bf16.mxu0 0
      %9115 = vmatmul.mubr.bf16.gmra.mrb[0].mxu0 %v8879
      %v9116 = vpop.f32.mrb[0].mxu0
      %v9117 = vadd.f32 0.0, %v9116
      %v9118 = vpop.f32.mrb[0].mxu0
      %v9119 = vpop.f32.mrb[0].mxu0
      %v9120 = vadd.f32 0.0, %v9119
      %v9121 = vpop.f32.mrb[0].mxu0
      %9122 = vdwg.mxu0
      %v9139 = vunpack.c.l.b16 %v8699
      %v9140 = vunpack.c.l.b16 %v8700
      %v9141 = vunpack.c.l.b16 %v8701
      %v9142 = vunpack.c.l.b16 %v8702
      %v9143 = vunpack.c.l.b16 %v8703
      %v9144 = vunpack.c.l.b16 %v8704
      %v9145 = vunpack.c.l.b16 %v8705
      %v9146 = vunpack.c.l.b16 %v8706
      %v9147 = vunpack.c.l.b16 %v8707
      %v9148 = vunpack.c.l.b16 %v8708
      %v9149 = vunpack.c.l.b16 %v8709
      %v9150 = vunpack.c.l.b16 %v8710
      %v9151 = vunpack.c.l.b16 %v8711
      %v9152 = vunpack.c.l.b16 %v8712
      %v9153 = vunpack.c.l.b16 %v8713
      %v9154 = vunpack.c.l.b16 %v8714
      %v9155 = vpack.c.b16 %v9140, %v9139
      %v9156 = vpack.c.b16 %v9142, %v9141
      %v9157 = vpack.c.b16 %v9144, %v9143
      %v9158 = vpack.c.b16 %v9146, %v9145
      %v9159 = vpack.c.b16 %v9148, %v9147
      %v9160 = vpack.c.b16 %v9150, %v9149
      %v9161 = vpack.c.b16 %v9152, %v9151
      %v9162 = vpack.c.b16 %v9154, %v9153
      %9171 = vmatprep.subr.bf16.mxu0 0
      %9172 = vmatpush1.bf16.msra.mxu0 %v9155
      %9173 = vmatprep.subr.bf16.mxu0 0
      %9174 = vmatpush1.bf16.msra.mxu0 %v9156
      %9175 = vmatprep.subr.bf16.mxu0 0
      %9176 = vmatpush1.bf16.msra.mxu0 %v9157
      %9177 = vmatprep.subr.bf16.mxu0 0
      %9178 = vmatpush1.bf16.msra.mxu0 %v9158
      %9179 = vmatprep.subr.bf16.mxu0 0
      %9180 = vmatpush1.bf16.msra.mxu0 %v9159
      %9181 = vmatprep.subr.bf16.mxu0 0
      %9182 = vmatpush1.bf16.msra.mxu0 %v9160
      %9183 = vmatprep.subr.bf16.mxu0 0
      %9184 = vmatpush1.bf16.msra.mxu0 %v9161
      %9185 = vmatprep.subr.bf16.mxu0 0
      %9186 = vmatpush1.bf16.msra.mxu0 %v9162
      %9187 = vmatprep.subr.bf16.mxu0 0
      %9188 = vmatpush1.bf16.msra.mxu0 0
      %9189 = vmatprep.subr.bf16.mxu0 0
      %9190 = vmatpush1.bf16.msra.mxu0 0
      %9191 = vmatprep.subr.bf16.mxu0 0
      %9192 = vmatpush1.bf16.msra.mxu0 0
      %9193 = vmatprep.subr.bf16.mxu0 0
      %9194 = vmatpush1.bf16.msra.mxu0 0
      %9195 = vmatprep.subr.bf16.mxu0 0
      %9196 = vmatpush1.bf16.msra.mxu0 0
      %9197 = vmatprep.subr.bf16.mxu0 0
      %9198 = vmatpush1.bf16.msra.mxu0 0
      %9199 = vmatprep.subr.bf16.mxu0 0
      %9200 = vmatpush1.bf16.msra.mxu0 0
      %9201 = vmatprep.subr.bf16.mxu0 0
      %9202 = vmatpush1.bf16.msra.mxu0 0
      %9203 = vmatprep.mubr.bf16.mxu0 0
      %9204 = vmatmul.mubr.bf16.gmra.mrb[0].mxu0 %v8681
      %v9205 = vpop.f32.mrb[0].mxu0
      %v9206 = vadd.f32 %v8981, %v9205
      %v9207 = vpop.f32.mrb[0].mxu0
      %v9208 = vpop.f32.mrb[0].mxu0
      %v9209 = vadd.f32 %v8984, %v9208
      %v9210 = vpop.f32.mrb[0].mxu0
      %9211 = vmatprep.mubr.bf16.mxu0 0
      %9212 = vmatmul.mubr.bf16.gmra.mrb[0].mxu0 %v8682
      %v9213 = vpop.f32.mrb[0].mxu0
      %v9214 = vadd.f32 %v8989, %v9213
      %v9215 = vpop.f32.mrb[0].mxu0
      %v9216 = vpop.f32.mrb[0].mxu0
      %v9217 = vadd.f32 %v8992, %v9216
      %v9218 = vpop.f32.mrb[0].mxu0
      %9219 = vmatprep.mubr.bf16.mxu0 0
      %9220 = vmatmul.mubr.bf16.gmra.mrb[0].mxu0 %v8683
      %v9221 = vpop.f32.mrb[0].mxu0
      %v9222 = vadd.f32 %v8997, %v9221
      %v9223 = vpop.f32.mrb[0].mxu0
      %v9224 = vpop.f32.mrb[0].mxu0
      %v9225 = vadd.f32 %v9000, %v9224
      %v9226 = vpop.f32.mrb[0].mxu0
      %9227 = vmatprep.mubr.bf16.mxu0 0
      %9228 = vmatmul.mubr.bf16.gmra.mrb[0].mxu0 %v8684
      %v9229 = vpop.f32.mrb[0].mxu0
      %v9230 = vadd.f32 %v9005, %v9229
      %v9231 = vpop.f32.mrb[0].mxu0
      %v9232 = vpop.f32.mrb[0].mxu0
      %v9233 = vadd.f32 %v9008, %v9232
      %v9234 = vpop.f32.mrb[0].mxu0
      %9235 = vmatprep.mubr.bf16.mxu0 0
      %9236 = vmatmul.mubr.bf16.gmra.mrb[0].mxu0 %v8685
      %v9237 = vpop.f32.mrb[0].mxu0
      %v9238 = vadd.f32 %v9013, %v9237
      %v9239 = vpop.f32.mrb[0].mxu0
      %v9240 = vpop.f32.mrb[0].mxu0
      %v9241 = vadd.f32 %v9016, %v9240
      %v9242 = vpop.f32.mrb[0].mxu0
      %9243 = vmatprep.mubr.bf16.mxu0 0
      %9244 = vmatmul.mubr.bf16.gmra.mrb[0].mxu0 %v8686
      %v9245 = vpop.f32.mrb[0].mxu0
      %v9246 = vadd.f32 %v9021, %v9245
      %v9247 = vpop.f32.mrb[0].mxu0
      %v9248 = vpop.f32.mrb[0].mxu0
      %v9249 = vadd.f32 %v9024, %v9248
      %v9250 = vpop.f32.mrb[0].mxu0
      %9251 = vmatprep.mubr.bf16.mxu0 0
      %9252 = vmatmul.mubr.bf16.gmra.mrb[0].mxu0 %v8687
      %v9253 = vpop.f32.mrb[0].mxu0
      %v9254 = vadd.f32 %v9029, %v9253
      %v9255 = vpop.f32.mrb[0].mxu0
      %v9256 = vpop.f32.mrb[0].mxu0
      %v9257 = vadd.f32 %v9032, %v9256
      %v9258 = vpop.f32.mrb[0].mxu0
      %9259 = vmatprep.mubr.bf16.mxu0 0
      %9260 = vmatmul.mubr.bf16.gmra.mrb[0].mxu0 %v8688
      %v9261 = vpop.f32.mrb[0].mxu0
      %v9262 = vadd.f32 %v9037, %v9261
      %v9263 = vpop.f32.mrb[0].mxu0
      %v9264 = vpop.f32.mrb[0].mxu0
      %v9265 = vadd.f32 %v9040, %v9264
      %v9266 = vpop.f32.mrb[0].mxu0
      %9267 = vmatprep.mubr.bf16.mxu0 0
      %9268 = vmatmul.mubr.bf16.gmra.mrb[0].mxu0 %v8689
      %v9269 = vpop.f32.mrb[0].mxu0
      %v9270 = vadd.f32 %v9045, %v9269
      %v9271 = vpop.f32.mrb[0].mxu0
      %v9272 = vpop.f32.mrb[0].mxu0
      %v9273 = vadd.f32 %v9048, %v9272
      %v9274 = vpop.f32.mrb[0].mxu0
      %9275 = vmatprep.mubr.bf16.mxu0 0
      %9276 = vmatmul.mubr.bf16.gmra.mrb[0].mxu0 %v8690
      %v9277 = vpop.f32.mrb[0].mxu0
      %v9278 = vadd.f32 %v9053, %v9277
      %v9279 = vpop.f32.mrb[0].mxu0
      %v9280 = vpop.f32.mrb[0].mxu0
      %v9281 = vadd.f32 %v9056, %v9280
      %v9282 = vpop.f32.mrb[0].mxu0
      %9283 = vmatprep.mubr.bf16.mxu0 0
      %9284 = vmatmul.mubr.bf16.gmra.mrb[0].mxu0 %v8691
      %v9285 = vpop.f32.mrb[0].mxu0
      %v9286 = vadd.f32 %v9061, %v9285
      %v9287 = vpop.f32.mrb[0].mxu0
      %v9288 = vpop.f32.mrb[0].mxu0
      %v9289 = vadd.f32 %v9064, %v9288
      %v9290 = vpop.f32.mrb[0].mxu0
      %9291 = vmatprep.mubr.bf16.mxu0 0
      %9292 = vmatmul.mubr.bf16.gmra.mrb[0].mxu0 %v8692
      %v9293 = vpop.f32.mrb[0].mxu0
      %v9294 = vadd.f32 %v9069, %v9293
      %v9295 = vpop.f32.mrb[0].mxu0
      %v9296 = vpop.f32.mrb[0].mxu0
      %v9297 = vadd.f32 %v9072, %v9296
      %v9298 = vpop.f32.mrb[0].mxu0
      %9299 = vmatprep.mubr.bf16.mxu0 0
      %9300 = vmatmul.mubr.bf16.gmra.mrb[0].mxu0 %v8693
      %v9301 = vpop.f32.mrb[0].mxu0
      %v9302 = vadd.f32 %v9077, %v9301
      %v9303 = vpop.f32.mrb[0].mxu0
      %v9304 = vpop.f32.mrb[0].mxu0
      %v9305 = vadd.f32 %v9080, %v9304
      %v9306 = vpop.f32.mrb[0].mxu0
      %9307 = vmatprep.mubr.bf16.mxu0 0
      %9308 = vmatmul.mubr.bf16.gmra.mrb[0].mxu0 %v8694
      %v9309 = vpop.f32.mrb[0].mxu0
      %v9310 = vadd.f32 %v9085, %v9309
      %v9311 = vpop.f32.mrb[0].mxu0
      %v9312 = vpop.f32.mrb[0].mxu0
      %v9313 = vadd.f32 %v9088, %v9312
      %v9314 = vpop.f32.mrb[0].mxu0
      %9315 = vmatprep.mubr.bf16.mxu0 0
      %9316 = vmatmul.mubr.bf16.gmra.mrb[0].mxu0 %v8695
      %v9317 = vpop.f32.mrb[0].mxu0
      %v9318 = vadd.f32 %v9093, %v9317
      %v9319 = vpop.f32.mrb[0].mxu0
      %v9320 = vpop.f32.mrb[0].mxu0
      %v9321 = vadd.f32 %v9096, %v9320
      %v9322 = vpop.f32.mrb[0].mxu0
      %9323 = vmatprep.mubr.bf16.mxu0 0
      %9324 = vmatmul.mubr.bf16.gmra.mrb[0].mxu0 %v8696
      %v9325 = vpop.f32.mrb[0].mxu0
      %v9326 = vadd.f32 %v9101, %v9325
      %v9327 = vpop.f32.mrb[0].mxu0
      %v9328 = vpop.f32.mrb[0].mxu0
      %v9329 = vadd.f32 %v9104, %v9328
      %v9330 = vpop.f32.mrb[0].mxu0
      %9331 = vmatprep.mubr.bf16.mxu0 0
      %9332 = vmatmul.mubr.bf16.gmra.mrb[0].mxu0 %v8697
      %v9333 = vpop.f32.mrb[0].mxu0
      %v9334 = vadd.f32 %v9109, %v9333
      %v9335 = vpop.f32.mrb[0].mxu0
      %v9336 = vpop.f32.mrb[0].mxu0
      %v9337 = vadd.f32 %v9112, %v9336
      %v9338 = vpop.f32.mrb[0].mxu0
      %9339 = vmatprep.mubr.bf16.mxu0 0
      %9340 = vmatmul.mubr.bf16.gmra.mrb[0].mxu0 %v8698
      %v9341 = vpop.f32.mrb[0].mxu0
      %v9342 = vadd.f32 %v9117, %v9341
      %v9343 = vpop.f32.mrb[0].mxu0
      %v9344 = vpop.f32.mrb[0].mxu0
      %v9345 = vadd.f32 %v9120, %v9344
      %v9346 = vpop.f32.mrb[0].mxu0
      %9347 = vdwg.mxu0
      %v9348 = vld [vmem:[#allocation4] sm:$0xfe]
      %v9349 = vld [vmem:[%s8 + $0x80] sm:$0xf]
      %v9350 = vld [vmem:[%s8 + $0x84] sm:$0xf]
      %v9351 = vld [vmem:[%s8 + $0x88] sm:$0xf]
      %v9352 = vld [vmem:[%s8 + $0x8c] sm:$0xf]
      %v9353 = vld [vmem:[%s8 + $0x90] sm:$0xf]
      %v9354 = vld [vmem:[%s8 + $0x94] sm:$0xf]
      %v9355 = vld [vmem:[%s8 + $0x98] sm:$0xf]
      %v9356 = vld [vmem:[%s8 + $0x9c] sm:$0xf]
      %v9357 = vld [vmem:[%s8 + $0xa0] sm:$0xf]
      %v9358 = vld [vmem:[%s8 + $0xa4] sm:$0xf]
      %v9359 = vld [vmem:[%s8 + $0xa8] sm:$0xf]
      %v9360 = vld [vmem:[%s8 + $0xac] sm:$0xf]
      %v9361 = vld [vmem:[%s8 + $0xb0] sm:$0xf]
      %v9362 = vld [vmem:[%s8 + $0xb4] sm:$0xf]
      %v9363 = vld [vmem:[%s8 + $0xb8] sm:$0xf]
      %v9364 = vld [vmem:[%s8 + $0xbc] sm:$0xf]
      %v9384 = vrot.slane %v9348, 1
      %v9385 = vrot.slane %v8682, 1
      %v9386 = vsel %vm1985, %v9384, %v9385
      %v9387 = vrot.slane %v8683, 1
      %v9388 = vsel %vm1985, %v9385, %v9387
      %v9389 = vrot.slane %v8684, 1
      %v9390 = vsel %vm1985, %v9387, %v9389
      %v9391 = vrot.slane %v8685, 1
      %v9392 = vsel %vm1985, %v9389, %v9391
      %v9393 = vrot.slane %v8686, 1
      %v9394 = vsel %vm1985, %v9391, %v9393
      %v9395 = vrot.slane %v8687, 1
      %v9396 = vsel %vm1985, %v9393, %v9395
      %v9397 = vrot.slane %v8688, 1
      %v9398 = vsel %vm1985, %v9395, %v9397
      %v9399 = vrot.slane %v8689, 1
      %v9400 = vsel %vm1985, %v9397, %v9399
      %v9401 = vrot.slane %v8690, 1
      %v9402 = vsel %vm1985, %v9399, %v9401
      %v9403 = vrot.slane %v8691, 1
      %v9404 = vsel %vm1985, %v9401, %v9403
      %v9405 = vrot.slane %v8692, 1
      %v9406 = vsel %vm1985, %v9403, %v9405
      %v9407 = vrot.slane %v8693, 1
      %v9408 = vsel %vm1985, %v9405, %v9407
      %v9409 = vrot.slane %v8694, 1
      %v9410 = vsel %vm1985, %v9407, %v9409
      %v9411 = vrot.slane %v8695, 1
      %v9412 = vsel %vm1985, %v9409, %v9411
      %v9413 = vrot.slane %v8696, 1
      %v9414 = vsel %vm1985, %v9411, %v9413
      %v9415 = vrot.slane %v8697, 1
      %v9416 = vsel %vm1985, %v9413, %v9415
      %v9417 = vrot.slane %v8698, 1
      %v9418 = vsel %vm1985, %v9415, %v9417
      %v9419 = vrot.slane %v8715, 1
      %v9420 = vsel %vm1985, %v9417, %v9419
      %v9455 = vunpack.c.l.b16 %v9349
      %v9456 = vunpack.c.l.b16 %v9350
      %v9457 = vunpack.c.l.b16 %v9351
      %v9458 = vunpack.c.l.b16 %v9352
      %v9459 = vunpack.c.l.b16 %v9353
      %v9460 = vunpack.c.l.b16 %v9354
      %v9461 = vunpack.c.l.b16 %v9355
      %v9462 = vunpack.c.l.b16 %v9356
      %v9463 = vunpack.c.l.b16 %v9357
      %v9464 = vunpack.c.l.b16 %v9358
      %v9465 = vunpack.c.l.b16 %v9359
      %v9466 = vunpack.c.l.b16 %v9360
      %v9467 = vunpack.c.l.b16 %v9361
      %v9468 = vunpack.c.l.b16 %v9362
      %v9469 = vunpack.c.l.b16 %v9363
      %v9470 = vunpack.c.l.b16 %v9364
      %v9471 = vpack.c.b16 %v9456, %v9455
      %v9472 = vpack.c.b16 %v9458, %v9457
      %v9473 = vpack.c.b16 %v9460, %v9459
      %v9474 = vpack.c.b16 %v9462, %v9461
      %v9475 = vpack.c.b16 %v9464, %v9463
      %v9476 = vpack.c.b16 %v9466, %v9465
      %v9477 = vpack.c.b16 %v9468, %v9467
      %v9478 = vpack.c.b16 %v9470, %v9469
      %9487 = vmatprep.subr.bf16.mxu0 0
      %9488 = vmatpush1.bf16.msra.mxu0 %v9471
      %9489 = vmatprep.subr.bf16.mxu0 0
      %9490 = vmatpush1.bf16.msra.mxu0 %v9472
      %9491 = vmatprep.subr.bf16.mxu0 0
      %9492 = vmatpush1.bf16.msra.mxu0 %v9473
      %9493 = vmatprep.subr.bf16.mxu0 0
      %9494 = vmatpush1.bf16.msra.mxu0 %v9474
      %9495 = vmatprep.subr.bf16.mxu0 0
      %9496 = vmatpush1.bf16.msra.mxu0 %v9475
      %9497 = vmatprep.subr.bf16.mxu0 0
      %9498 = vmatpush1.bf16.msra.mxu0 %v9476
      %9499 = vmatprep.subr.bf16.mxu0 0
      %9500 = vmatpush1.bf16.msra.mxu0 %v9477
      %9501 = vmatprep.subr.bf16.mxu0 0
      %9502 = vmatpush1.bf16.msra.mxu0 %v9478
      %9503 = vmatprep.subr.bf16.mxu0 0
      %9504 = vmatpush1.bf16.msra.mxu0 0
      %9505 = vmatprep.subr.bf16.mxu0 0
      %9506 = vmatpush1.bf16.msra.mxu0 0
      %9507 = vmatprep.subr.bf16.mxu0 0
      %9508 = vmatpush1.bf16.msra.mxu0 0
      %9509 = vmatprep.subr.bf16.mxu0 0
      %9510 = vmatpush1.bf16.msra.mxu0 0
      %9511 = vmatprep.subr.bf16.mxu0 0
      %9512 = vmatpush1.bf16.msra.mxu0 0
      %9513 = vmatprep.subr.bf16.mxu0 0
      %9514 = vmatpush1.bf16.msra.mxu0 0
      %9515 = vmatprep.subr.bf16.mxu0 0
      %9516 = vmatpush1.bf16.msra.mxu0 0
      %9517 = vmatprep.subr.bf16.mxu0 0
      %9518 = vmatpush1.bf16.msra.mxu0 0
      %9519 = vmatprep.mubr.bf16.mxu0 0
      %9520 = vmatmul.mubr.bf16.gmra.mrb[0].mxu0 %v9386
      %v9521 = vpop.f32.mrb[0].mxu0
      %v9522 = vadd.f32 0.0, %v9521
      %v9523 = vpop.f32.mrb[0].mxu0
      %v9524 = vpop.f32.mrb[0].mxu0
      %v9525 = vadd.f32 0.0, %v9524
      %v9526 = vpop.f32.mrb[0].mxu0
      %9527 = vmatprep.mubr.bf16.mxu0 0
      %9528 = vmatmul.mubr.bf16.gmra.mrb[0].mxu0 %v9388
      %v9529 = vpop.f32.mrb[0].mxu0
      %v9530 = vadd.f32 0.0, %v9529
      %v9531 = vpop.f32.mrb[0].mxu0
      %v9532 = vpop.f32.mrb[0].mxu0
      %v9533 = vadd.f32 0.0, %v9532
      %v9534 = vpop.f32.mrb[0].mxu0
      %9535 = vmatprep.mubr.bf16.mxu0 0
      %9536 = vmatmul.mubr.bf16.gmra.mrb[0].mxu0 %v9390
      %v9537 = vpop.f32.mrb[0].mxu0
      %v9538 = vadd.f32 0.0, %v9537
      %v9539 = vpop.f32.mrb[0].mxu0
      %v9540 = vpop.f32.mrb[0].mxu0
      %v9541 = vadd.f32 0.0, %v9540
      %v9542 = vpop.f32.mrb[0].mxu0
      %9543 = vmatprep.mubr.bf16.mxu0 0
      %9544 = vmatmul.mubr.bf16.gmra.mrb[0].mxu0 %v9392
      %v9545 = vpop.f32.mrb[0].mxu0
      %v9546 = vadd.f32 0.0, %v9545
      %v9547 = vpop.f32.mrb[0].mxu0
      %v9548 = vpop.f32.mrb[0].mxu0
      %v9549 = vadd.f32 0.0, %v9548
      %v9550 = vpop.f32.mrb[0].mxu0
      %9551 = vmatprep.mubr.bf16.mxu0 0
      %9552 = vmatmul.mubr.bf16.gmra.mrb[0].mxu0 %v9394
      %v9553 = vpop.f32.mrb[0].mxu0
      %v9554 = vadd.f32 0.0, %v9553
      %v9555 = vpop.f32.mrb[0].mxu0
      %v9556 = vpop.f32.mrb[0].mxu0
      %v9557 = vadd.f32 0.0, %v9556
      %v9558 = vpop.f32.mrb[0].mxu0
      %9559 = vmatprep.mubr.bf16.mxu0 0
      %9560 = vmatmul.mubr.bf16.gmra.mrb[0].mxu0 %v9396
      %v9561 = vpop.f32.mrb[0].mxu0
      %v9562 = vadd.f32 0.0, %v9561
      %v9563 = vpop.f32.mrb[0].mxu0
      %v9564 = vpop.f32.mrb[0].mxu0
      %v9565 = vadd.f32 0.0, %v9564
      %v9566 = vpop.f32.mrb[0].mxu0
      %9567 = vmatprep.mubr.bf16.mxu0 0
      %9568 = vmatmul.mubr.bf16.gmra.mrb[0].mxu0 %v9398
      %v9569 = vpop.f32.mrb[0].mxu0
      %v9570 = vadd.f32 0.0, %v9569
      %v9571 = vpop.f32.mrb[0].mxu0
      %v9572 = vpop.f32.mrb[0].mxu0
      %v9573 = vadd.f32 0.0, %v9572
      %v9574 = vpop.f32.mrb[0].mxu0
      %9575 = vmatprep.mubr.bf16.mxu0 0
      %9576 = vmatmul.mubr.bf16.gmra.mrb[0].mxu0 %v9400
      %v9577 = vpop.f32.mrb[0].mxu0
      %v9578 = vadd.f32 0.0, %v9577
      %v9579 = vpop.f32.mrb[0].mxu0
      %v9580 = vpop.f32.mrb[0].mxu0
      %v9581 = vadd.f32 0.0, %v9580
      %v9582 = vpop.f32.mrb[0].mxu0
      %9583 = vmatprep.mubr.bf16.mxu0 0
      %9584 = vmatmul.mubr.bf16.gmra.mrb[0].mxu0 %v9402
      %v9585 = vpop.f32.mrb[0].mxu0
      %v9586 = vadd.f32 0.0, %v9585
      %v9587 = vpop.f32.mrb[0].mxu0
      %v9588 = vpop.f32.mrb[0].mxu0
      %v9589 = vadd.f32 0.0, %v9588
      %v9590 = vpop.f32.mrb[0].mxu0
      %9591 = vmatprep.mubr.bf16.mxu0 0
      %9592 = vmatmul.mubr.bf16.gmra.mrb[0].mxu0 %v9404
      %v9593 = vpop.f32.mrb[0].mxu0
      %v9594 = vadd.f32 0.0, %v9593
      %v9595 = vpop.f32.mrb[0].mxu0
      %v9596 = vpop.f32.mrb[0].mxu0
      %v9597 = vadd.f32 0.0, %v9596
      %v9598 = vpop.f32.mrb[0].mxu0
      %9599 = vmatprep.mubr.bf16.mxu0 0
      %9600 = vmatmul.mubr.bf16.gmra.mrb[0].mxu0 %v9406
      %v9601 = vpop.f32.mrb[0].mxu0
      %v9602 = vadd.f32 0.0, %v9601
      %v9603 = vpop.f32.mrb[0].mxu0
      %v9604 = vpop.f32.mrb[0].mxu0
      %v9605 = vadd.f32 0.0, %v9604
      %v9606 = vpop.f32.mrb[0].mxu0
      %9607 = vmatprep.mubr.bf16.mxu0 0
      %9608 = vmatmul.mubr.bf16.gmra.mrb[0].mxu0 %v9408
      %v9609 = vpop.f32.mrb[0].mxu0
      %v9610 = vadd.f32 0.0, %v9609
      %v9611 = vpop.f32.mrb[0].mxu0
      %v9612 = vpop.f32.mrb[0].mxu0
      %v9613 = vadd.f32 0.0, %v9612
      %v9614 = vpop.f32.mrb[0].mxu0
      %9615 = vmatprep.mubr.bf16.mxu0 0
      %9616 = vmatmul.mubr.bf16.gmra.mrb[0].mxu0 %v9410
      %v9617 = vpop.f32.mrb[0].mxu0
      %v9618 = vadd.f32 0.0, %v9617
      %v9619 = vpop.f32.mrb[0].mxu0
      %v9620 = vpop.f32.mrb[0].mxu0
      %v9621 = vadd.f32 0.0, %v9620
      %v9622 = vpop.f32.mrb[0].mxu0
      %9623 = vmatprep.mubr.bf16.mxu0 0
      %9624 = vmatmul.mubr.bf16.gmra.mrb[0].mxu0 %v9412
      %v9625 = vpop.f32.mrb[0].mxu0
      %v9626 = vadd.f32 0.0, %v9625
      %v9627 = vpop.f32.mrb[0].mxu0
      %v9628 = vpop.f32.mrb[0].mxu0
      %v9629 = vadd.f32 0.0, %v9628
      %v9630 = vpop.f32.mrb[0].mxu0
      %9631 = vmatprep.mubr.bf16.mxu0 0
      %9632 = vmatmul.mubr.bf16.gmra.mrb[0].mxu0 %v9414
      %v9633 = vpop.f32.mrb[0].mxu0
      %v9634 = vadd.f32 0.0, %v9633
      %v9635 = vpop.f32.mrb[0].mxu0
      %v9636 = vpop.f32.mrb[0].mxu0
      %v9637 = vadd.f32 0.0, %v9636
      %v9638 = vpop.f32.mrb[0].mxu0
      %9639 = vmatprep.mubr.bf16.mxu0 0
      %9640 = vmatmul.mubr.bf16.gmra.mrb[0].mxu0 %v9416
      %v9641 = vpop.f32.mrb[0].mxu0
      %v9642 = vadd.f32 0.0, %v9641
      %v9643 = vpop.f32.mrb[0].mxu0
      %v9644 = vpop.f32.mrb[0].mxu0
      %v9645 = vadd.f32 0.0, %v9644
      %v9646 = vpop.f32.mrb[0].mxu0
      %9647 = vmatprep.mubr.bf16.mxu0 0
      %9648 = vmatmul.mubr.bf16.gmra.mrb[0].mxu0 %v9418
      %v9649 = vpop.f32.mrb[0].mxu0
      %v9650 = vadd.f32 0.0, %v9649
      %v9651 = vpop.f32.mrb[0].mxu0
      %v9652 = vpop.f32.mrb[0].mxu0
      %v9653 = vadd.f32 0.0, %v9652
      %v9654 = vpop.f32.mrb[0].mxu0
      %9655 = vmatprep.mubr.bf16.mxu0 0
      %9656 = vmatmul.mubr.bf16.gmra.mrb[0].mxu0 %v9420
      %v9657 = vpop.f32.mrb[0].mxu0
      %v9658 = vadd.f32 0.0, %v9657
      %v9659 = vpop.f32.mrb[0].mxu0
      %v9660 = vpop.f32.mrb[0].mxu0
      %v9661 = vadd.f32 0.0, %v9660
      %v9662 = vpop.f32.mrb[0].mxu0
      %9663 = vdwg.mxu0
      %v9664 = vadd.f32 %v9206, %v9522
      %v9665 = vadd.f32 %v9209, %v9525
      %v9666 = vadd.f32 %v9214, %v9530
      %v9667 = vadd.f32 %v9217, %v9533
      %v9668 = vadd.f32 %v9222, %v9538
      %v9669 = vadd.f32 %v9225, %v9541
      %v9670 = vadd.f32 %v9230, %v9546
      %v9671 = vadd.f32 %v9233, %v9549
      %v9672 = vadd.f32 %v9238, %v9554
      %v9673 = vadd.f32 %v9241, %v9557
      %v9674 = vadd.f32 %v9246, %v9562
      %v9675 = vadd.f32 %v9249, %v9565
      %v9676 = vadd.f32 %v9254, %v9570
      %v9677 = vadd.f32 %v9257, %v9573
      %v9678 = vadd.f32 %v9262, %v9578
      %v9679 = vadd.f32 %v9265, %v9581
      %v9680 = vadd.f32 %v9270, %v9586
      %v9681 = vadd.f32 %v9273, %v9589
      %v9682 = vadd.f32 %v9278, %v9594
      %v9683 = vadd.f32 %v9281, %v9597
      %v9684 = vadd.f32 %v9286, %v9602
      %v9685 = vadd.f32 %v9289, %v9605
      %v9686 = vadd.f32 %v9294, %v9610
      %v9687 = vadd.f32 %v9297, %v9613
      %v9688 = vadd.f32 %v9302, %v9618
      %v9689 = vadd.f32 %v9305, %v9621
      %v9690 = vadd.f32 %v9310, %v9626
      %v9691 = vadd.f32 %v9313, %v9629
      %v9692 = vadd.f32 %v9318, %v9634
      %v9693 = vadd.f32 %v9321, %v9637
      %v9694 = vadd.f32 %v9326, %v9642
      %v9695 = vadd.f32 %v9329, %v9645
      %v9696 = vadd.f32 %v9334, %v9650
      %v9697 = vadd.f32 %v9337, %v9653
      %v9698 = vadd.f32 %v9342, %v9658
      %v9699 = vadd.f32 %v9345, %v9661
      %v9700 = vld [vmem:[#allocation4 + $0x8] sm:$0xfe]
      %v9701 = vld [vmem:[#allocation4 + $0x10] sm:$0xff]
      %v9702 = vld [vmem:[#allocation4 + $0x18] sm:$0xff]
      %v9703 = vld [vmem:[#allocation4 + $0x20] sm:$0xff]
      %v9704 = vld [vmem:[#allocation4 + $0x28] sm:$0xff]
      %v9705 = vld [vmem:[#allocation4 + $0x30] sm:$0xff]
      %v9706 = vld [vmem:[#allocation4 + $0x38] sm:$0xff]
      %v9707 = vld [vmem:[#allocation4 + $0x40] sm:$0xff]
      %v9708 = vld [vmem:[#allocation4 + $0x48] sm:$0xff]
      %v9709 = vld [vmem:[#allocation4 + $0x50] sm:$0xff]
      %v9710 = vld [vmem:[#allocation4 + $0x58] sm:$0xff]
      %v9711 = vld [vmem:[#allocation4 + $0x60] sm:$0xff]
      %v9712 = vld [vmem:[#allocation4 + $0x68] sm:$0xff]
      %v9713 = vld [vmem:[#allocation4 + $0x70] sm:$0xff]
      %v9714 = vld [vmem:[#allocation4 + $0x78] sm:$0xff]
      %v9715 = vld [vmem:[#allocation4 + $0x80] sm:$0xff]
      %v9716 = vld [vmem:[#allocation4 + $0x88] sm:$0xff]
      %v9717 = vld [vmem:[#allocation4 + $0x90] sm:$0xff]
      %v9718 = vld [vmem:[#allocation4 + $0x98] sm:$0x1]
      %v9719 = vld [vmem:[%s8 + $0xc0] sm:$0xf]
      %v9720 = vld [vmem:[%s8 + $0xc4] sm:$0xf]
      %v9721 = vld [vmem:[%s8 + $0xc8] sm:$0xf]
      %v9722 = vld [vmem:[%s8 + $0xcc] sm:$0xf]
      %v9723 = vld [vmem:[%s8 + $0xd0] sm:$0xf]
      %v9724 = vld [vmem:[%s8 + $0xd4] sm:$0xf]
      %v9725 = vld [vmem:[%s8 + $0xd8] sm:$0xf]
      %v9726 = vld [vmem:[%s8 + $0xdc] sm:$0xf]
      %v9727 = vld [vmem:[%s8 + $0xe0] sm:$0xf]
      %v9728 = vld [vmem:[%s8 + $0xe4] sm:$0xf]
      %v9729 = vld [vmem:[%s8 + $0xe8] sm:$0xf]
      %v9730 = vld [vmem:[%s8 + $0xec] sm:$0xf]
      %v9731 = vld [vmem:[%s8 + $0xf0] sm:$0xf]
      %v9732 = vld [vmem:[%s8 + $0xf4] sm:$0xf]
      %v9733 = vld [vmem:[%s8 + $0xf8] sm:$0xf]
      %v9734 = vld [vmem:[%s8 + $0xfc] sm:$0xf]
      %v9754 = vrot.slane %v9700, 1
      %v9755 = vrot.slane %v9701, 1
      %v9756 = vsel %vm1985, %v9754, %v9755
      %v9757 = vrot.slane %v9702, 1
      %v9758 = vsel %vm1985, %v9755, %v9757
      %v9759 = vrot.slane %v9703, 1
      %v9760 = vsel %vm1985, %v9757, %v9759
      %v9761 = vrot.slane %v9704, 1
      %v9762 = vsel %vm1985, %v9759, %v9761
      %v9763 = vrot.slane %v9705, 1
      %v9764 = vsel %vm1985, %v9761, %v9763
      %v9765 = vrot.slane %v9706, 1
      %v9766 = vsel %vm1985, %v9763, %v9765
      %v9767 = vrot.slane %v9707, 1
      %v9768 = vsel %vm1985, %v9765, %v9767
      %v9769 = vrot.slane %v9708, 1
      %v9770 = vsel %vm1985, %v9767, %v9769
      %v9771 = vrot.slane %v9709, 1
      %v9772 = vsel %vm1985, %v9769, %v9771
      %v9773 = vrot.slane %v9710, 1
      %v9774 = vsel %vm1985, %v9771, %v9773
      %v9775 = vrot.slane %v9711, 1
      %v9776 = vsel %vm1985, %v9773, %v9775
      %v9777 = vrot.slane %v9712, 1
      %v9778 = vsel %vm1985, %v9775, %v9777
      %v9779 = vrot.slane %v9713, 1
      %v9780 = vsel %vm1985, %v9777, %v9779
      %v9781 = vrot.slane %v9714, 1
      %v9782 = vsel %vm1985, %v9779, %v9781
      %v9783 = vrot.slane %v9715, 1
      %v9784 = vsel %vm1985, %v9781, %v9783
      %v9785 = vrot.slane %v9716, 1
      %v9786 = vsel %vm1985, %v9783, %v9785
      %v9787 = vrot.slane %v9717, 1
      %v9788 = vsel %vm1985, %v9785, %v9787
      %v9789 = vrot.slane %v9718, 1
      %v9790 = vsel %vm1985, %v9787, %v9789
      %v9825 = vunpack.c.l.b16 %v9719
      %v9826 = vunpack.c.l.b16 %v9720
      %v9827 = vunpack.c.l.b16 %v9721
      %v9828 = vunpack.c.l.b16 %v9722
      %v9829 = vunpack.c.l.b16 %v9723
      %v9830 = vunpack.c.l.b16 %v9724
      %v9831 = vunpack.c.l.b16 %v9725
      %v9832 = vunpack.c.l.b16 %v9726
      %v9833 = vunpack.c.l.b16 %v9727
      %v9834 = vunpack.c.l.b16 %v9728
      %v9835 = vunpack.c.l.b16 %v9729
      %v9836 = vunpack.c.l.b16 %v9730
      %v9837 = vunpack.c.l.b16 %v9731
      %v9838 = vunpack.c.l.b16 %v9732
      %v9839 = vunpack.c.l.b16 %v9733
      %v9840 = vunpack.c.l.b16 %v9734
      %v9841 = vpack.c.b16 %v9826, %v9825
      %v9842 = vpack.c.b16 %v9828, %v9827
      %v9843 = vpack.c.b16 %v9830, %v9829
      %v9844 = vpack.c.b16 %v9832, %v9831
      %v9845 = vpack.c.b16 %v9834, %v9833
      %v9846 = vpack.c.b16 %v9836, %v9835
      %v9847 = vpack.c.b16 %v9838, %v9837
      %v9848 = vpack.c.b16 %v9840, %v9839
      %9857 = vmatprep.subr.bf16.mxu0 0
      %9858 = vmatpush1.bf16.msra.mxu0 %v9841
      %9859 = vmatprep.subr.bf16.mxu0 0
      %9860 = vmatpush1.bf16.msra.mxu0 %v9842
      %9861 = vmatprep.subr.bf16.mxu0 0
      %9862 = vmatpush1.bf16.msra.mxu0 %v9843
      %9863 = vmatprep.subr.bf16.mxu0 0
      %9864 = vmatpush1.bf16.msra.mxu0 %v9844
      %9865 = vmatprep.subr.bf16.mxu0 0
      %9866 = vmatpush1.bf16.msra.mxu0 %v9845
      %9867 = vmatprep.subr.bf16.mxu0 0
      %9868 = vmatpush1.bf16.msra.mxu0 %v9846
      %9869 = vmatprep.subr.bf16.mxu0 0
      %9870 = vmatpush1.bf16.msra.mxu0 %v9847
      %9871 = vmatprep.subr.bf16.mxu0 0
      %9872 = vmatpush1.bf16.msra.mxu0 %v9848
      %9873 = vmatprep.subr.bf16.mxu0 0
      %9874 = vmatpush1.bf16.msra.mxu0 0
      %9875 = vmatprep.subr.bf16.mxu0 0
      %9876 = vmatpush1.bf16.msra.mxu0 0
      %9877 = vmatprep.subr.bf16.mxu0 0
      %9878 = vmatpush1.bf16.msra.mxu0 0
      %9879 = vmatprep.subr.bf16.mxu0 0
      %9880 = vmatpush1.bf16.msra.mxu0 0
      %9881 = vmatprep.subr.bf16.mxu0 0
      %9882 = vmatpush1.bf16.msra.mxu0 0
      %9883 = vmatprep.subr.bf16.mxu0 0
      %9884 = vmatpush1.bf16.msra.mxu0 0
      %9885 = vmatprep.subr.bf16.mxu0 0
      %9886 = vmatpush1.bf16.msra.mxu0 0
      %9887 = vmatprep.subr.bf16.mxu0 0
      %9888 = vmatpush1.bf16.msra.mxu0 0
      %9889 = vmatprep.mubr.bf16.mxu0 0
      %9890 = vmatmul.mubr.bf16.gmra.mrb[0].mxu0 %v9756
      %v9891 = vpop.f32.mrb[0].mxu0
      %v9892 = vadd.f32 0.0, %v9891
      %v9893 = vpop.f32.mrb[0].mxu0
      %v9894 = vpop.f32.mrb[0].mxu0
      %v9895 = vadd.f32 0.0, %v9894
      %v9896 = vpop.f32.mrb[0].mxu0
      %9897 = vmatprep.mubr.bf16.mxu0 0
      %9898 = vmatmul.mubr.bf16.gmra.mrb[0].mxu0 %v9758
      %v9899 = vpop.f32.mrb[0].mxu0
      %v9900 = vadd.f32 0.0, %v9899
      %v9901 = vpop.f32.mrb[0].mxu0
      %v9902 = vpop.f32.mrb[0].mxu0
      %v9903 = vadd.f32 0.0, %v9902
      %v9904 = vpop.f32.mrb[0].mxu0
      %9905 = vmatprep.mubr.bf16.mxu0 0
      %9906 = vmatmul.mubr.bf16.gmra.mrb[0].mxu0 %v9760
      %v9907 = vpop.f32.mrb[0].mxu0
      %v9908 = vadd.f32 0.0, %v9907
      %v9909 = vpop.f32.mrb[0].mxu0
      %v9910 = vpop.f32.mrb[0].mxu0
      %v9911 = vadd.f32 0.0, %v9910
      %v9912 = vpop.f32.mrb[0].mxu0
      %9913 = vmatprep.mubr.bf16.mxu0 0
      %9914 = vmatmul.mubr.bf16.gmra.mrb[0].mxu0 %v9762
      %v9915 = vpop.f32.mrb[0].mxu0
      %v9916 = vadd.f32 0.0, %v9915
      %v9917 = vpop.f32.mrb[0].mxu0
      %v9918 = vpop.f32.mrb[0].mxu0
      %v9919 = vadd.f32 0.0, %v9918
      %v9920 = vpop.f32.mrb[0].mxu0
      %9921 = vmatprep.mubr.bf16.mxu0 0
      %9922 = vmatmul.mubr.bf16.gmra.mrb[0].mxu0 %v9764
      %v9923 = vpop.f32.mrb[0].mxu0
      %v9924 = vadd.f32 0.0, %v9923
      %v9925 = vpop.f32.mrb[0].mxu0
      %v9926 = vpop.f32.mrb[0].mxu0
      %v9927 = vadd.f32 0.0, %v9926
      %v9928 = vpop.f32.mrb[0].mxu0
      %9929 = vmatprep.mubr.bf16.mxu0 0
      %9930 = vmatmul.mubr.bf16.gmra.mrb[0].mxu0 %v9766
      %v9931 = vpop.f32.mrb[0].mxu0
      %v9932 = vadd.f32 0.0, %v9931
      %v9933 = vpop.f32.mrb[0].mxu0
      %v9934 = vpop.f32.mrb[0].mxu0
      %v9935 = vadd.f32 0.0, %v9934
      %v9936 = vpop.f32.mrb[0].mxu0
      %9937 = vmatprep.mubr.bf16.mxu0 0
      %9938 = vmatmul.mubr.bf16.gmra.mrb[0].mxu0 %v9768
      %v9939 = vpop.f32.mrb[0].mxu0
      %v9940 = vadd.f32 0.0, %v9939
      %v9941 = vpop.f32.mrb[0].mxu0
      %v9942 = vpop.f32.mrb[0].mxu0
      %v9943 = vadd.f32 0.0, %v9942
      %v9944 = vpop.f32.mrb[0].mxu0
      %9945 = vmatprep.mubr.bf16.mxu0 0
      %9946 = vmatmul.mubr.bf16.gmra.mrb[0].mxu0 %v9770
      %v9947 = vpop.f32.mrb[0].mxu0
      %v9948 = vadd.f32 0.0, %v9947
      %v9949 = vpop.f32.mrb[0].mxu0
      %v9950 = vpop.f32.mrb[0].mxu0
      %v9951 = vadd.f32 0.0, %v9950
      %v9952 = vpop.f32.mrb[0].mxu0
      %9953 = vmatprep.mubr.bf16.mxu0 0
      %9954 = vmatmul.mubr.bf16.gmra.mrb[0].mxu0 %v9772
      %v9955 = vpop.f32.mrb[0].mxu0
      %v9956 = vadd.f32 0.0, %v9955
      %v9957 = vpop.f32.mrb[0].mxu0
      %v9958 = vpop.f32.mrb[0].mxu0
      %v9959 = vadd.f32 0.0, %v9958
      %v9960 = vpop.f32.mrb[0].mxu0
      %9961 = vmatprep.mubr.bf16.mxu0 0
      %9962 = vmatmul.mubr.bf16.gmra.mrb[0].mxu0 %v9774
      %v9963 = vpop.f32.mrb[0].mxu0
      %v9964 = vadd.f32 0.0, %v9963
      %v9965 = vpop.f32.mrb[0].mxu0
      %v9966 = vpop.f32.mrb[0].mxu0
      %v9967 = vadd.f32 0.0, %v9966
      %v9968 = vpop.f32.mrb[0].mxu0
      %9969 = vmatprep.mubr.bf16.mxu0 0
      %9970 = vmatmul.mubr.bf16.gmra.mrb[0].mxu0 %v9776
      %v9971 = vpop.f32.mrb[0].mxu0
      %v9972 = vadd.f32 0.0, %v9971
      %v9973 = vpop.f32.mrb[0].mxu0
      %v9974 = vpop.f32.mrb[0].mxu0
      %v9975 = vadd.f32 0.0, %v9974
      %v9976 = vpop.f32.mrb[0].mxu0
      %9977 = vmatprep.mubr.bf16.mxu0 0
      %9978 = vmatmul.mubr.bf16.gmra.mrb[0].mxu0 %v9778
      %v9979 = vpop.f32.mrb[0].mxu0
      %v9980 = vadd.f32 0.0, %v9979
      %v9981 = vpop.f32.mrb[0].mxu0
      %v9982 = vpop.f32.mrb[0].mxu0
      %v9983 = vadd.f32 0.0, %v9982
      %v9984 = vpop.f32.mrb[0].mxu0
      %9985 = vmatprep.mubr.bf16.mxu0 0
      %9986 = vmatmul.mubr.bf16.gmra.mrb[0].mxu0 %v9780
      %v9987 = vpop.f32.mrb[0].mxu0
      %v9988 = vadd.f32 0.0, %v9987
      %v9989 = vpop.f32.mrb[0].mxu0
      %v9990 = vpop.f32.mrb[0].mxu0
      %v9991 = vadd.f32 0.0, %v9990
      %v9992 = vpop.f32.mrb[0].mxu0
      %9993 = vmatprep.mubr.bf16.mxu0 0
      %9994 = vmatmul.mubr.bf16.gmra.mrb[0].mxu0 %v9782
      %v9995 = vpop.f32.mrb[0].mxu0
      %v9996 = vadd.f32 0.0, %v9995
      %v9997 = vpop.f32.mrb[0].mxu0
      %v9998 = vpop.f32.mrb[0].mxu0
      %v9999 = vadd.f32 0.0, %v9998
      %v10000 = vpop.f32.mrb[0].mxu0
      %10001 = vmatprep.mubr.bf16.mxu0 0
      %10002 = vmatmul.mubr.bf16.gmra.mrb[0].mxu0 %v9784
      %v10003 = vpop.f32.mrb[0].mxu0
      %v10004 = vadd.f32 0.0, %v10003
      %v10005 = vpop.f32.mrb[0].mxu0
      %v10006 = vpop.f32.mrb[0].mxu0
      %v10007 = vadd.f32 0.0, %v10006
      %v10008 = vpop.f32.mrb[0].mxu0
      %10009 = vmatprep.mubr.bf16.mxu0 0
      %10010 = vmatmul.mubr.bf16.gmra.mrb[0].mxu0 %v9786
      %v10011 = vpop.f32.mrb[0].mxu0
      %v10012 = vadd.f32 0.0, %v10011
      %v10013 = vpop.f32.mrb[0].mxu0
      %v10014 = vpop.f32.mrb[0].mxu0
      %v10015 = vadd.f32 0.0, %v10014
      %v10016 = vpop.f32.mrb[0].mxu0
      %10017 = vmatprep.mubr.bf16.mxu0 0
      %10018 = vmatmul.mubr.bf16.gmra.mrb[0].mxu0 %v9788
      %v10019 = vpop.f32.mrb[0].mxu0
      %v10020 = vadd.f32 0.0, %v10019
      %v10021 = vpop.f32.mrb[0].mxu0
      %v10022 = vpop.f32.mrb[0].mxu0
      %v10023 = vadd.f32 0.0, %v10022
      %v10024 = vpop.f32.mrb[0].mxu0
      %10025 = vmatprep.mubr.bf16.mxu0 0
      %10026 = vmatmul.mubr.bf16.gmra.mrb[0].mxu0 %v9790
      %v10027 = vpop.f32.mrb[0].mxu0
      %v10028 = vadd.f32 0.0, %v10027
      %v10029 = vpop.f32.mrb[0].mxu0
      %v10030 = vpop.f32.mrb[0].mxu0
      %v10031 = vadd.f32 0.0, %v10030
      %v10032 = vpop.f32.mrb[0].mxu0
      %10033 = vdwg.mxu0
      %v10034 = vadd.f32 %v9664, %v9892
      %v10035 = vadd.f32 %v9665, %v9895
      %v10036 = vadd.f32 %v9666, %v9900
      %v10037 = vadd.f32 %v9667, %v9903
      %v10038 = vadd.f32 %v9668, %v9908
      %v10039 = vadd.f32 %v9669, %v9911
      %v10040 = vadd.f32 %v9670, %v9916
      %v10041 = vadd.f32 %v9671, %v9919
      %v10042 = vadd.f32 %v9672, %v9924
      %v10043 = vadd.f32 %v9673, %v9927
      %v10044 = vadd.f32 %v9674, %v9932
      %v10045 = vadd.f32 %v9675, %v9935
      %v10046 = vadd.f32 %v9676, %v9940
      %v10047 = vadd.f32 %v9677, %v9943
      %v10048 = vadd.f32 %v9678, %v9948
      %v10049 = vadd.f32 %v9679, %v9951
      %v10050 = vadd.f32 %v9680, %v9956
      %v10051 = vadd.f32 %v9681, %v9959
      %v10052 = vadd.f32 %v9682, %v9964
      %v10053 = vadd.f32 %v9683, %v9967
      %v10054 = vadd.f32 %v9684, %v9972
      %v10055 = vadd.f32 %v9685, %v9975
      %v10056 = vadd.f32 %v9686, %v9980
      %v10057 = vadd.f32 %v9687, %v9983
      %v10058 = vadd.f32 %v9688, %v9988
      %v10059 = vadd.f32 %v9689, %v9991
      %v10060 = vadd.f32 %v9690, %v9996
      %v10061 = vadd.f32 %v9691, %v9999
      %v10062 = vadd.f32 %v9692, %v10004
      %v10063 = vadd.f32 %v9693, %v10007
      %v10064 = vadd.f32 %v9694, %v10012
      %v10065 = vadd.f32 %v9695, %v10015
      %v10066 = vadd.f32 %v9696, %v10020
      %v10067 = vadd.f32 %v9697, %v10023
      %v10068 = vadd.f32 %v9698, %v10028
      %v10069 = vadd.f32 %v9699, %v10031
      %v10070 = vld [vmem:[#allocation4 + $0x98] sm:$0x3]
      %v10071 = vld [vmem:[%s8 + $0x100] sm:$0xf]
      %v10072 = vld [vmem:[%s8 + $0x104] sm:$0xf]
      %v10073 = vld [vmem:[%s8 + $0x108] sm:$0xf]
      %v10074 = vld [vmem:[%s8 + $0x10c] sm:$0xf]
      %v10075 = vld [vmem:[%s8 + $0x110] sm:$0xf]
      %v10076 = vld [vmem:[%s8 + $0x114] sm:$0xf]
      %v10077 = vld [vmem:[%s8 + $0x118] sm:$0xf]
      %v10078 = vld [vmem:[%s8 + $0x11c] sm:$0xf]
      %v10079 = vld [vmem:[%s8 + $0x120] sm:$0xf]
      %v10080 = vld [vmem:[%s8 + $0x124] sm:$0xf]
      %v10081 = vld [vmem:[%s8 + $0x128] sm:$0xf]
      %v10082 = vld [vmem:[%s8 + $0x12c] sm:$0xf]
      %v10083 = vld [vmem:[%s8 + $0x130] sm:$0xf]
      %v10084 = vld [vmem:[%s8 + $0x134] sm:$0xf]
      %v10085 = vld [vmem:[%s8 + $0x138] sm:$0xf]
      %v10086 = vld [vmem:[%s8 + $0x13c] sm:$0xf]
      %v10088 = vshrl.u32 %v9700, 16
      %v10090 = vrot.slane %v10088, 1
      %v10091 = vshll.u32 %v9700, 16
      %v10093 = vrot.slane %v10091, 2
      %v10094 = vor.u32 %v10090, %v10093
      %v10096 = vshrl.u32 %v9701, 16
      %v10098 = vrot.slane %v10096, 1
      %v10099 = vshll.u32 %v9701, 16
      %v10101 = vrot.slane %v10099, 2
      %v10102 = vor.u32 %v10098, %v10101
      %v10103 = vsel %vm2689, %v10094, %v10102
      %v10105 = vshrl.u32 %v9702, 16
      %v10107 = vrot.slane %v10105, 1
      %v10108 = vshll.u32 %v9702, 16
      %v10110 = vrot.slane %v10108, 2
      %v10111 = vor.u32 %v10107, %v10110
      %v10112 = vsel %vm2689, %v10102, %v10111
      %v10114 = vshrl.u32 %v9703, 16
      %v10116 = vrot.slane %v10114, 1
      %v10117 = vshll.u32 %v9703, 16
      %v10119 = vrot.slane %v10117, 2
      %v10120 = vor.u32 %v10116, %v10119
      %v10121 = vsel %vm2689, %v10111, %v10120
      %v10123 = vshrl.u32 %v9704, 16
      %v10125 = vrot.slane %v10123, 1
      %v10126 = vshll.u32 %v9704, 16
      %v10128 = vrot.slane %v10126, 2
      %v10129 = vor.u32 %v10125, %v10128
      %v10130 = vsel %vm2689, %v10120, %v10129
      %v10132 = vshrl.u32 %v9705, 16
      %v10134 = vrot.slane %v10132, 1
      %v10135 = vshll.u32 %v9705, 16
      %v10137 = vrot.slane %v10135, 2
      %v10138 = vor.u32 %v10134, %v10137
      %v10139 = vsel %vm2689, %v10129, %v10138
      %v10141 = vshrl.u32 %v9706, 16
      %v10143 = vrot.slane %v10141, 1
      %v10144 = vshll.u32 %v9706, 16
      %v10146 = vrot.slane %v10144, 2
      %v10147 = vor.u32 %v10143, %v10146
      %v10148 = vsel %vm2689, %v10138, %v10147
      %v10150 = vshrl.u32 %v9707, 16
      %v10152 = vrot.slane %v10150, 1
      %v10153 = vshll.u32 %v9707, 16
      %v10155 = vrot.slane %v10153, 2
      %v10156 = vor.u32 %v10152, %v10155
      %v10157 = vsel %vm2689, %v10147, %v10156
      %v10159 = vshrl.u32 %v9708, 16
      %v10161 = vrot.slane %v10159, 1
      %v10162 = vshll.u32 %v9708, 16
      %v10164 = vrot.slane %v10162, 2
      %v10165 = vor.u32 %v10161, %v10164
      %v10166 = vsel %vm2689, %v10156, %v10165
      %v10168 = vshrl.u32 %v9709, 16
      %v10170 = vrot.slane %v10168, 1
      %v10171 = vshll.u32 %v9709, 16
      %v10173 = vrot.slane %v10171, 2
      %v10174 = vor.u32 %v10170, %v10173
      %v10175 = vsel %vm2689, %v10165, %v10174
      %v10177 = vshrl.u32 %v9710, 16
      %v10179 = vrot.slane %v10177, 1
      %v10180 = vshll.u32 %v9710, 16
      %v10182 = vrot.slane %v10180, 2
      %v10183 = vor.u32 %v10179, %v10182
      %v10184 = vsel %vm2689, %v10174, %v10183
      %v10186 = vshrl.u32 %v9711, 16
      %v10188 = vrot.slane %v10186, 1
      %v10189 = vshll.u32 %v9711, 16
      %v10191 = vrot.slane %v10189, 2
      %v10192 = vor.u32 %v10188, %v10191
      %v10193 = vsel %vm2689, %v10183, %v10192
      %v10195 = vshrl.u32 %v9712, 16
      %v10197 = vrot.slane %v10195, 1
      %v10198 = vshll.u32 %v9712, 16
      %v10200 = vrot.slane %v10198, 2
      %v10201 = vor.u32 %v10197, %v10200
      %v10202 = vsel %vm2689, %v10192, %v10201
      %v10204 = vshrl.u32 %v9713, 16
      %v10206 = vrot.slane %v10204, 1
      %v10207 = vshll.u32 %v9713, 16
      %v10209 = vrot.slane %v10207, 2
      %v10210 = vor.u32 %v10206, %v10209
      %v10211 = vsel %vm2689, %v10201, %v10210
      %v10213 = vshrl.u32 %v9714, 16
      %v10215 = vrot.slane %v10213, 1
      %v10216 = vshll.u32 %v9714, 16
      %v10218 = vrot.slane %v10216, 2
      %v10219 = vor.u32 %v10215, %v10218
      %v10220 = vsel %vm2689, %v10210, %v10219
      %v10222 = vshrl.u32 %v9715, 16
      %v10224 = vrot.slane %v10222, 1
      %v10225 = vshll.u32 %v9715, 16
      %v10227 = vrot.slane %v10225, 2
      %v10228 = vor.u32 %v10224, %v10227
      %v10229 = vsel %vm2689, %v10219, %v10228
      %v10231 = vshrl.u32 %v9716, 16
      %v10233 = vrot.slane %v10231, 1
      %v10234 = vshll.u32 %v9716, 16
      %v10236 = vrot.slane %v10234, 2
      %v10237 = vor.u32 %v10233, %v10236
      %v10238 = vsel %vm2689, %v10228, %v10237
      %v10240 = vshrl.u32 %v9717, 16
      %v10242 = vrot.slane %v10240, 1
      %v10243 = vshll.u32 %v9717, 16
      %v10245 = vrot.slane %v10243, 2
      %v10246 = vor.u32 %v10242, %v10245
      %v10247 = vsel %vm2689, %v10237, %v10246
      %v10249 = vshrl.u32 %v10070, 16
      %v10251 = vrot.slane %v10249, 1
      %v10252 = vshll.u32 %v10070, 16
      %v10254 = vrot.slane %v10252, 2
      %v10255 = vor.u32 %v10251, %v10254
      %v10256 = vsel %vm2689, %v10246, %v10255
      %v10291 = vunpack.c.l.b16 %v10071
      %v10292 = vunpack.c.l.b16 %v10072
      %v10293 = vunpack.c.l.b16 %v10073
      %v10294 = vunpack.c.l.b16 %v10074
      %v10295 = vunpack.c.l.b16 %v10075
      %v10296 = vunpack.c.l.b16 %v10076
      %v10297 = vunpack.c.l.b16 %v10077
      %v10298 = vunpack.c.l.b16 %v10078
      %v10299 = vunpack.c.l.b16 %v10079
      %v10300 = vunpack.c.l.b16 %v10080
      %v10301 = vunpack.c.l.b16 %v10081
      %v10302 = vunpack.c.l.b16 %v10082
      %v10303 = vunpack.c.l.b16 %v10083
      %v10304 = vunpack.c.l.b16 %v10084
      %v10305 = vunpack.c.l.b16 %v10085
      %v10306 = vunpack.c.l.b16 %v10086
      %v10307 = vpack.c.b16 %v10292, %v10291
      %v10308 = vpack.c.b16 %v10294, %v10293
      %v10309 = vpack.c.b16 %v10296, %v10295
      %v10310 = vpack.c.b16 %v10298, %v10297
      %v10311 = vpack.c.b16 %v10300, %v10299
      %v10312 = vpack.c.b16 %v10302, %v10301
      %v10313 = vpack.c.b16 %v10304, %v10303
      %v10314 = vpack.c.b16 %v10306, %v10305
      %10323 = vmatprep.subr.bf16.mxu0 0
      %10324 = vmatpush1.bf16.msra.mxu0 %v10307
      %10325 = vmatprep.subr.bf16.mxu0 0
      %10326 = vmatpush1.bf16.msra.mxu0 %v10308
      %10327 = vmatprep.subr.bf16.mxu0 0
      %10328 = vmatpush1.bf16.msra.mxu0 %v10309
      %10329 = vmatprep.subr.bf16.mxu0 0
      %10330 = vmatpush1.bf16.msra.mxu0 %v10310
      %10331 = vmatprep.subr.bf16.mxu0 0
      %10332 = vmatpush1.bf16.msra.mxu0 %v10311
      %10333 = vmatprep.subr.bf16.mxu0 0
      %10334 = vmatpush1.bf16.msra.mxu0 %v10312
      %10335 = vmatprep.subr.bf16.mxu0 0
      %10336 = vmatpush1.bf16.msra.mxu0 %v10313
      %10337 = vmatprep.subr.bf16.mxu0 0
      %10338 = vmatpush1.bf16.msra.mxu0 %v10314
      %10339 = vmatprep.subr.bf16.mxu0 0
      %10340 = vmatpush1.bf16.msra.mxu0 0
      %10341 = vmatprep.subr.bf16.mxu0 0
      %10342 = vmatpush1.bf16.msra.mxu0 0
      %10343 = vmatprep.subr.bf16.mxu0 0
      %10344 = vmatpush1.bf16.msra.mxu0 0
      %10345 = vmatprep.subr.bf16.mxu0 0
      %10346 = vmatpush1.bf16.msra.mxu0 0
      %10347 = vmatprep.subr.bf16.mxu0 0
      %10348 = vmatpush1.bf16.msra.mxu0 0
      %10349 = vmatprep.subr.bf16.mxu0 0
      %10350 = vmatpush1.bf16.msra.mxu0 0
      %10351 = vmatprep.subr.bf16.mxu0 0
      %10352 = vmatpush1.bf16.msra.mxu0 0
      %10353 = vmatprep.subr.bf16.mxu0 0
      %10354 = vmatpush1.bf16.msra.mxu0 0
      %10355 = vmatprep.mubr.bf16.mxu0 0
      %10356 = vmatmul.mubr.bf16.gmra.mrb[0].mxu0 %v10103
      %v10357 = vpop.f32.mrb[0].mxu0
      %v10358 = vadd.f32 0.0, %v10357
      %v10359 = vpop.f32.mrb[0].mxu0
      %v10360 = vpop.f32.mrb[0].mxu0
      %v10361 = vadd.f32 0.0, %v10360
      %v10362 = vpop.f32.mrb[0].mxu0
      %10363 = vmatprep.mubr.bf16.mxu0 0
      %10364 = vmatmul.mubr.bf16.gmra.mrb[0].mxu0 %v10112
      %v10365 = vpop.f32.mrb[0].mxu0
      %v10366 = vadd.f32 0.0, %v10365
      %v10367 = vpop.f32.mrb[0].mxu0
      %v10368 = vpop.f32.mrb[0].mxu0
      %v10369 = vadd.f32 0.0, %v10368
      %v10370 = vpop.f32.mrb[0].mxu0
      %10371 = vmatprep.mubr.bf16.mxu0 0
      %10372 = vmatmul.mubr.bf16.gmra.mrb[0].mxu0 %v10121
      %v10373 = vpop.f32.mrb[0].mxu0
      %v10374 = vadd.f32 0.0, %v10373
      %v10375 = vpop.f32.mrb[0].mxu0
      %v10376 = vpop.f32.mrb[0].mxu0
      %v10377 = vadd.f32 0.0, %v10376
      %v10378 = vpop.f32.mrb[0].mxu0
      %10379 = vmatprep.mubr.bf16.mxu0 0
      %10380 = vmatmul.mubr.bf16.gmra.mrb[0].mxu0 %v10130
      %v10381 = vpop.f32.mrb[0].mxu0
      %v10382 = vadd.f32 0.0, %v10381
      %v10383 = vpop.f32.mrb[0].mxu0
      %v10384 = vpop.f32.mrb[0].mxu0
      %v10385 = vadd.f32 0.0, %v10384
      %v10386 = vpop.f32.mrb[0].mxu0
      %10387 = vmatprep.mubr.bf16.mxu0 0
      %10388 = vmatmul.mubr.bf16.gmra.mrb[0].mxu0 %v10139
      %v10389 = vpop.f32.mrb[0].mxu0
      %v10390 = vadd.f32 0.0, %v10389
      %v10391 = vpop.f32.mrb[0].mxu0
      %v10392 = vpop.f32.mrb[0].mxu0
      %v10393 = vadd.f32 0.0, %v10392
      %v10394 = vpop.f32.mrb[0].mxu0
      %10395 = vmatprep.mubr.bf16.mxu0 0
      %10396 = vmatmul.mubr.bf16.gmra.mrb[0].mxu0 %v10148
      %v10397 = vpop.f32.mrb[0].mxu0
      %v10398 = vadd.f32 0.0, %v10397
      %v10399 = vpop.f32.mrb[0].mxu0
      %v10400 = vpop.f32.mrb[0].mxu0
      %v10401 = vadd.f32 0.0, %v10400
      %v10402 = vpop.f32.mrb[0].mxu0
      %10403 = vmatprep.mubr.bf16.mxu0 0
      %10404 = vmatmul.mubr.bf16.gmra.mrb[0].mxu0 %v10157
      %v10405 = vpop.f32.mrb[0].mxu0
      %v10406 = vadd.f32 0.0, %v10405
      %v10407 = vpop.f32.mrb[0].mxu0
      %v10408 = vpop.f32.mrb[0].mxu0
      %v10409 = vadd.f32 0.0, %v10408
      %v10410 = vpop.f32.mrb[0].mxu0
      %10411 = vmatprep.mubr.bf16.mxu0 0
      %10412 = vmatmul.mubr.bf16.gmra.mrb[0].mxu0 %v10166
      %v10413 = vpop.f32.mrb[0].mxu0
      %v10414 = vadd.f32 0.0, %v10413
      %v10415 = vpop.f32.mrb[0].mxu0
      %v10416 = vpop.f32.mrb[0].mxu0
      %v10417 = vadd.f32 0.0, %v10416
      %v10418 = vpop.f32.mrb[0].mxu0
      %10419 = vmatprep.mubr.bf16.mxu0 0
      %10420 = vmatmul.mubr.bf16.gmra.mrb[0].mxu0 %v10175
      %v10421 = vpop.f32.mrb[0].mxu0
      %v10422 = vadd.f32 0.0, %v10421
      %v10423 = vpop.f32.mrb[0].mxu0
      %v10424 = vpop.f32.mrb[0].mxu0
      %v10425 = vadd.f32 0.0, %v10424
      %v10426 = vpop.f32.mrb[0].mxu0
      %10427 = vmatprep.mubr.bf16.mxu0 0
      %10428 = vmatmul.mubr.bf16.gmra.mrb[0].mxu0 %v10184
      %v10429 = vpop.f32.mrb[0].mxu0
      %v10430 = vadd.f32 0.0, %v10429
      %v10431 = vpop.f32.mrb[0].mxu0
      %v10432 = vpop.f32.mrb[0].mxu0
      %v10433 = vadd.f32 0.0, %v10432
      %v10434 = vpop.f32.mrb[0].mxu0
      %10435 = vmatprep.mubr.bf16.mxu0 0
      %10436 = vmatmul.mubr.bf16.gmra.mrb[0].mxu0 %v10193
      %v10437 = vpop.f32.mrb[0].mxu0
      %v10438 = vadd.f32 0.0, %v10437
      %v10439 = vpop.f32.mrb[0].mxu0
      %v10440 = vpop.f32.mrb[0].mxu0
      %v10441 = vadd.f32 0.0, %v10440
      %v10442 = vpop.f32.mrb[0].mxu0
      %10443 = vmatprep.mubr.bf16.mxu0 0
      %10444 = vmatmul.mubr.bf16.gmra.mrb[0].mxu0 %v10202
      %v10445 = vpop.f32.mrb[0].mxu0
      %v10446 = vadd.f32 0.0, %v10445
      %v10447 = vpop.f32.mrb[0].mxu0
      %v10448 = vpop.f32.mrb[0].mxu0
      %v10449 = vadd.f32 0.0, %v10448
      %v10450 = vpop.f32.mrb[0].mxu0
      %10451 = vmatprep.mubr.bf16.mxu0 0
      %10452 = vmatmul.mubr.bf16.gmra.mrb[0].mxu0 %v10211
      %v10453 = vpop.f32.mrb[0].mxu0
      %v10454 = vadd.f32 0.0, %v10453
      %v10455 = vpop.f32.mrb[0].mxu0
      %v10456 = vpop.f32.mrb[0].mxu0
      %v10457 = vadd.f32 0.0, %v10456
      %v10458 = vpop.f32.mrb[0].mxu0
      %10459 = vmatprep.mubr.bf16.mxu0 0
      %10460 = vmatmul.mubr.bf16.gmra.mrb[0].mxu0 %v10220
      %v10461 = vpop.f32.mrb[0].mxu0
      %v10462 = vadd.f32 0.0, %v10461
      %v10463 = vpop.f32.mrb[0].mxu0
      %v10464 = vpop.f32.mrb[0].mxu0
      %v10465 = vadd.f32 0.0, %v10464
      %v10466 = vpop.f32.mrb[0].mxu0
      %10467 = vmatprep.mubr.bf16.mxu0 0
      %10468 = vmatmul.mubr.bf16.gmra.mrb[0].mxu0 %v10229
      %v10469 = vpop.f32.mrb[0].mxu0
      %v10470 = vadd.f32 0.0, %v10469
      %v10471 = vpop.f32.mrb[0].mxu0
      %v10472 = vpop.f32.mrb[0].mxu0
      %v10473 = vadd.f32 0.0, %v10472
      %v10474 = vpop.f32.mrb[0].mxu0
      %10475 = vmatprep.mubr.bf16.mxu0 0
      %10476 = vmatmul.mubr.bf16.gmra.mrb[0].mxu0 %v10238
      %v10477 = vpop.f32.mrb[0].mxu0
      %v10478 = vadd.f32 0.0, %v10477
      %v10479 = vpop.f32.mrb[0].mxu0
      %v10480 = vpop.f32.mrb[0].mxu0
      %v10481 = vadd.f32 0.0, %v10480
      %v10482 = vpop.f32.mrb[0].mxu0
      %10483 = vmatprep.mubr.bf16.mxu0 0
      %10484 = vmatmul.mubr.bf16.gmra.mrb[0].mxu0 %v10247
      %v10485 = vpop.f32.mrb[0].mxu0
      %v10486 = vadd.f32 0.0, %v10485
      %v10487 = vpop.f32.mrb[0].mxu0
      %v10488 = vpop.f32.mrb[0].mxu0
      %v10489 = vadd.f32 0.0, %v10488
      %v10490 = vpop.f32.mrb[0].mxu0
      %10491 = vmatprep.mubr.bf16.mxu0 0
      %10492 = vmatmul.mubr.bf16.gmra.mrb[0].mxu0 %v10256
      %v10493 = vpop.f32.mrb[0].mxu0
      %v10494 = vadd.f32 0.0, %v10493
      %v10495 = vpop.f32.mrb[0].mxu0
      %v10496 = vpop.f32.mrb[0].mxu0
      %v10497 = vadd.f32 0.0, %v10496
      %v10498 = vpop.f32.mrb[0].mxu0
      %10499 = vdwg.mxu0
      %v10500 = vadd.f32 %v10034, %v10358
      %v10501 = vadd.f32 %v10035, %v10361
      %v10502 = vadd.f32 %v10036, %v10366
      %v10503 = vadd.f32 %v10037, %v10369
      %v10504 = vadd.f32 %v10038, %v10374
      %v10505 = vadd.f32 %v10039, %v10377
      %v10506 = vadd.f32 %v10040, %v10382
      %v10507 = vadd.f32 %v10041, %v10385
      %v10508 = vadd.f32 %v10042, %v10390
      %v10509 = vadd.f32 %v10043, %v10393
      %v10510 = vadd.f32 %v10044, %v10398
      %v10511 = vadd.f32 %v10045, %v10401
      %v10512 = vadd.f32 %v10046, %v10406
      %v10513 = vadd.f32 %v10047, %v10409
      %v10514 = vadd.f32 %v10048, %v10414
      %v10515 = vadd.f32 %v10049, %v10417
      %v10516 = vadd.f32 %v10050, %v10422
      %v10517 = vadd.f32 %v10051, %v10425
      %v10518 = vadd.f32 %v10052, %v10430
      %v10519 = vadd.f32 %v10053, %v10433
      %v10520 = vadd.f32 %v10054, %v10438
      %v10521 = vadd.f32 %v10055, %v10441
      %v10522 = vadd.f32 %v10056, %v10446
      %v10523 = vadd.f32 %v10057, %v10449
      %v10524 = vadd.f32 %v10058, %v10454
      %v10525 = vadd.f32 %v10059, %v10457
      %v10526 = vadd.f32 %v10060, %v10462
      %v10527 = vadd.f32 %v10061, %v10465
      %v10528 = vadd.f32 %v10062, %v10470
      %v10529 = vadd.f32 %v10063, %v10473
      %v10530 = vadd.f32 %v10064, %v10478
      %v10531 = vadd.f32 %v10065, %v10481
      %v10532 = vadd.f32 %v10066, %v10486
      %v10533 = vadd.f32 %v10067, %v10489
      %v10534 = vadd.f32 %v10068, %v10494
      %v10535 = vadd.f32 %v10069, %v10497
      %v10536 = vld [vmem:[#allocation4 + $0x8] sm:$0xfc]
      %v10537 = vld [vmem:[%s8 + $0x140] sm:$0xf]
      %v10538 = vld [vmem:[%s8 + $0x144] sm:$0xf]
      %v10539 = vld [vmem:[%s8 + $0x148] sm:$0xf]
      %v10540 = vld [vmem:[%s8 + $0x14c] sm:$0xf]
      %v10541 = vld [vmem:[%s8 + $0x150] sm:$0xf]
      %v10542 = vld [vmem:[%s8 + $0x154] sm:$0xf]
      %v10543 = vld [vmem:[%s8 + $0x158] sm:$0xf]
      %v10544 = vld [vmem:[%s8 + $0x15c] sm:$0xf]
      %v10545 = vld [vmem:[%s8 + $0x160] sm:$0xf]
      %v10546 = vld [vmem:[%s8 + $0x164] sm:$0xf]
      %v10547 = vld [vmem:[%s8 + $0x168] sm:$0xf]
      %v10548 = vld [vmem:[%s8 + $0x16c] sm:$0xf]
      %v10549 = vld [vmem:[%s8 + $0x170] sm:$0xf]
      %v10550 = vld [vmem:[%s8 + $0x174] sm:$0xf]
      %v10551 = vld [vmem:[%s8 + $0x178] sm:$0xf]
      %v10552 = vld [vmem:[%s8 + $0x17c] sm:$0xf]
      %v10555 = vrot.slane %v10536, 2
      %v10556 = vrot.slane %v9701, 2
      %v10557 = vsel %vm3158, %v10555, %v10556
      %v10558 = vrot.slane %v9702, 2
      %v10559 = vsel %vm3158, %v10556, %v10558
      %v10560 = vrot.slane %v9703, 2
      %v10561 = vsel %vm3158, %v10558, %v10560
      %v10562 = vrot.slane %v9704, 2
      %v10563 = vsel %vm3158, %v10560, %v10562
      %v10564 = vrot.slane %v9705, 2
      %v10565 = vsel %vm3158, %v10562, %v10564
      %v10566 = vrot.slane %v9706, 2
      %v10567 = vsel %vm3158, %v10564, %v10566
      %v10568 = vrot.slane %v9707, 2
      %v10569 = vsel %vm3158, %v10566, %v10568
      %v10570 = vrot.slane %v9708, 2
      %v10571 = vsel %vm3158, %v10568, %v10570
      %v10572 = vrot.slane %v9709, 2
      %v10573 = vsel %vm3158, %v10570, %v10572
      %v10574 = vrot.slane %v9710, 2
      %v10575 = vsel %vm3158, %v10572, %v10574
      %v10576 = vrot.slane %v9711, 2
      %v10577 = vsel %vm3158, %v10574, %v10576
      %v10578 = vrot.slane %v9712, 2
      %v10579 = vsel %vm3158, %v10576, %v10578
      %v10580 = vrot.slane %v9713, 2
      %v10581 = vsel %vm3158, %v10578, %v10580
      %v10582 = vrot.slane %v9714, 2
      %v10583 = vsel %vm3158, %v10580, %v10582
      %v10584 = vrot.slane %v9715, 2
      %v10585 = vsel %vm3158, %v10582, %v10584
      %v10586 = vrot.slane %v9716, 2
      %v10587 = vsel %vm3158, %v10584, %v10586
      %v10588 = vrot.slane %v9717, 2
      %v10589 = vsel %vm3158, %v10586, %v10588
      %v10590 = vrot.slane %v10070, 2
      %v10591 = vsel %vm3158, %v10588, %v10590
      %v10626 = vunpack.c.l.b16 %v10537
      %v10627 = vunpack.c.l.b16 %v10538
      %v10628 = vunpack.c.l.b16 %v10539
      %v10629 = vunpack.c.l.b16 %v10540
      %v10630 = vunpack.c.l.b16 %v10541
      %v10631 = vunpack.c.l.b16 %v10542
      %v10632 = vunpack.c.l.b16 %v10543
      %v10633 = vunpack.c.l.b16 %v10544
      %v10634 = vunpack.c.l.b16 %v10545
      %v10635 = vunpack.c.l.b16 %v10546
      %v10636 = vunpack.c.l.b16 %v10547
      %v10637 = vunpack.c.l.b16 %v10548
      %v10638 = vunpack.c.l.b16 %v10549
      %v10639 = vunpack.c.l.b16 %v10550
      %v10640 = vunpack.c.l.b16 %v10551
      %v10641 = vunpack.c.l.b16 %v10552
      %v10642 = vpack.c.b16 %v10627, %v10626
      %v10643 = vpack.c.b16 %v10629, %v10628
      %v10644 = vpack.c.b16 %v10631, %v10630
      %v10645 = vpack.c.b16 %v10633, %v10632
      %v10646 = vpack.c.b16 %v10635, %v10634
      %v10647 = vpack.c.b16 %v10637, %v10636
      %v10648 = vpack.c.b16 %v10639, %v10638
      %v10649 = vpack.c.b16 %v10641, %v10640
      %10658 = vmatprep.subr.bf16.mxu0 0
      %10659 = vmatpush1.bf16.msra.mxu0 %v10642
      %10660 = vmatprep.subr.bf16.mxu0 0
      %10661 = vmatpush1.bf16.msra.mxu0 %v10643
      %10662 = vmatprep.subr.bf16.mxu0 0
      %10663 = vmatpush1.bf16.msra.mxu0 %v10644
      %10664 = vmatprep.subr.bf16.mxu0 0
      %10665 = vmatpush1.bf16.msra.mxu0 %v10645
      %10666 = vmatprep.subr.bf16.mxu0 0
      %10667 = vmatpush1.bf16.msra.mxu0 %v10646
      %10668 = vmatprep.subr.bf16.mxu0 0
      %10669 = vmatpush1.bf16.msra.mxu0 %v10647
      %10670 = vmatprep.subr.bf16.mxu0 0
      %10671 = vmatpush1.bf16.msra.mxu0 %v10648
      %10672 = vmatprep.subr.bf16.mxu0 0
      %10673 = vmatpush1.bf16.msra.mxu0 %v10649
      %10674 = vmatprep.subr.bf16.mxu0 0
      %10675 = vmatpush1.bf16.msra.mxu0 0
      %10676 = vmatprep.subr.bf16.mxu0 0
      %10677 = vmatpush1.bf16.msra.mxu0 0
      %10678 = vmatprep.subr.bf16.mxu0 0
      %10679 = vmatpush1.bf16.msra.mxu0 0
      %10680 = vmatprep.subr.bf16.mxu0 0
      %10681 = vmatpush1.bf16.msra.mxu0 0
      %10682 = vmatprep.subr.bf16.mxu0 0
      %10683 = vmatpush1.bf16.msra.mxu0 0
      %10684 = vmatprep.subr.bf16.mxu0 0
      %10685 = vmatpush1.bf16.msra.mxu0 0
      %10686 = vmatprep.subr.bf16.mxu0 0
      %10687 = vmatpush1.bf16.msra.mxu0 0
      %10688 = vmatprep.subr.bf16.mxu0 0
      %10689 = vmatpush1.bf16.msra.mxu0 0
      %10690 = vmatprep.mubr.bf16.mxu0 0
      %10691 = vmatmul.mubr.bf16.gmra.mrb[0].mxu0 %v10557
      %v10692 = vpop.f32.mrb[0].mxu0
      %v10693 = vadd.f32 0.0, %v10692
      %v10694 = vpop.f32.mrb[0].mxu0
      %v10695 = vpop.f32.mrb[0].mxu0
      %v10696 = vadd.f32 0.0, %v10695
      %v10697 = vpop.f32.mrb[0].mxu0
      %10698 = vmatprep.mubr.bf16.mxu0 0
      %10699 = vmatmul.mubr.bf16.gmra.mrb[0].mxu0 %v10559
      %v10700 = vpop.f32.mrb[0].mxu0
      %v10701 = vadd.f32 0.0, %v10700
      %v10702 = vpop.f32.mrb[0].mxu0
      %v10703 = vpop.f32.mrb[0].mxu0
      %v10704 = vadd.f32 0.0, %v10703
      %v10705 = vpop.f32.mrb[0].mxu0
      %10706 = vmatprep.mubr.bf16.mxu0 0
      %10707 = vmatmul.mubr.bf16.gmra.mrb[0].mxu0 %v10561
      %v10708 = vpop.f32.mrb[0].mxu0
      %v10709 = vadd.f32 0.0, %v10708
      %v10710 = vpop.f32.mrb[0].mxu0
      %v10711 = vpop.f32.mrb[0].mxu0
      %v10712 = vadd.f32 0.0, %v10711
      %v10713 = vpop.f32.mrb[0].mxu0
      %10714 = vmatprep.mubr.bf16.mxu0 0
      %10715 = vmatmul.mubr.bf16.gmra.mrb[0].mxu0 %v10563
      %v10716 = vpop.f32.mrb[0].mxu0
      %v10717 = vadd.f32 0.0, %v10716
      %v10718 = vpop.f32.mrb[0].mxu0
      %v10719 = vpop.f32.mrb[0].mxu0
      %v10720 = vadd.f32 0.0, %v10719
      %v10721 = vpop.f32.mrb[0].mxu0
      %10722 = vmatprep.mubr.bf16.mxu0 0
      %10723 = vmatmul.mubr.bf16.gmra.mrb[0].mxu0 %v10565
      %v10724 = vpop.f32.mrb[0].mxu0
      %v10725 = vadd.f32 0.0, %v10724
      %v10726 = vpop.f32.mrb[0].mxu0
      %v10727 = vpop.f32.mrb[0].mxu0
      %v10728 = vadd.f32 0.0, %v10727
      %v10729 = vpop.f32.mrb[0].mxu0
      %10730 = vmatprep.mubr.bf16.mxu0 0
      %10731 = vmatmul.mubr.bf16.gmra.mrb[0].mxu0 %v10567
      %v10732 = vpop.f32.mrb[0].mxu0
      %v10733 = vadd.f32 0.0, %v10732
      %v10734 = vpop.f32.mrb[0].mxu0
      %v10735 = vpop.f32.mrb[0].mxu0
      %v10736 = vadd.f32 0.0, %v10735
      %v10737 = vpop.f32.mrb[0].mxu0
      %10738 = vmatprep.mubr.bf16.mxu0 0
      %10739 = vmatmul.mubr.bf16.gmra.mrb[0].mxu0 %v10569
      %v10740 = vpop.f32.mrb[0].mxu0
      %v10741 = vadd.f32 0.0, %v10740
      %v10742 = vpop.f32.mrb[0].mxu0
      %v10743 = vpop.f32.mrb[0].mxu0
      %v10744 = vadd.f32 0.0, %v10743
      %v10745 = vpop.f32.mrb[0].mxu0
      %10746 = vmatprep.mubr.bf16.mxu0 0
      %10747 = vmatmul.mubr.bf16.gmra.mrb[0].mxu0 %v10571
      %v10748 = vpop.f32.mrb[0].mxu0
      %v10749 = vadd.f32 0.0, %v10748
      %v10750 = vpop.f32.mrb[0].mxu0
      %v10751 = vpop.f32.mrb[0].mxu0
      %v10752 = vadd.f32 0.0, %v10751
      %v10753 = vpop.f32.mrb[0].mxu0
      %10754 = vmatprep.mubr.bf16.mxu0 0
      %10755 = vmatmul.mubr.bf16.gmra.mrb[0].mxu0 %v10573
      %v10756 = vpop.f32.mrb[0].mxu0
      %v10757 = vadd.f32 0.0, %v10756
      %v10758 = vpop.f32.mrb[0].mxu0
      %v10759 = vpop.f32.mrb[0].mxu0
      %v10760 = vadd.f32 0.0, %v10759
      %v10761 = vpop.f32.mrb[0].mxu0
      %10762 = vmatprep.mubr.bf16.mxu0 0
      %10763 = vmatmul.mubr.bf16.gmra.mrb[0].mxu0 %v10575
      %v10764 = vpop.f32.mrb[0].mxu0
      %v10765 = vadd.f32 0.0, %v10764
      %v10766 = vpop.f32.mrb[0].mxu0
      %v10767 = vpop.f32.mrb[0].mxu0
      %v10768 = vadd.f32 0.0, %v10767
      %v10769 = vpop.f32.mrb[0].mxu0
      %10770 = vmatprep.mubr.bf16.mxu0 0
      %10771 = vmatmul.mubr.bf16.gmra.mrb[0].mxu0 %v10577
      %v10772 = vpop.f32.mrb[0].mxu0
      %v10773 = vadd.f32 0.0, %v10772
      %v10774 = vpop.f32.mrb[0].mxu0
      %v10775 = vpop.f32.mrb[0].mxu0
      %v10776 = vadd.f32 0.0, %v10775
      %v10777 = vpop.f32.mrb[0].mxu0
      %10778 = vmatprep.mubr.bf16.mxu0 0
      %10779 = vmatmul.mubr.bf16.gmra.mrb[0].mxu0 %v10579
      %v10780 = vpop.f32.mrb[0].mxu0
      %v10781 = vadd.f32 0.0, %v10780
      %v10782 = vpop.f32.mrb[0].mxu0
      %v10783 = vpop.f32.mrb[0].mxu0
      %v10784 = vadd.f32 0.0, %v10783
      %v10785 = vpop.f32.mrb[0].mxu0
      %10786 = vmatprep.mubr.bf16.mxu0 0
      %10787 = vmatmul.mubr.bf16.gmra.mrb[0].mxu0 %v10581
      %v10788 = vpop.f32.mrb[0].mxu0
      %v10789 = vadd.f32 0.0, %v10788
      %v10790 = vpop.f32.mrb[0].mxu0
      %v10791 = vpop.f32.mrb[0].mxu0
      %v10792 = vadd.f32 0.0, %v10791
      %v10793 = vpop.f32.mrb[0].mxu0
      %10794 = vmatprep.mubr.bf16.mxu0 0
      %10795 = vmatmul.mubr.bf16.gmra.mrb[0].mxu0 %v10583
      %v10796 = vpop.f32.mrb[0].mxu0
      %v10797 = vadd.f32 0.0, %v10796
      %v10798 = vpop.f32.mrb[0].mxu0
      %v10799 = vpop.f32.mrb[0].mxu0
      %v10800 = vadd.f32 0.0, %v10799
      %v10801 = vpop.f32.mrb[0].mxu0
      %10802 = vmatprep.mubr.bf16.mxu0 0
      %10803 = vmatmul.mubr.bf16.gmra.mrb[0].mxu0 %v10585
      %v10804 = vpop.f32.mrb[0].mxu0
      %v10805 = vadd.f32 0.0, %v10804
      %v10806 = vpop.f32.mrb[0].mxu0
      %v10807 = vpop.f32.mrb[0].mxu0
      %v10808 = vadd.f32 0.0, %v10807
      %v10809 = vpop.f32.mrb[0].mxu0
      %10810 = vmatprep.mubr.bf16.mxu0 0
      %10811 = vmatmul.mubr.bf16.gmra.mrb[0].mxu0 %v10587
      %v10812 = vpop.f32.mrb[0].mxu0
      %v10813 = vadd.f32 0.0, %v10812
      %v10814 = vpop.f32.mrb[0].mxu0
      %v10815 = vpop.f32.mrb[0].mxu0
      %v10816 = vadd.f32 0.0, %v10815
      %v10817 = vpop.f32.mrb[0].mxu0
      %10818 = vmatprep.mubr.bf16.mxu0 0
      %10819 = vmatmul.mubr.bf16.gmra.mrb[0].mxu0 %v10589
      %v10820 = vpop.f32.mrb[0].mxu0
      %v10821 = vadd.f32 0.0, %v10820
      %v10822 = vpop.f32.mrb[0].mxu0
      %v10823 = vpop.f32.mrb[0].mxu0
      %v10824 = vadd.f32 0.0, %v10823
      %v10825 = vpop.f32.mrb[0].mxu0
      %10826 = vmatprep.mubr.bf16.mxu0 0
      %10827 = vmatmul.mubr.bf16.gmra.mrb[0].mxu0 %v10591
      %v10828 = vpop.f32.mrb[0].mxu0
      %v10829 = vadd.f32 0.0, %v10828
      %v10830 = vpop.f32.mrb[0].mxu0
      %v10831 = vpop.f32.mrb[0].mxu0
      %v10832 = vadd.f32 0.0, %v10831
      %v10833 = vpop.f32.mrb[0].mxu0
      %10834 = vdwg.mxu0
      %v10835 = vadd.f32 %v10500, %v10693
      %v10836 = vadd.f32 %v10501, %v10696
      %v10837 = vadd.f32 %v10502, %v10701
      %v10838 = vadd.f32 %v10503, %v10704
      %v10839 = vadd.f32 %v10504, %v10709
      %v10840 = vadd.f32 %v10505, %v10712
      %v10841 = vadd.f32 %v10506, %v10717
      %v10842 = vadd.f32 %v10507, %v10720
      %v10843 = vadd.f32 %v10508, %v10725
      %v10844 = vadd.f32 %v10509, %v10728
      %v10845 = vadd.f32 %v10510, %v10733
      %v10846 = vadd.f32 %v10511, %v10736
      %v10847 = vadd.f32 %v10512, %v10741
      %v10848 = vadd.f32 %v10513, %v10744
      %v10849 = vadd.f32 %v10514, %v10749
      %v10850 = vadd.f32 %v10515, %v10752
      %v10851 = vadd.f32 %v10516, %v10757
      %v10852 = vadd.f32 %v10517, %v10760
      %v10853 = vadd.f32 %v10518, %v10765
      %v10854 = vadd.f32 %v10519, %v10768
      %v10855 = vadd.f32 %v10520, %v10773
      %v10856 = vadd.f32 %v10521, %v10776
      %v10857 = vadd.f32 %v10522, %v10781
      %v10858 = vadd.f32 %v10523, %v10784
      %v10859 = vadd.f32 %v10524, %v10789
      %v10860 = vadd.f32 %v10525, %v10792
      %v10861 = vadd.f32 %v10526, %v10797
      %v10862 = vadd.f32 %v10527, %v10800
      %v10863 = vadd.f32 %v10528, %v10805
      %v10864 = vadd.f32 %v10529, %v10808
      %v10865 = vadd.f32 %v10530, %v10813
      %v10866 = vadd.f32 %v10531, %v10816
      %v10867 = vadd.f32 %v10532, %v10821
      %v10868 = vadd.f32 %v10533, %v10824
      %v10869 = vadd.f32 %v10534, %v10829
      %v10870 = vadd.f32 %v10535, %v10832
      %v10871 = vld [vmem:[#allocation4 + $0x10] sm:$0xfc]
      %v10872 = vld [vmem:[#allocation4 + $0x18] sm:$0xff]
      %v10873 = vld [vmem:[#allocation4 + $0x20] sm:$0xff]
      %v10874 = vld [vmem:[#allocation4 + $0x28] sm:$0xff]
      %v10875 = vld [vmem:[#allocation4 + $0x30] sm:$0xff]
      %v10876 = vld [vmem:[#allocation4 + $0x38] sm:$0xff]
      %v10877 = vld [vmem:[#allocation4 + $0x40] sm:$0xff]
      %v10878 = vld [vmem:[#allocation4 + $0x48] sm:$0xff]
      %v10879 = vld [vmem:[#allocation4 + $0x50] sm:$0xff]
      %v10880 = vld [vmem:[#allocation4 + $0x58] sm:$0xff]
      %v10881 = vld [vmem:[#allocation4 + $0x60] sm:$0xff]
      %v10882 = vld [vmem:[#allocation4 + $0x68] sm:$0xff]
      %v10883 = vld [vmem:[#allocation4 + $0x70] sm:$0xff]
      %v10884 = vld [vmem:[#allocation4 + $0x78] sm:$0xff]
      %v10885 = vld [vmem:[#allocation4 + $0x80] sm:$0xff]
      %v10886 = vld [vmem:[#allocation4 + $0x88] sm:$0xff]
      %v10887 = vld [vmem:[#allocation4 + $0x90] sm:$0xff]
      %v10888 = vld [vmem:[#allocation4 + $0x98] sm:$0xff]
      %v10889 = vld [vmem:[#allocation4 + $0xa0] sm:$0x3]
      %v10890 = vld [vmem:[%s8 + $0x180] sm:$0xf]
      %v10891 = vld [vmem:[%s8 + $0x184] sm:$0xf]
      %v10892 = vld [vmem:[%s8 + $0x188] sm:$0xf]
      %v10893 = vld [vmem:[%s8 + $0x18c] sm:$0xf]
      %v10894 = vld [vmem:[%s8 + $0x190] sm:$0xf]
      %v10895 = vld [vmem:[%s8 + $0x194] sm:$0xf]
      %v10896 = vld [vmem:[%s8 + $0x198] sm:$0xf]
      %v10897 = vld [vmem:[%s8 + $0x19c] sm:$0xf]
      %v10898 = vld [vmem:[%s8 + $0x1a0] sm:$0xf]
      %v10899 = vld [vmem:[%s8 + $0x1a4] sm:$0xf]
      %v10900 = vld [vmem:[%s8 + $0x1a8] sm:$0xf]
      %v10901 = vld [vmem:[%s8 + $0x1ac] sm:$0xf]
      %v10902 = vld [vmem:[%s8 + $0x1b0] sm:$0xf]
      %v10903 = vld [vmem:[%s8 + $0x1b4] sm:$0xf]
      %v10904 = vld [vmem:[%s8 + $0x1b8] sm:$0xf]
      %v10905 = vld [vmem:[%s8 + $0x1bc] sm:$0xf]
      %v10925 = vrot.slane %v10871, 2
      %v10926 = vrot.slane %v10872, 2
      %v10927 = vsel %vm3158, %v10925, %v10926
      %v10928 = vrot.slane %v10873, 2
      %v10929 = vsel %vm3158, %v10926, %v10928
      %v10930 = vrot.slane %v10874, 2
      %v10931 = vsel %vm3158, %v10928, %v10930
      %v10932 = vrot.slane %v10875, 2
      %v10933 = vsel %vm3158, %v10930, %v10932
      %v10934 = vrot.slane %v10876, 2
      %v10935 = vsel %vm3158, %v10932, %v10934
      %v10936 = vrot.slane %v10877, 2
      %v10937 = vsel %vm3158, %v10934, %v10936
      %v10938 = vrot.slane %v10878, 2
      %v10939 = vsel %vm3158, %v10936, %v10938
      %v10940 = vrot.slane %v10879, 2
      %v10941 = vsel %vm3158, %v10938, %v10940
      %v10942 = vrot.slane %v10880, 2
      %v10943 = vsel %vm3158, %v10940, %v10942
      %v10944 = vrot.slane %v10881, 2
      %v10945 = vsel %vm3158, %v10942, %v10944
      %v10946 = vrot.slane %v10882, 2
      %v10947 = vsel %vm3158, %v10944, %v10946
      %v10948 = vrot.slane %v10883, 2
      %v10949 = vsel %vm3158, %v10946, %v10948
      %v10950 = vrot.slane %v10884, 2
      %v10951 = vsel %vm3158, %v10948, %v10950
      %v10952 = vrot.slane %v10885, 2
      %v10953 = vsel %vm3158, %v10950, %v10952
      %v10954 = vrot.slane %v10886, 2
      %v10955 = vsel %vm3158, %v10952, %v10954
      %v10956 = vrot.slane %v10887, 2
      %v10957 = vsel %vm3158, %v10954, %v10956
      %v10958 = vrot.slane %v10888, 2
      %v10959 = vsel %vm3158, %v10956, %v10958
      %v10960 = vrot.slane %v10889, 2
      %v10961 = vsel %vm3158, %v10958, %v10960
      %v10996 = vunpack.c.l.b16 %v10890
      %v10997 = vunpack.c.l.b16 %v10891
      %v10998 = vunpack.c.l.b16 %v10892
      %v10999 = vunpack.c.l.b16 %v10893
      %v11000 = vunpack.c.l.b16 %v10894
      %v11001 = vunpack.c.l.b16 %v10895
      %v11002 = vunpack.c.l.b16 %v10896
      %v11003 = vunpack.c.l.b16 %v10897
      %v11004 = vunpack.c.l.b16 %v10898
      %v11005 = vunpack.c.l.b16 %v10899
      %v11006 = vunpack.c.l.b16 %v10900
      %v11007 = vunpack.c.l.b16 %v10901
      %v11008 = vunpack.c.l.b16 %v10902
      %v11009 = vunpack.c.l.b16 %v10903
      %v11010 = vunpack.c.l.b16 %v10904
      %v11011 = vunpack.c.l.b16 %v10905
      %v11012 = vpack.c.b16 %v10997, %v10996
      %v11013 = vpack.c.b16 %v10999, %v10998
      %v11014 = vpack.c.b16 %v11001, %v11000
      %v11015 = vpack.c.b16 %v11003, %v11002
      %v11016 = vpack.c.b16 %v11005, %v11004
      %v11017 = vpack.c.b16 %v11007, %v11006
      %v11018 = vpack.c.b16 %v11009, %v11008
      %v11019 = vpack.c.b16 %v11011, %v11010
      %11028 = vmatprep.subr.bf16.mxu0 0
      %11029 = vmatpush1.bf16.msra.mxu0 %v11012
      %11030 = vmatprep.subr.bf16.mxu0 0
      %11031 = vmatpush1.bf16.msra.mxu0 %v11013
      %11032 = vmatprep.subr.bf16.mxu0 0
      %11033 = vmatpush1.bf16.msra.mxu0 %v11014
      %11034 = vmatprep.subr.bf16.mxu0 0
      %11035 = vmatpush1.bf16.msra.mxu0 %v11015
      %11036 = vmatprep.subr.bf16.mxu0 0
      %11037 = vmatpush1.bf16.msra.mxu0 %v11016
      %11038 = vmatprep.subr.bf16.mxu0 0
      %11039 = vmatpush1.bf16.msra.mxu0 %v11017
      %11040 = vmatprep.subr.bf16.mxu0 0
      %11041 = vmatpush1.bf16.msra.mxu0 %v11018
      %11042 = vmatprep.subr.bf16.mxu0 0
      %11043 = vmatpush1.bf16.msra.mxu0 %v11019
      %11044 = vmatprep.subr.bf16.mxu0 0
      %11045 = vmatpush1.bf16.msra.mxu0 0
      %11046 = vmatprep.subr.bf16.mxu0 0
      %11047 = vmatpush1.bf16.msra.mxu0 0
      %11048 = vmatprep.subr.bf16.mxu0 0
      %11049 = vmatpush1.bf16.msra.mxu0 0
      %11050 = vmatprep.subr.bf16.mxu0 0
      %11051 = vmatpush1.bf16.msra.mxu0 0
      %11052 = vmatprep.subr.bf16.mxu0 0
      %11053 = vmatpush1.bf16.msra.mxu0 0
      %11054 = vmatprep.subr.bf16.mxu0 0
      %11055 = vmatpush1.bf16.msra.mxu0 0
      %11056 = vmatprep.subr.bf16.mxu0 0
      %11057 = vmatpush1.bf16.msra.mxu0 0
      %11058 = vmatprep.subr.bf16.mxu0 0
      %11059 = vmatpush1.bf16.msra.mxu0 0
      %11060 = vmatprep.mubr.bf16.mxu0 0
      %11061 = vmatmul.mubr.bf16.gmra.mrb[0].mxu0 %v10927
      %v11062 = vpop.f32.mrb[0].mxu0
      %v11063 = vadd.f32 0.0, %v11062
      %v11064 = vpop.f32.mrb[0].mxu0
      %v11065 = vpop.f32.mrb[0].mxu0
      %v11066 = vadd.f32 0.0, %v11065
      %v11067 = vpop.f32.mrb[0].mxu0
      %11068 = vmatprep.mubr.bf16.mxu0 0
      %11069 = vmatmul.mubr.bf16.gmra.mrb[0].mxu0 %v10929
      %v11070 = vpop.f32.mrb[0].mxu0
      %v11071 = vadd.f32 0.0, %v11070
      %v11072 = vpop.f32.mrb[0].mxu0
      %v11073 = vpop.f32.mrb[0].mxu0
      %v11074 = vadd.f32 0.0, %v11073
      %v11075 = vpop.f32.mrb[0].mxu0
      %11076 = vmatprep.mubr.bf16.mxu0 0
      %11077 = vmatmul.mubr.bf16.gmra.mrb[0].mxu0 %v10931
      %v11078 = vpop.f32.mrb[0].mxu0
      %v11079 = vadd.f32 0.0, %v11078
      %v11080 = vpop.f32.mrb[0].mxu0
      %v11081 = vpop.f32.mrb[0].mxu0
      %v11082 = vadd.f32 0.0, %v11081
      %v11083 = vpop.f32.mrb[0].mxu0
      %11084 = vmatprep.mubr.bf16.mxu0 0
      %11085 = vmatmul.mubr.bf16.gmra.mrb[0].mxu0 %v10933
      %v11086 = vpop.f32.mrb[0].mxu0
      %v11087 = vadd.f32 0.0, %v11086
      %v11088 = vpop.f32.mrb[0].mxu0
      %v11089 = vpop.f32.mrb[0].mxu0
      %v11090 = vadd.f32 0.0, %v11089
      %v11091 = vpop.f32.mrb[0].mxu0
      %11092 = vmatprep.mubr.bf16.mxu0 0
      %11093 = vmatmul.mubr.bf16.gmra.mrb[0].mxu0 %v10935
      %v11094 = vpop.f32.mrb[0].mxu0
      %v11095 = vadd.f32 0.0, %v11094
      %v11096 = vpop.f32.mrb[0].mxu0
      %v11097 = vpop.f32.mrb[0].mxu0
      %v11098 = vadd.f32 0.0, %v11097
      %v11099 = vpop.f32.mrb[0].mxu0
      %11100 = vmatprep.mubr.bf16.mxu0 0
      %11101 = vmatmul.mubr.bf16.gmra.mrb[0].mxu0 %v10937
      %v11102 = vpop.f32.mrb[0].mxu0
      %v11103 = vadd.f32 0.0, %v11102
      %v11104 = vpop.f32.mrb[0].mxu0
      %v11105 = vpop.f32.mrb[0].mxu0
      %v11106 = vadd.f32 0.0, %v11105
      %v11107 = vpop.f32.mrb[0].mxu0
      %11108 = vmatprep.mubr.bf16.mxu0 0
      %11109 = vmatmul.mubr.bf16.gmra.mrb[0].mxu0 %v10939
      %v11110 = vpop.f32.mrb[0].mxu0
      %v11111 = vadd.f32 0.0, %v11110
      %v11112 = vpop.f32.mrb[0].mxu0
      %v11113 = vpop.f32.mrb[0].mxu0
      %v11114 = vadd.f32 0.0, %v11113
      %v11115 = vpop.f32.mrb[0].mxu0
      %11116 = vmatprep.mubr.bf16.mxu0 0
      %11117 = vmatmul.mubr.bf16.gmra.mrb[0].mxu0 %v10941
      %v11118 = vpop.f32.mrb[0].mxu0
      %v11119 = vadd.f32 0.0, %v11118
      %v11120 = vpop.f32.mrb[0].mxu0
      %v11121 = vpop.f32.mrb[0].mxu0
      %v11122 = vadd.f32 0.0, %v11121
      %v11123 = vpop.f32.mrb[0].mxu0
      %11124 = vmatprep.mubr.bf16.mxu0 0
      %11125 = vmatmul.mubr.bf16.gmra.mrb[0].mxu0 %v10943
      %v11126 = vpop.f32.mrb[0].mxu0
      %v11127 = vadd.f32 0.0, %v11126
      %v11128 = vpop.f32.mrb[0].mxu0
      %v11129 = vpop.f32.mrb[0].mxu0
      %v11130 = vadd.f32 0.0, %v11129
      %v11131 = vpop.f32.mrb[0].mxu0
      %11132 = vmatprep.mubr.bf16.mxu0 0
      %11133 = vmatmul.mubr.bf16.gmra.mrb[0].mxu0 %v10945
      %v11134 = vpop.f32.mrb[0].mxu0
      %v11135 = vadd.f32 0.0, %v11134
      %v11136 = vpop.f32.mrb[0].mxu0
      %v11137 = vpop.f32.mrb[0].mxu0
      %v11138 = vadd.f32 0.0, %v11137
      %v11139 = vpop.f32.mrb[0].mxu0
      %11140 = vmatprep.mubr.bf16.mxu0 0
      %11141 = vmatmul.mubr.bf16.gmra.mrb[0].mxu0 %v10947
      %v11142 = vpop.f32.mrb[0].mxu0
      %v11143 = vadd.f32 0.0, %v11142
      %v11144 = vpop.f32.mrb[0].mxu0
      %v11145 = vpop.f32.mrb[0].mxu0
      %v11146 = vadd.f32 0.0, %v11145
      %v11147 = vpop.f32.mrb[0].mxu0
      %11148 = vmatprep.mubr.bf16.mxu0 0
      %11149 = vmatmul.mubr.bf16.gmra.mrb[0].mxu0 %v10949
      %v11150 = vpop.f32.mrb[0].mxu0
      %v11151 = vadd.f32 0.0, %v11150
      %v11152 = vpop.f32.mrb[0].mxu0
      %v11153 = vpop.f32.mrb[0].mxu0
      %v11154 = vadd.f32 0.0, %v11153
      %v11155 = vpop.f32.mrb[0].mxu0
      %11156 = vmatprep.mubr.bf16.mxu0 0
      %11157 = vmatmul.mubr.bf16.gmra.mrb[0].mxu0 %v10951
      %v11158 = vpop.f32.mrb[0].mxu0
      %v11159 = vadd.f32 0.0, %v11158
      %v11160 = vpop.f32.mrb[0].mxu0
      %v11161 = vpop.f32.mrb[0].mxu0
      %v11162 = vadd.f32 0.0, %v11161
      %v11163 = vpop.f32.mrb[0].mxu0
      %11164 = vmatprep.mubr.bf16.mxu0 0
      %11165 = vmatmul.mubr.bf16.gmra.mrb[0].mxu0 %v10953
      %v11166 = vpop.f32.mrb[0].mxu0
      %v11167 = vadd.f32 0.0, %v11166
      %v11168 = vpop.f32.mrb[0].mxu0
      %v11169 = vpop.f32.mrb[0].mxu0
      %v11170 = vadd.f32 0.0, %v11169
      %v11171 = vpop.f32.mrb[0].mxu0
      %11172 = vmatprep.mubr.bf16.mxu0 0
      %11173 = vmatmul.mubr.bf16.gmra.mrb[0].mxu0 %v10955
      %v11174 = vpop.f32.mrb[0].mxu0
      %v11175 = vadd.f32 0.0, %v11174
      %v11176 = vpop.f32.mrb[0].mxu0
      %v11177 = vpop.f32.mrb[0].mxu0
      %v11178 = vadd.f32 0.0, %v11177
      %v11179 = vpop.f32.mrb[0].mxu0
      %11180 = vmatprep.mubr.bf16.mxu0 0
      %11181 = vmatmul.mubr.bf16.gmra.mrb[0].mxu0 %v10957
      %v11182 = vpop.f32.mrb[0].mxu0
      %v11183 = vadd.f32 0.0, %v11182
      %v11184 = vpop.f32.mrb[0].mxu0
      %v11185 = vpop.f32.mrb[0].mxu0
      %v11186 = vadd.f32 0.0, %v11185
      %v11187 = vpop.f32.mrb[0].mxu0
      %11188 = vmatprep.mubr.bf16.mxu0 0
      %11189 = vmatmul.mubr.bf16.gmra.mrb[0].mxu0 %v10959
      %v11190 = vpop.f32.mrb[0].mxu0
      %v11191 = vadd.f32 0.0, %v11190
      %v11192 = vpop.f32.mrb[0].mxu0
      %v11193 = vpop.f32.mrb[0].mxu0
      %v11194 = vadd.f32 0.0, %v11193
      %v11195 = vpop.f32.mrb[0].mxu0
      %11196 = vmatprep.mubr.bf16.mxu0 0
      %11197 = vmatmul.mubr.bf16.gmra.mrb[0].mxu0 %v10961
      %v11198 = vpop.f32.mrb[0].mxu0
      %v11199 = vadd.f32 0.0, %v11198
      %v11200 = vpop.f32.mrb[0].mxu0
      %v11201 = vpop.f32.mrb[0].mxu0
      %v11202 = vadd.f32 0.0, %v11201
      %v11203 = vpop.f32.mrb[0].mxu0
      %11204 = vdwg.mxu0
      %v11205 = vadd.f32 %v10835, %v11063
      %v11206 = vadd.f32 %v10836, %v11066
      %v11207 = vadd.f32 %v10837, %v11071
      %v11208 = vadd.f32 %v10838, %v11074
      %v11209 = vadd.f32 %v10839, %v11079
      %v11210 = vadd.f32 %v10840, %v11082
      %v11211 = vadd.f32 %v10841, %v11087
      %v11212 = vadd.f32 %v10842, %v11090
      %v11213 = vadd.f32 %v10843, %v11095
      %v11214 = vadd.f32 %v10844, %v11098
      %v11215 = vadd.f32 %v10845, %v11103
      %v11216 = vadd.f32 %v10846, %v11106
      %v11217 = vadd.f32 %v10847, %v11111
      %v11218 = vadd.f32 %v10848, %v11114
      %v11219 = vadd.f32 %v10849, %v11119
      %v11220 = vadd.f32 %v10850, %v11122
      %v11221 = vadd.f32 %v10851, %v11127
      %v11222 = vadd.f32 %v10852, %v11130
      %v11223 = vadd.f32 %v10853, %v11135
      %v11224 = vadd.f32 %v10854, %v11138
      %v11225 = vadd.f32 %v10855, %v11143
      %v11226 = vadd.f32 %v10856, %v11146
      %v11227 = vadd.f32 %v10857, %v11151
      %v11228 = vadd.f32 %v10858, %v11154
      %v11229 = vadd.f32 %v10859, %v11159
      %v11230 = vadd.f32 %v10860, %v11162
      %v11231 = vadd.f32 %v10861, %v11167
      %v11232 = vadd.f32 %v10862, %v11170
      %v11233 = vadd.f32 %v10863, %v11175
      %v11234 = vadd.f32 %v10864, %v11178
      %v11235 = vadd.f32 %v10865, %v11183
      %v11236 = vadd.f32 %v10866, %v11186
      %v11237 = vadd.f32 %v10867, %v11191
      %v11238 = vadd.f32 %v10868, %v11194
      %v11239 = vadd.f32 %v10869, %v11199
      %v11240 = vadd.f32 %v10870, %v11202
      %v11241 = vld [vmem:[#allocation4 + $0xa0] sm:$0x7]
      %v11242 = vld [vmem:[%s8 + $0x1c0] sm:$0xf]
      %v11243 = vld [vmem:[%s8 + $0x1c4] sm:$0xf]
      %v11244 = vld [vmem:[%s8 + $0x1c8] sm:$0xf]
      %v11245 = vld [vmem:[%s8 + $0x1cc] sm:$0xf]
      %v11246 = vld [vmem:[%s8 + $0x1d0] sm:$0xf]
      %v11247 = vld [vmem:[%s8 + $0x1d4] sm:$0xf]
      %v11248 = vld [vmem:[%s8 + $0x1d8] sm:$0xf]
      %v11249 = vld [vmem:[%s8 + $0x1dc] sm:$0xf]
      %v11250 = vld [vmem:[%s8 + $0x1e0] sm:$0xf]
      %v11251 = vld [vmem:[%s8 + $0x1e4] sm:$0xf]
      %v11252 = vld [vmem:[%s8 + $0x1e8] sm:$0xf]
      %v11253 = vld [vmem:[%s8 + $0x1ec] sm:$0xf]
      %v11254 = vld [vmem:[%s8 + $0x1f0] sm:$0xf]
      %v11255 = vld [vmem:[%s8 + $0x1f4] sm:$0xf]
      %v11256 = vld [vmem:[%s8 + $0x1f8] sm:$0xf]
      %v11257 = vld [vmem:[%s8 + $0x1fc] sm:$0xf]
      %v11259 = vshrl.u32 %v10871, 16
      %v11261 = vrot.slane %v11259, 2
      %v11262 = vshll.u32 %v10871, 16
      %v11264 = vrot.slane %v11262, 3
      %v11265 = vor.u32 %v11261, %v11264
      %v11267 = vshrl.u32 %v10872, 16
      %v11269 = vrot.slane %v11267, 2
      %v11270 = vshll.u32 %v10872, 16
      %v11272 = vrot.slane %v11270, 3
      %v11273 = vor.u32 %v11269, %v11272
      %v11274 = vsel %vm3862, %v11265, %v11273
      %v11276 = vshrl.u32 %v10873, 16
      %v11278 = vrot.slane %v11276, 2
      %v11279 = vshll.u32 %v10873, 16
      %v11281 = vrot.slane %v11279, 3
      %v11282 = vor.u32 %v11278, %v11281
      %v11283 = vsel %vm3862, %v11273, %v11282
      %v11285 = vshrl.u32 %v10874, 16
      %v11287 = vrot.slane %v11285, 2
      %v11288 = vshll.u32 %v10874, 16
      %v11290 = vrot.slane %v11288, 3
      %v11291 = vor.u32 %v11287, %v11290
      %v11292 = vsel %vm3862, %v11282, %v11291
      %v11294 = vshrl.u32 %v10875, 16
      %v11296 = vrot.slane %v11294, 2
      %v11297 = vshll.u32 %v10875, 16
      %v11299 = vrot.slane %v11297, 3
      %v11300 = vor.u32 %v11296, %v11299
      %v11301 = vsel %vm3862, %v11291, %v11300
      %v11303 = vshrl.u32 %v10876, 16
      %v11305 = vrot.slane %v11303, 2
      %v11306 = vshll.u32 %v10876, 16
      %v11308 = vrot.slane %v11306, 3
      %v11309 = vor.u32 %v11305, %v11308
      %v11310 = vsel %vm3862, %v11300, %v11309
      %v11312 = vshrl.u32 %v10877, 16
      %v11314 = vrot.slane %v11312, 2
      %v11315 = vshll.u32 %v10877, 16
      %v11317 = vrot.slane %v11315, 3
      %v11318 = vor.u32 %v11314, %v11317
      %v11319 = vsel %vm3862, %v11309, %v11318
      %v11321 = vshrl.u32 %v10878, 16
      %v11323 = vrot.slane %v11321, 2
      %v11324 = vshll.u32 %v10878, 16
      %v11326 = vrot.slane %v11324, 3
      %v11327 = vor.u32 %v11323, %v11326
      %v11328 = vsel %vm3862, %v11318, %v11327
      %v11330 = vshrl.u32 %v10879, 16
      %v11332 = vrot.slane %v11330, 2
      %v11333 = vshll.u32 %v10879, 16
      %v11335 = vrot.slane %v11333, 3
      %v11336 = vor.u32 %v11332, %v11335
      %v11337 = vsel %vm3862, %v11327, %v11336
      %v11339 = vshrl.u32 %v10880, 16
      %v11341 = vrot.slane %v11339, 2
      %v11342 = vshll.u32 %v10880, 16
      %v11344 = vrot.slane %v11342, 3
      %v11345 = vor.u32 %v11341, %v11344
      %v11346 = vsel %vm3862, %v11336, %v11345
      %v11348 = vshrl.u32 %v10881, 16
      %v11350 = vrot.slane %v11348, 2
      %v11351 = vshll.u32 %v10881, 16
      %v11353 = vrot.slane %v11351, 3
      %v11354 = vor.u32 %v11350, %v11353
      %v11355 = vsel %vm3862, %v11345, %v11354
      %v11357 = vshrl.u32 %v10882, 16
      %v11359 = vrot.slane %v11357, 2
      %v11360 = vshll.u32 %v10882, 16
      %v11362 = vrot.slane %v11360, 3
      %v11363 = vor.u32 %v11359, %v11362
      %v11364 = vsel %vm3862, %v11354, %v11363
      %v11366 = vshrl.u32 %v10883, 16
      %v11368 = vrot.slane %v11366, 2
      %v11369 = vshll.u32 %v10883, 16
      %v11371 = vrot.slane %v11369, 3
      %v11372 = vor.u32 %v11368, %v11371
      %v11373 = vsel %vm3862, %v11363, %v11372
      %v11375 = vshrl.u32 %v10884, 16
      %v11377 = vrot.slane %v11375, 2
      %v11378 = vshll.u32 %v10884, 16
      %v11380 = vrot.slane %v11378, 3
      %v11381 = vor.u32 %v11377, %v11380
      %v11382 = vsel %vm3862, %v11372, %v11381
      %v11384 = vshrl.u32 %v10885, 16
      %v11386 = vrot.slane %v11384, 2
      %v11387 = vshll.u32 %v10885, 16
      %v11389 = vrot.slane %v11387, 3
      %v11390 = vor.u32 %v11386, %v11389
      %v11391 = vsel %vm3862, %v11381, %v11390
      %v11393 = vshrl.u32 %v10886, 16
      %v11395 = vrot.slane %v11393, 2
      %v11396 = vshll.u32 %v10886, 16
      %v11398 = vrot.slane %v11396, 3
      %v11399 = vor.u32 %v11395, %v11398
      %v11400 = vsel %vm3862, %v11390, %v11399
      %v11402 = vshrl.u32 %v10887, 16
      %v11404 = vrot.slane %v11402, 2
      %v11405 = vshll.u32 %v10887, 16
      %v11407 = vrot.slane %v11405, 3
      %v11408 = vor.u32 %v11404, %v11407
      %v11409 = vsel %vm3862, %v11399, %v11408
      %v11411 = vshrl.u32 %v10888, 16
      %v11413 = vrot.slane %v11411, 2
      %v11414 = vshll.u32 %v10888, 16
      %v11416 = vrot.slane %v11414, 3
      %v11417 = vor.u32 %v11413, %v11416
      %v11418 = vsel %vm3862, %v11408, %v11417
      %v11420 = vshrl.u32 %v11241, 16
      %v11422 = vrot.slane %v11420, 2
      %v11423 = vshll.u32 %v11241, 16
      %v11425 = vrot.slane %v11423, 3
      %v11426 = vor.u32 %v11422, %v11425
      %v11427 = vsel %vm3862, %v11417, %v11426
      %v11462 = vunpack.c.l.b16 %v11242
      %v11463 = vunpack.c.l.b16 %v11243
      %v11464 = vunpack.c.l.b16 %v11244
      %v11465 = vunpack.c.l.b16 %v11245
      %v11466 = vunpack.c.l.b16 %v11246
      %v11467 = vunpack.c.l.b16 %v11247
      %v11468 = vunpack.c.l.b16 %v11248
      %v11469 = vunpack.c.l.b16 %v11249
      %v11470 = vunpack.c.l.b16 %v11250
      %v11471 = vunpack.c.l.b16 %v11251
      %v11472 = vunpack.c.l.b16 %v11252
      %v11473 = vunpack.c.l.b16 %v11253
      %v11474 = vunpack.c.l.b16 %v11254
      %v11475 = vunpack.c.l.b16 %v11255
      %v11476 = vunpack.c.l.b16 %v11256
      %v11477 = vunpack.c.l.b16 %v11257
      %v11478 = vpack.c.b16 %v11463, %v11462
      %v11479 = vpack.c.b16 %v11465, %v11464
      %v11480 = vpack.c.b16 %v11467, %v11466
      %v11481 = vpack.c.b16 %v11469, %v11468
      %v11482 = vpack.c.b16 %v11471, %v11470
      %v11483 = vpack.c.b16 %v11473, %v11472
      %v11484 = vpack.c.b16 %v11475, %v11474
      %v11485 = vpack.c.b16 %v11477, %v11476
      %11494 = vmatprep.subr.bf16.mxu0 0
      %11495 = vmatpush1.bf16.msra.mxu0 %v11478
      %11496 = vmatprep.subr.bf16.mxu0 0
      %11497 = vmatpush1.bf16.msra.mxu0 %v11479
      %11498 = vmatprep.subr.bf16.mxu0 0
      %11499 = vmatpush1.bf16.msra.mxu0 %v11480
      %11500 = vmatprep.subr.bf16.mxu0 0
      %11501 = vmatpush1.bf16.msra.mxu0 %v11481
      %11502 = vmatprep.subr.bf16.mxu0 0
      %11503 = vmatpush1.bf16.msra.mxu0 %v11482
      %11504 = vmatprep.subr.bf16.mxu0 0
      %11505 = vmatpush1.bf16.msra.mxu0 %v11483
      %11506 = vmatprep.subr.bf16.mxu0 0
      %11507 = vmatpush1.bf16.msra.mxu0 %v11484
      %11508 = vmatprep.subr.bf16.mxu0 0
      %11509 = vmatpush1.bf16.msra.mxu0 %v11485
      %11510 = vmatprep.subr.bf16.mxu0 0
      %11511 = vmatpush1.bf16.msra.mxu0 0
      %11512 = vmatprep.subr.bf16.mxu0 0
      %11513 = vmatpush1.bf16.msra.mxu0 0
      %11514 = vmatprep.subr.bf16.mxu0 0
      %11515 = vmatpush1.bf16.msra.mxu0 0
      %11516 = vmatprep.subr.bf16.mxu0 0
      %11517 = vmatpush1.bf16.msra.mxu0 0
      %11518 = vmatprep.subr.bf16.mxu0 0
      %11519 = vmatpush1.bf16.msra.mxu0 0
      %11520 = vmatprep.subr.bf16.mxu0 0
      %11521 = vmatpush1.bf16.msra.mxu0 0
      %11522 = vmatprep.subr.bf16.mxu0 0
      %11523 = vmatpush1.bf16.msra.mxu0 0
      %11524 = vmatprep.subr.bf16.mxu0 0
      %11525 = vmatpush1.bf16.msra.mxu0 0
      %11526 = vmatprep.mubr.bf16.mxu0 0
      %11527 = vmatmul.mubr.bf16.gmra.mrb[0].mxu0 %v11274
      %v11528 = vpop.f32.mrb[0].mxu0
      %v11529 = vadd.f32 0.0, %v11528
      %v11530 = vpop.f32.mrb[0].mxu0
      %v11531 = vpop.f32.mrb[0].mxu0
      %v11532 = vadd.f32 0.0, %v11531
      %v11533 = vpop.f32.mrb[0].mxu0
      %11534 = vmatprep.mubr.bf16.mxu0 0
      %11535 = vmatmul.mubr.bf16.gmra.mrb[0].mxu0 %v11283
      %v11536 = vpop.f32.mrb[0].mxu0
      %v11537 = vadd.f32 0.0, %v11536
      %v11538 = vpop.f32.mrb[0].mxu0
      %v11539 = vpop.f32.mrb[0].mxu0
      %v11540 = vadd.f32 0.0, %v11539
      %v11541 = vpop.f32.mrb[0].mxu0
      %11542 = vmatprep.mubr.bf16.mxu0 0
      %11543 = vmatmul.mubr.bf16.gmra.mrb[0].mxu0 %v11292
      %v11544 = vpop.f32.mrb[0].mxu0
      %v11545 = vadd.f32 0.0, %v11544
      %v11546 = vpop.f32.mrb[0].mxu0
      %v11547 = vpop.f32.mrb[0].mxu0
      %v11548 = vadd.f32 0.0, %v11547
      %v11549 = vpop.f32.mrb[0].mxu0
      %11550 = vmatprep.mubr.bf16.mxu0 0
      %11551 = vmatmul.mubr.bf16.gmra.mrb[0].mxu0 %v11301
      %v11552 = vpop.f32.mrb[0].mxu0
      %v11553 = vadd.f32 0.0, %v11552
      %v11554 = vpop.f32.mrb[0].mxu0
      %v11555 = vpop.f32.mrb[0].mxu0
      %v11556 = vadd.f32 0.0, %v11555
      %v11557 = vpop.f32.mrb[0].mxu0
      %11558 = vmatprep.mubr.bf16.mxu0 0
      %11559 = vmatmul.mubr.bf16.gmra.mrb[0].mxu0 %v11310
      %v11560 = vpop.f32.mrb[0].mxu0
      %v11561 = vadd.f32 0.0, %v11560
      %v11562 = vpop.f32.mrb[0].mxu0
      %v11563 = vpop.f32.mrb[0].mxu0
      %v11564 = vadd.f32 0.0, %v11563
      %v11565 = vpop.f32.mrb[0].mxu0
      %11566 = vmatprep.mubr.bf16.mxu0 0
      %11567 = vmatmul.mubr.bf16.gmra.mrb[0].mxu0 %v11319
      %v11568 = vpop.f32.mrb[0].mxu0
      %v11569 = vadd.f32 0.0, %v11568
      %v11570 = vpop.f32.mrb[0].mxu0
      %v11571 = vpop.f32.mrb[0].mxu0
      %v11572 = vadd.f32 0.0, %v11571
      %v11573 = vpop.f32.mrb[0].mxu0
      %11574 = vmatprep.mubr.bf16.mxu0 0
      %11575 = vmatmul.mubr.bf16.gmra.mrb[0].mxu0 %v11328
      %v11576 = vpop.f32.mrb[0].mxu0
      %v11577 = vadd.f32 0.0, %v11576
      %v11578 = vpop.f32.mrb[0].mxu0
      %v11579 = vpop.f32.mrb[0].mxu0
      %v11580 = vadd.f32 0.0, %v11579
      %v11581 = vpop.f32.mrb[0].mxu0
      %11582 = vmatprep.mubr.bf16.mxu0 0
      %11583 = vmatmul.mubr.bf16.gmra.mrb[0].mxu0 %v11337
      %v11584 = vpop.f32.mrb[0].mxu0
      %v11585 = vadd.f32 0.0, %v11584
      %v11586 = vpop.f32.mrb[0].mxu0
      %v11587 = vpop.f32.mrb[0].mxu0
      %v11588 = vadd.f32 0.0, %v11587
      %v11589 = vpop.f32.mrb[0].mxu0
      %11590 = vmatprep.mubr.bf16.mxu0 0
      %11591 = vmatmul.mubr.bf16.gmra.mrb[0].mxu0 %v11346
      %v11592 = vpop.f32.mrb[0].mxu0
      %v11593 = vadd.f32 0.0, %v11592
      %v11594 = vpop.f32.mrb[0].mxu0
      %v11595 = vpop.f32.mrb[0].mxu0
      %v11596 = vadd.f32 0.0, %v11595
      %v11597 = vpop.f32.mrb[0].mxu0
      %11598 = vmatprep.mubr.bf16.mxu0 0
      %11599 = vmatmul.mubr.bf16.gmra.mrb[0].mxu0 %v11355
      %v11600 = vpop.f32.mrb[0].mxu0
      %v11601 = vadd.f32 0.0, %v11600
      %v11602 = vpop.f32.mrb[0].mxu0
      %v11603 = vpop.f32.mrb[0].mxu0
      %v11604 = vadd.f32 0.0, %v11603
      %v11605 = vpop.f32.mrb[0].mxu0
      %11606 = vmatprep.mubr.bf16.mxu0 0
      %11607 = vmatmul.mubr.bf16.gmra.mrb[0].mxu0 %v11364
      %v11608 = vpop.f32.mrb[0].mxu0
      %v11609 = vadd.f32 0.0, %v11608
      %v11610 = vpop.f32.mrb[0].mxu0
      %v11611 = vpop.f32.mrb[0].mxu0
      %v11612 = vadd.f32 0.0, %v11611
      %v11613 = vpop.f32.mrb[0].mxu0
      %11614 = vmatprep.mubr.bf16.mxu0 0
      %11615 = vmatmul.mubr.bf16.gmra.mrb[0].mxu0 %v11373
      %v11616 = vpop.f32.mrb[0].mxu0
      %v11617 = vadd.f32 0.0, %v11616
      %v11618 = vpop.f32.mrb[0].mxu0
      %v11619 = vpop.f32.mrb[0].mxu0
      %v11620 = vadd.f32 0.0, %v11619
      %v11621 = vpop.f32.mrb[0].mxu0
      %11622 = vmatprep.mubr.bf16.mxu0 0
      %11623 = vmatmul.mubr.bf16.gmra.mrb[0].mxu0 %v11382
      %v11624 = vpop.f32.mrb[0].mxu0
      %v11625 = vadd.f32 0.0, %v11624
      %v11626 = vpop.f32.mrb[0].mxu0
      %v11627 = vpop.f32.mrb[0].mxu0
      %v11628 = vadd.f32 0.0, %v11627
      %v11629 = vpop.f32.mrb[0].mxu0
      %11630 = vmatprep.mubr.bf16.mxu0 0
      %11631 = vmatmul.mubr.bf16.gmra.mrb[0].mxu0 %v11391
      %v11632 = vpop.f32.mrb[0].mxu0
      %v11633 = vadd.f32 0.0, %v11632
      %v11634 = vpop.f32.mrb[0].mxu0
      %v11635 = vpop.f32.mrb[0].mxu0
      %v11636 = vadd.f32 0.0, %v11635
      %v11637 = vpop.f32.mrb[0].mxu0
      %11638 = vmatprep.mubr.bf16.mxu0 0
      %11639 = vmatmul.mubr.bf16.gmra.mrb[0].mxu0 %v11400
      %v11640 = vpop.f32.mrb[0].mxu0
      %v11641 = vadd.f32 0.0, %v11640
      %v11642 = vpop.f32.mrb[0].mxu0
      %v11643 = vpop.f32.mrb[0].mxu0
      %v11644 = vadd.f32 0.0, %v11643
      %v11645 = vpop.f32.mrb[0].mxu0
      %11646 = vmatprep.mubr.bf16.mxu0 0
      %11647 = vmatmul.mubr.bf16.gmra.mrb[0].mxu0 %v11409
      %v11648 = vpop.f32.mrb[0].mxu0
      %v11649 = vadd.f32 0.0, %v11648
      %v11650 = vpop.f32.mrb[0].mxu0
      %v11651 = vpop.f32.mrb[0].mxu0
      %v11652 = vadd.f32 0.0, %v11651
      %v11653 = vpop.f32.mrb[0].mxu0
      %11654 = vmatprep.mubr.bf16.mxu0 0
      %11655 = vmatmul.mubr.bf16.gmra.mrb[0].mxu0 %v11418
      %v11656 = vpop.f32.mrb[0].mxu0
      %v11657 = vadd.f32 0.0, %v11656
      %v11658 = vpop.f32.mrb[0].mxu0
      %v11659 = vpop.f32.mrb[0].mxu0
      %v11660 = vadd.f32 0.0, %v11659
      %v11661 = vpop.f32.mrb[0].mxu0
      %11662 = vmatprep.mubr.bf16.mxu0 0
      %11663 = vmatmul.mubr.bf16.gmra.mrb[0].mxu0 %v11427
      %v11664 = vpop.f32.mrb[0].mxu0
      %v11665 = vadd.f32 0.0, %v11664
      %v11666 = vpop.f32.mrb[0].mxu0
      %v11667 = vpop.f32.mrb[0].mxu0
      %v11668 = vadd.f32 0.0, %v11667
      %v11669 = vpop.f32.mrb[0].mxu0
      %11670 = vdwg.mxu0
      %v11671 = vadd.f32 %v11205, %v11529
      %v11672 = vadd.f32 %v11206, %v11532
      %v11673 = vadd.f32 %v11207, %v11537
      %v11674 = vadd.f32 %v11208, %v11540
      %v11675 = vadd.f32 %v11209, %v11545
      %v11676 = vadd.f32 %v11210, %v11548
      %v11677 = vadd.f32 %v11211, %v11553
      %v11678 = vadd.f32 %v11212, %v11556
      %v11679 = vadd.f32 %v11213, %v11561
      %v11680 = vadd.f32 %v11214, %v11564
      %v11681 = vadd.f32 %v11215, %v11569
      %v11682 = vadd.f32 %v11216, %v11572
      %v11683 = vadd.f32 %v11217, %v11577
      %v11684 = vadd.f32 %v11218, %v11580
      %v11685 = vadd.f32 %v11219, %v11585
      %v11686 = vadd.f32 %v11220, %v11588
      %v11687 = vadd.f32 %v11221, %v11593
      %v11688 = vadd.f32 %v11222, %v11596
      %v11689 = vadd.f32 %v11223, %v11601
      %v11690 = vadd.f32 %v11224, %v11604
      %v11691 = vadd.f32 %v11225, %v11609
      %v11692 = vadd.f32 %v11226, %v11612
      %v11693 = vadd.f32 %v11227, %v11617
      %v11694 = vadd.f32 %v11228, %v11620
      %v11695 = vadd.f32 %v11229, %v11625
      %v11696 = vadd.f32 %v11230, %v11628
      %v11697 = vadd.f32 %v11231, %v11633
      %v11698 = vadd.f32 %v11232, %v11636
      %v11699 = vadd.f32 %v11233, %v11641
      %v11700 = vadd.f32 %v11234, %v11644
      %v11701 = vadd.f32 %v11235, %v11649
      %v11702 = vadd.f32 %v11236, %v11652
      %v11703 = vadd.f32 %v11237, %v11657
      %v11704 = vadd.f32 %v11238, %v11660
      %v11705 = vadd.f32 %v11239, %v11665
      %v11706 = vadd.f32 %v11240, %v11668
      %v11707 = vld [vmem:[#allocation4 + $0x10] sm:$0xf8]
      %v11708 = vld [vmem:[%s8 + $0x200] sm:$0xf]
      %v11709 = vld [vmem:[%s8 + $0x204] sm:$0xf]
      %v11710 = vld [vmem:[%s8 + $0x208] sm:$0xf]
      %v11711 = vld [vmem:[%s8 + $0x20c] sm:$0xf]
      %v11712 = vld [vmem:[%s8 + $0x210] sm:$0xf]
      %v11713 = vld [vmem:[%s8 + $0x214] sm:$0xf]
      %v11714 = vld [vmem:[%s8 + $0x218] sm:$0xf]
      %v11715 = vld [vmem:[%s8 + $0x21c] sm:$0xf]
      %v11716 = vld [vmem:[%s8 + $0x220] sm:$0xf]
      %v11717 = vld [vmem:[%s8 + $0x224] sm:$0xf]
      %v11718 = vld [vmem:[%s8 + $0x228] sm:$0xf]
      %v11719 = vld [vmem:[%s8 + $0x22c] sm:$0xf]
      %v11720 = vld [vmem:[%s8 + $0x230] sm:$0xf]
      %v11721 = vld [vmem:[%s8 + $0x234] sm:$0xf]
      %v11722 = vld [vmem:[%s8 + $0x238] sm:$0xf]
      %v11723 = vld [vmem:[%s8 + $0x23c] sm:$0xf]
      %v11726 = vrot.slane %v11707, 3
      %v11727 = vrot.slane %v10872, 3
      %v11728 = vsel %vm4331, %v11726, %v11727
      %v11729 = vrot.slane %v10873, 3
      %v11730 = vsel %vm4331, %v11727, %v11729
      %v11731 = vrot.slane %v10874, 3
      %v11732 = vsel %vm4331, %v11729, %v11731
      %v11733 = vrot.slane %v10875, 3
      %v11734 = vsel %vm4331, %v11731, %v11733
      %v11735 = vrot.slane %v10876, 3
      %v11736 = vsel %vm4331, %v11733, %v11735
      %v11737 = vrot.slane %v10877, 3
      %v11738 = vsel %vm4331, %v11735, %v11737
      %v11739 = vrot.slane %v10878, 3
      %v11740 = vsel %vm4331, %v11737, %v11739
      %v11741 = vrot.slane %v10879, 3
      %v11742 = vsel %vm4331, %v11739, %v11741
      %v11743 = vrot.slane %v10880, 3
      %v11744 = vsel %vm4331, %v11741, %v11743
      %v11745 = vrot.slane %v10881, 3
      %v11746 = vsel %vm4331, %v11743, %v11745
      %v11747 = vrot.slane %v10882, 3
      %v11748 = vsel %vm4331, %v11745, %v11747
      %v11749 = vrot.slane %v10883, 3
      %v11750 = vsel %vm4331, %v11747, %v11749
      %v11751 = vrot.slane %v10884, 3
      %v11752 = vsel %vm4331, %v11749, %v11751
      %v11753 = vrot.slane %v10885, 3
      %v11754 = vsel %vm4331, %v11751, %v11753
      %v11755 = vrot.slane %v10886, 3
      %v11756 = vsel %vm4331, %v11753, %v11755
      %v11757 = vrot.slane %v10887, 3
      %v11758 = vsel %vm4331, %v11755, %v11757
      %v11759 = vrot.slane %v10888, 3
      %v11760 = vsel %vm4331, %v11757, %v11759
      %v11761 = vrot.slane %v11241, 3
      %v11762 = vsel %vm4331, %v11759, %v11761
      %v11797 = vunpack.c.l.b16 %v11708
      %v11798 = vunpack.c.l.b16 %v11709
      %v11799 = vunpack.c.l.b16 %v11710
      %v11800 = vunpack.c.l.b16 %v11711
      %v11801 = vunpack.c.l.b16 %v11712
      %v11802 = vunpack.c.l.b16 %v11713
      %v11803 = vunpack.c.l.b16 %v11714
      %v11804 = vunpack.c.l.b16 %v11715
      %v11805 = vunpack.c.l.b16 %v11716
      %v11806 = vunpack.c.l.b16 %v11717
      %v11807 = vunpack.c.l.b16 %v11718
      %v11808 = vunpack.c.l.b16 %v11719
      %v11809 = vunpack.c.l.b16 %v11720
      %v11810 = vunpack.c.l.b16 %v11721
      %v11811 = vunpack.c.l.b16 %v11722
      %v11812 = vunpack.c.l.b16 %v11723
      %v11813 = vpack.c.b16 %v11798, %v11797
      %v11814 = vpack.c.b16 %v11800, %v11799
      %v11815 = vpack.c.b16 %v11802, %v11801
      %v11816 = vpack.c.b16 %v11804, %v11803
      %v11817 = vpack.c.b16 %v11806, %v11805
      %v11818 = vpack.c.b16 %v11808, %v11807
      %v11819 = vpack.c.b16 %v11810, %v11809
      %v11820 = vpack.c.b16 %v11812, %v11811
      %11829 = vmatprep.subr.bf16.mxu0 0
      %11830 = vmatpush1.bf16.msra.mxu0 %v11813
      %11831 = vmatprep.subr.bf16.mxu0 0
      %11832 = vmatpush1.bf16.msra.mxu0 %v11814
      %11833 = vmatprep.subr.bf16.mxu0 0
      %11834 = vmatpush1.bf16.msra.mxu0 %v11815
      %11835 = vmatprep.subr.bf16.mxu0 0
      %11836 = vmatpush1.bf16.msra.mxu0 %v11816
      %11837 = vmatprep.subr.bf16.mxu0 0
      %11838 = vmatpush1.bf16.msra.mxu0 %v11817
      %11839 = vmatprep.subr.bf16.mxu0 0
      %11840 = vmatpush1.bf16.msra.mxu0 %v11818
      %11841 = vmatprep.subr.bf16.mxu0 0
      %11842 = vmatpush1.bf16.msra.mxu0 %v11819
      %11843 = vmatprep.subr.bf16.mxu0 0
      %11844 = vmatpush1.bf16.msra.mxu0 %v11820
      %11845 = vmatprep.subr.bf16.mxu0 0
      %11846 = vmatpush1.bf16.msra.mxu0 0
      %11847 = vmatprep.subr.bf16.mxu0 0
      %11848 = vmatpush1.bf16.msra.mxu0 0
      %11849 = vmatprep.subr.bf16.mxu0 0
      %11850 = vmatpush1.bf16.msra.mxu0 0
      %11851 = vmatprep.subr.bf16.mxu0 0
      %11852 = vmatpush1.bf16.msra.mxu0 0
      %11853 = vmatprep.subr.bf16.mxu0 0
      %11854 = vmatpush1.bf16.msra.mxu0 0
      %11855 = vmatprep.subr.bf16.mxu0 0
      %11856 = vmatpush1.bf16.msra.mxu0 0
      %11857 = vmatprep.subr.bf16.mxu0 0
      %11858 = vmatpush1.bf16.msra.mxu0 0
      %11859 = vmatprep.subr.bf16.mxu0 0
      %11860 = vmatpush1.bf16.msra.mxu0 0
      %11861 = vmatprep.mubr.bf16.mxu0 0
      %11862 = vmatmul.mubr.bf16.gmra.mrb[0].mxu0 %v11728
      %v11863 = vpop.f32.mrb[0].mxu0
      %v11864 = vadd.f32 0.0, %v11863
      %v11865 = vpop.f32.mrb[0].mxu0
      %v11866 = vpop.f32.mrb[0].mxu0
      %v11867 = vadd.f32 0.0, %v11866
      %v11868 = vpop.f32.mrb[0].mxu0
      %11869 = vmatprep.mubr.bf16.mxu0 0
      %11870 = vmatmul.mubr.bf16.gmra.mrb[0].mxu0 %v11730
      %v11871 = vpop.f32.mrb[0].mxu0
      %v11872 = vadd.f32 0.0, %v11871
      %v11873 = vpop.f32.mrb[0].mxu0
      %v11874 = vpop.f32.mrb[0].mxu0
      %v11875 = vadd.f32 0.0, %v11874
      %v11876 = vpop.f32.mrb[0].mxu0
      %11877 = vmatprep.mubr.bf16.mxu0 0
      %11878 = vmatmul.mubr.bf16.gmra.mrb[0].mxu0 %v11732
      %v11879 = vpop.f32.mrb[0].mxu0
      %v11880 = vadd.f32 0.0, %v11879
      %v11881 = vpop.f32.mrb[0].mxu0
      %v11882 = vpop.f32.mrb[0].mxu0
      %v11883 = vadd.f32 0.0, %v11882
      %v11884 = vpop.f32.mrb[0].mxu0
      %11885 = vmatprep.mubr.bf16.mxu0 0
      %11886 = vmatmul.mubr.bf16.gmra.mrb[0].mxu0 %v11734
      %v11887 = vpop.f32.mrb[0].mxu0
      %v11888 = vadd.f32 0.0, %v11887
      %v11889 = vpop.f32.mrb[0].mxu0
      %v11890 = vpop.f32.mrb[0].mxu0
      %v11891 = vadd.f32 0.0, %v11890
      %v11892 = vpop.f32.mrb[0].mxu0
      %11893 = vmatprep.mubr.bf16.mxu0 0
      %11894 = vmatmul.mubr.bf16.gmra.mrb[0].mxu0 %v11736
      %v11895 = vpop.f32.mrb[0].mxu0
      %v11896 = vadd.f32 0.0, %v11895
      %v11897 = vpop.f32.mrb[0].mxu0
      %v11898 = vpop.f32.mrb[0].mxu0
      %v11899 = vadd.f32 0.0, %v11898
      %v11900 = vpop.f32.mrb[0].mxu0
      %11901 = vmatprep.mubr.bf16.mxu0 0
      %11902 = vmatmul.mubr.bf16.gmra.mrb[0].mxu0 %v11738
      %v11903 = vpop.f32.mrb[0].mxu0
      %v11904 = vadd.f32 0.0, %v11903
      %v11905 = vpop.f32.mrb[0].mxu0
      %v11906 = vpop.f32.mrb[0].mxu0
      %v11907 = vadd.f32 0.0, %v11906
      %v11908 = vpop.f32.mrb[0].mxu0
      %11909 = vmatprep.mubr.bf16.mxu0 0
      %11910 = vmatmul.mubr.bf16.gmra.mrb[0].mxu0 %v11740
      %v11911 = vpop.f32.mrb[0].mxu0
      %v11912 = vadd.f32 0.0, %v11911
      %v11913 = vpop.f32.mrb[0].mxu0
      %v11914 = vpop.f32.mrb[0].mxu0
      %v11915 = vadd.f32 0.0, %v11914
      %v11916 = vpop.f32.mrb[0].mxu0
      %11917 = vmatprep.mubr.bf16.mxu0 0
      %11918 = vmatmul.mubr.bf16.gmra.mrb[0].mxu0 %v11742
      %v11919 = vpop.f32.mrb[0].mxu0
      %v11920 = vadd.f32 0.0, %v11919
      %v11921 = vpop.f32.mrb[0].mxu0
      %v11922 = vpop.f32.mrb[0].mxu0
      %v11923 = vadd.f32 0.0, %v11922
      %v11924 = vpop.f32.mrb[0].mxu0
      %11925 = vmatprep.mubr.bf16.mxu0 0
      %11926 = vmatmul.mubr.bf16.gmra.mrb[0].mxu0 %v11744
      %v11927 = vpop.f32.mrb[0].mxu0
      %v11928 = vadd.f32 0.0, %v11927
      %v11929 = vpop.f32.mrb[0].mxu0
      %v11930 = vpop.f32.mrb[0].mxu0
      %v11931 = vadd.f32 0.0, %v11930
      %v11932 = vpop.f32.mrb[0].mxu0
      %11933 = vmatprep.mubr.bf16.mxu0 0
      %11934 = vmatmul.mubr.bf16.gmra.mrb[0].mxu0 %v11746
      %v11935 = vpop.f32.mrb[0].mxu0
      %v11936 = vadd.f32 0.0, %v11935
      %v11937 = vpop.f32.mrb[0].mxu0
      %v11938 = vpop.f32.mrb[0].mxu0
      %v11939 = vadd.f32 0.0, %v11938
      %v11940 = vpop.f32.mrb[0].mxu0
      %11941 = vmatprep.mubr.bf16.mxu0 0
      %11942 = vmatmul.mubr.bf16.gmra.mrb[0].mxu0 %v11748
      %v11943 = vpop.f32.mrb[0].mxu0
      %v11944 = vadd.f32 0.0, %v11943
      %v11945 = vpop.f32.mrb[0].mxu0
      %v11946 = vpop.f32.mrb[0].mxu0
      %v11947 = vadd.f32 0.0, %v11946
      %v11948 = vpop.f32.mrb[0].mxu0
      %11949 = vmatprep.mubr.bf16.mxu0 0
      %11950 = vmatmul.mubr.bf16.gmra.mrb[0].mxu0 %v11750
      %v11951 = vpop.f32.mrb[0].mxu0
      %v11952 = vadd.f32 0.0, %v11951
      %v11953 = vpop.f32.mrb[0].mxu0
      %v11954 = vpop.f32.mrb[0].mxu0
      %v11955 = vadd.f32 0.0, %v11954
      %v11956 = vpop.f32.mrb[0].mxu0
      %11957 = vmatprep.mubr.bf16.mxu0 0
      %11958 = vmatmul.mubr.bf16.gmra.mrb[0].mxu0 %v11752
      %v11959 = vpop.f32.mrb[0].mxu0
      %v11960 = vadd.f32 0.0, %v11959
      %v11961 = vpop.f32.mrb[0].mxu0
      %v11962 = vpop.f32.mrb[0].mxu0
      %v11963 = vadd.f32 0.0, %v11962
      %v11964 = vpop.f32.mrb[0].mxu0
      %11965 = vmatprep.mubr.bf16.mxu0 0
      %11966 = vmatmul.mubr.bf16.gmra.mrb[0].mxu0 %v11754
      %v11967 = vpop.f32.mrb[0].mxu0
      %v11968 = vadd.f32 0.0, %v11967
      %v11969 = vpop.f32.mrb[0].mxu0
      %v11970 = vpop.f32.mrb[0].mxu0
      %v11971 = vadd.f32 0.0, %v11970
      %v11972 = vpop.f32.mrb[0].mxu0
      %11973 = vmatprep.mubr.bf16.mxu0 0
      %11974 = vmatmul.mubr.bf16.gmra.mrb[0].mxu0 %v11756
      %v11975 = vpop.f32.mrb[0].mxu0
      %v11976 = vadd.f32 0.0, %v11975
      %v11977 = vpop.f32.mrb[0].mxu0
      %v11978 = vpop.f32.mrb[0].mxu0
      %v11979 = vadd.f32 0.0, %v11978
      %v11980 = vpop.f32.mrb[0].mxu0
      %11981 = vmatprep.mubr.bf16.mxu0 0
      %11982 = vmatmul.mubr.bf16.gmra.mrb[0].mxu0 %v11758
      %v11983 = vpop.f32.mrb[0].mxu0
      %v11984 = vadd.f32 0.0, %v11983
      %v11985 = vpop.f32.mrb[0].mxu0
      %v11986 = vpop.f32.mrb[0].mxu0
      %v11987 = vadd.f32 0.0, %v11986
      %v11988 = vpop.f32.mrb[0].mxu0
      %11989 = vmatprep.mubr.bf16.mxu0 0
      %11990 = vmatmul.mubr.bf16.gmra.mrb[0].mxu0 %v11760
      %v11991 = vpop.f32.mrb[0].mxu0
      %v11992 = vadd.f32 0.0, %v11991
      %v11993 = vpop.f32.mrb[0].mxu0
      %v11994 = vpop.f32.mrb[0].mxu0
      %v11995 = vadd.f32 0.0, %v11994
      %v11996 = vpop.f32.mrb[0].mxu0
      %11997 = vmatprep.mubr.bf16.mxu0 0
      %11998 = vmatmul.mubr.bf16.gmra.mrb[0].mxu0 %v11762
      %v11999 = vpop.f32.mrb[0].mxu0
      %v12000 = vadd.f32 0.0, %v11999
      %v12001 = vpop.f32.mrb[0].mxu0
      %v12002 = vpop.f32.mrb[0].mxu0
      %v12003 = vadd.f32 0.0, %v12002
      %v12004 = vpop.f32.mrb[0].mxu0
      %12005 = vdwg.mxu0
      %v12006 = vadd.f32 %v11671, %v11864
      %v12007 = vadd.f32 %v11672, %v11867
      %v12008 = vadd.f32 %v11673, %v11872
      %v12009 = vadd.f32 %v11674, %v11875
      %v12010 = vadd.f32 %v11675, %v11880
      %v12011 = vadd.f32 %v11676, %v11883
      %v12012 = vadd.f32 %v11677, %v11888
      %v12013 = vadd.f32 %v11678, %v11891
      %v12014 = vadd.f32 %v11679, %v11896
      %v12015 = vadd.f32 %v11680, %v11899
      %v12016 = vadd.f32 %v11681, %v11904
      %v12017 = vadd.f32 %v11682, %v11907
      %v12018 = vadd.f32 %v11683, %v11912
      %v12019 = vadd.f32 %v11684, %v11915
      %v12020 = vadd.f32 %v11685, %v11920
      %v12021 = vadd.f32 %v11686, %v11923
      %v12022 = vadd.f32 %v11687, %v11928
      %v12023 = vadd.f32 %v11688, %v11931
      %v12024 = vadd.f32 %v11689, %v11936
      %v12025 = vadd.f32 %v11690, %v11939
      %v12026 = vadd.f32 %v11691, %v11944
      %v12027 = vadd.f32 %v11692, %v11947
      %v12028 = vadd.f32 %v11693, %v11952
      %v12029 = vadd.f32 %v11694, %v11955
      %v12030 = vadd.f32 %v11695, %v11960
      %v12031 = vadd.f32 %v11696, %v11963
      %v12032 = vadd.f32 %v11697, %v11968
      %v12033 = vadd.f32 %v11698, %v11971
      %v12034 = vadd.f32 %v11699, %v11976
      %v12035 = vadd.f32 %v11700, %v11979
      %v12036 = vadd.f32 %v11701, %v11984
      %v12037 = vadd.f32 %v11702, %v11987
      %v12038 = vadd.f32 %v11703, %v11992
      %v12039 = vadd.f32 %v11704, %v11995
      %v12040 = vadd.f32 %v11705, %v12000
      %v12041 = vadd.f32 %v11706, %v12003
      %v12042 = vld [vmem:[%s9] sm:$0x1]
      %v12044 = vlaneseq
      %v12045 = vshrl.u32 %v12044, 7
      %v12046 = vsub.s32 0, %v12045
      %v12047 = vrot.slane %v12042, %v12046
      %v12049 = vadd.f32 %v12006, %v12047
      %v12050 = vadd.f32 %v12007, %v12047
      %v12051 = vadd.f32 %v12008, %v12047
      %v12052 = vadd.f32 %v12009, %v12047
      %v12053 = vadd.f32 %v12010, %v12047
      %v12054 = vadd.f32 %v12011, %v12047
      %v12055 = vadd.f32 %v12012, %v12047
      %v12056 = vadd.f32 %v12013, %v12047
      %v12057 = vadd.f32 %v12014, %v12047
      %v12058 = vadd.f32 %v12015, %v12047
      %v12059 = vadd.f32 %v12016, %v12047
      %v12060 = vadd.f32 %v12017, %v12047
      %v12061 = vadd.f32 %v12018, %v12047
      %v12062 = vadd.f32 %v12019, %v12047
      %v12063 = vadd.f32 %v12020, %v12047
      %v12064 = vadd.f32 %v12021, %v12047
      %v12065 = vadd.f32 %v12022, %v12047
      %v12066 = vadd.f32 %v12023, %v12047
      %v12067 = vadd.f32 %v12024, %v12047
      %v12068 = vadd.f32 %v12025, %v12047
      %v12069 = vadd.f32 %v12026, %v12047
      %v12070 = vadd.f32 %v12027, %v12047
      %v12071 = vadd.f32 %v12028, %v12047
      %v12072 = vadd.f32 %v12029, %v12047
      %v12073 = vadd.f32 %v12030, %v12047
      %v12074 = vadd.f32 %v12031, %v12047
      %v12075 = vadd.f32 %v12032, %v12047
      %v12076 = vadd.f32 %v12033, %v12047
      %v12077 = vadd.f32 %v12034, %v12047
      %v12078 = vadd.f32 %v12035, %v12047
      %v12079 = vadd.f32 %v12036, %v12047
      %v12080 = vadd.f32 %v12037, %v12047
      %v12081 = vadd.f32 %v12038, %v12047
      %v12082 = vadd.f32 %v12039, %v12047
      %v12083 = vadd.f32 %v12040, %v12047
      %v12084 = vadd.f32 %v12041, %v12047
      %v12085 = vmul.f32 %v12049, %v847
      %v12086 = vmul.f32 %v12050, %v852
      %v12087 = vmul.f32 %v12051, %v857
      %v12088 = vmul.f32 %v12052, %v862
      %v12089 = vmul.f32 %v12053, %v867
      %v12090 = vmul.f32 %v12054, %v872
      %v12091 = vmul.f32 %v12055, %v877
      %v12092 = vmul.f32 %v12056, %v882
      %v12093 = vmul.f32 %v12057, %v887
      %v12094 = vmul.f32 %v12058, %v892
      %v12095 = vmul.f32 %v12059, %v897
      %v12096 = vmul.f32 %v12060, %v902
      %v12097 = vmul.f32 %v12061, %v907
      %v12098 = vmul.f32 %v12062, %v912
      %v12099 = vmul.f32 %v12063, %v917
      %v12100 = vmul.f32 %v12064, %v922
      %v12101 = vmul.f32 %v12065, %v927
      %v12102 = vmul.f32 %v12066, %v932
      %v12103 = vmul.f32 %v12067, %v937
      %v12104 = vmul.f32 %v12068, %v942
      %v12105 = vmul.f32 %v12069, %v947
      %v12106 = vmul.f32 %v12070, %v952
      %v12107 = vmul.f32 %v12071, %v957
      %v12108 = vmul.f32 %v12072, %v962
      %v12109 = vmul.f32 %v12073, %v967
      %v12110 = vmul.f32 %v12074, %v972
      %v12111 = vmul.f32 %v12075, %v977
      %v12112 = vmul.f32 %v12076, %v982
      %v12113 = vmul.f32 %v12077, %v987
      %v12114 = vmul.f32 %v12078, %v992
      %v12115 = vmul.f32 %v12079, %v997
      %v12116 = vmul.f32 %v12080, %v1002
      %v12117 = vmul.f32 %v12081, %v1007
      %v12118 = vmul.f32 %v12082, %v1012
      %v12119 = vmul.f32 %v12083, %v1017
      %v12120 = vmul.f32 %v12084, %v1022
      %12121 = vst [vmem:[%s359] sm:$0xff] %v12085
      %12122 = vst [vmem:[%s359 + $0x8] sm:$0xff] %v12086
      %12123 = vst [vmem:[%s359 + $0x10] sm:$0xff] %v12087
      %12124 = vst [vmem:[%s359 + $0x18] sm:$0xff] %v12088
      %12125 = vst [vmem:[%s359 + $0x20] sm:$0xff] %v12089
      %12126 = vst [vmem:[%s359 + $0x28] sm:$0xff] %v12090
      %12127 = vst [vmem:[%s359 + $0x30] sm:$0xff] %v12091
      %12128 = vst [vmem:[%s359 + $0x38] sm:$0xff] %v12092
      %12129 = vst [vmem:[%s359 + $0x40] sm:$0xff] %v12093
      %12130 = vst [vmem:[%s359 + $0x48] sm:$0xff] %v12094
      %12131 = vst [vmem:[%s359 + $0x50] sm:$0xff] %v12095
      %12132 = vst [vmem:[%s359 + $0x58] sm:$0xff] %v12096
      %12133 = vst [vmem:[%s359 + $0x60] sm:$0xff] %v12097
      %12134 = vst [vmem:[%s359 + $0x68] sm:$0xff] %v12098
      %12135 = vst [vmem:[%s359 + $0x70] sm:$0xff] %v12099
      %12136 = vst [vmem:[%s359 + $0x78] sm:$0xff] %v12100
      %12137 = vst [vmem:[%s359 + $0x80] sm:$0xff] %v12101
      %12138 = vst [vmem:[%s359 + $0x88] sm:$0xff] %v12102
      %12139 = vst [vmem:[%s359 + $0x90] sm:$0xff] %v12103
      %12140 = vst [vmem:[%s359 + $0x98] sm:$0xff] %v12104
      %12141 = vst [vmem:[%s359 + $0xa0] sm:$0xff] %v12105
      %12142 = vst [vmem:[%s359 + $0xa8] sm:$0xff] %v12106
      %12143 = vst [vmem:[%s359 + $0xb0] sm:$0xff] %v12107
      %12144 = vst [vmem:[%s359 + $0xb8] sm:$0xff] %v12108
      %12145 = vst [vmem:[%s359 + $0xc0] sm:$0xff] %v12109
      %12146 = vst [vmem:[%s359 + $0xc8] sm:$0xff] %v12110
      %12147 = vst [vmem:[%s359 + $0xd0] sm:$0xff] %v12111
      %12148 = vst [vmem:[%s359 + $0xd8] sm:$0xff] %v12112
      %12149 = vst [vmem:[%s359 + $0xe0] sm:$0xff] %v12113
      %12150 = vst [vmem:[%s359 + $0xe8] sm:$0xff] %v12114
      %12151 = vst [vmem:[%s359 + $0xf0] sm:$0xff] %v12115
      %12152 = vst [vmem:[%s359 + $0xf8] sm:$0xff] %v12116
      %12153 = vst [vmem:[%s359 + $0x100] sm:$0xff] %v12117
      %12154 = vst [vmem:[%s359 + $0x108] sm:$0xff] %v12118
      %12155 = vst [vmem:[%s359 + $0x110] sm:$0xff] %v12119
      %12156 = vst [vmem:[%s359 + $0x118] sm:$0xff] %v12120
      %p12157 = scmp.lt.s32.totalorder %s21, 1
      %s12158 = scalar_select %p12157, %s21, 1
      %s12159 = smul.addr %s12158, 36
      %s12160 = smul.addr %s12159, 8
      %s12161 = scalar_lea.vmem %s10, %s12160
      // Predicated region
      $region61: #{sr_forward.1} parent=59 // pred_check
        %p12162 = pneg %p254
      $region62: #{sr_forward.1} parent=59 // pred_check_branch
        %12164 = sbr.rel (%p12162) target = $region64
      $region63: #{sr_forward.1} parent=59 // pred_region
        _
      $region64: #{sr_forward.1} parent=59 // pred_fallthru
        _
    $region60: #{sr_forward.1} parent=5 // pred_fallthru
      _
    %p12165 = scmp.le.s32.totalorder 2, %s16
    // Predicated region
    $region65: #{sr_forward.1} parent=5 // pred_check
      %p12166 = pneg %p12165
    $region66: #{sr_forward.1} parent=5 // pred_check_branch
      %12168 = sbr.rel (%p12166) target = $region68
    $region67: #{sr_forward.1} parent=5 // pred_region
      %s12169 = ssub.s32 %s16, 2
      // Predicated region
      $region69: #{sr_forward.1} parent=67 // pred_check
        %p12170 = pneg %p260
      $region70: #{sr_forward.1} parent=67 // pred_check_branch
        %12172 = sbr.rel (%p12170) target = $region72
      $region71: #{sr_forward.1} parent=67 // pred_region
        %p12173 = scmp.lt.s32.totalorder %s22, 1
        %s12174 = scalar_select %p12173, %s22, 1
        %s12175 = smul.addr %s12174, 36
        %s12176 = smul.addr %s12175, 8
        %s12177 = scalar_lea.vmem %s10, %s12176
      $region72: #{sr_forward.1} parent=67 // pred_fallthru
        _
    $region68: #{sr_forward.1} parent=5 // pred_fallthru
      _
  $region6: #{sr_forward.1} parent=0 // loop_footer
    %s20 = sadd.s32 1, %s16
  $region7: #{sr_forward.1} parent=0 // loop_footer_branch
    %15 = sbr.rel target = $region3
  $region8: #{sr_forward.1} parent=0 // loop_exit
    _

</llo_original>
